<compile_context>
chip_gen: v5e
topology: v5e:2x2
jax: 0.10.0
libtpu: 0.0.40
codegen_flags: <defaults>
</compile_context>

<pallas_src>
import functools

import jax
import jax.numpy as jnp
from jax import lax
from jax.experimental import pallas as pl
from jax.experimental.pallas import tpu as pltpu


# ------------------------------ tiling helper ------------------------------- #

def _pick_row_tile(n_rows, cap=1024):
    """Largest row tile dividing n_rows, sublane-aligned, <= cap.

    Prefers >=2 grid steps (so the row axis can be sharded across TensorCores
    on v7x); falls back to the full extent when nothing divides cleanly.
    """
    if n_rows <= cap:
        half = n_rows // 2
        if n_rows % 2 == 0 and half % 8 == 0 and half >= 128:
            return half
        return n_rows
    for t in range(cap, 7, -1):
        if n_rows % t == 0 and t % 8 == 0:
            return t
    return n_rows


# ------------------------------ Pallas kernels ------------------------------ #

def _linear_kernel(x_ref, w_ref, b_ref, o_ref, *, apply_silu):
    y = jnp.dot(x_ref[...], w_ref[...], preferred_element_type=jnp.float32)
    y = y + b_ref[...]
    if apply_silu:
        y = y * jax.nn.sigmoid(y)
    o_ref[...] = y.astype(o_ref.dtype)


def linear_pallas(x2d, w, b, apply_silu=False):
    """x2d: (N, Din), w: (Din, Dout), b: (1, Dout) -> (N, Dout) f32."""
    N, Din = x2d.shape
    Dout = w.shape[1]
    tile_n = _pick_row_tile(N)
    return pl.pallas_call(
        functools.partial(_linear_kernel, apply_silu=apply_silu),
        out_shape=jax.ShapeDtypeStruct((N, Dout), jnp.float32),
        grid_spec=pltpu.PrefetchScalarGridSpec(
            num_scalar_prefetch=0,
            grid=(N // tile_n,),
            in_specs=[
                pl.BlockSpec((tile_n, Din), lambda i: (i, 0)),
                pl.BlockSpec((Din, Dout), lambda i: (0, 0)),
                pl.BlockSpec((1, Dout), lambda i: (0, 0)),
            ],
            out_specs=pl.BlockSpec((tile_n, Dout), lambda i: (i, 0)),
        ),
        compiler_params=pltpu.CompilerParams(dimension_semantics=("parallel",)),
    )(x2d, w, b)


def _resadd_act_kernel(x_ref, xi_ref, w_ref, b_ref, o_ref, *, apply_silu):
    # SiLU(xi + x @ W + b): residual linear fused with the add + activation.
    y = jnp.dot(x_ref[...], w_ref[...], preferred_element_type=jnp.float32)
    y = y + b_ref[...] + xi_ref[...]
    if apply_silu:
        y = y * jax.nn.sigmoid(y)
    o_ref[...] = y.astype(o_ref.dtype)


def resadd_act_pallas(x2d, xi2d, w, b, apply_silu=True):
    """x2d: (N, Cin), xi2d: (N, Cout), w: (Cin, Cout), b: (1, Cout) -> (N, Cout)."""
    N, Cin = x2d.shape
    Cout = w.shape[1]
    tile_n = _pick_row_tile(N)
    return pl.pallas_call(
        functools.partial(_resadd_act_kernel, apply_silu=apply_silu),
        out_shape=jax.ShapeDtypeStruct((N, Cout), jnp.float32),
        grid_spec=pltpu.PrefetchScalarGridSpec(
            num_scalar_prefetch=0,
            grid=(N // tile_n,),
            in_specs=[
                pl.BlockSpec((tile_n, Cin), lambda i: (i, 0)),
                pl.BlockSpec((tile_n, Cout), lambda i: (i, 0)),
                pl.BlockSpec((Cin, Cout), lambda i: (0, 0)),
                pl.BlockSpec((1, Cout), lambda i: (0, 0)),
            ],
            out_specs=pl.BlockSpec((tile_n, Cout), lambda i: (i, 0)),
        ),
        compiler_params=pltpu.CompilerParams(dimension_semantics=("parallel",)),
    )(x2d, xi2d, w, b)


def _mlp_kernel(x_ref, w1_ref, b1_ref, w2_ref, b2_ref, o_ref):
    # Fused regressor: (x @ W1 + b1) -> SiLU -> (@ W2 + b2); both weights VMEM-resident,
    # intermediate never touches HBM.
    h = jnp.dot(x_ref[...], w1_ref[...], preferred_element_type=jnp.float32) + b1_ref[...]
    h = h * jax.nn.sigmoid(h)
    y = jnp.dot(h, w2_ref[...], preferred_element_type=jnp.float32) + b2_ref[...]
    o_ref[...] = y.astype(o_ref.dtype)


def mlp_pallas(x2d, w1, b1, w2, b2):
    """x2d: (N, D) -> (N, Dout) computing SiLU(x@W1+b1)@W2+b2 in one kernel."""
    N, D = x2d.shape
    Dff = w1.shape[1]
    Dout = w2.shape[1]
    tile_n = _pick_row_tile(N)
    return pl.pallas_call(
        _mlp_kernel,
        out_shape=jax.ShapeDtypeStruct((N, Dout), jnp.float32),
        grid_spec=pltpu.PrefetchScalarGridSpec(
            num_scalar_prefetch=0,
            grid=(N // tile_n,),
            in_specs=[
                pl.BlockSpec((tile_n, D), lambda i: (i, 0)),
                pl.BlockSpec((D, Dff), lambda i: (0, 0)),
                pl.BlockSpec((1, Dff), lambda i: (0, 0)),
                pl.BlockSpec((Dff, Dout), lambda i: (0, 0)),
                pl.BlockSpec((1, Dout), lambda i: (0, 0)),
            ],
            out_specs=pl.BlockSpec((tile_n, Dout), lambda i: (i, 0)),
        ),
        compiler_params=pltpu.CompilerParams(dimension_semantics=("parallel",)),
    )(x2d, w1, b1, w2, b2)


def _spectral_mix_kernel(ar_ref, ai_ref, wr_ref, wi_ref, or_ref, oi_ref):
    # Complex einsum 'bif,iof->bof' as a broadcast-multiply-reduce over the
    # in-channel axis (no per-channel sublane slicing).  One grid step per
    # frequency block (low-modes with w0, high-modes with w1).
    ar = ar_ref[0]            # (B, Ci, F)
    ai = ai_ref[0]
    wr = wr_ref[0]            # (Ci, Co, F)
    wi = wi_ref[0]
    arb = ar[:, :, None, :]   # (B, Ci, 1, F)
    aib = ai[:, :, None, :]
    or_ref[0] = jnp.sum(arb * wr - aib * wi, axis=1)   # (B, Co, F)
    oi_ref[0] = jnp.sum(aib * wr + arb * wi, axis=1)


def spectral_mix_pallas(ar, ai, wr, wi):
    """ar/ai: (2, B, Ci, F) f32; wr/wi: (2, Ci, Co, F) f32 -> two (2, B, Co, F) f32."""
    _, B, Ci, F = ar.shape
    Co = wr.shape[2]
    return pl.pallas_call(
        _spectral_mix_kernel,
        out_shape=(
            jax.ShapeDtypeStruct((2, B, Co, F), jnp.float32),
            jax.ShapeDtypeStruct((2, B, Co, F), jnp.float32),
        ),
        grid_spec=pltpu.PrefetchScalarGridSpec(
            num_scalar_prefetch=0,
            grid=(2,),
            in_specs=[
                pl.BlockSpec((1, B, Ci, F), lambda g: (g, 0, 0, 0)),
                pl.BlockSpec((1, B, Ci, F), lambda g: (g, 0, 0, 0)),
                pl.BlockSpec((1, Ci, Co, F), lambda g: (g, 0, 0, 0)),
                pl.BlockSpec((1, Ci, Co, F), lambda g: (g, 0, 0, 0)),
            ],
            out_specs=[
                pl.BlockSpec((1, B, Co, F), lambda g: (g, 0, 0, 0)),
                pl.BlockSpec((1, B, Co, F), lambda g: (g, 0, 0, 0)),
            ],
        ),
        compiler_params=pltpu.CompilerParams(dimension_semantics=("parallel",)),
    )(ar, ai, wr, wi)


# ---------------------------- model forward (glue) --------------------------- #

def spectral_conv2d_forward(x, lp, modes, apply_silu=True):
    """x: (B, n, n, Cin) -> (B, n, n, Cout). Mirrors SpectralConv2d.forward (eval)."""
    B, n, _, Cin = x.shape
    Cout = lp["lin_w"].shape[1]
    N = B * n * n
    m = modes
    F = m * m

    # Channels-last FFT: no full-tensor NHWC<->NCHW transposes.
    # dropout -> identity (inference).
    x_ft = jnp.fft.rfft2(x, s=(n, n), axes=(1, 2), norm="ortho")   # (B, n, n//2+1, Cin)

    lo = x_ft[:, :m, :m, :]                                        # (B, m, m, Cin)
    hi = x_ft[:, n - m:, :m, :]
    a = jnp.stack([lo, hi], axis=0)                                # (2, B, m, m, Cin)
    a = jnp.transpose(a, (0, 1, 4, 2, 3)).reshape(2, B, Cin, F)    # tiny block only
    ar = jnp.real(a).astype(jnp.float32)
    ai = jnp.imag(a).astype(jnp.float32)

    out_r, out_i = spectral_mix_pallas(ar, ai, lp["wr"], lp["wi"])  # (2, B, Cout, F)
    out_c = lax.complex(out_r, out_i).reshape(2, B, Cout, m, m)
    out_c = jnp.transpose(out_c, (0, 1, 3, 4, 2))                   # (2, B, m, m, Cout)

    # Build out_ft by concat + pad (no zeros-buffer scatter passes).
    mid = jnp.zeros((B, n - 2 * m, m, Cout), out_c.dtype)
    left = jnp.concatenate([out_c[0], mid, out_c[1]], axis=1)       # (B, n, m, Cout)
    out_ft = jnp.pad(left, ((0, 0), (0, 0), (0, n // 2 + 1 - m), (0, 0)))

    xi = jnp.fft.irfft2(out_ft, s=(n, n), axes=(1, 2), norm="ortho")  # (B, n, n, Cout) f32

    # Fused: SiLU(xi + x @ W_res + b) in one Pallas pass (residual never hits HBM).
    out = resadd_act_pallas(x.reshape(N, Cin), xi.reshape(N, Cout),
                            lp["lin_w"], lp["lin_b"], apply_silu=apply_silu)
    return out.reshape(B, n, n, Cout)


def fno_forward(x, gradx, grid, params, modes):
    """FourierNeuralOperator.forward (2D, spacial_fc=True, add_grad_channel=False)."""
    del gradx  # add_grad_channel=False -> gradx only ndim-checked in the reference
    B, n, _, _ = x.shape
    N = B * n * n

    # spacial_fc: concat grid, zero-pad the tiny feature dim up to a sublane multiple
    # (padded weight rows are zero, so the result is unchanged).
    feats = [x, grid]
    din_pad = params["fc_w"].shape[0]
    pad = din_pad - (x.shape[-1] + grid.shape[-1])
    if pad > 0:
        feats.append(jnp.zeros((B, n, n, pad), jnp.float32))
    h = jnp.concatenate(feats, axis=-1)                             # (B, n, n, din_pad)

    h2d = linear_pallas(h.reshape(N, din_pad), params["fc_w"], params["fc_b"])
    h = h2d.reshape(B, n, n, -1)

    for lp in params["spectral"]:
        h = spectral_conv2d_forward(h, lp, modes, apply_silu=True)  # last_activation=True

    # Fused regressor: Linear -> SiLU -> Linear in one kernel.
    out2d = mlp_pallas(h.reshape(N, h.shape[-1]),
                       params["reg1_w"], params["reg1_b"],
                       params["reg2_w"], params["reg2_b"])
    return {"preds": out2d.reshape(B, n, n, -1)}


# ----------------------------- parameter creation ---------------------------- #

def _lin_init(key, din, dout, din_pad=None):
    kw, kb = jax.random.split(key)
    bound = 1.0 / jnp.sqrt(float(din))
    w = jax.random.uniform(kw, (din, dout), jnp.float32, -bound, bound)
    if din_pad is not None and din_pad > din:
        w = jnp.concatenate([w, jnp.zeros((din_pad - din, dout), jnp.float32)], axis=0)
    b = jax.random.uniform(kb, (1, dout), jnp.float32, -bound, bound)
    return w, b


def init_params(key, in_dim, n_hidden, freq_dim, out_dim, modes,
                num_spectral_layers=2, spacial_dim=2):
    dim_ff = 2 * spacial_dim * freq_dim
    keys = list(jax.random.split(key, 3 + 2 * num_spectral_layers))
    kit = iter(keys)
    params = {}

    din = in_dim + spacial_dim
    din_pad = ((din + 7) // 8) * 8
    params["fc_w"], params["fc_b"] = _lin_init(next(kit), din, n_hidden, din_pad=din_pad)

    spectral = []
    ci = n_hidden
    for _ in range(num_spectral_layers):
        co = freq_dim
        lw, lb = _lin_init(next(kit), ci, co)
        # xavier_normal_ with gain = sqrt(ci+co)/(ci*co) on a (ci,co,m,m,2) tensor
        # -> std = gain * sqrt(2 / (fan_in + fan_out)) = 1 / (ci * co * modes)
        std = 1.0 / (ci * co * modes)
        wfull = std * jax.random.normal(next(kit), (2, ci, co, modes, modes, 2), jnp.float32)
        wr = wfull[..., 0].reshape(2, ci, co, modes * modes)
        wi = wfull[..., 1].reshape(2, ci, co, modes * modes)
        spectral.append(dict(lin_w=lw, lin_b=lb, wr=wr, wi=wi))
        ci = co
    params["spectral"] = spectral

    params["reg1_w"], params["reg1_b"] = _lin_init(next(kit), freq_dim, dim_ff)
    params["reg2_w"], params["reg2_b"] = _lin_init(next(kit), dim_ff, out_dim)
    return params


# ------------------------------------ main ----------------------------------- #

if __name__ == "__main__":
    B, n = 2, 16
    in_dim, n_hidden, freq_dim, out_dim, modes = 4, 32, 16, 3, 4
    num_spectral_layers = 2

    key = jax.random.PRNGKey(0)
    kx, kg, kp = jax.random.split(key, 3)

    x = jax.random.normal(kx, (B, n, n, in_dim), jnp.float32)
    gradx = jax.random.normal(kg, (B, n, n, in_dim), jnp.float32)
    coords = jnp.linspace(0.0, 1.0, n)
    gx, gy = jnp.meshgrid(coords, coords, indexing="ij")
    grid = jnp.broadcast_to(jnp.stack([gx, gy], axis=-1)[None], (B, n, n, 2)).astype(jnp.float32)

    params = init_params(kp, in_dim, n_hidden, freq_dim, out_dim, modes,
                         num_spectral_layers=num_spectral_layers, spacial_dim=2)

    fwd = jax.jit(lambda x_, g_, gr_, p_: fno_forward(x_, g_, gr_, p_, modes))
    out = fwd(x, gradx, grid, params)
    out = jax.block_until_ready(out)

    preds = out["preds"]
    assert preds.shape == (B, n, n, out_dim), preds.shape
    assert bool(jnp.all(jnp.isfinite(preds)))
    print("KERNEL_OK")
</pallas_src>

<mosaic_0001>
module attributes {stable_mosaic.version = 11 : i64} {
  func.func @_linear_kernel(%arg0: i32, %arg1: memref<256x8xf32, #tpu.memory_space<vmem>>, %arg2: memref<8x32xf32, #tpu.memory_space<vmem>>, %arg3: memref<1x32xf32, #tpu.memory_space<vmem>>, %arg4: memref<256x32xf32, #tpu.memory_space<vmem>>) attributes {dimension_semantics = [#tpu.dimension_semantics<parallel>], iteration_bounds = array<i64: 2>, scalar_prefetch = 0 : i64, scratch_operands = 0 : i64, tpu.core_type = #tpu.core_type<tc>, window_params = [{transform_indices = @transform_0, window_bounds = array<i64: 256, 8>}, {pipeline_mode = #tpu.pipeline_mode<synchronous>, transform_indices = @transform_1, window_bounds = array<i64: 8, 32>}, {pipeline_mode = #tpu.pipeline_mode<synchronous>, transform_indices = @transform_2, window_bounds = array<i64: 1, 32>}, {transform_indices = @transform_3, window_bounds = array<i64: 256, 32>}]} {
    %c0 = arith.constant 0 : index
    %c0_0 = arith.constant 0 : index
    %0 = vector.load %arg1[%c0, %c0_0] : memref<256x8xf32, #tpu.memory_space<vmem>>, vector<256x8xf32>
    %c0_1 = arith.constant 0 : index
    %c0_2 = arith.constant 0 : index
    %1 = vector.load %arg2[%c0_1, %c0_2] : memref<8x32xf32, #tpu.memory_space<vmem>>, vector<8x32xf32>
    %cst = arith.constant dense<0.000000e+00> : vector<256x32xf32>
    %2 = tpu.matmul %0, %1, %cst {dimension_numbers = #tpu.dot_dimension_numbers<[1], [0], [0], [1], [0, 0, 1, 1], [], []>} : vector<256x8xf32>, vector<8x32xf32>, vector<256x32xf32> -> vector<256x32xf32>
    %c0_3 = arith.constant 0 : index
    %c0_4 = arith.constant 0 : index
    %3 = vector.load %arg3[%c0_3, %c0_4] : memref<1x32xf32, #tpu.memory_space<vmem>>, vector<1x32xf32>
    %4 = vector.broadcast %3 : vector<1x32xf32> to vector<256x32xf32>
    %5 = arith.addf %2, %4 : vector<256x32xf32>
    %c0_5 = arith.constant 0 : index
    %c0_6 = arith.constant 0 : index
    %6 = vector.load %arg4[%c0_5, %c0_6] : memref<256x32xf32, #tpu.memory_space<vmem>>, vector<256x32xf32>
    tpu.vector_store %arg4[%c0_5, %c0_6], %5 {strides = array<i32>} : memref<256x32xf32, #tpu.memory_space<vmem>>, vector<256x32xf32>,
    return
  }
  func.func @transform_0(%arg0: i32) -> (i32, i32) {
    %c0_i32 = arith.constant 0 : i32
    %c0_i32_0 = arith.constant 0 : i32
    return %arg0, %c0_i32 : i32, i32
  }
  func.func @transform_1(%arg0: i32) -> (i32, i32) {
    %c0_i32 = arith.constant 0 : i32
    %c0_i32_0 = arith.constant 0 : i32
    %c0_i32_1 = arith.constant 0 : i32
    return %c0_i32, %c0_i32_0 : i32, i32
  }
  func.func @transform_2(%arg0: i32) -> (i32, i32) {
    %c0_i32 = arith.constant 0 : i32
    %c0_i32_0 = arith.constant 0 : i32
    %c0_i32_1 = arith.constant 0 : i32
    return %c0_i32, %c0_i32_0 : i32, i32
  }
  func.func @transform_3(%arg0: i32) -> (i32, i32) {
    %c0_i32 = arith.constant 0 : i32
    %c0_i32_0 = arith.constant 0 : i32
    return %arg0, %c0_i32 : i32, i32
  }
}

module attributes {stable_mosaic.version = 11 : i64} {
  func.func @_spectral_mix_kernel(%arg0: i32, %arg1: memref<1x2x32x16xf32, #tpu.memory_space<vmem>>, %arg2: memref<1x2x32x16xf32, #tpu.memory_space<vmem>>, %arg3: memref<1x32x16x16xf32, #tpu.memory_space<vmem>>, %arg4: memref<1x32x16x16xf32, #tpu.memory_space<vmem>>, %arg5: memref<1x2x16x16xf32, #tpu.memory_space<vmem>>, %arg6: memref<1x2x16x16xf32, #tpu.memory_space<vmem>>) attributes {dimension_semantics = [#tpu.dimension_semantics<parallel>], iteration_bounds = array<i64: 2>, scalar_prefetch = 0 : i64, scratch_operands = 0 : i64, tpu.core_type = #tpu.core_type<tc>, window_params = [{transform_indices = @transform_0, window_bounds = array<i64: 1, 2, 32, 16>}, {transform_indices = @transform_1, window_bounds = array<i64: 1, 2, 32, 16>}, {transform_indices = @transform_2, window_bounds = array<i64: 1, 32, 16, 16>}, {transform_indices = @transform_3, window_bounds = array<i64: 1, 32, 16, 16>}, {transform_indices = @transform_4, window_bounds = array<i64: 1, 2, 16, 16>}, {transform_indices = @transform_5, window_bounds = array<i64: 1, 2, 16, 16>}]} {
    %c0 = arith.constant 0 : index
    %c0_0 = arith.constant 0 : index
    %c0_1 = arith.constant 0 : index
    %c0_2 = arith.constant 0 : index
    %0 = vector.load %arg1[%c0, %c0_0, %c0_1, %c0_2] : memref<1x2x32x16xf32, #tpu.memory_space<vmem>>, vector<1x2x32x16xf32>
    %1 = vector.shape_cast %0 : vector<1x2x32x16xf32> to vector<2x32x16xf32>
    %c0_3 = arith.constant 0 : index
    %c0_4 = arith.constant 0 : index
    %c0_5 = arith.constant 0 : index
    %c0_6 = arith.constant 0 : index
    %2 = vector.load %arg2[%c0_3, %c0_4, %c0_5, %c0_6] : memref<1x2x32x16xf32, #tpu.memory_space<vmem>>, vector<1x2x32x16xf32>
    %3 = vector.shape_cast %2 : vector<1x2x32x16xf32> to vector<2x32x16xf32>
    %c0_7 = arith.constant 0 : index
    %c0_8 = arith.constant 0 : index
    %c0_9 = arith.constant 0 : index
    %c0_10 = arith.constant 0 : index
    %4 = vector.load %arg3[%c0_7, %c0_8, %c0_9, %c0_10] : memref<1x32x16x16xf32, #tpu.memory_space<vmem>>, vector<1x32x16x16xf32>
    %5 = vector.shape_cast %4 : vector<1x32x16x16xf32> to vector<32x16x16xf32>
    %c0_11 = arith.constant 0 : index
    %c0_12 = arith.constant 0 : index
    %c0_13 = arith.constant 0 : index
    %c0_14 = arith.constant 0 : index
    %6 = vector.load %arg4[%c0_11, %c0_12, %c0_13, %c0_14] : memref<1x32x16x16xf32, #tpu.memory_space<vmem>>, vector<1x32x16x16xf32>
    %7 = vector.shape_cast %6 : vector<1x32x16x16xf32> to vector<32x16x16xf32>
    %8 = vector.shape_cast %1 : vector<2x32x16xf32> to vector<2x32x1x16xf32>
    %9 = vector.shape_cast %3 : vector<2x32x16xf32> to vector<2x32x1x16xf32>
    %10 = vector.shape_cast %5 : vector<32x16x16xf32> to vector<1x32x16x16xf32>
    %11 = vector.broadcast %8 : vector<2x32x1x16xf32> to vector<2x32x16x16xf32>
    %12 = vector.broadcast %10 : vector<1x32x16x16xf32> to vector<2x32x16x16xf32>
    %13 = arith.mulf %11, %12 : vector<2x32x16x16xf32>
    %14 = vector.shape_cast %7 : vector<32x16x16xf32> to vector<1x32x16x16xf32>
    %15 = vector.broadcast %9 : vector<2x32x1x16xf32> to vector<2x32x16x16xf32>
    %16 = vector.broadcast %14 : vector<1x32x16x16xf32> to vector<2x32x16x16xf32>
    %17 = arith.mulf %15, %16 : vector<2x32x16x16xf32>
    %18 = arith.subf %13, %17 : vector<2x32x16x16xf32>
    %cst = arith.constant dense<0.000000e+00> : vector<2x16x16xf32>
    %19 = vector.multi_reduction <add>, %18, %cst [1] : vector<2x32x16x16xf32> to vector<2x16x16xf32>
    %c0_15 = arith.constant 0 : index
    %c0_16 = arith.constant 0 : index
    %c0_17 = arith.constant 0 : index
    %c0_18 = arith.constant 0 : index
    %20 = vector.load %arg5[%c0_15, %c0_16, %c0_17, %c0_18] : memref<1x2x16x16xf32, #tpu.memory_space<vmem>>, vector<1x2x16x16xf32>
    %21 = vector.shape_cast %20 : vector<1x2x16x16xf32> to vector<2x16x16xf32>
    %22 = vector.shape_cast %19 : vector<2x16x16xf32> to vector<1x2x16x16xf32>
    tpu.vector_store %arg5[%c0_15, %c0_16, %c0_17, %c0_18], %22 {strides = array<i32>} : memref<1x2x16x16xf32, #tpu.memory_space<vmem>>, vector<1x2x16x16xf32>,
    %23 = vector.shape_cast %5 : vector<32x16x16xf32> to vector<1x32x16x16xf32>
    %24 = vector.broadcast %9 : vector<2x32x1x16xf32> to vector<2x32x16x16xf32>
    %25 = vector.broadcast %23 : vector<1x32x16x16xf32> to vector<2x32x16x16xf32>
    %26 = arith.mulf %24, %25 : vector<2x32x16x16xf32>
    %27 = vector.shape_cast %7 : vector<32x16x16xf32> to vector<1x32x16x16xf32>
    %28 = vector.broadcast %8 : vector<2x32x1x16xf32> to vector<2x32x16x16xf32>
    %29 = vector.broadcast %27 : vector<1x32x16x16xf32> to vector<2x32x16x16xf32>
    %30 = arith.mulf %28, %29 : vector<2x32x16x16xf32>
    %31 = arith.addf %26, %30 : vector<2x32x16x16xf32>
    %cst_19 = arith.constant dense<0.000000e+00> : vector<2x16x16xf32>
    %32 = vector.multi_reduction <add>, %31, %cst_19 [1] : vector<2x32x16x16xf32> to vector<2x16x16xf32>
    %c0_20 = arith.constant 0 : index
    %c0_21 = arith.constant 0 : index
    %c0_22 = arith.constant 0 : index
    %c0_23 = arith.constant 0 : index
    %33 = vector.load %arg6[%c0_20, %c0_21, %c0_22, %c0_23] : memref<1x2x16x16xf32, #tpu.memory_space<vmem>>, vector<1x2x16x16xf32>
    %34 = vector.shape_cast %33 : vector<1x2x16x16xf32> to vector<2x16x16xf32>
    %35 = vector.shape_cast %32 : vector<2x16x16xf32> to vector<1x2x16x16xf32>
    tpu.vector_store %arg6[%c0_20, %c0_21, %c0_22, %c0_23], %35 {strides = array<i32>} : memref<1x2x16x16xf32, #tpu.memory_space<vmem>>, vector<1x2x16x16xf32>,
    return
  }
  func.func @transform_0(%arg0: i32) -> (i32, i32, i32, i32) {
    %c0_i32 = arith.constant 0 : i32
    %c0_i32_0 = arith.constant 0 : i32
    %c0_i32_1 = arith.constant 0 : i32
    %c0_i32_2 = arith.constant 0 : i32
    return %arg0, %c0_i32, %c0_i32_0, %c0_i32_1 : i32, i32, i32, i32
  }
  func.func @transform_1(%arg0: i32) -> (i32, i32, i32, i32) {
    %c0_i32 = arith.constant 0 : i32
    %c0_i32_0 = arith.constant 0 : i32
    %c0_i32_1 = arith.constant 0 : i32
    %c0_i32_2 = arith.constant 0 : i32
    return %arg0, %c0_i32, %c0_i32_0, %c0_i32_1 : i32, i32, i32, i32
  }
  func.func @transform_2(%arg0: i32) -> (i32, i32, i32, i32) {
    %c0_i32 = arith.constant 0 : i32
    %c0_i32_0 = arith.constant 0 : i32
    %c0_i32_1 = arith.constant 0 : i32
    %c0_i32_2 = arith.constant 0 : i32
    return %arg0, %c0_i32, %c0_i32_0, %c0_i32_1 : i32, i32, i32, i32
  }
  func.func @transform_3(%arg0: i32) -> (i32, i32, i32, i32) {
    %c0_i32 = arith.constant 0 : i32
    %c0_i32_0 = arith.constant 0 : i32
    %c0_i32_1 = arith.constant 0 : i32
    %c0_i32_2 = arith.constant 0 : i32
    return %arg0, %c0_i32, %c0_i32_0, %c0_i32_1 : i32, i32, i32, i32
  }
  func.func @transform_4(%arg0: i32) -> (i32, i32, i32, i32) {
    %c0_i32 = arith.constant 0 : i32
    %c0_i32_0 = arith.constant 0 : i32
    %c0_i32_1 = arith.constant 0 : i32
    %c0_i32_2 = arith.constant 0 : i32
    return %arg0, %c0_i32, %c0_i32_0, %c0_i32_1 : i32, i32, i32, i32
  }
  func.func @transform_5(%arg0: i32) -> (i32, i32, i32, i32) {
    %c0_i32 = arith.constant 0 : i32
    %c0_i32_0 = arith.constant 0 : i32
    %c0_i32_1 = arith.constant 0 : i32
    %c0_i32_2 = arith.constant 0 : i32
    return %arg0, %c0_i32, %c0_i32_0, %c0_i32_1 : i32, i32, i32, i32
  }
}

module attributes {stable_mosaic.version = 11 : i64} {
  func.func @_resadd_act_kernel(%arg0: i32, %arg1: memref<256x32xf32, #tpu.memory_space<vmem>>, %arg2: memref<256x16xf32, #tpu.memory_space<vmem>>, %arg3: memref<32x16xf32, #tpu.memory_space<vmem>>, %arg4: memref<1x16xf32, #tpu.memory_space<vmem>>, %arg5: memref<256x16xf32, #tpu.memory_space<vmem>>) attributes {dimension_semantics = [#tpu.dimension_semantics<parallel>], iteration_bounds = array<i64: 2>, scalar_prefetch = 0 : i64, scratch_operands = 0 : i64, tpu.core_type = #tpu.core_type<tc>, window_params = [{transform_indices = @transform_0, window_bounds = array<i64: 256, 32>}, {transform_indices = @transform_1, window_bounds = array<i64: 256, 16>}, {pipeline_mode = #tpu.pipeline_mode<synchronous>, transform_indices = @transform_2, window_bounds = array<i64: 32, 16>}, {pipeline_mode = #tpu.pipeline_mode<synchronous>, transform_indices = @transform_3, window_bounds = array<i64: 1, 16>}, {transform_indices = @transform_4, window_bounds = array<i64: 256, 16>}]} {
    %c0 = arith.constant 0 : index
    %c0_0 = arith.constant 0 : index
    %0 = vector.load %arg1[%c0, %c0_0] : memref<256x32xf32, #tpu.memory_space<vmem>>, vector<256x32xf32>
    %c0_1 = arith.constant 0 : index
    %c0_2 = arith.constant 0 : index
    %1 = vector.load %arg3[%c0_1, %c0_2] : memref<32x16xf32, #tpu.memory_space<vmem>>, vector<32x16xf32>
    %cst = arith.constant dense<0.000000e+00> : vector<256x16xf32>
    %2 = tpu.matmul %0, %1, %cst {dimension_numbers = #tpu.dot_dimension_numbers<[1], [0], [0], [1], [0, 0, 1, 1], [], []>} : vector<256x32xf32>, vector<32x16xf32>, vector<256x16xf32> -> vector<256x16xf32>
    %c0_3 = arith.constant 0 : index
    %c0_4 = arith.constant 0 : index
    %3 = vector.load %arg4[%c0_3, %c0_4] : memref<1x16xf32, #tpu.memory_space<vmem>>, vector<1x16xf32>
    %4 = vector.broadcast %3 : vector<1x16xf32> to vector<256x16xf32>
    %5 = arith.addf %2, %4 : vector<256x16xf32>
    %c0_5 = arith.constant 0 : index
    %c0_6 = arith.constant 0 : index
    %6 = vector.load %arg2[%c0_5, %c0_6] : memref<256x16xf32, #tpu.memory_space<vmem>>, vector<256x16xf32>
    %7 = arith.addf %5, %6 : vector<256x16xf32>
    %8 = arith.negf %7 : vector<256x16xf32>
    %9 = math.exp %8 : vector<256x16xf32>
    %cst_7 = arith.constant 1.000000e+00 : f32
    %10 = vector.broadcast %cst_7 : f32 to vector<256x16xf32>
    %11 = arith.addf %10, %9 : vector<256x16xf32>
    %12 = arith.divf %10, %11 : vector<256x16xf32>
    %13 = arith.mulf %7, %12 : vector<256x16xf32>
    %c0_8 = arith.constant 0 : index
    %c0_9 = arith.constant 0 : index
    %14 = vector.load %arg5[%c0_8, %c0_9] : memref<256x16xf32, #tpu.memory_space<vmem>>, vector<256x16xf32>
    tpu.vector_store %arg5[%c0_8, %c0_9], %13 {strides = array<i32>} : memref<256x16xf32, #tpu.memory_space<vmem>>, vector<256x16xf32>,
    return
  }
  func.func @transform_0(%arg0: i32) -> (i32, i32) {
    %c0_i32 = arith.constant 0 : i32
    %c0_i32_0 = arith.constant 0 : i32
    return %arg0, %c0_i32 : i32, i32
  }
  func.func @transform_1(%arg0: i32) -> (i32, i32) {
    %c0_i32 = arith.constant 0 : i32
    %c0_i32_0 = arith.constant 0 : i32
    return %arg0, %c0_i32 : i32, i32
  }
  func.func @transform_2(%arg0: i32) -> (i32, i32) {
    %c0_i32 = arith.constant 0 : i32
    %c0_i32_0 = arith.constant 0 : i32
    %c0_i32_1 = arith.constant 0 : i32
    return %c0_i32, %c0_i32_0 : i32, i32
  }
  func.func @transform_3(%arg0: i32) -> (i32, i32) {
    %c0_i32 = arith.constant 0 : i32
    %c0_i32_0 = arith.constant 0 : i32
    %c0_i32_1 = arith.constant 0 : i32
    return %c0_i32, %c0_i32_0 : i32, i32
  }
  func.func @transform_4(%arg0: i32) -> (i32, i32) {
    %c0_i32 = arith.constant 0 : i32
    %c0_i32_0 = arith.constant 0 : i32
    return %arg0, %c0_i32 : i32, i32
  }
}

module attributes {stable_mosaic.version = 11 : i64} {
  func.func @_spectral_mix_kernel(%arg0: i32, %arg1: memref<1x2x16x16xf32, #tpu.memory_space<vmem>>, %arg2: memref<1x2x16x16xf32, #tpu.memory_space<vmem>>, %arg3: memref<1x16x16x16xf32, #tpu.memory_space<vmem>>, %arg4: memref<1x16x16x16xf32, #tpu.memory_space<vmem>>, %arg5: memref<1x2x16x16xf32, #tpu.memory_space<vmem>>, %arg6: memref<1x2x16x16xf32, #tpu.memory_space<vmem>>) attributes {dimension_semantics = [#tpu.dimension_semantics<parallel>], iteration_bounds = array<i64: 2>, scalar_prefetch = 0 : i64, scratch_operands = 0 : i64, tpu.core_type = #tpu.core_type<tc>, window_params = [{transform_indices = @transform_0, window_bounds = array<i64: 1, 2, 16, 16>}, {transform_indices = @transform_1, window_bounds = array<i64: 1, 2, 16, 16>}, {transform_indices = @transform_2, window_bounds = array<i64: 1, 16, 16, 16>}, {transform_indices = @transform_3, window_bounds = array<i64: 1, 16, 16, 16>}, {transform_indices = @transform_4, window_bounds = array<i64: 1, 2, 16, 16>}, {transform_indices = @transform_5, window_bounds = array<i64: 1, 2, 16, 16>}]} {
    %c0 = arith.constant 0 : index
    %c0_0 = arith.constant 0 : index
    %c0_1 = arith.constant 0 : index
    %c0_2 = arith.constant 0 : index
    %0 = vector.load %arg1[%c0, %c0_0, %c0_1, %c0_2] : memref<1x2x16x16xf32, #tpu.memory_space<vmem>>, vector<1x2x16x16xf32>
    %1 = vector.shape_cast %0 : vector<1x2x16x16xf32> to vector<2x16x16xf32>
    %c0_3 = arith.constant 0 : index
    %c0_4 = arith.constant 0 : index
    %c0_5 = arith.constant 0 : index
    %c0_6 = arith.constant 0 : index
    %2 = vector.load %arg2[%c0_3, %c0_4, %c0_5, %c0_6] : memref<1x2x16x16xf32, #tpu.memory_space<vmem>>, vector<1x2x16x16xf32>
    %3 = vector.shape_cast %2 : vector<1x2x16x16xf32> to vector<2x16x16xf32>
    %c0_7 = arith.constant 0 : index
    %c0_8 = arith.constant 0 : index
    %c0_9 = arith.constant 0 : index
    %c0_10 = arith.constant 0 : index
    %4 = vector.load %arg3[%c0_7, %c0_8, %c0_9, %c0_10] : memref<1x16x16x16xf32, #tpu.memory_space<vmem>>, vector<1x16x16x16xf32>
    %5 = vector.shape_cast %4 : vector<1x16x16x16xf32> to vector<16x16x16xf32>
    %c0_11 = arith.constant 0 : index
    %c0_12 = arith.constant 0 : index
    %c0_13 = arith.constant 0 : index
    %c0_14 = arith.constant 0 : index
    %6 = vector.load %arg4[%c0_11, %c0_12, %c0_13, %c0_14] : memref<1x16x16x16xf32, #tpu.memory_space<vmem>>, vector<1x16x16x16xf32>
    %7 = vector.shape_cast %6 : vector<1x16x16x16xf32> to vector<16x16x16xf32>
    %8 = vector.shape_cast %1 : vector<2x16x16xf32> to vector<2x16x1x16xf32>
    %9 = vector.shape_cast %3 : vector<2x16x16xf32> to vector<2x16x1x16xf32>
    %10 = vector.shape_cast %5 : vector<16x16x16xf32> to vector<1x16x16x16xf32>
    %11 = vector.broadcast %8 : vector<2x16x1x16xf32> to vector<2x16x16x16xf32>
    %12 = vector.broadcast %10 : vector<1x16x16x16xf32> to vector<2x16x16x16xf32>
    %13 = arith.mulf %11, %12 : vector<2x16x16x16xf32>
    %14 = vector.shape_cast %7 : vector<16x16x16xf32> to vector<1x16x16x16xf32>
    %15 = vector.broadcast %9 : vector<2x16x1x16xf32> to vector<2x16x16x16xf32>
    %16 = vector.broadcast %14 : vector<1x16x16x16xf32> to vector<2x16x16x16xf32>
    %17 = arith.mulf %15, %16 : vector<2x16x16x16xf32>
    %18 = arith.subf %13, %17 : vector<2x16x16x16xf32>
    %cst = arith.constant dense<0.000000e+00> : vector<2x16x16xf32>
    %19 = vector.multi_reduction <add>, %18, %cst [1] : vector<2x16x16x16xf32> to vector<2x16x16xf32>
    %c0_15 = arith.constant 0 : index
    %c0_16 = arith.constant 0 : index
    %c0_17 = arith.constant 0 : index
    %c0_18 = arith.constant 0 : index
    %20 = vector.load %arg5[%c0_15, %c0_16, %c0_17, %c0_18] : memref<1x2x16x16xf32, #tpu.memory_space<vmem>>, vector<1x2x16x16xf32>
    %21 = vector.shape_cast %20 : vector<1x2x16x16xf32> to vector<2x16x16xf32>
    %22 = vector.shape_cast %19 : vector<2x16x16xf32> to vector<1x2x16x16xf32>
    tpu.vector_store %arg5[%c0_15, %c0_16, %c0_17, %c0_18], %22 {strides = array<i32>} : memref<1x2x16x16xf32, #tpu.memory_space<vmem>>, vector<1x2x16x16xf32>,
    %23 = vector.shape_cast %5 : vector<16x16x16xf32> to vector<1x16x16x16xf32>
    %24 = vector.broadcast %9 : vector<2x16x1x16xf32> to vector<2x16x16x16xf32>
    %25 = vector.broadcast %23 : vector<1x16x16x16xf32> to vector<2x16x16x16xf32>
    %26 = arith.mulf %24, %25 : vector<2x16x16x16xf32>
    %27 = vector.shape_cast %7 : vector<16x16x16xf32> to vector<1x16x16x16xf32>
    %28 = vector.broadcast %8 : vector<2x16x1x16xf32> to vector<2x16x16x16xf32>
    %29 = vector.broadcast %27 : vector<1x16x16x16xf32> to vector<2x16x16x16xf32>
    %30 = arith.mulf %28, %29 : vector<2x16x16x16xf32>
    %31 = arith.addf %26, %30 : vector<2x16x16x16xf32>
    %cst_19 = arith.constant dense<0.000000e+00> : vector<2x16x16xf32>
    %32 = vector.multi_reduction <add>, %31, %cst_19 [1] : vector<2x16x16x16xf32> to vector<2x16x16xf32>
    %c0_20 = arith.constant 0 : index
    %c0_21 = arith.constant 0 : index
    %c0_22 = arith.constant 0 : index
    %c0_23 = arith.constant 0 : index
    %33 = vector.load %arg6[%c0_20, %c0_21, %c0_22, %c0_23] : memref<1x2x16x16xf32, #tpu.memory_space<vmem>>, vector<1x2x16x16xf32>
    %34 = vector.shape_cast %33 : vector<1x2x16x16xf32> to vector<2x16x16xf32>
    %35 = vector.shape_cast %32 : vector<2x16x16xf32> to vector<1x2x16x16xf32>
    tpu.vector_store %arg6[%c0_20, %c0_21, %c0_22, %c0_23], %35 {strides = array<i32>} : memref<1x2x16x16xf32, #tpu.memory_space<vmem>>, vector<1x2x16x16xf32>,
    return
  }
  func.func @transform_0(%arg0: i32) -> (i32, i32, i32, i32) {
    %c0_i32 = arith.constant 0 : i32
    %c0_i32_0 = arith.constant 0 : i32
    %c0_i32_1 = arith.constant 0 : i32
    %c0_i32_2 = arith.constant 0 : i32
    return %arg0, %c0_i32, %c0_i32_0, %c0_i32_1 : i32, i32, i32, i32
  }
  func.func @transform_1(%arg0: i32) -> (i32, i32, i32, i32) {
    %c0_i32 = arith.constant 0 : i32
    %c0_i32_0 = arith.constant 0 : i32
    %c0_i32_1 = arith.constant 0 : i32
    %c0_i32_2 = arith.constant 0 : i32
    return %arg0, %c0_i32, %c0_i32_0, %c0_i32_1 : i32, i32, i32, i32
  }
  func.func @transform_2(%arg0: i32) -> (i32, i32, i32, i32) {
    %c0_i32 = arith.constant 0 : i32
    %c0_i32_0 = arith.constant 0 : i32
    %c0_i32_1 = arith.constant 0 : i32
    %c0_i32_2 = arith.constant 0 : i32
    return %arg0, %c0_i32, %c0_i32_0, %c0_i32_1 : i32, i32, i32, i32
  }
  func.func @transform_3(%arg0: i32) -> (i32, i32, i32, i32) {
    %c0_i32 = arith.constant 0 : i32
    %c0_i32_0 = arith.constant 0 : i32
    %c0_i32_1 = arith.constant 0 : i32
    %c0_i32_2 = arith.constant 0 : i32
    return %arg0, %c0_i32, %c0_i32_0, %c0_i32_1 : i32, i32, i32, i32
  }
  func.func @transform_4(%arg0: i32) -> (i32, i32, i32, i32) {
    %c0_i32 = arith.constant 0 : i32
    %c0_i32_0 = arith.constant 0 : i32
    %c0_i32_1 = arith.constant 0 : i32
    %c0_i32_2 = arith.constant 0 : i32
    return %arg0, %c0_i32, %c0_i32_0, %c0_i32_1 : i32, i32, i32, i32
  }
  func.func @transform_5(%arg0: i32) -> (i32, i32, i32, i32) {
    %c0_i32 = arith.constant 0 : i32
    %c0_i32_0 = arith.constant 0 : i32
    %c0_i32_1 = arith.constant 0 : i32
    %c0_i32_2 = arith.constant 0 : i32
    return %arg0, %c0_i32, %c0_i32_0, %c0_i32_1 : i32, i32, i32, i32
  }
}

module attributes {stable_mosaic.version = 11 : i64} {
  func.func @_resadd_act_kernel(%arg0: i32, %arg1: memref<256x16xf32, #tpu.memory_space<vmem>>, %arg2: memref<256x16xf32, #tpu.memory_space<vmem>>, %arg3: memref<16x16xf32, #tpu.memory_space<vmem>>, %arg4: memref<1x16xf32, #tpu.memory_space<vmem>>, %arg5: memref<256x16xf32, #tpu.memory_space<vmem>>) attributes {dimension_semantics = [#tpu.dimension_semantics<parallel>], iteration_bounds = array<i64: 2>, scalar_prefetch = 0 : i64, scratch_operands = 0 : i64, tpu.core_type = #tpu.core_type<tc>, window_params = [{transform_indices = @transform_0, window_bounds = array<i64: 256, 16>}, {transform_indices = @transform_1, window_bounds = array<i64: 256, 16>}, {pipeline_mode = #tpu.pipeline_mode<synchronous>, transform_indices = @transform_2, window_bounds = array<i64: 16, 16>}, {pipeline_mode = #tpu.pipeline_mode<synchronous>, transform_indices = @transform_3, window_bounds = array<i64: 1, 16>}, {transform_indices = @transform_4, window_bounds = array<i64: 256, 16>}]} {
    %c0 = arith.constant 0 : index
    %c0_0 = arith.constant 0 : index
    %0 = vector.load %arg1[%c0, %c0_0] : memref<256x16xf32, #tpu.memory_space<vmem>>, vector<256x16xf32>
    %c0_1 = arith.constant 0 : index
    %c0_2 = arith.constant 0 : index
    %1 = vector.load %arg3[%c0_1, %c0_2] : memref<16x16xf32, #tpu.memory_space<vmem>>, vector<16x16xf32>
    %cst = arith.constant dense<0.000000e+00> : vector<256x16xf32>
    %2 = tpu.matmul %0, %1, %cst {dimension_numbers = #tpu.dot_dimension_numbers<[1], [0], [0], [1], [0, 0, 1, 1], [], []>} : vector<256x16xf32>, vector<16x16xf32>, vector<256x16xf32> -> vector<256x16xf32>
    %c0_3 = arith.constant 0 : index
    %c0_4 = arith.constant 0 : index
    %3 = vector.load %arg4[%c0_3, %c0_4] : memref<1x16xf32, #tpu.memory_space<vmem>>, vector<1x16xf32>
    %4 = vector.broadcast %3 : vector<1x16xf32> to vector<256x16xf32>
    %5 = arith.addf %2, %4 : vector<256x16xf32>
    %c0_5 = arith.constant 0 : index
    %c0_6 = arith.constant 0 : index
    %6 = vector.load %arg2[%c0_5, %c0_6] : memref<256x16xf32, #tpu.memory_space<vmem>>, vector<256x16xf32>
    %7 = arith.addf %5, %6 : vector<256x16xf32>
    %8 = arith.negf %7 : vector<256x16xf32>
    %9 = math.exp %8 : vector<256x16xf32>
    %cst_7 = arith.constant 1.000000e+00 : f32
    %10 = vector.broadcast %cst_7 : f32 to vector<256x16xf32>
    %11 = arith.addf %10, %9 : vector<256x16xf32>
    %12 = arith.divf %10, %11 : vector<256x16xf32>
    %13 = arith.mulf %7, %12 : vector<256x16xf32>
    %c0_8 = arith.constant 0 : index
    %c0_9 = arith.constant 0 : index
    %14 = vector.load %arg5[%c0_8, %c0_9] : memref<256x16xf32, #tpu.memory_space<vmem>>, vector<256x16xf32>
    tpu.vector_store %arg5[%c0_8, %c0_9], %13 {strides = array<i32>} : memref<256x16xf32, #tpu.memory_space<vmem>>, vector<256x16xf32>,
    return
  }
  func.func @transform_0(%arg0: i32) -> (i32, i32) {
    %c0_i32 = arith.constant 0 : i32
    %c0_i32_0 = arith.constant 0 : i32
    return %arg0, %c0_i32 : i32, i32
  }
  func.func @transform_1(%arg0: i32) -> (i32, i32) {
    %c0_i32 = arith.constant 0 : i32
    %c0_i32_0 = arith.constant 0 : i32
    return %arg0, %c0_i32 : i32, i32
  }
  func.func @transform_2(%arg0: i32) -> (i32, i32) {
    %c0_i32 = arith.constant 0 : i32
    %c0_i32_0 = arith.constant 0 : i32
    %c0_i32_1 = arith.constant 0 : i32
    return %c0_i32, %c0_i32_0 : i32, i32
  }
  func.func @transform_3(%arg0: i32) -> (i32, i32) {
    %c0_i32 = arith.constant 0 : i32
    %c0_i32_0 = arith.constant 0 : i32
    %c0_i32_1 = arith.constant 0 : i32
    return %c0_i32, %c0_i32_0 : i32, i32
  }
  func.func @transform_4(%arg0: i32) -> (i32, i32) {
    %c0_i32 = arith.constant 0 : i32
    %c0_i32_0 = arith.constant 0 : i32
    return %arg0, %c0_i32 : i32, i32
  }
}

module attributes {stable_mosaic.version = 11 : i64} {
  func.func @_mlp_kernel(%arg0: i32, %arg1: memref<256x16xf32, #tpu.memory_space<vmem>>, %arg2: memref<16x64xf32, #tpu.memory_space<vmem>>, %arg3: memref<1x64xf32, #tpu.memory_space<vmem>>, %arg4: memref<64x3xf32, #tpu.memory_space<vmem>>, %arg5: memref<1x3xf32, #tpu.memory_space<vmem>>, %arg6: memref<256x3xf32, #tpu.memory_space<vmem>>) attributes {dimension_semantics = [#tpu.dimension_semantics<parallel>], iteration_bounds = array<i64: 2>, scalar_prefetch = 0 : i64, scratch_operands = 0 : i64, tpu.core_type = #tpu.core_type<tc>, window_params = [{transform_indices = @transform_0, window_bounds = array<i64: 256, 16>}, {pipeline_mode = #tpu.pipeline_mode<synchronous>, transform_indices = @transform_1, window_bounds = array<i64: 16, 64>}, {pipeline_mode = #tpu.pipeline_mode<synchronous>, transform_indices = @transform_2, window_bounds = array<i64: 1, 64>}, {pipeline_mode = #tpu.pipeline_mode<synchronous>, transform_indices = @transform_3, window_bounds = array<i64: 64, 3>}, {pipeline_mode = #tpu.pipeline_mode<synchronous>, transform_indices = @transform_4, window_bounds = array<i64: 1, 3>}, {transform_indices = @transform_5, window_bounds = array<i64: 256, 3>}]} {
    %c0 = arith.constant 0 : index
    %c0_0 = arith.constant 0 : index
    %0 = vector.load %arg1[%c0, %c0_0] : memref<256x16xf32, #tpu.memory_space<vmem>>, vector<256x16xf32>
    %c0_1 = arith.constant 0 : index
    %c0_2 = arith.constant 0 : index
    %1 = vector.load %arg2[%c0_1, %c0_2] : memref<16x64xf32, #tpu.memory_space<vmem>>, vector<16x64xf32>
    %cst = arith.constant dense<0.000000e+00> : vector<256x64xf32>
    %2 = tpu.matmul %0, %1, %cst {dimension_numbers = #tpu.dot_dimension_numbers<[1], [0], [0], [1], [0, 0, 1, 1], [], []>} : vector<256x16xf32>, vector<16x64xf32>, vector<256x64xf32> -> vector<256x64xf32>
    %c0_3 = arith.constant 0 : index
    %c0_4 = arith.constant 0 : index
    %3 = vector.load %arg3[%c0_3, %c0_4] : memref<1x64xf32, #tpu.memory_space<vmem>>, vector<1x64xf32>
    %4 = vector.broadcast %3 : vector<1x64xf32> to vector<256x64xf32>
    %5 = arith.addf %2, %4 : vector<256x64xf32>
    %6 = arith.negf %5 : vector<256x64xf32>
    %7 = math.exp %6 : vector<256x64xf32>
    %cst_5 = arith.constant 1.000000e+00 : f32
    %8 = vector.broadcast %cst_5 : f32 to vector<256x64xf32>
    %9 = arith.addf %8, %7 : vector<256x64xf32>
    %10 = arith.divf %8, %9 : vector<256x64xf32>
    %11 = arith.mulf %5, %10 : vector<256x64xf32>
    %c0_6 = arith.constant 0 : index
    %c0_7 = arith.constant 0 : index
    %12 = vector.load %arg4[%c0_6, %c0_7] : memref<64x3xf32, #tpu.memory_space<vmem>>, vector<64x3xf32>
    %cst_8 = arith.constant dense<0.000000e+00> : vector<256x3xf32>
    %13 = tpu.matmul %11, %12, %cst_8 {dimension_numbers = #tpu.dot_dimension_numbers<[1], [0], [0], [1], [0, 0, 1, 1], [], []>} : vector<256x64xf32>, vector<64x3xf32>, vector<256x3xf32> -> vector<256x3xf32>
    %c0_9 = arith.constant 0 : index
    %c0_10 = arith.constant 0 : index
    %14 = vector.load %arg5[%c0_9, %c0_10] : memref<1x3xf32, #tpu.memory_space<vmem>>, vector<1x3xf32>
    %15 = vector.broadcast %14 : vector<1x3xf32> to vector<256x3xf32>
    %16 = arith.addf %13, %15 : vector<256x3xf32>
    %c0_11 = arith.constant 0 : index
    %c0_12 = arith.constant 0 : index
    %17 = vector.load %arg6[%c0_11, %c0_12] : memref<256x3xf32, #tpu.memory_space<vmem>>, vector<256x3xf32>
    tpu.vector_store %arg6[%c0_11, %c0_12], %16 {strides = array<i32>} : memref<256x3xf32, #tpu.memory_space<vmem>>, vector<256x3xf32>,
    return
  }
  func.func @transform_0(%arg0: i32) -> (i32, i32) {
    %c0_i32 = arith.constant 0 : i32
    %c0_i32_0 = arith.constant 0 : i32
    return %arg0, %c0_i32 : i32, i32
  }
  func.func @transform_1(%arg0: i32) -> (i32, i32) {
    %c0_i32 = arith.constant 0 : i32
    %c0_i32_0 = arith.constant 0 : i32
    %c0_i32_1 = arith.constant 0 : i32
    return %c0_i32, %c0_i32_0 : i32, i32
  }
  func.func @transform_2(%arg0: i32) -> (i32, i32) {
    %c0_i32 = arith.constant 0 : i32
    %c0_i32_0 = arith.constant 0 : i32
    %c0_i32_1 = arith.constant 0 : i32
    return %c0_i32, %c0_i32_0 : i32, i32
  }
  func.func @transform_3(%arg0: i32) -> (i32, i32) {
    %c0_i32 = arith.constant 0 : i32
    %c0_i32_0 = arith.constant 0 : i32
    %c0_i32_1 = arith.constant 0 : i32
    return %c0_i32, %c0_i32_0 : i32, i32
  }
  func.func @transform_4(%arg0: i32) -> (i32, i32) {
    %c0_i32 = arith.constant 0 : i32
    %c0_i32_0 = arith.constant 0 : i32
    %c0_i32_1 = arith.constant 0 : i32
    return %c0_i32, %c0_i32_0 : i32, i32
  }
  func.func @transform_5(%arg0: i32) -> (i32, i32) {
    %c0_i32 = arith.constant 0 : i32
    %c0_i32_0 = arith.constant 0 : i32
    return %arg0, %c0_i32 : i32, i32
  }
}

</mosaic_0001>

<llo_original>
// kernel: _lambda_.6
$region0: #{_lambda_.6}
  #allocation0 [shape = 'u32[]', space=smem, size = 0x4, offset = 0x4, fixed_abs, tag = 'smem constant byte address 0x4 - core index']
  #allocation1 [shape = 'u32[72,128]{1,0:T(1,128)}', space=vmem, size = 0x9000, scoped, tag = 'internal scratch']
  %s0 = inlined_call_operand.vmem [shape: f32[512,8], index: 0, kind: input, shape index: {}]
  %s1 = inlined_call_operand.vmem [shape: f32[8,32], index: 1, kind: input, shape index: {}]
  %s2 = inlined_call_operand.vmem [shape: f32[1,32], index: 2, kind: input, shape index: {}]
  %s3 = inlined_call_operand.vmem [shape: f32[512,32], index: 3, kind: output, shape index: {}]
  %s4 = sld [smem:[#allocation0]]
  $region45: #{_lambda_.6} parent=0
    _
  %s6 = ssub.s32 1, %s4
  %s7 = scalar_select 0, %s6, %s4
  loop: start=0, step=1, limit=4
  $region2: #{_lambda_.6} parent=0 // loop_pre_header
    _
  $region3: #{_lambda_.6} parent=0 // loop_header
    %s9 = sphi 0, %s13
    %p10 = scmp.ge.s32.totalorder %s9, 4
    %s19 = sphi 0, %s21
    %s22 = sphi 0, %s19
    %s23 = sphi 0, %s22
    %s39 = sphi 0, %s23
    %s43 = sphi 0, %s43
    %s45 = sphi 0, %s43
    %s46 = sphi 0, %s45
    %s60 = sphi 0, %s46
    %s64 = sphi 0, %s64
    %s66 = sphi 0, %s64
    %s67 = sphi 0, %s66
    %s81 = sphi 0, %s67
    %s87 = sphi 0, %s89
    %s90 = sphi 0, %s87
    %s91 = sphi 0, %s90
    %s107 = sphi 0, %s91
  $region4: #{_lambda_.6} parent=0 // loop_header_branch
    %12 = sbr.rel (%p10) target = $region8
  $region5: #{_lambda_.6} parent=0 // loop_body
    %s14 = ssub.s32 %s9, 1
    %s15 = ssub.s32 %s9, 2
    %s16 = sadd.s32 %s9, 1
    %s17 = ssub.s32 %s9, %s16
    %p18 = scmp.eq.s32.totalorder %s17, 0
    %s20 = sadd.s32 %s19, 1
    %s21 = scalar_select %p18, %s19, %s20
    %p24 = pneg %p18
    %p25 = scmp.eq.s32.totalorder %s9, 1
    %p26 = por %p24, %p25
    %p27 = scmp.ne.s32.totalorder %s19, %s22
    %p28 = scmp.eq.s32.totalorder %s9, 0
    %p29 = por %p27, %p28
    %p30 = scmp.ne.s32.totalorder %s19, %s22
    %p31 = scmp.eq.s32.totalorder %s14, 1
    %p32 = por %p30, %p31
    %p33 = scmp.ne.s32.totalorder %s22, %s23
    %p34 = scmp.eq.s32.totalorder %s14, 0
    %p35 = por %p33, %p34
    %p36 = scmp.ne.s32.totalorder %s22, %s23
    %p37 = scmp.eq.s32.totalorder %s15, 1
    %p38 = por %p36, %p37
    %p40 = scmp.ne.s32.totalorder %s23, %s39
    %p41 = scmp.eq.s32.totalorder %s15, 0
    %p42 = por %p40, %p41
    %s44 = sadd.s32 %s43, 1
    %p47 = scmp.eq.s32.totalorder %s9, 1
    %p48 = scmp.ne.s32.totalorder %s43, %s45
    %p49 = scmp.eq.s32.totalorder %s9, 0
    %p50 = por %p48, %p49
    %p51 = scmp.ne.s32.totalorder %s43, %s45
    %p52 = scmp.eq.s32.totalorder %s14, 1
    %p53 = por %p51, %p52
    %p54 = scmp.ne.s32.totalorder %s45, %s46
    %p55 = scmp.eq.s32.totalorder %s14, 0
    %p56 = por %p54, %p55
    %p57 = scmp.ne.s32.totalorder %s45, %s46
    %p58 = scmp.eq.s32.totalorder %s15, 1
    %p59 = por %p57, %p58
    %p61 = scmp.ne.s32.totalorder %s46, %s60
    %p62 = scmp.eq.s32.totalorder %s15, 0
    %p63 = por %p61, %p62
    %s65 = sadd.s32 %s64, 1
    %p68 = scmp.eq.s32.totalorder %s9, 1
    %p69 = scmp.ne.s32.totalorder %s64, %s66
    %p70 = scmp.eq.s32.totalorder %s9, 0
    %p71 = por %p69, %p70
    %p72 = scmp.ne.s32.totalorder %s64, %s66
    %p73 = scmp.eq.s32.totalorder %s14, 1
    %p74 = por %p72, %p73
    %p75 = scmp.ne.s32.totalorder %s66, %s67
    %p76 = scmp.eq.s32.totalorder %s14, 0
    %p77 = por %p75, %p76
    %p78 = scmp.ne.s32.totalorder %s66, %s67
    %p79 = scmp.eq.s32.totalorder %s15, 1
    %p80 = por %p78, %p79
    %p82 = scmp.ne.s32.totalorder %s67, %s81
    %p83 = scmp.eq.s32.totalorder %s15, 0
    %p84 = por %p82, %p83
    %s85 = ssub.s32 %s9, %s16
    %p86 = scmp.eq.s32.totalorder %s85, 0
    %s88 = sadd.s32 %s87, 1
    %s89 = scalar_select %p86, %s87, %s88
    %p92 = pneg %p86
    %p93 = scmp.eq.s32.totalorder %s9, 1
    %p94 = por %p92, %p93
    %p95 = scmp.ne.s32.totalorder %s87, %s90
    %p96 = scmp.eq.s32.totalorder %s9, 0
    %p97 = por %p95, %p96
    %p98 = scmp.ne.s32.totalorder %s87, %s90
    %p99 = scmp.eq.s32.totalorder %s14, 1
    %p100 = por %p98, %p99
    %p101 = scmp.ne.s32.totalorder %s90, %s91
    %p102 = scmp.eq.s32.totalorder %s14, 0
    %p103 = por %p101, %p102
    %p104 = scmp.ne.s32.totalorder %s90, %s91
    %p105 = scmp.eq.s32.totalorder %s15, 1
    %p106 = por %p104, %p105
    %p108 = scmp.ne.s32.totalorder %s91, %s107
    %p109 = scmp.eq.s32.totalorder %s15, 0
    %p110 = por %p108, %p109
    %p111 = scmp.le.s32.totalorder 1, %s9
    %p112 = scmp.lt.s32.totalorder %s9, 3
    %p113 = pnand %p111, %p112
    %p114 = pneg %p113
    // Predicated region
    $region9: #{_lambda_.6} parent=5 // pred_check
      _
    $region10: #{_lambda_.6} parent=5 // pred_check_branch
      %116 = sbr.rel (%p113) target = $region12
    $region11: #{_lambda_.6} parent=5 // pred_region
      %s117 = ssub.s32 %s9, 1
      // Predicated region
      $region13: #{_lambda_.6} parent=11 // pred_check
        %p118 = pneg %p56
      $region14: #{_lambda_.6} parent=11 // pred_check_branch
        %120 = sbr.rel (%p118) target = $region16
      $region15: #{_lambda_.6} parent=11 // pred_region
        _
      $region16: #{_lambda_.6} parent=11 // pred_fallthru
        _
      // Predicated region
      $region17: #{_lambda_.6} parent=11 // pred_check
        %p121 = pneg %p77
      $region18: #{_lambda_.6} parent=11 // pred_check_branch
        %123 = sbr.rel (%p121) target = $region20
      $region19: #{_lambda_.6} parent=11 // pred_region
        _
      $region20: #{_lambda_.6} parent=11 // pred_fallthru
        _
    $region12: #{_lambda_.6} parent=5 // pred_fallthru
      _
    %p124 = scmp.lt.s32.totalorder %s9, 2
    // Predicated region
    $region21: #{_lambda_.6} parent=5 // pred_check
      %p125 = pneg %p124
    $region22: #{_lambda_.6} parent=5 // pred_check_branch
      %127 = sbr.rel (%p125) target = $region24
    $region23: #{_lambda_.6} parent=5 // pred_region
      // Predicated region
      $region25: #{_lambda_.6} parent=23 // pred_check
        %p128 = pneg %p29
      $region26: #{_lambda_.6} parent=23 // pred_check_branch
        %130 = sbr.rel (%p128) target = $region28
      $region27: #{_lambda_.6} parent=23 // pred_region
        %s131 = smul.u32 32, %s9
        %p132 = scmp.lt.s32.totalorder %s131, 63
        %s133 = scalar_select %p132, %s131, 63
        %s134 = smul.addr %s133, 8
        %s135 = scalar_lea.vmem %s0, %s134
        %s136 = smul.u32 32, %s9
      $region28: #{_lambda_.6} parent=23 // pred_fallthru
        _
    $region24: #{_lambda_.6} parent=5 // pred_fallthru
      _
    %p137 = scmp.le.s32.totalorder 1, %s9
    %p138 = scmp.lt.s32.totalorder %s9, 3
    %p139 = pnand %p137, %p138
    %p140 = pneg %p139
    // Predicated region
    $region29: #{_lambda_.6} parent=5 // pred_check
      _
    $region30: #{_lambda_.6} parent=5 // pred_check_branch
      %142 = sbr.rel (%p139) target = $region32
    $region31: #{_lambda_.6} parent=5 // pred_region
      %s143 = ssub.s32 %s9, 1
      %s144 = smul.u32 32, %s14
      %p145 = scmp.lt.s32.totalorder %s144, 63
      %s146 = scalar_select %p145, %s144, 63
      %s147 = smul.addr %s146, 8
      %s148 = scalar_lea.vmem %s0, %s147
      %p149 = pneg %p35
      %p150 = pneg %p32
      %p151 = pneg %p56
      %p152 = pneg %p53
      %p153 = pneg %p77
      %p154 = pneg %p74
      %p155 = pneg %p103
      %p156 = pneg %p100
      %s157 = smul.u32 32, %s14
      %p158 = scmp.lt.s32.totalorder %s157, 63
      %s159 = scalar_select %p158, %s157, 63
      %s160 = smul.addr %s159, 8
      %s161 = scalar_lea.vmem %s3, %s160
      %s162 = smul.u32 32, %s14
      %p163 = scmp.lt.s32.totalorder %s162, 63
      %s164 = scalar_select %p163, %s162, 63
      %s165 = smul.addr %s164, 8
      %s166 = scalar_lea.vmem %s0, %s165
      %s167 = smul.u32 32, %s14
      %s168 = smul.u32 32, %s14
      %p169 = scmp.lt.s32.totalorder %s168, 63
      %s170 = scalar_select %p169, %s168, 63
      %s171 = smul.addr %s170, 8
      %s172 = scalar_lea.vmem %s3, %s171
      %s173 = smul.u32 32, %s14
      %v174 = vld [vmem:[%s166] sm:$0xff]
      %v175 = vld [vmem:[%s166 + $0x8] sm:$0xff]
      %v176 = vld [vmem:[%s166 + $0x10] sm:$0xff]
      %v177 = vld [vmem:[%s166 + $0x18] sm:$0xff]
      %v178 = vld [vmem:[%s166 + $0x20] sm:$0xff]
      %v179 = vld [vmem:[%s166 + $0x28] sm:$0xff]
      %v180 = vld [vmem:[%s166 + $0x30] sm:$0xff]
      %v181 = vld [vmem:[%s166 + $0x38] sm:$0xff]
      %v182 = vld [vmem:[%s166 + $0x40] sm:$0xff]
      %v183 = vld [vmem:[%s166 + $0x48] sm:$0xff]
      %v184 = vld [vmem:[%s166 + $0x50] sm:$0xff]
      %v185 = vld [vmem:[%s166 + $0x58] sm:$0xff]
      %v186 = vld [vmem:[%s166 + $0x60] sm:$0xff]
      %v187 = vld [vmem:[%s166 + $0x68] sm:$0xff]
      %v188 = vld [vmem:[%s166 + $0x70] sm:$0xff]
      %v189 = vld [vmem:[%s166 + $0x78] sm:$0xff]
      %v190 = vld [vmem:[%s166 + $0x80] sm:$0xff]
      %v191 = vld [vmem:[%s166 + $0x88] sm:$0xff]
      %v192 = vld [vmem:[%s166 + $0x90] sm:$0xff]
      %v193 = vld [vmem:[%s166 + $0x98] sm:$0xff]
      %v194 = vld [vmem:[%s166 + $0xa0] sm:$0xff]
      %v195 = vld [vmem:[%s166 + $0xa8] sm:$0xff]
      %v196 = vld [vmem:[%s166 + $0xb0] sm:$0xff]
      %v197 = vld [vmem:[%s166 + $0xb8] sm:$0xff]
      %v198 = vld [vmem:[%s166 + $0xc0] sm:$0xff]
      %v199 = vld [vmem:[%s166 + $0xc8] sm:$0xff]
      %v200 = vld [vmem:[%s166 + $0xd0] sm:$0xff]
      %v201 = vld [vmem:[%s166 + $0xd8] sm:$0xff]
      %v202 = vld [vmem:[%s166 + $0xe0] sm:$0xff]
      %v203 = vld [vmem:[%s166 + $0xe8] sm:$0xff]
      %v204 = vld [vmem:[%s166 + $0xf0] sm:$0xff]
      %v205 = vld [vmem:[%s166 + $0xf8] sm:$0xff]
      %v206 = vld [vmem:[%s1] sm:$0xff]
      %v207 = vld [vmem:[%s2] sm:$0x1]
      %v209 = vperm.slane %v207, 0
      %vm211 = vcmask 64512
      %v213 = vsel %vm211, %v174, 0
      %v216 = vsel %vm211, %v175, 0
      %v219 = vsel %vm211, %v176, 0
      %v222 = vsel %vm211, %v177, 0
      %v225 = vsel %vm211, %v178, 0
      %v228 = vsel %vm211, %v179, 0
      %v231 = vsel %vm211, %v180, 0
      %v234 = vsel %vm211, %v181, 0
      %v237 = vsel %vm211, %v182, 0
      %v240 = vsel %vm211, %v183, 0
      %v243 = vsel %vm211, %v184, 0
      %v246 = vsel %vm211, %v185, 0
      %v249 = vsel %vm211, %v186, 0
      %v252 = vsel %vm211, %v187, 0
      %v255 = vsel %vm211, %v188, 0
      %v258 = vsel %vm211, %v189, 0
      %v261 = vsel %vm211, %v190, 0
      %v264 = vsel %vm211, %v191, 0
      %v267 = vsel %vm211, %v192, 0
      %v270 = vsel %vm211, %v193, 0
      %v273 = vsel %vm211, %v194, 0
      %v276 = vsel %vm211, %v195, 0
      %v279 = vsel %vm211, %v196, 0
      %v282 = vsel %vm211, %v197, 0
      %v285 = vsel %vm211, %v198, 0
      %v288 = vsel %vm211, %v199, 0
      %v291 = vsel %vm211, %v200, 0
      %v294 = vsel %vm211, %v201, 0
      %v297 = vsel %vm211, %v202, 0
      %v300 = vsel %vm211, %v203, 0
      %v303 = vsel %vm211, %v204, 0
      %v306 = vsel %vm211, %v205, 0
      %308 = vmatpush.msra.mxu0 0.0
      %309 = vmatpush.msra.mxu0 0.0
      %310 = vmatpush.msra.mxu0 0.0
      %311 = vmatpush.msra.mxu0 0.0
      %312 = vmatpush.msra.mxu0 0.0
      %313 = vmatpush.msra.mxu0 0.0
      %314 = vmatpush.msra.mxu0 0.0
      %315 = vmatpush.msra.mxu0 0.0
      %316 = vmatpush.msra.mxu0 0.0
      %317 = vmatpush.msra.mxu0 0.0
      %318 = vmatpush.msra.mxu0 0.0
      %319 = vmatpush.msra.mxu0 0.0
      %320 = vmatpush.msra.mxu0 0.0
      %321 = vmatpush.msra.mxu0 0.0
      %322 = vmatpush.msra.mxu0 0.0
      %323 = vmatpush.msra.mxu0 %v206
      %324 = vmatmul.f32.gmra.mxu0 %v213
      %v325 = vpop.f32.mrf.mxu0
      %v326 = vadd.f32 %v209, %v325
      %327 = vmatmul.f32.gmra.mxu0 %v216
      %v328 = vpop.f32.mrf.mxu0
      %v329 = vadd.f32 %v209, %v328
      %330 = vmatmul.f32.gmra.mxu0 %v219
      %v331 = vpop.f32.mrf.mxu0
      %v332 = vadd.f32 %v209, %v331
      %333 = vmatmul.f32.gmra.mxu0 %v222
      %v334 = vpop.f32.mrf.mxu0
      %v335 = vadd.f32 %v209, %v334
      %336 = vmatmul.f32.gmra.mxu0 %v225
      %v337 = vpop.f32.mrf.mxu0
      %v338 = vadd.f32 %v209, %v337
      %339 = vmatmul.f32.gmra.mxu0 %v228
      %v340 = vpop.f32.mrf.mxu0
      %v341 = vadd.f32 %v209, %v340
      %342 = vmatmul.f32.gmra.mxu0 %v231
      %v343 = vpop.f32.mrf.mxu0
      %v344 = vadd.f32 %v209, %v343
      %345 = vmatmul.f32.gmra.mxu0 %v234
      %v346 = vpop.f32.mrf.mxu0
      %v347 = vadd.f32 %v209, %v346
      %348 = vmatmul.f32.gmra.mxu0 %v237
      %v349 = vpop.f32.mrf.mxu0
      %v350 = vadd.f32 %v209, %v349
      %351 = vmatmul.f32.gmra.mxu0 %v240
      %v352 = vpop.f32.mrf.mxu0
      %v353 = vadd.f32 %v209, %v352
      %354 = vmatmul.f32.gmra.mxu0 %v243
      %v355 = vpop.f32.mrf.mxu0
      %v356 = vadd.f32 %v209, %v355
      %357 = vmatmul.f32.gmra.mxu0 %v246
      %v358 = vpop.f32.mrf.mxu0
      %v359 = vadd.f32 %v209, %v358
      %360 = vmatmul.f32.gmra.mxu0 %v249
      %v361 = vpop.f32.mrf.mxu0
      %v362 = vadd.f32 %v209, %v361
      %363 = vmatmul.f32.gmra.mxu0 %v252
      %v364 = vpop.f32.mrf.mxu0
      %v365 = vadd.f32 %v209, %v364
      %366 = vmatmul.f32.gmra.mxu0 %v255
      %v367 = vpop.f32.mrf.mxu0
      %v368 = vadd.f32 %v209, %v367
      %369 = vmatmul.f32.gmra.mxu0 %v258
      %v370 = vpop.f32.mrf.mxu0
      %v371 = vadd.f32 %v209, %v370
      %372 = vmatmul.f32.gmra.mxu0 %v261
      %v373 = vpop.f32.mrf.mxu0
      %v374 = vadd.f32 %v209, %v373
      %375 = vmatmul.f32.gmra.mxu0 %v264
      %v376 = vpop.f32.mrf.mxu0
      %v377 = vadd.f32 %v209, %v376
      %378 = vmatmul.f32.gmra.mxu0 %v267
      %v379 = vpop.f32.mrf.mxu0
      %v380 = vadd.f32 %v209, %v379
      %381 = vmatmul.f32.gmra.mxu0 %v270
      %v382 = vpop.f32.mrf.mxu0
      %v383 = vadd.f32 %v209, %v382
      %384 = vmatmul.f32.gmra.mxu0 %v273
      %v385 = vpop.f32.mrf.mxu0
      %v386 = vadd.f32 %v209, %v385
      %387 = vmatmul.f32.gmra.mxu0 %v276
      %v388 = vpop.f32.mrf.mxu0
      %v389 = vadd.f32 %v209, %v388
      %390 = vmatmul.f32.gmra.mxu0 %v279
      %v391 = vpop.f32.mrf.mxu0
      %v392 = vadd.f32 %v209, %v391
      %393 = vmatmul.f32.gmra.mxu0 %v282
      %v394 = vpop.f32.mrf.mxu0
      %v395 = vadd.f32 %v209, %v394
      %396 = vmatmul.f32.gmra.mxu0 %v285
      %v397 = vpop.f32.mrf.mxu0
      %v398 = vadd.f32 %v209, %v397
      %399 = vmatmul.f32.gmra.mxu0 %v288
      %v400 = vpop.f32.mrf.mxu0
      %v401 = vadd.f32 %v209, %v400
      %402 = vmatmul.f32.gmra.mxu0 %v291
      %v403 = vpop.f32.mrf.mxu0
      %v404 = vadd.f32 %v209, %v403
      %405 = vmatmul.f32.gmra.mxu0 %v294
      %v406 = vpop.f32.mrf.mxu0
      %v407 = vadd.f32 %v209, %v406
      %408 = vmatmul.f32.gmra.mxu0 %v297
      %v409 = vpop.f32.mrf.mxu0
      %v410 = vadd.f32 %v209, %v409
      %411 = vmatmul.f32.gmra.mxu0 %v300
      %v412 = vpop.f32.mrf.mxu0
      %v413 = vadd.f32 %v209, %v412
      %414 = vmatmul.f32.gmra.mxu0 %v303
      %v415 = vpop.f32.mrf.mxu0
      %v416 = vadd.f32 %v209, %v415
      %417 = vmatmul.f32.gmra.mxu0 %v306
      %v418 = vpop.f32.mrf.mxu0
      %v419 = vadd.f32 %v209, %v418
      %420 = vdwg.mxu0
      %vm421 = vcmask 261120
      %422 = vst.msk [vmem:[%s172] sm:$0xff] %vm421, %v326
      %423 = vst.msk [vmem:[%s172 + $0x8] sm:$0xff] %vm421, %v329
      %424 = vst.msk [vmem:[%s172 + $0x10] sm:$0xff] %vm421, %v332
      %425 = vst.msk [vmem:[%s172 + $0x18] sm:$0xff] %vm421, %v335
      %426 = vst.msk [vmem:[%s172 + $0x20] sm:$0xff] %vm421, %v338
      %427 = vst.msk [vmem:[%s172 + $0x28] sm:$0xff] %vm421, %v341
      %428 = vst.msk [vmem:[%s172 + $0x30] sm:$0xff] %vm421, %v344
      %429 = vst.msk [vmem:[%s172 + $0x38] sm:$0xff] %vm421, %v347
      %430 = vst.msk [vmem:[%s172 + $0x40] sm:$0xff] %vm421, %v350
      %431 = vst.msk [vmem:[%s172 + $0x48] sm:$0xff] %vm421, %v353
      %432 = vst.msk [vmem:[%s172 + $0x50] sm:$0xff] %vm421, %v356
      %433 = vst.msk [vmem:[%s172 + $0x58] sm:$0xff] %vm421, %v359
      %434 = vst.msk [vmem:[%s172 + $0x60] sm:$0xff] %vm421, %v362
      %435 = vst.msk [vmem:[%s172 + $0x68] sm:$0xff] %vm421, %v365
      %436 = vst.msk [vmem:[%s172 + $0x70] sm:$0xff] %vm421, %v368
      %437 = vst.msk [vmem:[%s172 + $0x78] sm:$0xff] %vm421, %v371
      %438 = vst.msk [vmem:[%s172 + $0x80] sm:$0xff] %vm421, %v374
      %439 = vst.msk [vmem:[%s172 + $0x88] sm:$0xff] %vm421, %v377
      %440 = vst.msk [vmem:[%s172 + $0x90] sm:$0xff] %vm421, %v380
      %441 = vst.msk [vmem:[%s172 + $0x98] sm:$0xff] %vm421, %v383
      %442 = vst.msk [vmem:[%s172 + $0xa0] sm:$0xff] %vm421, %v386
      %443 = vst.msk [vmem:[%s172 + $0xa8] sm:$0xff] %vm421, %v389
      %444 = vst.msk [vmem:[%s172 + $0xb0] sm:$0xff] %vm421, %v392
      %445 = vst.msk [vmem:[%s172 + $0xb8] sm:$0xff] %vm421, %v395
      %446 = vst.msk [vmem:[%s172 + $0xc0] sm:$0xff] %vm421, %v398
      %447 = vst.msk [vmem:[%s172 + $0xc8] sm:$0xff] %vm421, %v401
      %448 = vst.msk [vmem:[%s172 + $0xd0] sm:$0xff] %vm421, %v404
      %449 = vst.msk [vmem:[%s172 + $0xd8] sm:$0xff] %vm421, %v407
      %450 = vst.msk [vmem:[%s172 + $0xe0] sm:$0xff] %vm421, %v410
      %451 = vst.msk [vmem:[%s172 + $0xe8] sm:$0xff] %vm421, %v413
      %452 = vst.msk [vmem:[%s172 + $0xf0] sm:$0xff] %vm421, %v416
      %453 = vst.msk [vmem:[%s172 + $0xf8] sm:$0xff] %vm421, %v419
      %s454 = smul.u32 32, %s14
      %p455 = scmp.lt.s32.totalorder %s454, 63
      %s456 = scalar_select %p455, %s454, 63
      %s457 = smul.addr %s456, 8
      %s458 = scalar_lea.vmem %s3, %s457
      // Predicated region
      $region33: #{_lambda_.6} parent=31 // pred_check
        %p459 = pneg %p100
      $region34: #{_lambda_.6} parent=31 // pred_check_branch
        %461 = sbr.rel (%p459) target = $region36
      $region35: #{_lambda_.6} parent=31 // pred_region
        %s462 = smul.u32 32, %s14
      $region36: #{_lambda_.6} parent=31 // pred_fallthru
        _
    $region32: #{_lambda_.6} parent=5 // pred_fallthru
      _
    %p463 = scmp.le.s32.totalorder 2, %s9
    // Predicated region
    $region37: #{_lambda_.6} parent=5 // pred_check
      %p464 = pneg %p463
    $region38: #{_lambda_.6} parent=5 // pred_check_branch
      %466 = sbr.rel (%p464) target = $region40
    $region39: #{_lambda_.6} parent=5 // pred_region
      %s467 = ssub.s32 %s9, 2
      // Predicated region
      $region41: #{_lambda_.6} parent=39 // pred_check
        %p468 = pneg %p106
      $region42: #{_lambda_.6} parent=39 // pred_check_branch
        %470 = sbr.rel (%p468) target = $region44
      $region43: #{_lambda_.6} parent=39 // pred_region
        %s471 = smul.u32 32, %s15
        %p472 = scmp.lt.s32.totalorder %s471, 63
        %s473 = scalar_select %p472, %s471, 63
        %s474 = smul.addr %s473, 8
        %s475 = scalar_lea.vmem %s3, %s474
      $region44: #{_lambda_.6} parent=39 // pred_fallthru
        _
    $region40: #{_lambda_.6} parent=5 // pred_fallthru
      _
  $region6: #{_lambda_.6} parent=0 // loop_footer
    %s13 = sadd.s32 1, %s9
  $region7: #{_lambda_.6} parent=0 // loop_footer_branch
    %8 = sbr.rel target = $region3
  $region8: #{_lambda_.6} parent=0 // loop_exit
    _

// kernel: reverse.4
$region0: #{reverse.4}
  #allocation0 [shape = 's32[1]{0}', space=sflag, size = 0x4, scoped, tag = 'scoped memory for reverse.4']
  %s0 = inlined_call_operand.vmem [shape: f32[2,16,16,7], index: 0, kind: input, shape index: {}]
  %s1 = inlined_call_operand.vmem [shape: f32[2,16,16,7], index: 1, kind: output, shape index: {}]
  %s2 = scalar_lea.vmem %s0, 96
  %v3 = vld [vmem:[%s2] sm:$0xff]
  %4 = vst [vmem:[%s1] sm:$0xff] %v3
  %s5 = scalar_lea.vmem %s0, 208
  %v6 = vld [vmem:[%s5] sm:$0xff]
  %s7 = scalar_lea.vmem %s1, 112
  %8 = vst [vmem:[%s7] sm:$0xff] %v6
  %s9 = scalar_lea.vmem %s0, 80
  %v10 = vld [vmem:[%s9] sm:$0xff]
  %s11 = scalar_lea.vmem %s1, 16
  %12 = vst [vmem:[%s11] sm:$0xff] %v10
  %s13 = scalar_lea.vmem %s0, 192
  %v14 = vld [vmem:[%s13] sm:$0xff]
  %s15 = scalar_lea.vmem %s1, 128
  %16 = vst [vmem:[%s15] sm:$0xff] %v14
  %s17 = scalar_lea.vmem %s0, 64
  %v18 = vld [vmem:[%s17] sm:$0xff]
  %s19 = scalar_lea.vmem %s1, 32
  %20 = vst [vmem:[%s19] sm:$0xff] %v18
  %s21 = scalar_lea.vmem %s0, 176
  %v22 = vld [vmem:[%s21] sm:$0xff]
  %s23 = scalar_lea.vmem %s1, 144
  %24 = vst [vmem:[%s23] sm:$0xff] %v22
  %s25 = scalar_lea.vmem %s0, 48
  %v26 = vld [vmem:[%s25] sm:$0xff]
  %s27 = scalar_lea.vmem %s1, 48
  %28 = vst [vmem:[%s27] sm:$0xff] %v26
  %s29 = scalar_lea.vmem %s0, 160
  %v30 = vld [vmem:[%s29] sm:$0xff]
  %s31 = scalar_lea.vmem %s1, 160
  %32 = vst [vmem:[%s31] sm:$0xff] %v30
  %s33 = scalar_lea.vmem %s0, 32
  %v34 = vld [vmem:[%s33] sm:$0xff]
  %s35 = scalar_lea.vmem %s1, 64
  %36 = vst [vmem:[%s35] sm:$0xff] %v34
  %s37 = scalar_lea.vmem %s0, 144
  %v38 = vld [vmem:[%s37] sm:$0xff]
  %s39 = scalar_lea.vmem %s1, 176
  %40 = vst [vmem:[%s39] sm:$0xff] %v38
  %s41 = scalar_lea.vmem %s0, 16
  %v42 = vld [vmem:[%s41] sm:$0xff]
  %s43 = scalar_lea.vmem %s1, 80
  %44 = vst [vmem:[%s43] sm:$0xff] %v42
  %s45 = scalar_lea.vmem %s0, 128
  %v46 = vld [vmem:[%s45] sm:$0xff]
  %s47 = scalar_lea.vmem %s1, 192
  %48 = vst [vmem:[%s47] sm:$0xff] %v46
  %v49 = vld [vmem:[%s0] sm:$0xff]
  %s50 = scalar_lea.vmem %s1, 96
  %51 = vst [vmem:[%s50] sm:$0xff] %v49
  %s52 = scalar_lea.vmem %s0, 112
  %v53 = vld [vmem:[%s52] sm:$0xff]
  %s54 = scalar_lea.vmem %s1, 208
  %55 = vst [vmem:[%s54] sm:$0xff] %v53
  %s56 = scalar_lea.vmem %s0, 104
  %v57 = vld [vmem:[%s56] sm:$0xff]
  %s58 = scalar_lea.vmem %s1, 8
  %59 = vst [vmem:[%s58] sm:$0xff] %v57
  %s60 = scalar_lea.vmem %s0, 216
  %v61 = vld [vmem:[%s60] sm:$0xff]
  %s62 = scalar_lea.vmem %s1, 120
  %63 = vst [vmem:[%s62] sm:$0xff] %v61
  %s64 = scalar_lea.vmem %s0, 88
  %v65 = vld [vmem:[%s64] sm:$0xff]
  %s66 = scalar_lea.vmem %s1, 24
  %67 = vst [vmem:[%s66] sm:$0xff] %v65
  %s68 = scalar_lea.vmem %s0, 200
  %v69 = vld [vmem:[%s68] sm:$0xff]
  %s70 = scalar_lea.vmem %s1, 136
  %71 = vst [vmem:[%s70] sm:$0xff] %v69
  %s72 = scalar_lea.vmem %s0, 72
  %v73 = vld [vmem:[%s72] sm:$0xff]
  %s74 = scalar_lea.vmem %s1, 40
  %75 = vst [vmem:[%s74] sm:$0xff] %v73
  %s76 = scalar_lea.vmem %s0, 184
  %v77 = vld [vmem:[%s76] sm:$0xff]
  %s78 = scalar_lea.vmem %s1, 152
  %79 = vst [vmem:[%s78] sm:$0xff] %v77
  %s80 = scalar_lea.vmem %s0, 56
  %v81 = vld [vmem:[%s80] sm:$0xff]
  %s82 = scalar_lea.vmem %s1, 56
  %83 = vst [vmem:[%s82] sm:$0xff] %v81
  %s84 = scalar_lea.vmem %s0, 168
  %v85 = vld [vmem:[%s84] sm:$0xff]
  %s86 = scalar_lea.vmem %s1, 168
  %87 = vst [vmem:[%s86] sm:$0xff] %v85
  %s88 = scalar_lea.vmem %s0, 40
  %v89 = vld [vmem:[%s88] sm:$0xff]
  %s90 = scalar_lea.vmem %s1, 72
  %91 = vst [vmem:[%s90] sm:$0xff] %v89
  %s92 = scalar_lea.vmem %s0, 152
  %v93 = vld [vmem:[%s92] sm:$0xff]
  %s94 = scalar_lea.vmem %s1, 184
  %95 = vst [vmem:[%s94] sm:$0xff] %v93
  %s96 = scalar_lea.vmem %s0, 24
  %v97 = vld [vmem:[%s96] sm:$0xff]
  %s98 = scalar_lea.vmem %s1, 88
  %99 = vst [vmem:[%s98] sm:$0xff] %v97
  %s100 = scalar_lea.vmem %s0, 136
  %v101 = vld [vmem:[%s100] sm:$0xff]
  %s102 = scalar_lea.vmem %s1, 200
  %103 = vst [vmem:[%s102] sm:$0xff] %v101
  %s104 = scalar_lea.vmem %s0, 8
  %v105 = vld [vmem:[%s104] sm:$0xff]
  %s106 = scalar_lea.vmem %s1, 104
  %107 = vst [vmem:[%s106] sm:$0xff] %v105
  %s108 = scalar_lea.vmem %s0, 120
  %v109 = vld [vmem:[%s108] sm:$0xff]
  %s110 = scalar_lea.vmem %s1, 216
  %111 = vst [vmem:[%s110] sm:$0xff] %v109

// kernel: _lambda_.7
$region0: #{_lambda_.7}
  #allocation0 [shape = 'u32[]', space=smem, size = 0x4, offset = 0x4, fixed_abs, tag = 'smem constant byte address 0x4 - core index']
  #allocation1 [shape = 'u32[72,128]{1,0:T(1,128)}', space=vmem, size = 0x9000, scoped, tag = 'internal scratch']
  %s0 = inlined_call_operand.vmem [shape: f32[2,2,32,16], index: 0, kind: input, shape index: {}]
  %s1 = inlined_call_operand.vmem [shape: f32[2,2,32,16], index: 1, kind: input, shape index: {}]
  %s2 = inlined_call_operand.vmem [shape: f32[2,32,16,16], index: 2, kind: input, shape index: {}]
  %s3 = inlined_call_operand.vmem [shape: f32[2,32,16,16], index: 3, kind: input, shape index: {}]
  %s4 = inlined_call_operand.vmem [shape: f32[2,2,16,16], index: 4, kind: output, shape index: {0}]
  %s5 = inlined_call_operand.vmem [shape: f32[2,2,16,16], index: 5, kind: output, shape index: {1}]
  %6 = xla_tuple %s4, %s5
  %s7 = sld [smem:[#allocation0]]
  $region57: #{_lambda_.7} parent=0
    _
  %s9 = ssub.s32 1, %s7
  %s10 = scalar_select 0, %s9, %s7
  loop: start=0, step=1, limit=4
  $region2: #{_lambda_.7} parent=0 // loop_pre_header
    _
  $region3: #{_lambda_.7} parent=0 // loop_header
    %s12 = sphi 0, %s16
    %p13 = scmp.ge.s32.totalorder %s12, 4
    %s22 = sphi 0, %s24
    %s25 = sphi 0, %s22
    %s26 = sphi 0, %s25
    %s42 = sphi 0, %s26
    %s48 = sphi 0, %s50
    %s51 = sphi 0, %s48
    %s52 = sphi 0, %s51
    %s68 = sphi 0, %s52
    %s74 = sphi 0, %s76
    %s77 = sphi 0, %s74
    %s78 = sphi 0, %s77
    %s94 = sphi 0, %s78
    %s100 = sphi 0, %s102
    %s103 = sphi 0, %s100
    %s104 = sphi 0, %s103
    %s120 = sphi 0, %s104
    %s126 = sphi 0, %s128
    %s129 = sphi 0, %s126
    %s130 = sphi 0, %s129
    %s146 = sphi 0, %s130
    %s152 = sphi 0, %s154
    %s155 = sphi 0, %s152
    %s156 = sphi 0, %s155
    %s172 = sphi 0, %s156
  $region4: #{_lambda_.7} parent=0 // loop_header_branch
    %15 = sbr.rel (%p13) target = $region8
  $region5: #{_lambda_.7} parent=0 // loop_body
    %s17 = ssub.s32 %s12, 1
    %s18 = ssub.s32 %s12, 2
    %s19 = sadd.s32 %s12, 1
    %s20 = ssub.s32 %s12, %s19
    %p21 = scmp.eq.s32.totalorder %s20, 0
    %s23 = sadd.s32 %s22, 1
    %s24 = scalar_select %p21, %s22, %s23
    %p27 = pneg %p21
    %p28 = scmp.eq.s32.totalorder %s12, 1
    %p29 = por %p27, %p28
    %p30 = scmp.ne.s32.totalorder %s22, %s25
    %p31 = scmp.eq.s32.totalorder %s12, 0
    %p32 = por %p30, %p31
    %p33 = scmp.ne.s32.totalorder %s22, %s25
    %p34 = scmp.eq.s32.totalorder %s17, 1
    %p35 = por %p33, %p34
    %p36 = scmp.ne.s32.totalorder %s25, %s26
    %p37 = scmp.eq.s32.totalorder %s17, 0
    %p38 = por %p36, %p37
    %p39 = scmp.ne.s32.totalorder %s25, %s26
    %p40 = scmp.eq.s32.totalorder %s18, 1
    %p41 = por %p39, %p40
    %p43 = scmp.ne.s32.totalorder %s26, %s42
    %p44 = scmp.eq.s32.totalorder %s18, 0
    %p45 = por %p43, %p44
    %s46 = ssub.s32 %s12, %s19
    %p47 = scmp.eq.s32.totalorder %s46, 0
    %s49 = sadd.s32 %s48, 1
    %s50 = scalar_select %p47, %s48, %s49
    %p53 = pneg %p47
    %p54 = scmp.eq.s32.totalorder %s12, 1
    %p55 = por %p53, %p54
    %p56 = scmp.ne.s32.totalorder %s48, %s51
    %p57 = scmp.eq.s32.totalorder %s12, 0
    %p58 = por %p56, %p57
    %p59 = scmp.ne.s32.totalorder %s48, %s51
    %p60 = scmp.eq.s32.totalorder %s17, 1
    %p61 = por %p59, %p60
    %p62 = scmp.ne.s32.totalorder %s51, %s52
    %p63 = scmp.eq.s32.totalorder %s17, 0
    %p64 = por %p62, %p63
    %p65 = scmp.ne.s32.totalorder %s51, %s52
    %p66 = scmp.eq.s32.totalorder %s18, 1
    %p67 = por %p65, %p66
    %p69 = scmp.ne.s32.totalorder %s52, %s68
    %p70 = scmp.eq.s32.totalorder %s18, 0
    %p71 = por %p69, %p70
    %s72 = ssub.s32 %s12, %s19
    %p73 = scmp.eq.s32.totalorder %s72, 0
    %s75 = sadd.s32 %s74, 1
    %s76 = scalar_select %p73, %s74, %s75
    %p79 = pneg %p73
    %p80 = scmp.eq.s32.totalorder %s12, 1
    %p81 = por %p79, %p80
    %p82 = scmp.ne.s32.totalorder %s74, %s77
    %p83 = scmp.eq.s32.totalorder %s12, 0
    %p84 = por %p82, %p83
    %p85 = scmp.ne.s32.totalorder %s74, %s77
    %p86 = scmp.eq.s32.totalorder %s17, 1
    %p87 = por %p85, %p86
    %p88 = scmp.ne.s32.totalorder %s77, %s78
    %p89 = scmp.eq.s32.totalorder %s17, 0
    %p90 = por %p88, %p89
    %p91 = scmp.ne.s32.totalorder %s77, %s78
    %p92 = scmp.eq.s32.totalorder %s18, 1
    %p93 = por %p91, %p92
    %p95 = scmp.ne.s32.totalorder %s78, %s94
    %p96 = scmp.eq.s32.totalorder %s18, 0
    %p97 = por %p95, %p96
    %s98 = ssub.s32 %s12, %s19
    %p99 = scmp.eq.s32.totalorder %s98, 0
    %s101 = sadd.s32 %s100, 1
    %s102 = scalar_select %p99, %s100, %s101
    %p105 = pneg %p99
    %p106 = scmp.eq.s32.totalorder %s12, 1
    %p107 = por %p105, %p106
    %p108 = scmp.ne.s32.totalorder %s100, %s103
    %p109 = scmp.eq.s32.totalorder %s12, 0
    %p110 = por %p108, %p109
    %p111 = scmp.ne.s32.totalorder %s100, %s103
    %p112 = scmp.eq.s32.totalorder %s17, 1
    %p113 = por %p111, %p112
    %p114 = scmp.ne.s32.totalorder %s103, %s104
    %p115 = scmp.eq.s32.totalorder %s17, 0
    %p116 = por %p114, %p115
    %p117 = scmp.ne.s32.totalorder %s103, %s104
    %p118 = scmp.eq.s32.totalorder %s18, 1
    %p119 = por %p117, %p118
    %p121 = scmp.ne.s32.totalorder %s104, %s120
    %p122 = scmp.eq.s32.totalorder %s18, 0
    %p123 = por %p121, %p122
    %s124 = ssub.s32 %s12, %s19
    %p125 = scmp.eq.s32.totalorder %s124, 0
    %s127 = sadd.s32 %s126, 1
    %s128 = scalar_select %p125, %s126, %s127
    %p131 = pneg %p125
    %p132 = scmp.eq.s32.totalorder %s12, 1
    %p133 = por %p131, %p132
    %p134 = scmp.ne.s32.totalorder %s126, %s129
    %p135 = scmp.eq.s32.totalorder %s12, 0
    %p136 = por %p134, %p135
    %p137 = scmp.ne.s32.totalorder %s126, %s129
    %p138 = scmp.eq.s32.totalorder %s17, 1
    %p139 = por %p137, %p138
    %p140 = scmp.ne.s32.totalorder %s129, %s130
    %p141 = scmp.eq.s32.totalorder %s17, 0
    %p142 = por %p140, %p141
    %p143 = scmp.ne.s32.totalorder %s129, %s130
    %p144 = scmp.eq.s32.totalorder %s18, 1
    %p145 = por %p143, %p144
    %p147 = scmp.ne.s32.totalorder %s130, %s146
    %p148 = scmp.eq.s32.totalorder %s18, 0
    %p149 = por %p147, %p148
    %s150 = ssub.s32 %s12, %s19
    %p151 = scmp.eq.s32.totalorder %s150, 0
    %s153 = sadd.s32 %s152, 1
    %s154 = scalar_select %p151, %s152, %s153
    %p157 = pneg %p151
    %p158 = scmp.eq.s32.totalorder %s12, 1
    %p159 = por %p157, %p158
    %p160 = scmp.ne.s32.totalorder %s152, %s155
    %p161 = scmp.eq.s32.totalorder %s12, 0
    %p162 = por %p160, %p161
    %p163 = scmp.ne.s32.totalorder %s152, %s155
    %p164 = scmp.eq.s32.totalorder %s17, 1
    %p165 = por %p163, %p164
    %p166 = scmp.ne.s32.totalorder %s155, %s156
    %p167 = scmp.eq.s32.totalorder %s17, 0
    %p168 = por %p166, %p167
    %p169 = scmp.ne.s32.totalorder %s155, %s156
    %p170 = scmp.eq.s32.totalorder %s18, 1
    %p171 = por %p169, %p170
    %p173 = scmp.ne.s32.totalorder %s156, %s172
    %p174 = scmp.eq.s32.totalorder %s18, 0
    %p175 = por %p173, %p174
    %p176 = scmp.le.s32.totalorder 1, %s12
    %p177 = scmp.lt.s32.totalorder %s12, 3
    %p178 = pnand %p176, %p177
    %p179 = pneg %p178
    // Predicated region
    $region9: #{_lambda_.7} parent=5 // pred_check
      _
    $region10: #{_lambda_.7} parent=5 // pred_check_branch
      %181 = sbr.rel (%p178) target = $region12
    $region11: #{_lambda_.7} parent=5 // pred_region
      %s182 = ssub.s32 %s12, 1
    $region12: #{_lambda_.7} parent=5 // pred_fallthru
      _
    %p183 = scmp.lt.s32.totalorder %s12, 2
    // Predicated region
    $region13: #{_lambda_.7} parent=5 // pred_check
      %p184 = pneg %p183
    $region14: #{_lambda_.7} parent=5 // pred_check_branch
      %186 = sbr.rel (%p184) target = $region16
    $region15: #{_lambda_.7} parent=5 // pred_region
      // Predicated region
      $region17: #{_lambda_.7} parent=15 // pred_check
        %p187 = pneg %p32
      $region18: #{_lambda_.7} parent=15 // pred_check_branch
        %189 = sbr.rel (%p187) target = $region20
      $region19: #{_lambda_.7} parent=15 // pred_region
        %p190 = scmp.lt.s32.totalorder %s12, 1
        %s191 = scalar_select %p190, %s12, 1
        %s192 = smul.addr %s191, 8
        %s193 = smul.addr %s192, 8
        %s194 = scalar_lea.vmem %s0, %s193
      $region20: #{_lambda_.7} parent=15 // pred_fallthru
        _
      // Predicated region
      $region21: #{_lambda_.7} parent=15 // pred_check
        %p195 = pneg %p58
      $region22: #{_lambda_.7} parent=15 // pred_check_branch
        %197 = sbr.rel (%p195) target = $region24
      $region23: #{_lambda_.7} parent=15 // pred_region
        %p198 = scmp.lt.s32.totalorder %s12, 1
        %s199 = scalar_select %p198, %s12, 1
        %s200 = smul.addr %s199, 8
        %s201 = smul.addr %s200, 8
        %s202 = scalar_lea.vmem %s1, %s201
      $region24: #{_lambda_.7} parent=15 // pred_fallthru
        _
      // Predicated region
      $region25: #{_lambda_.7} parent=15 // pred_check
        %p203 = pneg %p84
      $region26: #{_lambda_.7} parent=15 // pred_check_branch
        %205 = sbr.rel (%p203) target = $region28
      $region27: #{_lambda_.7} parent=15 // pred_region
        %p206 = scmp.lt.s32.totalorder %s12, 1
        %s207 = scalar_select %p206, %s12, 1
        %s208 = smul.addr %s207, 64
        %s209 = smul.addr %s208, 8
        %s210 = scalar_lea.vmem %s2, %s209
      $region28: #{_lambda_.7} parent=15 // pred_fallthru
        _
      // Predicated region
      $region29: #{_lambda_.7} parent=15 // pred_check
        %p211 = pneg %p110
      $region30: #{_lambda_.7} parent=15 // pred_check_branch
        %213 = sbr.rel (%p211) target = $region32
      $region31: #{_lambda_.7} parent=15 // pred_region
        %p214 = scmp.lt.s32.totalorder %s12, 1
        %s215 = scalar_select %p214, %s12, 1
        %s216 = smul.addr %s215, 64
        %s217 = smul.addr %s216, 8
        %s218 = scalar_lea.vmem %s3, %s217
      $region32: #{_lambda_.7} parent=15 // pred_fallthru
        _
    $region16: #{_lambda_.7} parent=5 // pred_fallthru
      _
    %p219 = scmp.le.s32.totalorder 1, %s12
    %p220 = scmp.lt.s32.totalorder %s12, 3
    %p221 = pnand %p219, %p220
    %p222 = pneg %p221
    // Predicated region
    $region33: #{_lambda_.7} parent=5 // pred_check
      _
    $region34: #{_lambda_.7} parent=5 // pred_check_branch
      %224 = sbr.rel (%p221) target = $region36
    $region35: #{_lambda_.7} parent=5 // pred_region
      %s225 = ssub.s32 %s12, 1
      %p226 = scmp.lt.s32.totalorder %s17, 1
      %s227 = scalar_select %p226, %s17, 1
      %s228 = smul.addr %s227, 8
      %s229 = smul.addr %s228, 8
      %s230 = scalar_lea.vmem %s0, %s229
      %p231 = pneg %p38
      %p232 = pneg %p35
      %p233 = scmp.lt.s32.totalorder %s17, 1
      %s234 = scalar_select %p233, %s17, 1
      %s235 = smul.addr %s234, 8
      %s236 = smul.addr %s235, 8
      %s237 = scalar_lea.vmem %s1, %s236
      %p238 = pneg %p64
      %p239 = pneg %p61
      %p240 = scmp.lt.s32.totalorder %s17, 1
      %s241 = scalar_select %p240, %s17, 1
      %s242 = smul.addr %s241, 64
      %s243 = smul.addr %s242, 8
      %s244 = scalar_lea.vmem %s2, %s243
      %p245 = pneg %p90
      %p246 = pneg %p87
      %p247 = scmp.lt.s32.totalorder %s17, 1
      %s248 = scalar_select %p247, %s17, 1
      %s249 = smul.addr %s248, 64
      %s250 = smul.addr %s249, 8
      %s251 = scalar_lea.vmem %s3, %s250
      %p252 = pneg %p116
      %p253 = pneg %p113
      %p254 = pneg %p142
      %p255 = pneg %p139
      %p256 = scmp.lt.s32.totalorder %s17, 1
      %s257 = scalar_select %p256, %s17, 1
      %s258 = smul.addr %s257, 4
      %s259 = smul.addr %s258, 8
      %s260 = scalar_lea.vmem %s4, %s259
      %p261 = pneg %p168
      %p262 = pneg %p165
      %p263 = scmp.lt.s32.totalorder %s17, 1
      %s264 = scalar_select %p263, %s17, 1
      %s265 = smul.addr %s264, 4
      %s266 = smul.addr %s265, 8
      %s267 = scalar_lea.vmem %s5, %s266
      %p268 = scmp.lt.s32.totalorder %s17, 1
      %s269 = scalar_select %p268, %s17, 1
      %s270 = smul.addr %s269, 8
      %s271 = smul.addr %s270, 8
      %s272 = scalar_lea.vmem %s0, %s271
      %p273 = scmp.lt.s32.totalorder %s17, 1
      %s274 = scalar_select %p273, %s17, 1
      %s275 = smul.addr %s274, 8
      %s276 = smul.addr %s275, 8
      %s277 = scalar_lea.vmem %s1, %s276
      %p278 = scmp.lt.s32.totalorder %s17, 1
      %s279 = scalar_select %p278, %s17, 1
      %s280 = smul.addr %s279, 64
      %s281 = smul.addr %s280, 8
      %s282 = scalar_lea.vmem %s2, %s281
      %p283 = scmp.lt.s32.totalorder %s17, 1
      %s284 = scalar_select %p283, %s17, 1
      %s285 = smul.addr %s284, 64
      %s286 = smul.addr %s285, 8
      %s287 = scalar_lea.vmem %s3, %s286
      %p288 = scmp.lt.s32.totalorder %s17, 1
      %s289 = scalar_select %p288, %s17, 1
      %s290 = smul.addr %s289, 4
      %s291 = smul.addr %s290, 8
      %s292 = scalar_lea.vmem %s4, %s291
      %p293 = scmp.lt.s32.totalorder %s17, 1
      %s294 = scalar_select %p293, %s17, 1
      %s295 = smul.addr %s294, 4
      %s296 = smul.addr %s295, 8
      %s297 = scalar_lea.vmem %s5, %s296
      %v298 = vld [vmem:[%s272] sm:$0xff]
      %v299 = vld [vmem:[%s272 + $0x8] sm:$0xff]
      %v300 = vld [vmem:[%s272 + $0x10] sm:$0xff]
      %v301 = vld [vmem:[%s272 + $0x18] sm:$0xff]
      %v302 = vld [vmem:[%s272 + $0x20] sm:$0xff]
      %v303 = vld [vmem:[%s272 + $0x28] sm:$0xff]
      %v304 = vld [vmem:[%s272 + $0x30] sm:$0xff]
      %v305 = vld [vmem:[%s272 + $0x38] sm:$0xff]
      %v306 = vld [vmem:[%s277] sm:$0xff]
      %v307 = vld [vmem:[%s277 + $0x8] sm:$0xff]
      %v308 = vld [vmem:[%s277 + $0x10] sm:$0xff]
      %v309 = vld [vmem:[%s277 + $0x18] sm:$0xff]
      %v310 = vld [vmem:[%s277 + $0x20] sm:$0xff]
      %v311 = vld [vmem:[%s277 + $0x28] sm:$0xff]
      %v312 = vld [vmem:[%s277 + $0x30] sm:$0xff]
      %v313 = vld [vmem:[%s277 + $0x38] sm:$0xff]
      %v314 = vld [vmem:[%s282] sm:$0xff]
      %v315 = vld [vmem:[%s282 + $0x8] sm:$0xff]
      %v316 = vld [vmem:[%s282 + $0x10] sm:$0xff]
      %v317 = vld [vmem:[%s282 + $0x18] sm:$0xff]
      %v318 = vld [vmem:[%s282 + $0x20] sm:$0xff]
      %v319 = vld [vmem:[%s282 + $0x28] sm:$0xff]
      %v320 = vld [vmem:[%s282 + $0x30] sm:$0xff]
      %v321 = vld [vmem:[%s282 + $0x38] sm:$0xff]
      %v322 = vld [vmem:[%s282 + $0x40] sm:$0xff]
      %v323 = vld [vmem:[%s282 + $0x48] sm:$0xff]
      %v324 = vld [vmem:[%s282 + $0x50] sm:$0xff]
      %v325 = vld [vmem:[%s282 + $0x58] sm:$0xff]
      %v326 = vld [vmem:[%s282 + $0x60] sm:$0xff]
      %v327 = vld [vmem:[%s282 + $0x68] sm:$0xff]
      %v328 = vld [vmem:[%s282 + $0x70] sm:$0xff]
      %v329 = vld [vmem:[%s282 + $0x78] sm:$0xff]
      %v330 = vld [vmem:[%s282 + $0x80] sm:$0xff]
      %v331 = vld [vmem:[%s282 + $0x88] sm:$0xff]
      %v332 = vld [vmem:[%s282 + $0x90] sm:$0xff]
      %v333 = vld [vmem:[%s282 + $0x98] sm:$0xff]
      %v334 = vld [vmem:[%s282 + $0xa0] sm:$0xff]
      %v335 = vld [vmem:[%s282 + $0xa8] sm:$0xff]
      %v336 = vld [vmem:[%s282 + $0xb0] sm:$0xff]
      %v337 = vld [vmem:[%s282 + $0xb8] sm:$0xff]
      %v338 = vld [vmem:[%s282 + $0xc0] sm:$0xff]
      %v339 = vld [vmem:[%s282 + $0xc8] sm:$0xff]
      %v340 = vld [vmem:[%s282 + $0xd0] sm:$0xff]
      %v341 = vld [vmem:[%s282 + $0xd8] sm:$0xff]
      %v342 = vld [vmem:[%s282 + $0xe0] sm:$0xff]
      %v343 = vld [vmem:[%s282 + $0xe8] sm:$0xff]
      %v344 = vld [vmem:[%s282 + $0xf0] sm:$0xff]
      %v345 = vld [vmem:[%s282 + $0xf8] sm:$0xff]
      %v346 = vld [vmem:[%s282 + $0x100] sm:$0xff]
      %v347 = vld [vmem:[%s282 + $0x108] sm:$0xff]
      %v348 = vld [vmem:[%s282 + $0x110] sm:$0xff]
      %v349 = vld [vmem:[%s282 + $0x118] sm:$0xff]
      %v350 = vld [vmem:[%s282 + $0x120] sm:$0xff]
      %v351 = vld [vmem:[%s282 + $0x128] sm:$0xff]
      %v352 = vld [vmem:[%s282 + $0x130] sm:$0xff]
      %v353 = vld [vmem:[%s282 + $0x138] sm:$0xff]
      %v354 = vld [vmem:[%s282 + $0x140] sm:$0xff]
      %v355 = vld [vmem:[%s282 + $0x148] sm:$0xff]
      %v356 = vld [vmem:[%s282 + $0x150] sm:$0xff]
      %v357 = vld [vmem:[%s282 + $0x158] sm:$0xff]
      %v358 = vld [vmem:[%s282 + $0x160] sm:$0xff]
      %v359 = vld [vmem:[%s282 + $0x168] sm:$0xff]
      %v360 = vld [vmem:[%s282 + $0x170] sm:$0xff]
      %v361 = vld [vmem:[%s282 + $0x178] sm:$0xff]
      %v362 = vld [vmem:[%s282 + $0x180] sm:$0xff]
      %v363 = vld [vmem:[%s282 + $0x188] sm:$0xff]
      %v364 = vld [vmem:[%s282 + $0x190] sm:$0xff]
      %v365 = vld [vmem:[%s282 + $0x198] sm:$0xff]
      %v366 = vld [vmem:[%s282 + $0x1a0] sm:$0xff]
      %v367 = vld [vmem:[%s282 + $0x1a8] sm:$0xff]
      %v368 = vld [vmem:[%s282 + $0x1b0] sm:$0xff]
      %v369 = vld [vmem:[%s282 + $0x1b8] sm:$0xff]
      %v370 = vld [vmem:[%s282 + $0x1c0] sm:$0xff]
      %v371 = vld [vmem:[%s282 + $0x1c8] sm:$0xff]
      %v372 = vld [vmem:[%s282 + $0x1d0] sm:$0xff]
      %v373 = vld [vmem:[%s282 + $0x1d8] sm:$0xff]
      %v374 = vld [vmem:[%s282 + $0x1e0] sm:$0xff]
      %v375 = vld [vmem:[%s282 + $0x1e8] sm:$0xff]
      %v376 = vld [vmem:[%s282 + $0x1f0] sm:$0xff]
      %v377 = vld [vmem:[%s282 + $0x1f8] sm:$0xff]
      %v378 = vld [vmem:[%s287] sm:$0xff]
      %v379 = vld [vmem:[%s287 + $0x8] sm:$0xff]
      %v380 = vld [vmem:[%s287 + $0x10] sm:$0xff]
      %v381 = vld [vmem:[%s287 + $0x18] sm:$0xff]
      %v382 = vld [vmem:[%s287 + $0x20] sm:$0xff]
      %v383 = vld [vmem:[%s287 + $0x28] sm:$0xff]
      %v384 = vld [vmem:[%s287 + $0x30] sm:$0xff]
      %v385 = vld [vmem:[%s287 + $0x38] sm:$0xff]
      %v386 = vld [vmem:[%s287 + $0x40] sm:$0xff]
      %v387 = vld [vmem:[%s287 + $0x48] sm:$0xff]
      %v388 = vld [vmem:[%s287 + $0x50] sm:$0xff]
      %v389 = vld [vmem:[%s287 + $0x58] sm:$0xff]
      %v390 = vld [vmem:[%s287 + $0x60] sm:$0xff]
      %v391 = vld [vmem:[%s287 + $0x68] sm:$0xff]
      %v392 = vld [vmem:[%s287 + $0x70] sm:$0xff]
      %v393 = vld [vmem:[%s287 + $0x78] sm:$0xff]
      %v394 = vld [vmem:[%s287 + $0x80] sm:$0xff]
      %v395 = vld [vmem:[%s287 + $0x88] sm:$0xff]
      %v396 = vld [vmem:[%s287 + $0x90] sm:$0xff]
      %v397 = vld [vmem:[%s287 + $0x98] sm:$0xff]
      %v398 = vld [vmem:[%s287 + $0xa0] sm:$0xff]
      %v399 = vld [vmem:[%s287 + $0xa8] sm:$0xff]
      %v400 = vld [vmem:[%s287 + $0xb0] sm:$0xff]
      %v401 = vld [vmem:[%s287 + $0xb8] sm:$0xff]
      %v402 = vld [vmem:[%s287 + $0xc0] sm:$0xff]
      %v403 = vld [vmem:[%s287 + $0xc8] sm:$0xff]
      %v404 = vld [vmem:[%s287 + $0xd0] sm:$0xff]
      %v405 = vld [vmem:[%s287 + $0xd8] sm:$0xff]
      %v406 = vld [vmem:[%s287 + $0xe0] sm:$0xff]
      %v407 = vld [vmem:[%s287 + $0xe8] sm:$0xff]
      %v408 = vld [vmem:[%s287 + $0xf0] sm:$0xff]
      %v409 = vld [vmem:[%s287 + $0xf8] sm:$0xff]
      %v410 = vld [vmem:[%s287 + $0x100] sm:$0xff]
      %v411 = vld [vmem:[%s287 + $0x108] sm:$0xff]
      %v412 = vld [vmem:[%s287 + $0x110] sm:$0xff]
      %v413 = vld [vmem:[%s287 + $0x118] sm:$0xff]
      %v414 = vld [vmem:[%s287 + $0x120] sm:$0xff]
      %v415 = vld [vmem:[%s287 + $0x128] sm:$0xff]
      %v416 = vld [vmem:[%s287 + $0x130] sm:$0xff]
      %v417 = vld [vmem:[%s287 + $0x138] sm:$0xff]
      %v418 = vld [vmem:[%s287 + $0x140] sm:$0xff]
      %v419 = vld [vmem:[%s287 + $0x148] sm:$0xff]
      %v420 = vld [vmem:[%s287 + $0x150] sm:$0xff]
      %v421 = vld [vmem:[%s287 + $0x158] sm:$0xff]
      %v422 = vld [vmem:[%s287 + $0x160] sm:$0xff]
      %v423 = vld [vmem:[%s287 + $0x168] sm:$0xff]
      %v424 = vld [vmem:[%s287 + $0x170] sm:$0xff]
      %v425 = vld [vmem:[%s287 + $0x178] sm:$0xff]
      %v426 = vld [vmem:[%s287 + $0x180] sm:$0xff]
      %v427 = vld [vmem:[%s287 + $0x188] sm:$0xff]
      %v428 = vld [vmem:[%s287 + $0x190] sm:$0xff]
      %v429 = vld [vmem:[%s287 + $0x198] sm:$0xff]
      %v430 = vld [vmem:[%s287 + $0x1a0] sm:$0xff]
      %v431 = vld [vmem:[%s287 + $0x1a8] sm:$0xff]
      %v432 = vld [vmem:[%s287 + $0x1b0] sm:$0xff]
      %v433 = vld [vmem:[%s287 + $0x1b8] sm:$0xff]
      %v434 = vld [vmem:[%s287 + $0x1c0] sm:$0xff]
      %v435 = vld [vmem:[%s287 + $0x1c8] sm:$0xff]
      %v436 = vld [vmem:[%s287 + $0x1d0] sm:$0xff]
      %v437 = vld [vmem:[%s287 + $0x1d8] sm:$0xff]
      %v438 = vld [vmem:[%s287 + $0x1e0] sm:$0xff]
      %v439 = vld [vmem:[%s287 + $0x1e8] sm:$0xff]
      %v440 = vld [vmem:[%s287 + $0x1f0] sm:$0xff]
      %v441 = vld [vmem:[%s287 + $0x1f8] sm:$0xff]
      %v450 = vrot.slane %v298, 1
      %v451 = vrot.slane %v298, 2
      %v452 = vrot.slane %v298, 3
      %v453 = vrot.slane %v298, 4
      %v454 = vrot.slane %v298, 5
      %v455 = vrot.slane %v298, 6
      %v456 = vrot.slane %v298, 7
      %v457 = vrot.slane %v299, 1
      %v458 = vrot.slane %v299, 2
      %v459 = vrot.slane %v299, 3
      %v460 = vrot.slane %v299, 4
      %v461 = vrot.slane %v299, 5
      %v462 = vrot.slane %v299, 6
      %v463 = vrot.slane %v299, 7
      %v464 = vrot.slane %v300, 1
      %v465 = vrot.slane %v300, 2
      %v466 = vrot.slane %v300, 3
      %v467 = vrot.slane %v300, 4
      %v468 = vrot.slane %v300, 5
      %v469 = vrot.slane %v300, 6
      %v470 = vrot.slane %v300, 7
      %v471 = vrot.slane %v301, 1
      %v472 = vrot.slane %v301, 2
      %v473 = vrot.slane %v301, 3
      %v474 = vrot.slane %v301, 4
      %v475 = vrot.slane %v301, 5
      %v476 = vrot.slane %v301, 6
      %v477 = vrot.slane %v301, 7
      %v478 = vrot.slane %v302, 1
      %v479 = vrot.slane %v302, 2
      %v480 = vrot.slane %v302, 3
      %v481 = vrot.slane %v302, 4
      %v482 = vrot.slane %v302, 5
      %v483 = vrot.slane %v302, 6
      %v484 = vrot.slane %v302, 7
      %v485 = vrot.slane %v303, 1
      %v486 = vrot.slane %v303, 2
      %v487 = vrot.slane %v303, 3
      %v488 = vrot.slane %v303, 4
      %v489 = vrot.slane %v303, 5
      %v490 = vrot.slane %v303, 6
      %v491 = vrot.slane %v303, 7
      %v492 = vrot.slane %v304, 1
      %v493 = vrot.slane %v304, 2
      %v494 = vrot.slane %v304, 3
      %v495 = vrot.slane %v304, 4
      %v496 = vrot.slane %v304, 5
      %v497 = vrot.slane %v304, 6
      %v498 = vrot.slane %v304, 7
      %v499 = vrot.slane %v305, 1
      %v500 = vrot.slane %v305, 2
      %v501 = vrot.slane %v305, 3
      %v502 = vrot.slane %v305, 4
      %v503 = vrot.slane %v305, 5
      %v504 = vrot.slane %v305, 6
      %v505 = vrot.slane %v305, 7
      %v514 = vrot.slane %v306, 1
      %v515 = vrot.slane %v306, 2
      %v516 = vrot.slane %v306, 3
      %v517 = vrot.slane %v306, 4
      %v518 = vrot.slane %v306, 5
      %v519 = vrot.slane %v306, 6
      %v520 = vrot.slane %v306, 7
      %v521 = vrot.slane %v307, 1
      %v522 = vrot.slane %v307, 2
      %v523 = vrot.slane %v307, 3
      %v524 = vrot.slane %v307, 4
      %v525 = vrot.slane %v307, 5
      %v526 = vrot.slane %v307, 6
      %v527 = vrot.slane %v307, 7
      %v528 = vrot.slane %v308, 1
      %v529 = vrot.slane %v308, 2
      %v530 = vrot.slane %v308, 3
      %v531 = vrot.slane %v308, 4
      %v532 = vrot.slane %v308, 5
      %v533 = vrot.slane %v308, 6
      %v534 = vrot.slane %v308, 7
      %v535 = vrot.slane %v309, 1
      %v536 = vrot.slane %v309, 2
      %v537 = vrot.slane %v309, 3
      %v538 = vrot.slane %v309, 4
      %v539 = vrot.slane %v309, 5
      %v540 = vrot.slane %v309, 6
      %v541 = vrot.slane %v309, 7
      %v542 = vrot.slane %v310, 1
      %v543 = vrot.slane %v310, 2
      %v544 = vrot.slane %v310, 3
      %v545 = vrot.slane %v310, 4
      %v546 = vrot.slane %v310, 5
      %v547 = vrot.slane %v310, 6
      %v548 = vrot.slane %v310, 7
      %v549 = vrot.slane %v311, 1
      %v550 = vrot.slane %v311, 2
      %v551 = vrot.slane %v311, 3
      %v552 = vrot.slane %v311, 4
      %v553 = vrot.slane %v311, 5
      %v554 = vrot.slane %v311, 6
      %v555 = vrot.slane %v311, 7
      %v556 = vrot.slane %v312, 1
      %v557 = vrot.slane %v312, 2
      %v558 = vrot.slane %v312, 3
      %v559 = vrot.slane %v312, 4
      %v560 = vrot.slane %v312, 5
      %v561 = vrot.slane %v312, 6
      %v562 = vrot.slane %v312, 7
      %v563 = vrot.slane %v313, 1
      %v564 = vrot.slane %v313, 2
      %v565 = vrot.slane %v313, 3
      %v566 = vrot.slane %v313, 4
      %v567 = vrot.slane %v313, 5
      %v568 = vrot.slane %v313, 6
      %v569 = vrot.slane %v313, 7
      %v570 = vperm.slane %v298, 0
      %v571 = vperm.slane %v450, 0
      %v572 = vperm.slane %v451, 0
      %v573 = vperm.slane %v452, 0
      %v574 = vperm.slane %v453, 0
      %v575 = vperm.slane %v454, 0
      %v576 = vperm.slane %v455, 0
      %v577 = vperm.slane %v456, 0
      %v578 = vperm.slane %v299, 0
      %v579 = vperm.slane %v457, 0
      %v580 = vperm.slane %v458, 0
      %v581 = vperm.slane %v459, 0
      %v582 = vperm.slane %v460, 0
      %v583 = vperm.slane %v461, 0
      %v584 = vperm.slane %v462, 0
      %v585 = vperm.slane %v463, 0
      %v586 = vperm.slane %v300, 0
      %v587 = vperm.slane %v464, 0
      %v588 = vperm.slane %v465, 0
      %v589 = vperm.slane %v466, 0
      %v590 = vperm.slane %v467, 0
      %v591 = vperm.slane %v468, 0
      %v592 = vperm.slane %v469, 0
      %v593 = vperm.slane %v470, 0
      %v594 = vperm.slane %v301, 0
      %v595 = vperm.slane %v471, 0
      %v596 = vperm.slane %v472, 0
      %v597 = vperm.slane %v473, 0
      %v598 = vperm.slane %v474, 0
      %v599 = vperm.slane %v475, 0
      %v600 = vperm.slane %v476, 0
      %v601 = vperm.slane %v477, 0
      %v602 = vperm.slane %v302, 0
      %v603 = vperm.slane %v478, 0
      %v604 = vperm.slane %v479, 0
      %v605 = vperm.slane %v480, 0
      %v606 = vperm.slane %v481, 0
      %v607 = vperm.slane %v482, 0
      %v608 = vperm.slane %v483, 0
      %v609 = vperm.slane %v484, 0
      %v610 = vperm.slane %v303, 0
      %v611 = vperm.slane %v485, 0
      %v612 = vperm.slane %v486, 0
      %v613 = vperm.slane %v487, 0
      %v614 = vperm.slane %v488, 0
      %v615 = vperm.slane %v489, 0
      %v616 = vperm.slane %v490, 0
      %v617 = vperm.slane %v491, 0
      %v618 = vperm.slane %v304, 0
      %v619 = vperm.slane %v492, 0
      %v620 = vperm.slane %v493, 0
      %v621 = vperm.slane %v494, 0
      %v622 = vperm.slane %v495, 0
      %v623 = vperm.slane %v496, 0
      %v624 = vperm.slane %v497, 0
      %v625 = vperm.slane %v498, 0
      %v626 = vperm.slane %v305, 0
      %v627 = vperm.slane %v499, 0
      %v628 = vperm.slane %v500, 0
      %v629 = vperm.slane %v501, 0
      %v630 = vperm.slane %v502, 0
      %v631 = vperm.slane %v503, 0
      %v632 = vperm.slane %v504, 0
      %v633 = vperm.slane %v505, 0
      %v698 = vmul.f32 %v570, %v314
      %v699 = vmul.f32 %v570, %v315
      %v700 = vmul.f32 %v571, %v316
      %v701 = vmul.f32 %v571, %v317
      %v702 = vmul.f32 %v572, %v318
      %v703 = vmul.f32 %v572, %v319
      %v704 = vmul.f32 %v573, %v320
      %v705 = vmul.f32 %v573, %v321
      %v706 = vmul.f32 %v574, %v322
      %v707 = vmul.f32 %v574, %v323
      %v708 = vmul.f32 %v575, %v324
      %v709 = vmul.f32 %v575, %v325
      %v710 = vmul.f32 %v576, %v326
      %v711 = vmul.f32 %v576, %v327
      %v712 = vmul.f32 %v577, %v328
      %v713 = vmul.f32 %v577, %v329
      %v714 = vmul.f32 %v578, %v330
      %v715 = vmul.f32 %v578, %v331
      %v716 = vmul.f32 %v579, %v332
      %v717 = vmul.f32 %v579, %v333
      %v718 = vmul.f32 %v580, %v334
      %v719 = vmul.f32 %v580, %v335
      %v720 = vmul.f32 %v581, %v336
      %v721 = vmul.f32 %v581, %v337
      %v722 = vmul.f32 %v582, %v338
      %v723 = vmul.f32 %v582, %v339
      %v724 = vmul.f32 %v583, %v340
      %v725 = vmul.f32 %v583, %v341
      %v726 = vmul.f32 %v584, %v342
      %v727 = vmul.f32 %v584, %v343
      %v728 = vmul.f32 %v585, %v344
      %v729 = vmul.f32 %v585, %v345
      %v730 = vmul.f32 %v586, %v346
      %v731 = vmul.f32 %v586, %v347
      %v732 = vmul.f32 %v587, %v348
      %v733 = vmul.f32 %v587, %v349
      %v734 = vmul.f32 %v588, %v350
      %v735 = vmul.f32 %v588, %v351
      %v736 = vmul.f32 %v589, %v352
      %v737 = vmul.f32 %v589, %v353
      %v738 = vmul.f32 %v590, %v354
      %v739 = vmul.f32 %v590, %v355
      %v740 = vmul.f32 %v591, %v356
      %v741 = vmul.f32 %v591, %v357
      %v742 = vmul.f32 %v592, %v358
      %v743 = vmul.f32 %v592, %v359
      %v744 = vmul.f32 %v593, %v360
      %v745 = vmul.f32 %v593, %v361
      %v746 = vmul.f32 %v594, %v362
      %v747 = vmul.f32 %v594, %v363
      %v748 = vmul.f32 %v595, %v364
      %v749 = vmul.f32 %v595, %v365
      %v750 = vmul.f32 %v596, %v366
      %v751 = vmul.f32 %v596, %v367
      %v752 = vmul.f32 %v597, %v368
      %v753 = vmul.f32 %v597, %v369
      %v754 = vmul.f32 %v598, %v370
      %v755 = vmul.f32 %v598, %v371
      %v756 = vmul.f32 %v599, %v372
      %v757 = vmul.f32 %v599, %v373
      %v758 = vmul.f32 %v600, %v374
      %v759 = vmul.f32 %v600, %v375
      %v760 = vmul.f32 %v601, %v376
      %v761 = vmul.f32 %v601, %v377
      %v762 = vmul.f32 %v602, %v314
      %v763 = vmul.f32 %v602, %v315
      %v764 = vmul.f32 %v603, %v316
      %v765 = vmul.f32 %v603, %v317
      %v766 = vmul.f32 %v604, %v318
      %v767 = vmul.f32 %v604, %v319
      %v768 = vmul.f32 %v605, %v320
      %v769 = vmul.f32 %v605, %v321
      %v770 = vmul.f32 %v606, %v322
      %v771 = vmul.f32 %v606, %v323
      %v772 = vmul.f32 %v607, %v324
      %v773 = vmul.f32 %v607, %v325
      %v774 = vmul.f32 %v608, %v326
      %v775 = vmul.f32 %v608, %v327
      %v776 = vmul.f32 %v609, %v328
      %v777 = vmul.f32 %v609, %v329
      %v778 = vmul.f32 %v610, %v330
      %v779 = vmul.f32 %v610, %v331
      %v780 = vmul.f32 %v611, %v332
      %v781 = vmul.f32 %v611, %v333
      %v782 = vmul.f32 %v612, %v334
      %v783 = vmul.f32 %v612, %v335
      %v784 = vmul.f32 %v613, %v336
      %v785 = vmul.f32 %v613, %v337
      %v786 = vmul.f32 %v614, %v338
      %v787 = vmul.f32 %v614, %v339
      %v788 = vmul.f32 %v615, %v340
      %v789 = vmul.f32 %v615, %v341
      %v790 = vmul.f32 %v616, %v342
      %v791 = vmul.f32 %v616, %v343
      %v792 = vmul.f32 %v617, %v344
      %v793 = vmul.f32 %v617, %v345
      %v794 = vmul.f32 %v618, %v346
      %v795 = vmul.f32 %v618, %v347
      %v796 = vmul.f32 %v619, %v348
      %v797 = vmul.f32 %v619, %v349
      %v798 = vmul.f32 %v620, %v350
      %v799 = vmul.f32 %v620, %v351
      %v800 = vmul.f32 %v621, %v352
      %v801 = vmul.f32 %v621, %v353
      %v802 = vmul.f32 %v622, %v354
      %v803 = vmul.f32 %v622, %v355
      %v804 = vmul.f32 %v623, %v356
      %v805 = vmul.f32 %v623, %v357
      %v806 = vmul.f32 %v624, %v358
      %v807 = vmul.f32 %v624, %v359
      %v808 = vmul.f32 %v625, %v360
      %v809 = vmul.f32 %v625, %v361
      %v810 = vmul.f32 %v626, %v362
      %v811 = vmul.f32 %v626, %v363
      %v812 = vmul.f32 %v627, %v364
      %v813 = vmul.f32 %v627, %v365
      %v814 = vmul.f32 %v628, %v366
      %v815 = vmul.f32 %v628, %v367
      %v816 = vmul.f32 %v629, %v368
      %v817 = vmul.f32 %v629, %v369
      %v818 = vmul.f32 %v630, %v370
      %v819 = vmul.f32 %v630, %v371
      %v820 = vmul.f32 %v631, %v372
      %v821 = vmul.f32 %v631, %v373
      %v822 = vmul.f32 %v632, %v374
      %v823 = vmul.f32 %v632, %v375
      %v824 = vmul.f32 %v633, %v376
      %v825 = vmul.f32 %v633, %v377
      %v826 = vperm.slane %v306, 0
      %v827 = vperm.slane %v514, 0
      %v828 = vperm.slane %v515, 0
      %v829 = vperm.slane %v516, 0
      %v830 = vperm.slane %v517, 0
      %v831 = vperm.slane %v518, 0
      %v832 = vperm.slane %v519, 0
      %v833 = vperm.slane %v520, 0
      %v834 = vperm.slane %v307, 0
      %v835 = vperm.slane %v521, 0
      %v836 = vperm.slane %v522, 0
      %v837 = vperm.slane %v523, 0
      %v838 = vperm.slane %v524, 0
      %v839 = vperm.slane %v525, 0
      %v840 = vperm.slane %v526, 0
      %v841 = vperm.slane %v527, 0
      %v842 = vperm.slane %v308, 0
      %v843 = vperm.slane %v528, 0
      %v844 = vperm.slane %v529, 0
      %v845 = vperm.slane %v530, 0
      %v846 = vperm.slane %v531, 0
      %v847 = vperm.slane %v532, 0
      %v848 = vperm.slane %v533, 0
      %v849 = vperm.slane %v534, 0
      %v850 = vperm.slane %v309, 0
      %v851 = vperm.slane %v535, 0
      %v852 = vperm.slane %v536, 0
      %v853 = vperm.slane %v537, 0
      %v854 = vperm.slane %v538, 0
      %v855 = vperm.slane %v539, 0
      %v856 = vperm.slane %v540, 0
      %v857 = vperm.slane %v541, 0
      %v858 = vperm.slane %v310, 0
      %v859 = vperm.slane %v542, 0
      %v860 = vperm.slane %v543, 0
      %v861 = vperm.slane %v544, 0
      %v862 = vperm.slane %v545, 0
      %v863 = vperm.slane %v546, 0
      %v864 = vperm.slane %v547, 0
      %v865 = vperm.slane %v548, 0
      %v866 = vperm.slane %v311, 0
      %v867 = vperm.slane %v549, 0
      %v868 = vperm.slane %v550, 0
      %v869 = vperm.slane %v551, 0
      %v870 = vperm.slane %v552, 0
      %v871 = vperm.slane %v553, 0
      %v872 = vperm.slane %v554, 0
      %v873 = vperm.slane %v555, 0
      %v874 = vperm.slane %v312, 0
      %v875 = vperm.slane %v556, 0
      %v876 = vperm.slane %v557, 0
      %v877 = vperm.slane %v558, 0
      %v878 = vperm.slane %v559, 0
      %v879 = vperm.slane %v560, 0
      %v880 = vperm.slane %v561, 0
      %v881 = vperm.slane %v562, 0
      %v882 = vperm.slane %v313, 0
      %v883 = vperm.slane %v563, 0
      %v884 = vperm.slane %v564, 0
      %v885 = vperm.slane %v565, 0
      %v886 = vperm.slane %v566, 0
      %v887 = vperm.slane %v567, 0
      %v888 = vperm.slane %v568, 0
      %v889 = vperm.slane %v569, 0
      %v954 = vmul.f32 %v826, %v378
      %v955 = vmul.f32 %v826, %v379
      %v956 = vmul.f32 %v827, %v380
      %v957 = vmul.f32 %v827, %v381
      %v958 = vmul.f32 %v828, %v382
      %v959 = vmul.f32 %v828, %v383
      %v960 = vmul.f32 %v829, %v384
      %v961 = vmul.f32 %v829, %v385
      %v962 = vmul.f32 %v830, %v386
      %v963 = vmul.f32 %v830, %v387
      %v964 = vmul.f32 %v831, %v388
      %v965 = vmul.f32 %v831, %v389
      %v966 = vmul.f32 %v832, %v390
      %v967 = vmul.f32 %v832, %v391
      %v968 = vmul.f32 %v833, %v392
      %v969 = vmul.f32 %v833, %v393
      %v970 = vmul.f32 %v834, %v394
      %v971 = vmul.f32 %v834, %v395
      %v972 = vmul.f32 %v835, %v396
      %v973 = vmul.f32 %v835, %v397
      %v974 = vmul.f32 %v836, %v398
      %v975 = vmul.f32 %v836, %v399
      %v976 = vmul.f32 %v837, %v400
      %v977 = vmul.f32 %v837, %v401
      %v978 = vmul.f32 %v838, %v402
      %v979 = vmul.f32 %v838, %v403
      %v980 = vmul.f32 %v839, %v404
      %v981 = vmul.f32 %v839, %v405
      %v982 = vmul.f32 %v840, %v406
      %v983 = vmul.f32 %v840, %v407
      %v984 = vmul.f32 %v841, %v408
      %v985 = vmul.f32 %v841, %v409
      %v986 = vmul.f32 %v842, %v410
      %v987 = vmul.f32 %v842, %v411
      %v988 = vmul.f32 %v843, %v412
      %v989 = vmul.f32 %v843, %v413
      %v990 = vmul.f32 %v844, %v414
      %v991 = vmul.f32 %v844, %v415
      %v992 = vmul.f32 %v845, %v416
      %v993 = vmul.f32 %v845, %v417
      %v994 = vmul.f32 %v846, %v418
      %v995 = vmul.f32 %v846, %v419
      %v996 = vmul.f32 %v847, %v420
      %v997 = vmul.f32 %v847, %v421
      %v998 = vmul.f32 %v848, %v422
      %v999 = vmul.f32 %v848, %v423
      %v1000 = vmul.f32 %v849, %v424
      %v1001 = vmul.f32 %v849, %v425
      %v1002 = vmul.f32 %v850, %v426
      %v1003 = vmul.f32 %v850, %v427
      %v1004 = vmul.f32 %v851, %v428
      %v1005 = vmul.f32 %v851, %v429
      %v1006 = vmul.f32 %v852, %v430
      %v1007 = vmul.f32 %v852, %v431
      %v1008 = vmul.f32 %v853, %v432
      %v1009 = vmul.f32 %v853, %v433
      %v1010 = vmul.f32 %v854, %v434
      %v1011 = vmul.f32 %v854, %v435
      %v1012 = vmul.f32 %v855, %v436
      %v1013 = vmul.f32 %v855, %v437
      %v1014 = vmul.f32 %v856, %v438
      %v1015 = vmul.f32 %v856, %v439
      %v1016 = vmul.f32 %v857, %v440
      %v1017 = vmul.f32 %v857, %v441
      %v1018 = vmul.f32 %v858, %v378
      %v1019 = vmul.f32 %v858, %v379
      %v1020 = vmul.f32 %v859, %v380
      %v1021 = vmul.f32 %v859, %v381
      %v1022 = vmul.f32 %v860, %v382
      %v1023 = vmul.f32 %v860, %v383
      %v1024 = vmul.f32 %v861, %v384
      %v1025 = vmul.f32 %v861, %v385
      %v1026 = vmul.f32 %v862, %v386
      %v1027 = vmul.f32 %v862, %v387
      %v1028 = vmul.f32 %v863, %v388
      %v1029 = vmul.f32 %v863, %v389
      %v1030 = vmul.f32 %v864, %v390
      %v1031 = vmul.f32 %v864, %v391
      %v1032 = vmul.f32 %v865, %v392
      %v1033 = vmul.f32 %v865, %v393
      %v1034 = vmul.f32 %v866, %v394
      %v1035 = vmul.f32 %v866, %v395
      %v1036 = vmul.f32 %v867, %v396
      %v1037 = vmul.f32 %v867, %v397
      %v1038 = vmul.f32 %v868, %v398
      %v1039 = vmul.f32 %v868, %v399
      %v1040 = vmul.f32 %v869, %v400
      %v1041 = vmul.f32 %v869, %v401
      %v1042 = vmul.f32 %v870, %v402
      %v1043 = vmul.f32 %v870, %v403
      %v1044 = vmul.f32 %v871, %v404
      %v1045 = vmul.f32 %v871, %v405
      %v1046 = vmul.f32 %v872, %v406
      %v1047 = vmul.f32 %v872, %v407
      %v1048 = vmul.f32 %v873, %v408
      %v1049 = vmul.f32 %v873, %v409
      %v1050 = vmul.f32 %v874, %v410
      %v1051 = vmul.f32 %v874, %v411
      %v1052 = vmul.f32 %v875, %v412
      %v1053 = vmul.f32 %v875, %v413
      %v1054 = vmul.f32 %v876, %v414
      %v1055 = vmul.f32 %v876, %v415
      %v1056 = vmul.f32 %v877, %v416
      %v1057 = vmul.f32 %v877, %v417
      %v1058 = vmul.f32 %v878, %v418
      %v1059 = vmul.f32 %v878, %v419
      %v1060 = vmul.f32 %v879, %v420
      %v1061 = vmul.f32 %v879, %v421
      %v1062 = vmul.f32 %v880, %v422
      %v1063 = vmul.f32 %v880, %v423
      %v1064 = vmul.f32 %v881, %v424
      %v1065 = vmul.f32 %v881, %v425
      %v1066 = vmul.f32 %v882, %v426
      %v1067 = vmul.f32 %v882, %v427
      %v1068 = vmul.f32 %v883, %v428
      %v1069 = vmul.f32 %v883, %v429
      %v1070 = vmul.f32 %v884, %v430
      %v1071 = vmul.f32 %v884, %v431
      %v1072 = vmul.f32 %v885, %v432
      %v1073 = vmul.f32 %v885, %v433
      %v1074 = vmul.f32 %v886, %v434
      %v1075 = vmul.f32 %v886, %v435
      %v1076 = vmul.f32 %v887, %v436
      %v1077 = vmul.f32 %v887, %v437
      %v1078 = vmul.f32 %v888, %v438
      %v1079 = vmul.f32 %v888, %v439
      %v1080 = vmul.f32 %v889, %v440
      %v1081 = vmul.f32 %v889, %v441
      %v1082 = vsub.f32 %v698, %v954
      %v1083 = vsub.f32 %v699, %v955
      %v1084 = vsub.f32 %v700, %v956
      %v1085 = vsub.f32 %v701, %v957
      %v1086 = vsub.f32 %v702, %v958
      %v1087 = vsub.f32 %v703, %v959
      %v1088 = vsub.f32 %v704, %v960
      %v1089 = vsub.f32 %v705, %v961
      %v1090 = vsub.f32 %v706, %v962
      %v1091 = vsub.f32 %v707, %v963
      %v1092 = vsub.f32 %v708, %v964
      %v1093 = vsub.f32 %v709, %v965
      %v1094 = vsub.f32 %v710, %v966
      %v1095 = vsub.f32 %v711, %v967
      %v1096 = vsub.f32 %v712, %v968
      %v1097 = vsub.f32 %v713, %v969
      %v1098 = vsub.f32 %v714, %v970
      %v1099 = vsub.f32 %v715, %v971
      %v1100 = vsub.f32 %v716, %v972
      %v1101 = vsub.f32 %v717, %v973
      %v1102 = vsub.f32 %v718, %v974
      %v1103 = vsub.f32 %v719, %v975
      %v1104 = vsub.f32 %v720, %v976
      %v1105 = vsub.f32 %v721, %v977
      %v1106 = vsub.f32 %v722, %v978
      %v1107 = vsub.f32 %v723, %v979
      %v1108 = vsub.f32 %v724, %v980
      %v1109 = vsub.f32 %v725, %v981
      %v1110 = vsub.f32 %v726, %v982
      %v1111 = vsub.f32 %v727, %v983
      %v1112 = vsub.f32 %v728, %v984
      %v1113 = vsub.f32 %v729, %v985
      %v1114 = vsub.f32 %v730, %v986
      %v1115 = vsub.f32 %v731, %v987
      %v1116 = vsub.f32 %v732, %v988
      %v1117 = vsub.f32 %v733, %v989
      %v1118 = vsub.f32 %v734, %v990
      %v1119 = vsub.f32 %v735, %v991
      %v1120 = vsub.f32 %v736, %v992
      %v1121 = vsub.f32 %v737, %v993
      %v1122 = vsub.f32 %v738, %v994
      %v1123 = vsub.f32 %v739, %v995
      %v1124 = vsub.f32 %v740, %v996
      %v1125 = vsub.f32 %v741, %v997
      %v1126 = vsub.f32 %v742, %v998
      %v1127 = vsub.f32 %v743, %v999
      %v1128 = vsub.f32 %v744, %v1000
      %v1129 = vsub.f32 %v745, %v1001
      %v1130 = vsub.f32 %v746, %v1002
      %v1131 = vsub.f32 %v747, %v1003
      %v1132 = vsub.f32 %v748, %v1004
      %v1133 = vsub.f32 %v749, %v1005
      %v1134 = vsub.f32 %v750, %v1006
      %v1135 = vsub.f32 %v751, %v1007
      %v1136 = vsub.f32 %v752, %v1008
      %v1137 = vsub.f32 %v753, %v1009
      %v1138 = vsub.f32 %v754, %v1010
      %v1139 = vsub.f32 %v755, %v1011
      %v1140 = vsub.f32 %v756, %v1012
      %v1141 = vsub.f32 %v757, %v1013
      %v1142 = vsub.f32 %v758, %v1014
      %v1143 = vsub.f32 %v759, %v1015
      %v1144 = vsub.f32 %v760, %v1016
      %v1145 = vsub.f32 %v761, %v1017
      %v1146 = vsub.f32 %v762, %v1018
      %v1147 = vsub.f32 %v763, %v1019
      %v1148 = vsub.f32 %v764, %v1020
      %v1149 = vsub.f32 %v765, %v1021
      %v1150 = vsub.f32 %v766, %v1022
      %v1151 = vsub.f32 %v767, %v1023
      %v1152 = vsub.f32 %v768, %v1024
      %v1153 = vsub.f32 %v769, %v1025
      %v1154 = vsub.f32 %v770, %v1026
      %v1155 = vsub.f32 %v771, %v1027
      %v1156 = vsub.f32 %v772, %v1028
      %v1157 = vsub.f32 %v773, %v1029
      %v1158 = vsub.f32 %v774, %v1030
      %v1159 = vsub.f32 %v775, %v1031
      %v1160 = vsub.f32 %v776, %v1032
      %v1161 = vsub.f32 %v777, %v1033
      %v1162 = vsub.f32 %v778, %v1034
      %v1163 = vsub.f32 %v779, %v1035
      %v1164 = vsub.f32 %v780, %v1036
      %v1165 = vsub.f32 %v781, %v1037
      %v1166 = vsub.f32 %v782, %v1038
      %v1167 = vsub.f32 %v783, %v1039
      %v1168 = vsub.f32 %v784, %v1040
      %v1169 = vsub.f32 %v785, %v1041
      %v1170 = vsub.f32 %v786, %v1042
      %v1171 = vsub.f32 %v787, %v1043
      %v1172 = vsub.f32 %v788, %v1044
      %v1173 = vsub.f32 %v789, %v1045
      %v1174 = vsub.f32 %v790, %v1046
      %v1175 = vsub.f32 %v791, %v1047
      %v1176 = vsub.f32 %v792, %v1048
      %v1177 = vsub.f32 %v793, %v1049
      %v1178 = vsub.f32 %v794, %v1050
      %v1179 = vsub.f32 %v795, %v1051
      %v1180 = vsub.f32 %v796, %v1052
      %v1181 = vsub.f32 %v797, %v1053
      %v1182 = vsub.f32 %v798, %v1054
      %v1183 = vsub.f32 %v799, %v1055
      %v1184 = vsub.f32 %v800, %v1056
      %v1185 = vsub.f32 %v801, %v1057
      %v1186 = vsub.f32 %v802, %v1058
      %v1187 = vsub.f32 %v803, %v1059
      %v1188 = vsub.f32 %v804, %v1060
      %v1189 = vsub.f32 %v805, %v1061
      %v1190 = vsub.f32 %v806, %v1062
      %v1191 = vsub.f32 %v807, %v1063
      %v1192 = vsub.f32 %v808, %v1064
      %v1193 = vsub.f32 %v809, %v1065
      %v1194 = vsub.f32 %v810, %v1066
      %v1195 = vsub.f32 %v811, %v1067
      %v1196 = vsub.f32 %v812, %v1068
      %v1197 = vsub.f32 %v813, %v1069
      %v1198 = vsub.f32 %v814, %v1070
      %v1199 = vsub.f32 %v815, %v1071
      %v1200 = vsub.f32 %v816, %v1072
      %v1201 = vsub.f32 %v817, %v1073
      %v1202 = vsub.f32 %v818, %v1074
      %v1203 = vsub.f32 %v819, %v1075
      %v1204 = vsub.f32 %v820, %v1076
      %v1205 = vsub.f32 %v821, %v1077
      %v1206 = vsub.f32 %v822, %v1078
      %v1207 = vsub.f32 %v823, %v1079
      %v1208 = vsub.f32 %v824, %v1080
      %v1209 = vsub.f32 %v825, %v1081
      %vm1210 = vcmask 130048
      %v1211 = vsel %vm1210, %v1082, 0.0
      %v1212 = vsel %vm1210, %v1084, 0.0
      %v1213 = vadd.f32 %v1211, %v1212
      %v1214 = vsel %vm1210, %v1086, 0.0
      %v1215 = vadd.f32 %v1213, %v1214
      %v1216 = vsel %vm1210, %v1088, 0.0
      %v1217 = vadd.f32 %v1215, %v1216
      %v1218 = vsel %vm1210, %v1090, 0.0
      %v1219 = vadd.f32 %v1217, %v1218
      %v1220 = vsel %vm1210, %v1092, 0.0
      %v1221 = vadd.f32 %v1219, %v1220
      %v1222 = vsel %vm1210, %v1094, 0.0
      %v1223 = vadd.f32 %v1221, %v1222
      %v1224 = vsel %vm1210, %v1096, 0.0
      %v1225 = vadd.f32 %v1223, %v1224
      %v1226 = vsel %vm1210, %v1098, 0.0
      %v1227 = vadd.f32 %v1225, %v1226
      %v1228 = vsel %vm1210, %v1100, 0.0
      %v1229 = vadd.f32 %v1227, %v1228
      %v1230 = vsel %vm1210, %v1102, 0.0
      %v1231 = vadd.f32 %v1229, %v1230
      %v1232 = vsel %vm1210, %v1104, 0.0
      %v1233 = vadd.f32 %v1231, %v1232
      %v1234 = vsel %vm1210, %v1106, 0.0
      %v1235 = vadd.f32 %v1233, %v1234
      %v1236 = vsel %vm1210, %v1108, 0.0
      %v1237 = vadd.f32 %v1235, %v1236
      %v1238 = vsel %vm1210, %v1110, 0.0
      %v1239 = vadd.f32 %v1237, %v1238
      %v1240 = vsel %vm1210, %v1112, 0.0
      %v1241 = vadd.f32 %v1239, %v1240
      %v1242 = vsel %vm1210, %v1114, 0.0
      %v1243 = vadd.f32 %v1241, %v1242
      %v1244 = vsel %vm1210, %v1116, 0.0
      %v1245 = vadd.f32 %v1243, %v1244
      %v1246 = vsel %vm1210, %v1118, 0.0
      %v1247 = vadd.f32 %v1245, %v1246
      %v1248 = vsel %vm1210, %v1120, 0.0
      %v1249 = vadd.f32 %v1247, %v1248
      %v1250 = vsel %vm1210, %v1122, 0.0
      %v1251 = vadd.f32 %v1249, %v1250
      %v1252 = vsel %vm1210, %v1124, 0.0
      %v1253 = vadd.f32 %v1251, %v1252
      %v1254 = vsel %vm1210, %v1126, 0.0
      %v1255 = vadd.f32 %v1253, %v1254
      %v1256 = vsel %vm1210, %v1128, 0.0
      %v1257 = vadd.f32 %v1255, %v1256
      %v1258 = vsel %vm1210, %v1130, 0.0
      %v1259 = vadd.f32 %v1257, %v1258
      %v1260 = vsel %vm1210, %v1132, 0.0
      %v1261 = vadd.f32 %v1259, %v1260
      %v1262 = vsel %vm1210, %v1134, 0.0
      %v1263 = vadd.f32 %v1261, %v1262
      %v1264 = vsel %vm1210, %v1136, 0.0
      %v1265 = vadd.f32 %v1263, %v1264
      %v1266 = vsel %vm1210, %v1138, 0.0
      %v1267 = vadd.f32 %v1265, %v1266
      %v1268 = vsel %vm1210, %v1140, 0.0
      %v1269 = vadd.f32 %v1267, %v1268
      %v1270 = vsel %vm1210, %v1142, 0.0
      %v1271 = vadd.f32 %v1269, %v1270
      %v1272 = vsel %vm1210, %v1144, 0.0
      %v1273 = vadd.f32 %v1271, %v1272
      %v1274 = vsel %vm1210, %v1083, 0.0
      %v1275 = vsel %vm1210, %v1085, 0.0
      %v1276 = vadd.f32 %v1274, %v1275
      %v1277 = vsel %vm1210, %v1087, 0.0
      %v1278 = vadd.f32 %v1276, %v1277
      %v1279 = vsel %vm1210, %v1089, 0.0
      %v1280 = vadd.f32 %v1278, %v1279
      %v1281 = vsel %vm1210, %v1091, 0.0
      %v1282 = vadd.f32 %v1280, %v1281
      %v1283 = vsel %vm1210, %v1093, 0.0
      %v1284 = vadd.f32 %v1282, %v1283
      %v1285 = vsel %vm1210, %v1095, 0.0
      %v1286 = vadd.f32 %v1284, %v1285
      %v1287 = vsel %vm1210, %v1097, 0.0
      %v1288 = vadd.f32 %v1286, %v1287
      %v1289 = vsel %vm1210, %v1099, 0.0
      %v1290 = vadd.f32 %v1288, %v1289
      %v1291 = vsel %vm1210, %v1101, 0.0
      %v1292 = vadd.f32 %v1290, %v1291
      %v1293 = vsel %vm1210, %v1103, 0.0
      %v1294 = vadd.f32 %v1292, %v1293
      %v1295 = vsel %vm1210, %v1105, 0.0
      %v1296 = vadd.f32 %v1294, %v1295
      %v1297 = vsel %vm1210, %v1107, 0.0
      %v1298 = vadd.f32 %v1296, %v1297
      %v1299 = vsel %vm1210, %v1109, 0.0
      %v1300 = vadd.f32 %v1298, %v1299
      %v1301 = vsel %vm1210, %v1111, 0.0
      %v1302 = vadd.f32 %v1300, %v1301
      %v1303 = vsel %vm1210, %v1113, 0.0
      %v1304 = vadd.f32 %v1302, %v1303
      %v1305 = vsel %vm1210, %v1115, 0.0
      %v1306 = vadd.f32 %v1304, %v1305
      %v1307 = vsel %vm1210, %v1117, 0.0
      %v1308 = vadd.f32 %v1306, %v1307
      %v1309 = vsel %vm1210, %v1119, 0.0
      %v1310 = vadd.f32 %v1308, %v1309
      %v1311 = vsel %vm1210, %v1121, 0.0
      %v1312 = vadd.f32 %v1310, %v1311
      %v1313 = vsel %vm1210, %v1123, 0.0
      %v1314 = vadd.f32 %v1312, %v1313
      %v1315 = vsel %vm1210, %v1125, 0.0
      %v1316 = vadd.f32 %v1314, %v1315
      %v1317 = vsel %vm1210, %v1127, 0.0
      %v1318 = vadd.f32 %v1316, %v1317
      %v1319 = vsel %vm1210, %v1129, 0.0
      %v1320 = vadd.f32 %v1318, %v1319
      %v1321 = vsel %vm1210, %v1131, 0.0
      %v1322 = vadd.f32 %v1320, %v1321
      %v1323 = vsel %vm1210, %v1133, 0.0
      %v1324 = vadd.f32 %v1322, %v1323
      %v1325 = vsel %vm1210, %v1135, 0.0
      %v1326 = vadd.f32 %v1324, %v1325
      %v1327 = vsel %vm1210, %v1137, 0.0
      %v1328 = vadd.f32 %v1326, %v1327
      %v1329 = vsel %vm1210, %v1139, 0.0
      %v1330 = vadd.f32 %v1328, %v1329
      %v1331 = vsel %vm1210, %v1141, 0.0
      %v1332 = vadd.f32 %v1330, %v1331
      %v1333 = vsel %vm1210, %v1143, 0.0
      %v1334 = vadd.f32 %v1332, %v1333
      %v1335 = vsel %vm1210, %v1145, 0.0
      %v1336 = vadd.f32 %v1334, %v1335
      %v1337 = vsel %vm1210, %v1146, 0.0
      %v1338 = vsel %vm1210, %v1148, 0.0
      %v1339 = vadd.f32 %v1337, %v1338
      %v1340 = vsel %vm1210, %v1150, 0.0
      %v1341 = vadd.f32 %v1339, %v1340
      %v1342 = vsel %vm1210, %v1152, 0.0
      %v1343 = vadd.f32 %v1341, %v1342
      %v1344 = vsel %vm1210, %v1154, 0.0
      %v1345 = vadd.f32 %v1343, %v1344
      %v1346 = vsel %vm1210, %v1156, 0.0
      %v1347 = vadd.f32 %v1345, %v1346
      %v1348 = vsel %vm1210, %v1158, 0.0
      %v1349 = vadd.f32 %v1347, %v1348
      %v1350 = vsel %vm1210, %v1160, 0.0
      %v1351 = vadd.f32 %v1349, %v1350
      %v1352 = vsel %vm1210, %v1162, 0.0
      %v1353 = vadd.f32 %v1351, %v1352
      %v1354 = vsel %vm1210, %v1164, 0.0
      %v1355 = vadd.f32 %v1353, %v1354
      %v1356 = vsel %vm1210, %v1166, 0.0
      %v1357 = vadd.f32 %v1355, %v1356
      %v1358 = vsel %vm1210, %v1168, 0.0
      %v1359 = vadd.f32 %v1357, %v1358
      %v1360 = vsel %vm1210, %v1170, 0.0
      %v1361 = vadd.f32 %v1359, %v1360
      %v1362 = vsel %vm1210, %v1172, 0.0
      %v1363 = vadd.f32 %v1361, %v1362
      %v1364 = vsel %vm1210, %v1174, 0.0
      %v1365 = vadd.f32 %v1363, %v1364
      %v1366 = vsel %vm1210, %v1176, 0.0
      %v1367 = vadd.f32 %v1365, %v1366
      %v1368 = vsel %vm1210, %v1178, 0.0
      %v1369 = vadd.f32 %v1367, %v1368
      %v1370 = vsel %vm1210, %v1180, 0.0
      %v1371 = vadd.f32 %v1369, %v1370
      %v1372 = vsel %vm1210, %v1182, 0.0
      %v1373 = vadd.f32 %v1371, %v1372
      %v1374 = vsel %vm1210, %v1184, 0.0
      %v1375 = vadd.f32 %v1373, %v1374
      %v1376 = vsel %vm1210, %v1186, 0.0
      %v1377 = vadd.f32 %v1375, %v1376
      %v1378 = vsel %vm1210, %v1188, 0.0
      %v1379 = vadd.f32 %v1377, %v1378
      %v1380 = vsel %vm1210, %v1190, 0.0
      %v1381 = vadd.f32 %v1379, %v1380
      %v1382 = vsel %vm1210, %v1192, 0.0
      %v1383 = vadd.f32 %v1381, %v1382
      %v1384 = vsel %vm1210, %v1194, 0.0
      %v1385 = vadd.f32 %v1383, %v1384
      %v1386 = vsel %vm1210, %v1196, 0.0
      %v1387 = vadd.f32 %v1385, %v1386
      %v1388 = vsel %vm1210, %v1198, 0.0
      %v1389 = vadd.f32 %v1387, %v1388
      %v1390 = vsel %vm1210, %v1200, 0.0
      %v1391 = vadd.f32 %v1389, %v1390
      %v1392 = vsel %vm1210, %v1202, 0.0
      %v1393 = vadd.f32 %v1391, %v1392
      %v1394 = vsel %vm1210, %v1204, 0.0
      %v1395 = vadd.f32 %v1393, %v1394
      %v1396 = vsel %vm1210, %v1206, 0.0
      %v1397 = vadd.f32 %v1395, %v1396
      %v1398 = vsel %vm1210, %v1208, 0.0
      %v1399 = vadd.f32 %v1397, %v1398
      %v1400 = vsel %vm1210, %v1147, 0.0
      %v1401 = vsel %vm1210, %v1149, 0.0
      %v1402 = vadd.f32 %v1400, %v1401
      %v1403 = vsel %vm1210, %v1151, 0.0
      %v1404 = vadd.f32 %v1402, %v1403
      %v1405 = vsel %vm1210, %v1153, 0.0
      %v1406 = vadd.f32 %v1404, %v1405
      %v1407 = vsel %vm1210, %v1155, 0.0
      %v1408 = vadd.f32 %v1406, %v1407
      %v1409 = vsel %vm1210, %v1157, 0.0
      %v1410 = vadd.f32 %v1408, %v1409
      %v1411 = vsel %vm1210, %v1159, 0.0
      %v1412 = vadd.f32 %v1410, %v1411
      %v1413 = vsel %vm1210, %v1161, 0.0
      %v1414 = vadd.f32 %v1412, %v1413
      %v1415 = vsel %vm1210, %v1163, 0.0
      %v1416 = vadd.f32 %v1414, %v1415
      %v1417 = vsel %vm1210, %v1165, 0.0
      %v1418 = vadd.f32 %v1416, %v1417
      %v1419 = vsel %vm1210, %v1167, 0.0
      %v1420 = vadd.f32 %v1418, %v1419
      %v1421 = vsel %vm1210, %v1169, 0.0
      %v1422 = vadd.f32 %v1420, %v1421
      %v1423 = vsel %vm1210, %v1171, 0.0
      %v1424 = vadd.f32 %v1422, %v1423
      %v1425 = vsel %vm1210, %v1173, 0.0
      %v1426 = vadd.f32 %v1424, %v1425
      %v1427 = vsel %vm1210, %v1175, 0.0
      %v1428 = vadd.f32 %v1426, %v1427
      %v1429 = vsel %vm1210, %v1177, 0.0
      %v1430 = vadd.f32 %v1428, %v1429
      %v1431 = vsel %vm1210, %v1179, 0.0
      %v1432 = vadd.f32 %v1430, %v1431
      %v1433 = vsel %vm1210, %v1181, 0.0
      %v1434 = vadd.f32 %v1432, %v1433
      %v1435 = vsel %vm1210, %v1183, 0.0
      %v1436 = vadd.f32 %v1434, %v1435
      %v1437 = vsel %vm1210, %v1185, 0.0
      %v1438 = vadd.f32 %v1436, %v1437
      %v1439 = vsel %vm1210, %v1187, 0.0
      %v1440 = vadd.f32 %v1438, %v1439
      %v1441 = vsel %vm1210, %v1189, 0.0
      %v1442 = vadd.f32 %v1440, %v1441
      %v1443 = vsel %vm1210, %v1191, 0.0
      %v1444 = vadd.f32 %v1442, %v1443
      %v1445 = vsel %vm1210, %v1193, 0.0
      %v1446 = vadd.f32 %v1444, %v1445
      %v1447 = vsel %vm1210, %v1195, 0.0
      %v1448 = vadd.f32 %v1446, %v1447
      %v1449 = vsel %vm1210, %v1197, 0.0
      %v1450 = vadd.f32 %v1448, %v1449
      %v1451 = vsel %vm1210, %v1199, 0.0
      %v1452 = vadd.f32 %v1450, %v1451
      %v1453 = vsel %vm1210, %v1201, 0.0
      %v1454 = vadd.f32 %v1452, %v1453
      %v1455 = vsel %vm1210, %v1203, 0.0
      %v1456 = vadd.f32 %v1454, %v1455
      %v1457 = vsel %vm1210, %v1205, 0.0
      %v1458 = vadd.f32 %v1456, %v1457
      %v1459 = vsel %vm1210, %v1207, 0.0
      %v1460 = vadd.f32 %v1458, %v1459
      %v1461 = vsel %vm1210, %v1209, 0.0
      %v1462 = vadd.f32 %v1460, %v1461
      %1463 = vst.msk [vmem:[%s292] sm:$0xff] %vm1210, %v1273
      %1464 = vst.msk [vmem:[%s292 + $0x8] sm:$0xff] %vm1210, %v1336
      %1465 = vst.msk [vmem:[%s292 + $0x10] sm:$0xff] %vm1210, %v1399
      %1466 = vst.msk [vmem:[%s292 + $0x18] sm:$0xff] %vm1210, %v1462
      %v1467 = vmul.f32 %v826, %v314
      %v1468 = vmul.f32 %v826, %v315
      %v1469 = vmul.f32 %v827, %v316
      %v1470 = vmul.f32 %v827, %v317
      %v1471 = vmul.f32 %v828, %v318
      %v1472 = vmul.f32 %v828, %v319
      %v1473 = vmul.f32 %v829, %v320
      %v1474 = vmul.f32 %v829, %v321
      %v1475 = vmul.f32 %v830, %v322
      %v1476 = vmul.f32 %v830, %v323
      %v1477 = vmul.f32 %v831, %v324
      %v1478 = vmul.f32 %v831, %v325
      %v1479 = vmul.f32 %v832, %v326
      %v1480 = vmul.f32 %v832, %v327
      %v1481 = vmul.f32 %v833, %v328
      %v1482 = vmul.f32 %v833, %v329
      %v1483 = vmul.f32 %v834, %v330
      %v1484 = vmul.f32 %v834, %v331
      %v1485 = vmul.f32 %v835, %v332
      %v1486 = vmul.f32 %v835, %v333
      %v1487 = vmul.f32 %v836, %v334
      %v1488 = vmul.f32 %v836, %v335
      %v1489 = vmul.f32 %v837, %v336
      %v1490 = vmul.f32 %v837, %v337
      %v1491 = vmul.f32 %v838, %v338
      %v1492 = vmul.f32 %v838, %v339
      %v1493 = vmul.f32 %v839, %v340
      %v1494 = vmul.f32 %v839, %v341
      %v1495 = vmul.f32 %v840, %v342
      %v1496 = vmul.f32 %v840, %v343
      %v1497 = vmul.f32 %v841, %v344
      %v1498 = vmul.f32 %v841, %v345
      %v1499 = vmul.f32 %v842, %v346
      %v1500 = vmul.f32 %v842, %v347
      %v1501 = vmul.f32 %v843, %v348
      %v1502 = vmul.f32 %v843, %v349
      %v1503 = vmul.f32 %v844, %v350
      %v1504 = vmul.f32 %v844, %v351
      %v1505 = vmul.f32 %v845, %v352
      %v1506 = vmul.f32 %v845, %v353
      %v1507 = vmul.f32 %v846, %v354
      %v1508 = vmul.f32 %v846, %v355
      %v1509 = vmul.f32 %v847, %v356
      %v1510 = vmul.f32 %v847, %v357
      %v1511 = vmul.f32 %v848, %v358
      %v1512 = vmul.f32 %v848, %v359
      %v1513 = vmul.f32 %v849, %v360
      %v1514 = vmul.f32 %v849, %v361
      %v1515 = vmul.f32 %v850, %v362
      %v1516 = vmul.f32 %v850, %v363
      %v1517 = vmul.f32 %v851, %v364
      %v1518 = vmul.f32 %v851, %v365
      %v1519 = vmul.f32 %v852, %v366
      %v1520 = vmul.f32 %v852, %v367
      %v1521 = vmul.f32 %v853, %v368
      %v1522 = vmul.f32 %v853, %v369
      %v1523 = vmul.f32 %v854, %v370
      %v1524 = vmul.f32 %v854, %v371
      %v1525 = vmul.f32 %v855, %v372
      %v1526 = vmul.f32 %v855, %v373
      %v1527 = vmul.f32 %v856, %v374
      %v1528 = vmul.f32 %v856, %v375
      %v1529 = vmul.f32 %v857, %v376
      %v1530 = vmul.f32 %v857, %v377
      %v1531 = vmul.f32 %v858, %v314
      %v1532 = vmul.f32 %v858, %v315
      %v1533 = vmul.f32 %v859, %v316
      %v1534 = vmul.f32 %v859, %v317
      %v1535 = vmul.f32 %v860, %v318
      %v1536 = vmul.f32 %v860, %v319
      %v1537 = vmul.f32 %v861, %v320
      %v1538 = vmul.f32 %v861, %v321
      %v1539 = vmul.f32 %v862, %v322
      %v1540 = vmul.f32 %v862, %v323
      %v1541 = vmul.f32 %v863, %v324
      %v1542 = vmul.f32 %v863, %v325
      %v1543 = vmul.f32 %v864, %v326
      %v1544 = vmul.f32 %v864, %v327
      %v1545 = vmul.f32 %v865, %v328
      %v1546 = vmul.f32 %v865, %v329
      %v1547 = vmul.f32 %v866, %v330
      %v1548 = vmul.f32 %v866, %v331
      %v1549 = vmul.f32 %v867, %v332
      %v1550 = vmul.f32 %v867, %v333
      %v1551 = vmul.f32 %v868, %v334
      %v1552 = vmul.f32 %v868, %v335
      %v1553 = vmul.f32 %v869, %v336
      %v1554 = vmul.f32 %v869, %v337
      %v1555 = vmul.f32 %v870, %v338
      %v1556 = vmul.f32 %v870, %v339
      %v1557 = vmul.f32 %v871, %v340
      %v1558 = vmul.f32 %v871, %v341
      %v1559 = vmul.f32 %v872, %v342
      %v1560 = vmul.f32 %v872, %v343
      %v1561 = vmul.f32 %v873, %v344
      %v1562 = vmul.f32 %v873, %v345
      %v1563 = vmul.f32 %v874, %v346
      %v1564 = vmul.f32 %v874, %v347
      %v1565 = vmul.f32 %v875, %v348
      %v1566 = vmul.f32 %v875, %v349
      %v1567 = vmul.f32 %v876, %v350
      %v1568 = vmul.f32 %v876, %v351
      %v1569 = vmul.f32 %v877, %v352
      %v1570 = vmul.f32 %v877, %v353
      %v1571 = vmul.f32 %v878, %v354
      %v1572 = vmul.f32 %v878, %v355
      %v1573 = vmul.f32 %v879, %v356
      %v1574 = vmul.f32 %v879, %v357
      %v1575 = vmul.f32 %v880, %v358
      %v1576 = vmul.f32 %v880, %v359
      %v1577 = vmul.f32 %v881, %v360
      %v1578 = vmul.f32 %v881, %v361
      %v1579 = vmul.f32 %v882, %v362
      %v1580 = vmul.f32 %v882, %v363
      %v1581 = vmul.f32 %v883, %v364
      %v1582 = vmul.f32 %v883, %v365
      %v1583 = vmul.f32 %v884, %v366
      %v1584 = vmul.f32 %v884, %v367
      %v1585 = vmul.f32 %v885, %v368
      %v1586 = vmul.f32 %v885, %v369
      %v1587 = vmul.f32 %v886, %v370
      %v1588 = vmul.f32 %v886, %v371
      %v1589 = vmul.f32 %v887, %v372
      %v1590 = vmul.f32 %v887, %v373
      %v1591 = vmul.f32 %v888, %v374
      %v1592 = vmul.f32 %v888, %v375
      %v1593 = vmul.f32 %v889, %v376
      %v1594 = vmul.f32 %v889, %v377
      %v1595 = vmul.f32 %v570, %v378
      %v1596 = vmul.f32 %v570, %v379
      %v1597 = vmul.f32 %v571, %v380
      %v1598 = vmul.f32 %v571, %v381
      %v1599 = vmul.f32 %v572, %v382
      %v1600 = vmul.f32 %v572, %v383
      %v1601 = vmul.f32 %v573, %v384
      %v1602 = vmul.f32 %v573, %v385
      %v1603 = vmul.f32 %v574, %v386
      %v1604 = vmul.f32 %v574, %v387
      %v1605 = vmul.f32 %v575, %v388
      %v1606 = vmul.f32 %v575, %v389
      %v1607 = vmul.f32 %v576, %v390
      %v1608 = vmul.f32 %v576, %v391
      %v1609 = vmul.f32 %v577, %v392
      %v1610 = vmul.f32 %v577, %v393
      %v1611 = vmul.f32 %v578, %v394
      %v1612 = vmul.f32 %v578, %v395
      %v1613 = vmul.f32 %v579, %v396
      %v1614 = vmul.f32 %v579, %v397
      %v1615 = vmul.f32 %v580, %v398
      %v1616 = vmul.f32 %v580, %v399
      %v1617 = vmul.f32 %v581, %v400
      %v1618 = vmul.f32 %v581, %v401
      %v1619 = vmul.f32 %v582, %v402
      %v1620 = vmul.f32 %v582, %v403
      %v1621 = vmul.f32 %v583, %v404
      %v1622 = vmul.f32 %v583, %v405
      %v1623 = vmul.f32 %v584, %v406
      %v1624 = vmul.f32 %v584, %v407
      %v1625 = vmul.f32 %v585, %v408
      %v1626 = vmul.f32 %v585, %v409
      %v1627 = vmul.f32 %v586, %v410
      %v1628 = vmul.f32 %v586, %v411
      %v1629 = vmul.f32 %v587, %v412
      %v1630 = vmul.f32 %v587, %v413
      %v1631 = vmul.f32 %v588, %v414
      %v1632 = vmul.f32 %v588, %v415
      %v1633 = vmul.f32 %v589, %v416
      %v1634 = vmul.f32 %v589, %v417
      %v1635 = vmul.f32 %v590, %v418
      %v1636 = vmul.f32 %v590, %v419
      %v1637 = vmul.f32 %v591, %v420
      %v1638 = vmul.f32 %v591, %v421
      %v1639 = vmul.f32 %v592, %v422
      %v1640 = vmul.f32 %v592, %v423
      %v1641 = vmul.f32 %v593, %v424
      %v1642 = vmul.f32 %v593, %v425
      %v1643 = vmul.f32 %v594, %v426
      %v1644 = vmul.f32 %v594, %v427
      %v1645 = vmul.f32 %v595, %v428
      %v1646 = vmul.f32 %v595, %v429
      %v1647 = vmul.f32 %v596, %v430
      %v1648 = vmul.f32 %v596, %v431
      %v1649 = vmul.f32 %v597, %v432
      %v1650 = vmul.f32 %v597, %v433
      %v1651 = vmul.f32 %v598, %v434
      %v1652 = vmul.f32 %v598, %v435
      %v1653 = vmul.f32 %v599, %v436
      %v1654 = vmul.f32 %v599, %v437
      %v1655 = vmul.f32 %v600, %v438
      %v1656 = vmul.f32 %v600, %v439
      %v1657 = vmul.f32 %v601, %v440
      %v1658 = vmul.f32 %v601, %v441
      %v1659 = vmul.f32 %v602, %v378
      %v1660 = vmul.f32 %v602, %v379
      %v1661 = vmul.f32 %v603, %v380
      %v1662 = vmul.f32 %v603, %v381
      %v1663 = vmul.f32 %v604, %v382
      %v1664 = vmul.f32 %v604, %v383
      %v1665 = vmul.f32 %v605, %v384
      %v1666 = vmul.f32 %v605, %v385
      %v1667 = vmul.f32 %v606, %v386
      %v1668 = vmul.f32 %v606, %v387
      %v1669 = vmul.f32 %v607, %v388
      %v1670 = vmul.f32 %v607, %v389
      %v1671 = vmul.f32 %v608, %v390
      %v1672 = vmul.f32 %v608, %v391
      %v1673 = vmul.f32 %v609, %v392
      %v1674 = vmul.f32 %v609, %v393
      %v1675 = vmul.f32 %v610, %v394
      %v1676 = vmul.f32 %v610, %v395
      %v1677 = vmul.f32 %v611, %v396
      %v1678 = vmul.f32 %v611, %v397
      %v1679 = vmul.f32 %v612, %v398
      %v1680 = vmul.f32 %v612, %v399
      %v1681 = vmul.f32 %v613, %v400
      %v1682 = vmul.f32 %v613, %v401
      %v1683 = vmul.f32 %v614, %v402
      %v1684 = vmul.f32 %v614, %v403
      %v1685 = vmul.f32 %v615, %v404
      %v1686 = vmul.f32 %v615, %v405
      %v1687 = vmul.f32 %v616, %v406
      %v1688 = vmul.f32 %v616, %v407
      %v1689 = vmul.f32 %v617, %v408
      %v1690 = vmul.f32 %v617, %v409
      %v1691 = vmul.f32 %v618, %v410
      %v1692 = vmul.f32 %v618, %v411
      %v1693 = vmul.f32 %v619, %v412
      %v1694 = vmul.f32 %v619, %v413
      %v1695 = vmul.f32 %v620, %v414
      %v1696 = vmul.f32 %v620, %v415
      %v1697 = vmul.f32 %v621, %v416
      %v1698 = vmul.f32 %v621, %v417
      %v1699 = vmul.f32 %v622, %v418
      %v1700 = vmul.f32 %v622, %v419
      %v1701 = vmul.f32 %v623, %v420
      %v1702 = vmul.f32 %v623, %v421
      %v1703 = vmul.f32 %v624, %v422
      %v1704 = vmul.f32 %v624, %v423
      %v1705 = vmul.f32 %v625, %v424
      %v1706 = vmul.f32 %v625, %v425
      %v1707 = vmul.f32 %v626, %v426
      %v1708 = vmul.f32 %v626, %v427
      %v1709 = vmul.f32 %v627, %v428
      %v1710 = vmul.f32 %v627, %v429
      %v1711 = vmul.f32 %v628, %v430
      %v1712 = vmul.f32 %v628, %v431
      %v1713 = vmul.f32 %v629, %v432
      %v1714 = vmul.f32 %v629, %v433
      %v1715 = vmul.f32 %v630, %v434
      %v1716 = vmul.f32 %v630, %v435
      %v1717 = vmul.f32 %v631, %v436
      %v1718 = vmul.f32 %v631, %v437
      %v1719 = vmul.f32 %v632, %v438
      %v1720 = vmul.f32 %v632, %v439
      %v1721 = vmul.f32 %v633, %v440
      %v1722 = vmul.f32 %v633, %v441
      %v1723 = vadd.f32 %v1467, %v1595
      %v1724 = vadd.f32 %v1468, %v1596
      %v1725 = vadd.f32 %v1469, %v1597
      %v1726 = vadd.f32 %v1470, %v1598
      %v1727 = vadd.f32 %v1471, %v1599
      %v1728 = vadd.f32 %v1472, %v1600
      %v1729 = vadd.f32 %v1473, %v1601
      %v1730 = vadd.f32 %v1474, %v1602
      %v1731 = vadd.f32 %v1475, %v1603
      %v1732 = vadd.f32 %v1476, %v1604
      %v1733 = vadd.f32 %v1477, %v1605
      %v1734 = vadd.f32 %v1478, %v1606
      %v1735 = vadd.f32 %v1479, %v1607
      %v1736 = vadd.f32 %v1480, %v1608
      %v1737 = vadd.f32 %v1481, %v1609
      %v1738 = vadd.f32 %v1482, %v1610
      %v1739 = vadd.f32 %v1483, %v1611
      %v1740 = vadd.f32 %v1484, %v1612
      %v1741 = vadd.f32 %v1485, %v1613
      %v1742 = vadd.f32 %v1486, %v1614
      %v1743 = vadd.f32 %v1487, %v1615
      %v1744 = vadd.f32 %v1488, %v1616
      %v1745 = vadd.f32 %v1489, %v1617
      %v1746 = vadd.f32 %v1490, %v1618
      %v1747 = vadd.f32 %v1491, %v1619
      %v1748 = vadd.f32 %v1492, %v1620
      %v1749 = vadd.f32 %v1493, %v1621
      %v1750 = vadd.f32 %v1494, %v1622
      %v1751 = vadd.f32 %v1495, %v1623
      %v1752 = vadd.f32 %v1496, %v1624
      %v1753 = vadd.f32 %v1497, %v1625
      %v1754 = vadd.f32 %v1498, %v1626
      %v1755 = vadd.f32 %v1499, %v1627
      %v1756 = vadd.f32 %v1500, %v1628
      %v1757 = vadd.f32 %v1501, %v1629
      %v1758 = vadd.f32 %v1502, %v1630
      %v1759 = vadd.f32 %v1503, %v1631
      %v1760 = vadd.f32 %v1504, %v1632
      %v1761 = vadd.f32 %v1505, %v1633
      %v1762 = vadd.f32 %v1506, %v1634
      %v1763 = vadd.f32 %v1507, %v1635
      %v1764 = vadd.f32 %v1508, %v1636
      %v1765 = vadd.f32 %v1509, %v1637
      %v1766 = vadd.f32 %v1510, %v1638
      %v1767 = vadd.f32 %v1511, %v1639
      %v1768 = vadd.f32 %v1512, %v1640
      %v1769 = vadd.f32 %v1513, %v1641
      %v1770 = vadd.f32 %v1514, %v1642
      %v1771 = vadd.f32 %v1515, %v1643
      %v1772 = vadd.f32 %v1516, %v1644
      %v1773 = vadd.f32 %v1517, %v1645
      %v1774 = vadd.f32 %v1518, %v1646
      %v1775 = vadd.f32 %v1519, %v1647
      %v1776 = vadd.f32 %v1520, %v1648
      %v1777 = vadd.f32 %v1521, %v1649
      %v1778 = vadd.f32 %v1522, %v1650
      %v1779 = vadd.f32 %v1523, %v1651
      %v1780 = vadd.f32 %v1524, %v1652
      %v1781 = vadd.f32 %v1525, %v1653
      %v1782 = vadd.f32 %v1526, %v1654
      %v1783 = vadd.f32 %v1527, %v1655
      %v1784 = vadd.f32 %v1528, %v1656
      %v1785 = vadd.f32 %v1529, %v1657
      %v1786 = vadd.f32 %v1530, %v1658
      %v1787 = vadd.f32 %v1531, %v1659
      %v1788 = vadd.f32 %v1532, %v1660
      %v1789 = vadd.f32 %v1533, %v1661
      %v1790 = vadd.f32 %v1534, %v1662
      %v1791 = vadd.f32 %v1535, %v1663
      %v1792 = vadd.f32 %v1536, %v1664
      %v1793 = vadd.f32 %v1537, %v1665
      %v1794 = vadd.f32 %v1538, %v1666
      %v1795 = vadd.f32 %v1539, %v1667
      %v1796 = vadd.f32 %v1540, %v1668
      %v1797 = vadd.f32 %v1541, %v1669
      %v1798 = vadd.f32 %v1542, %v1670
      %v1799 = vadd.f32 %v1543, %v1671
      %v1800 = vadd.f32 %v1544, %v1672
      %v1801 = vadd.f32 %v1545, %v1673
      %v1802 = vadd.f32 %v1546, %v1674
      %v1803 = vadd.f32 %v1547, %v1675
      %v1804 = vadd.f32 %v1548, %v1676
      %v1805 = vadd.f32 %v1549, %v1677
      %v1806 = vadd.f32 %v1550, %v1678
      %v1807 = vadd.f32 %v1551, %v1679
      %v1808 = vadd.f32 %v1552, %v1680
      %v1809 = vadd.f32 %v1553, %v1681
      %v1810 = vadd.f32 %v1554, %v1682
      %v1811 = vadd.f32 %v1555, %v1683
      %v1812 = vadd.f32 %v1556, %v1684
      %v1813 = vadd.f32 %v1557, %v1685
      %v1814 = vadd.f32 %v1558, %v1686
      %v1815 = vadd.f32 %v1559, %v1687
      %v1816 = vadd.f32 %v1560, %v1688
      %v1817 = vadd.f32 %v1561, %v1689
      %v1818 = vadd.f32 %v1562, %v1690
      %v1819 = vadd.f32 %v1563, %v1691
      %v1820 = vadd.f32 %v1564, %v1692
      %v1821 = vadd.f32 %v1565, %v1693
      %v1822 = vadd.f32 %v1566, %v1694
      %v1823 = vadd.f32 %v1567, %v1695
      %v1824 = vadd.f32 %v1568, %v1696
      %v1825 = vadd.f32 %v1569, %v1697
      %v1826 = vadd.f32 %v1570, %v1698
      %v1827 = vadd.f32 %v1571, %v1699
      %v1828 = vadd.f32 %v1572, %v1700
      %v1829 = vadd.f32 %v1573, %v1701
      %v1830 = vadd.f32 %v1574, %v1702
      %v1831 = vadd.f32 %v1575, %v1703
      %v1832 = vadd.f32 %v1576, %v1704
      %v1833 = vadd.f32 %v1577, %v1705
      %v1834 = vadd.f32 %v1578, %v1706
      %v1835 = vadd.f32 %v1579, %v1707
      %v1836 = vadd.f32 %v1580, %v1708
      %v1837 = vadd.f32 %v1581, %v1709
      %v1838 = vadd.f32 %v1582, %v1710
      %v1839 = vadd.f32 %v1583, %v1711
      %v1840 = vadd.f32 %v1584, %v1712
      %v1841 = vadd.f32 %v1585, %v1713
      %v1842 = vadd.f32 %v1586, %v1714
      %v1843 = vadd.f32 %v1587, %v1715
      %v1844 = vadd.f32 %v1588, %v1716
      %v1845 = vadd.f32 %v1589, %v1717
      %v1846 = vadd.f32 %v1590, %v1718
      %v1847 = vadd.f32 %v1591, %v1719
      %v1848 = vadd.f32 %v1592, %v1720
      %v1849 = vadd.f32 %v1593, %v1721
      %v1850 = vadd.f32 %v1594, %v1722
      %v1851 = vsel %vm1210, %v1723, 0.0
      %v1852 = vsel %vm1210, %v1725, 0.0
      %v1853 = vadd.f32 %v1851, %v1852
      %v1854 = vsel %vm1210, %v1727, 0.0
      %v1855 = vadd.f32 %v1853, %v1854
      %v1856 = vsel %vm1210, %v1729, 0.0
      %v1857 = vadd.f32 %v1855, %v1856
      %v1858 = vsel %vm1210, %v1731, 0.0
      %v1859 = vadd.f32 %v1857, %v1858
      %v1860 = vsel %vm1210, %v1733, 0.0
      %v1861 = vadd.f32 %v1859, %v1860
      %v1862 = vsel %vm1210, %v1735, 0.0
      %v1863 = vadd.f32 %v1861, %v1862
      %v1864 = vsel %vm1210, %v1737, 0.0
      %v1865 = vadd.f32 %v1863, %v1864
      %v1866 = vsel %vm1210, %v1739, 0.0
      %v1867 = vadd.f32 %v1865, %v1866
      %v1868 = vsel %vm1210, %v1741, 0.0
      %v1869 = vadd.f32 %v1867, %v1868
      %v1870 = vsel %vm1210, %v1743, 0.0
      %v1871 = vadd.f32 %v1869, %v1870
      %v1872 = vsel %vm1210, %v1745, 0.0
      %v1873 = vadd.f32 %v1871, %v1872
      %v1874 = vsel %vm1210, %v1747, 0.0
      %v1875 = vadd.f32 %v1873, %v1874
      %v1876 = vsel %vm1210, %v1749, 0.0
      %v1877 = vadd.f32 %v1875, %v1876
      %v1878 = vsel %vm1210, %v1751, 0.0
      %v1879 = vadd.f32 %v1877, %v1878
      %v1880 = vsel %vm1210, %v1753, 0.0
      %v1881 = vadd.f32 %v1879, %v1880
      %v1882 = vsel %vm1210, %v1755, 0.0
      %v1883 = vadd.f32 %v1881, %v1882
      %v1884 = vsel %vm1210, %v1757, 0.0
      %v1885 = vadd.f32 %v1883, %v1884
      %v1886 = vsel %vm1210, %v1759, 0.0
      %v1887 = vadd.f32 %v1885, %v1886
      %v1888 = vsel %vm1210, %v1761, 0.0
      %v1889 = vadd.f32 %v1887, %v1888
      %v1890 = vsel %vm1210, %v1763, 0.0
      %v1891 = vadd.f32 %v1889, %v1890
      %v1892 = vsel %vm1210, %v1765, 0.0
      %v1893 = vadd.f32 %v1891, %v1892
      %v1894 = vsel %vm1210, %v1767, 0.0
      %v1895 = vadd.f32 %v1893, %v1894
      %v1896 = vsel %vm1210, %v1769, 0.0
      %v1897 = vadd.f32 %v1895, %v1896
      %v1898 = vsel %vm1210, %v1771, 0.0
      %v1899 = vadd.f32 %v1897, %v1898
      %v1900 = vsel %vm1210, %v1773, 0.0
      %v1901 = vadd.f32 %v1899, %v1900
      %v1902 = vsel %vm1210, %v1775, 0.0
      %v1903 = vadd.f32 %v1901, %v1902
      %v1904 = vsel %vm1210, %v1777, 0.0
      %v1905 = vadd.f32 %v1903, %v1904
      %v1906 = vsel %vm1210, %v1779, 0.0
      %v1907 = vadd.f32 %v1905, %v1906
      %v1908 = vsel %vm1210, %v1781, 0.0
      %v1909 = vadd.f32 %v1907, %v1908
      %v1910 = vsel %vm1210, %v1783, 0.0
      %v1911 = vadd.f32 %v1909, %v1910
      %v1912 = vsel %vm1210, %v1785, 0.0
      %v1913 = vadd.f32 %v1911, %v1912
      %v1914 = vsel %vm1210, %v1724, 0.0
      %v1915 = vsel %vm1210, %v1726, 0.0
      %v1916 = vadd.f32 %v1914, %v1915
      %v1917 = vsel %vm1210, %v1728, 0.0
      %v1918 = vadd.f32 %v1916, %v1917
      %v1919 = vsel %vm1210, %v1730, 0.0
      %v1920 = vadd.f32 %v1918, %v1919
      %v1921 = vsel %vm1210, %v1732, 0.0
      %v1922 = vadd.f32 %v1920, %v1921
      %v1923 = vsel %vm1210, %v1734, 0.0
      %v1924 = vadd.f32 %v1922, %v1923
      %v1925 = vsel %vm1210, %v1736, 0.0
      %v1926 = vadd.f32 %v1924, %v1925
      %v1927 = vsel %vm1210, %v1738, 0.0
      %v1928 = vadd.f32 %v1926, %v1927
      %v1929 = vsel %vm1210, %v1740, 0.0
      %v1930 = vadd.f32 %v1928, %v1929
      %v1931 = vsel %vm1210, %v1742, 0.0
      %v1932 = vadd.f32 %v1930, %v1931
      %v1933 = vsel %vm1210, %v1744, 0.0
      %v1934 = vadd.f32 %v1932, %v1933
      %v1935 = vsel %vm1210, %v1746, 0.0
      %v1936 = vadd.f32 %v1934, %v1935
      %v1937 = vsel %vm1210, %v1748, 0.0
      %v1938 = vadd.f32 %v1936, %v1937
      %v1939 = vsel %vm1210, %v1750, 0.0
      %v1940 = vadd.f32 %v1938, %v1939
      %v1941 = vsel %vm1210, %v1752, 0.0
      %v1942 = vadd.f32 %v1940, %v1941
      %v1943 = vsel %vm1210, %v1754, 0.0
      %v1944 = vadd.f32 %v1942, %v1943
      %v1945 = vsel %vm1210, %v1756, 0.0
      %v1946 = vadd.f32 %v1944, %v1945
      %v1947 = vsel %vm1210, %v1758, 0.0
      %v1948 = vadd.f32 %v1946, %v1947
      %v1949 = vsel %vm1210, %v1760, 0.0
      %v1950 = vadd.f32 %v1948, %v1949
      %v1951 = vsel %vm1210, %v1762, 0.0
      %v1952 = vadd.f32 %v1950, %v1951
      %v1953 = vsel %vm1210, %v1764, 0.0
      %v1954 = vadd.f32 %v1952, %v1953
      %v1955 = vsel %vm1210, %v1766, 0.0
      %v1956 = vadd.f32 %v1954, %v1955
      %v1957 = vsel %vm1210, %v1768, 0.0
      %v1958 = vadd.f32 %v1956, %v1957
      %v1959 = vsel %vm1210, %v1770, 0.0
      %v1960 = vadd.f32 %v1958, %v1959
      %v1961 = vsel %vm1210, %v1772, 0.0
      %v1962 = vadd.f32 %v1960, %v1961
      %v1963 = vsel %vm1210, %v1774, 0.0
      %v1964 = vadd.f32 %v1962, %v1963
      %v1965 = vsel %vm1210, %v1776, 0.0
      %v1966 = vadd.f32 %v1964, %v1965
      %v1967 = vsel %vm1210, %v1778, 0.0
      %v1968 = vadd.f32 %v1966, %v1967
      %v1969 = vsel %vm1210, %v1780, 0.0
      %v1970 = vadd.f32 %v1968, %v1969
      %v1971 = vsel %vm1210, %v1782, 0.0
      %v1972 = vadd.f32 %v1970, %v1971
      %v1973 = vsel %vm1210, %v1784, 0.0
      %v1974 = vadd.f32 %v1972, %v1973
      %v1975 = vsel %vm1210, %v1786, 0.0
      %v1976 = vadd.f32 %v1974, %v1975
      %v1977 = vsel %vm1210, %v1787, 0.0
      %v1978 = vsel %vm1210, %v1789, 0.0
      %v1979 = vadd.f32 %v1977, %v1978
      %v1980 = vsel %vm1210, %v1791, 0.0
      %v1981 = vadd.f32 %v1979, %v1980
      %v1982 = vsel %vm1210, %v1793, 0.0
      %v1983 = vadd.f32 %v1981, %v1982
      %v1984 = vsel %vm1210, %v1795, 0.0
      %v1985 = vadd.f32 %v1983, %v1984
      %v1986 = vsel %vm1210, %v1797, 0.0
      %v1987 = vadd.f32 %v1985, %v1986
      %v1988 = vsel %vm1210, %v1799, 0.0
      %v1989 = vadd.f32 %v1987, %v1988
      %v1990 = vsel %vm1210, %v1801, 0.0
      %v1991 = vadd.f32 %v1989, %v1990
      %v1992 = vsel %vm1210, %v1803, 0.0
      %v1993 = vadd.f32 %v1991, %v1992
      %v1994 = vsel %vm1210, %v1805, 0.0
      %v1995 = vadd.f32 %v1993, %v1994
      %v1996 = vsel %vm1210, %v1807, 0.0
      %v1997 = vadd.f32 %v1995, %v1996
      %v1998 = vsel %vm1210, %v1809, 0.0
      %v1999 = vadd.f32 %v1997, %v1998
      %v2000 = vsel %vm1210, %v1811, 0.0
      %v2001 = vadd.f32 %v1999, %v2000
      %v2002 = vsel %vm1210, %v1813, 0.0
      %v2003 = vadd.f32 %v2001, %v2002
      %v2004 = vsel %vm1210, %v1815, 0.0
      %v2005 = vadd.f32 %v2003, %v2004
      %v2006 = vsel %vm1210, %v1817, 0.0
      %v2007 = vadd.f32 %v2005, %v2006
      %v2008 = vsel %vm1210, %v1819, 0.0
      %v2009 = vadd.f32 %v2007, %v2008
      %v2010 = vsel %vm1210, %v1821, 0.0
      %v2011 = vadd.f32 %v2009, %v2010
      %v2012 = vsel %vm1210, %v1823, 0.0
      %v2013 = vadd.f32 %v2011, %v2012
      %v2014 = vsel %vm1210, %v1825, 0.0
      %v2015 = vadd.f32 %v2013, %v2014
      %v2016 = vsel %vm1210, %v1827, 0.0
      %v2017 = vadd.f32 %v2015, %v2016
      %v2018 = vsel %vm1210, %v1829, 0.0
      %v2019 = vadd.f32 %v2017, %v2018
      %v2020 = vsel %vm1210, %v1831, 0.0
      %v2021 = vadd.f32 %v2019, %v2020
      %v2022 = vsel %vm1210, %v1833, 0.0
      %v2023 = vadd.f32 %v2021, %v2022
      %v2024 = vsel %vm1210, %v1835, 0.0
      %v2025 = vadd.f32 %v2023, %v2024
      %v2026 = vsel %vm1210, %v1837, 0.0
      %v2027 = vadd.f32 %v2025, %v2026
      %v2028 = vsel %vm1210, %v1839, 0.0
      %v2029 = vadd.f32 %v2027, %v2028
      %v2030 = vsel %vm1210, %v1841, 0.0
      %v2031 = vadd.f32 %v2029, %v2030
      %v2032 = vsel %vm1210, %v1843, 0.0
      %v2033 = vadd.f32 %v2031, %v2032
      %v2034 = vsel %vm1210, %v1845, 0.0
      %v2035 = vadd.f32 %v2033, %v2034
      %v2036 = vsel %vm1210, %v1847, 0.0
      %v2037 = vadd.f32 %v2035, %v2036
      %v2038 = vsel %vm1210, %v1849, 0.0
      %v2039 = vadd.f32 %v2037, %v2038
      %v2040 = vsel %vm1210, %v1788, 0.0
      %v2041 = vsel %vm1210, %v1790, 0.0
      %v2042 = vadd.f32 %v2040, %v2041
      %v2043 = vsel %vm1210, %v1792, 0.0
      %v2044 = vadd.f32 %v2042, %v2043
      %v2045 = vsel %vm1210, %v1794, 0.0
      %v2046 = vadd.f32 %v2044, %v2045
      %v2047 = vsel %vm1210, %v1796, 0.0
      %v2048 = vadd.f32 %v2046, %v2047
      %v2049 = vsel %vm1210, %v1798, 0.0
      %v2050 = vadd.f32 %v2048, %v2049
      %v2051 = vsel %vm1210, %v1800, 0.0
      %v2052 = vadd.f32 %v2050, %v2051
      %v2053 = vsel %vm1210, %v1802, 0.0
      %v2054 = vadd.f32 %v2052, %v2053
      %v2055 = vsel %vm1210, %v1804, 0.0
      %v2056 = vadd.f32 %v2054, %v2055
      %v2057 = vsel %vm1210, %v1806, 0.0
      %v2058 = vadd.f32 %v2056, %v2057
      %v2059 = vsel %vm1210, %v1808, 0.0
      %v2060 = vadd.f32 %v2058, %v2059
      %v2061 = vsel %vm1210, %v1810, 0.0
      %v2062 = vadd.f32 %v2060, %v2061
      %v2063 = vsel %vm1210, %v1812, 0.0
      %v2064 = vadd.f32 %v2062, %v2063
      %v2065 = vsel %vm1210, %v1814, 0.0
      %v2066 = vadd.f32 %v2064, %v2065
      %v2067 = vsel %vm1210, %v1816, 0.0
      %v2068 = vadd.f32 %v2066, %v2067
      %v2069 = vsel %vm1210, %v1818, 0.0
      %v2070 = vadd.f32 %v2068, %v2069
      %v2071 = vsel %vm1210, %v1820, 0.0
      %v2072 = vadd.f32 %v2070, %v2071
      %v2073 = vsel %vm1210, %v1822, 0.0
      %v2074 = vadd.f32 %v2072, %v2073
      %v2075 = vsel %vm1210, %v1824, 0.0
      %v2076 = vadd.f32 %v2074, %v2075
      %v2077 = vsel %vm1210, %v1826, 0.0
      %v2078 = vadd.f32 %v2076, %v2077
      %v2079 = vsel %vm1210, %v1828, 0.0
      %v2080 = vadd.f32 %v2078, %v2079
      %v2081 = vsel %vm1210, %v1830, 0.0
      %v2082 = vadd.f32 %v2080, %v2081
      %v2083 = vsel %vm1210, %v1832, 0.0
      %v2084 = vadd.f32 %v2082, %v2083
      %v2085 = vsel %vm1210, %v1834, 0.0
      %v2086 = vadd.f32 %v2084, %v2085
      %v2087 = vsel %vm1210, %v1836, 0.0
      %v2088 = vadd.f32 %v2086, %v2087
      %v2089 = vsel %vm1210, %v1838, 0.0
      %v2090 = vadd.f32 %v2088, %v2089
      %v2091 = vsel %vm1210, %v1840, 0.0
      %v2092 = vadd.f32 %v2090, %v2091
      %v2093 = vsel %vm1210, %v1842, 0.0
      %v2094 = vadd.f32 %v2092, %v2093
      %v2095 = vsel %vm1210, %v1844, 0.0
      %v2096 = vadd.f32 %v2094, %v2095
      %v2097 = vsel %vm1210, %v1846, 0.0
      %v2098 = vadd.f32 %v2096, %v2097
      %v2099 = vsel %vm1210, %v1848, 0.0
      %v2100 = vadd.f32 %v2098, %v2099
      %v2101 = vsel %vm1210, %v1850, 0.0
      %v2102 = vadd.f32 %v2100, %v2101
      %2103 = vst.msk [vmem:[%s297] sm:$0xff] %vm1210, %v1913
      %2104 = vst.msk [vmem:[%s297 + $0x8] sm:$0xff] %vm1210, %v1976
      %2105 = vst.msk [vmem:[%s297 + $0x10] sm:$0xff] %vm1210, %v2039
      %2106 = vst.msk [vmem:[%s297 + $0x18] sm:$0xff] %vm1210, %v2102
      %p2107 = scmp.lt.s32.totalorder %s17, 1
      %s2108 = scalar_select %p2107, %s17, 1
      %s2109 = smul.addr %s2108, 4
      %s2110 = smul.addr %s2109, 8
      %s2111 = scalar_lea.vmem %s4, %s2110
      %p2112 = scmp.lt.s32.totalorder %s17, 1
      %s2113 = scalar_select %p2112, %s17, 1
      %s2114 = smul.addr %s2113, 4
      %s2115 = smul.addr %s2114, 8
      %s2116 = scalar_lea.vmem %s5, %s2115
      // Predicated region
      $region37: #{_lambda_.7} parent=35 // pred_check
        %p2117 = pneg %p139
      $region38: #{_lambda_.7} parent=35 // pred_check_branch
        %2119 = sbr.rel (%p2117) target = $region40
      $region39: #{_lambda_.7} parent=35 // pred_region
        _
      $region40: #{_lambda_.7} parent=35 // pred_fallthru
        _
      // Predicated region
      $region41: #{_lambda_.7} parent=35 // pred_check
        %p2120 = pneg %p165
      $region42: #{_lambda_.7} parent=35 // pred_check_branch
        %2122 = sbr.rel (%p2120) target = $region44
      $region43: #{_lambda_.7} parent=35 // pred_region
        _
      $region44: #{_lambda_.7} parent=35 // pred_fallthru
        _
    $region36: #{_lambda_.7} parent=5 // pred_fallthru
      _
    %p2123 = scmp.le.s32.totalorder 2, %s12
    // Predicated region
    $region45: #{_lambda_.7} parent=5 // pred_check
      %p2124 = pneg %p2123
    $region46: #{_lambda_.7} parent=5 // pred_check_branch
      %2126 = sbr.rel (%p2124) target = $region48
    $region47: #{_lambda_.7} parent=5 // pred_region
      %s2127 = ssub.s32 %s12, 2
      // Predicated region
      $region49: #{_lambda_.7} parent=47 // pred_check
        %p2128 = pneg %p145
      $region50: #{_lambda_.7} parent=47 // pred_check_branch
        %2130 = sbr.rel (%p2128) target = $region52
      $region51: #{_lambda_.7} parent=47 // pred_region
        %p2131 = scmp.lt.s32.totalorder %s18, 1
        %s2132 = scalar_select %p2131, %s18, 1
        %s2133 = smul.addr %s2132, 4
        %s2134 = smul.addr %s2133, 8
        %s2135 = scalar_lea.vmem %s4, %s2134
      $region52: #{_lambda_.7} parent=47 // pred_fallthru
        _
      // Predicated region
      $region53: #{_lambda_.7} parent=47 // pred_check
        %p2136 = pneg %p171
      $region54: #{_lambda_.7} parent=47 // pred_check_branch
        %2138 = sbr.rel (%p2136) target = $region56
      $region55: #{_lambda_.7} parent=47 // pred_region
        %p2139 = scmp.lt.s32.totalorder %s18, 1
        %s2140 = scalar_select %p2139, %s18, 1
        %s2141 = smul.addr %s2140, 4
        %s2142 = smul.addr %s2141, 8
        %s2143 = scalar_lea.vmem %s5, %s2142
      $region56: #{_lambda_.7} parent=47 // pred_fallthru
        _
    $region48: #{_lambda_.7} parent=5 // pred_fallthru
      _
  $region6: #{_lambda_.7} parent=0 // loop_footer
    %s16 = sadd.s32 1, %s12
  $region7: #{_lambda_.7} parent=0 // loop_footer_branch
    %11 = sbr.rel target = $region3
  $region8: #{_lambda_.7} parent=0 // loop_exit
    _

// kernel: _lambda_.8
$region0: #{_lambda_.8}
  #allocation0 [shape = 'u32[]', space=smem, size = 0x4, offset = 0x4, fixed_abs, tag = 'smem constant byte address 0x4 - core index']
  #allocation1 [shape = 'u32[72,128]{1,0:T(1,128)}', space=vmem, size = 0x9000, scoped, tag = 'internal scratch']
  %s0 = inlined_call_operand.vmem [shape: f32[512,32], index: 0, kind: input, shape index: {}]
  %s1 = inlined_call_operand.vmem [shape: f32[512,16], index: 1, kind: input, shape index: {}]
  %s2 = inlined_call_operand.vmem [shape: f32[32,16], index: 2, kind: input, shape index: {}]
  %s3 = inlined_call_operand.vmem [shape: f32[1,16], index: 3, kind: input, shape index: {}]
  %s4 = inlined_call_operand.vmem [shape: f32[512,16], index: 4, kind: output, shape index: {}]
  %s5 = sld [smem:[#allocation0]]
  $region49: #{_lambda_.8} parent=0
    _
  %s7 = ssub.s32 1, %s5
  %s8 = scalar_select 0, %s7, %s5
  loop: start=0, step=1, limit=4
  $region2: #{_lambda_.8} parent=0 // loop_pre_header
    _
  $region3: #{_lambda_.8} parent=0 // loop_header
    %s10 = sphi 0, %s14
    %p11 = scmp.ge.s32.totalorder %s10, 4
    %s20 = sphi 0, %s22
    %s23 = sphi 0, %s20
    %s24 = sphi 0, %s23
    %s40 = sphi 0, %s24
    %s46 = sphi 0, %s48
    %s49 = sphi 0, %s46
    %s50 = sphi 0, %s49
    %s66 = sphi 0, %s50
    %s70 = sphi 0, %s70
    %s72 = sphi 0, %s70
    %s73 = sphi 0, %s72
    %s87 = sphi 0, %s73
    %s91 = sphi 0, %s91
    %s93 = sphi 0, %s91
    %s94 = sphi 0, %s93
    %s108 = sphi 0, %s94
    %s114 = sphi 0, %s116
    %s117 = sphi 0, %s114
    %s118 = sphi 0, %s117
    %s134 = sphi 0, %s118
  $region4: #{_lambda_.8} parent=0 // loop_header_branch
    %13 = sbr.rel (%p11) target = $region8
  $region5: #{_lambda_.8} parent=0 // loop_body
    %s15 = ssub.s32 %s10, 1
    %s16 = ssub.s32 %s10, 2
    %s17 = sadd.s32 %s10, 1
    %s18 = ssub.s32 %s10, %s17
    %p19 = scmp.eq.s32.totalorder %s18, 0
    %s21 = sadd.s32 %s20, 1
    %s22 = scalar_select %p19, %s20, %s21
    %p25 = pneg %p19
    %p26 = scmp.eq.s32.totalorder %s10, 1
    %p27 = por %p25, %p26
    %p28 = scmp.ne.s32.totalorder %s20, %s23
    %p29 = scmp.eq.s32.totalorder %s10, 0
    %p30 = por %p28, %p29
    %p31 = scmp.ne.s32.totalorder %s20, %s23
    %p32 = scmp.eq.s32.totalorder %s15, 1
    %p33 = por %p31, %p32
    %p34 = scmp.ne.s32.totalorder %s23, %s24
    %p35 = scmp.eq.s32.totalorder %s15, 0
    %p36 = por %p34, %p35
    %p37 = scmp.ne.s32.totalorder %s23, %s24
    %p38 = scmp.eq.s32.totalorder %s16, 1
    %p39 = por %p37, %p38
    %p41 = scmp.ne.s32.totalorder %s24, %s40
    %p42 = scmp.eq.s32.totalorder %s16, 0
    %p43 = por %p41, %p42
    %s44 = ssub.s32 %s10, %s17
    %p45 = scmp.eq.s32.totalorder %s44, 0
    %s47 = sadd.s32 %s46, 1
    %s48 = scalar_select %p45, %s46, %s47
    %p51 = pneg %p45
    %p52 = scmp.eq.s32.totalorder %s10, 1
    %p53 = por %p51, %p52
    %p54 = scmp.ne.s32.totalorder %s46, %s49
    %p55 = scmp.eq.s32.totalorder %s10, 0
    %p56 = por %p54, %p55
    %p57 = scmp.ne.s32.totalorder %s46, %s49
    %p58 = scmp.eq.s32.totalorder %s15, 1
    %p59 = por %p57, %p58
    %p60 = scmp.ne.s32.totalorder %s49, %s50
    %p61 = scmp.eq.s32.totalorder %s15, 0
    %p62 = por %p60, %p61
    %p63 = scmp.ne.s32.totalorder %s49, %s50
    %p64 = scmp.eq.s32.totalorder %s16, 1
    %p65 = por %p63, %p64
    %p67 = scmp.ne.s32.totalorder %s50, %s66
    %p68 = scmp.eq.s32.totalorder %s16, 0
    %p69 = por %p67, %p68
    %s71 = sadd.s32 %s70, 1
    %p74 = scmp.eq.s32.totalorder %s10, 1
    %p75 = scmp.ne.s32.totalorder %s70, %s72
    %p76 = scmp.eq.s32.totalorder %s10, 0
    %p77 = por %p75, %p76
    %p78 = scmp.ne.s32.totalorder %s70, %s72
    %p79 = scmp.eq.s32.totalorder %s15, 1
    %p80 = por %p78, %p79
    %p81 = scmp.ne.s32.totalorder %s72, %s73
    %p82 = scmp.eq.s32.totalorder %s15, 0
    %p83 = por %p81, %p82
    %p84 = scmp.ne.s32.totalorder %s72, %s73
    %p85 = scmp.eq.s32.totalorder %s16, 1
    %p86 = por %p84, %p85
    %p88 = scmp.ne.s32.totalorder %s73, %s87
    %p89 = scmp.eq.s32.totalorder %s16, 0
    %p90 = por %p88, %p89
    %s92 = sadd.s32 %s91, 1
    %p95 = scmp.eq.s32.totalorder %s10, 1
    %p96 = scmp.ne.s32.totalorder %s91, %s93
    %p97 = scmp.eq.s32.totalorder %s10, 0
    %p98 = por %p96, %p97
    %p99 = scmp.ne.s32.totalorder %s91, %s93
    %p100 = scmp.eq.s32.totalorder %s15, 1
    %p101 = por %p99, %p100
    %p102 = scmp.ne.s32.totalorder %s93, %s94
    %p103 = scmp.eq.s32.totalorder %s15, 0
    %p104 = por %p102, %p103
    %p105 = scmp.ne.s32.totalorder %s93, %s94
    %p106 = scmp.eq.s32.totalorder %s16, 1
    %p107 = por %p105, %p106
    %p109 = scmp.ne.s32.totalorder %s94, %s108
    %p110 = scmp.eq.s32.totalorder %s16, 0
    %p111 = por %p109, %p110
    %s112 = ssub.s32 %s10, %s17
    %p113 = scmp.eq.s32.totalorder %s112, 0
    %s115 = sadd.s32 %s114, 1
    %s116 = scalar_select %p113, %s114, %s115
    %p119 = pneg %p113
    %p120 = scmp.eq.s32.totalorder %s10, 1
    %p121 = por %p119, %p120
    %p122 = scmp.ne.s32.totalorder %s114, %s117
    %p123 = scmp.eq.s32.totalorder %s10, 0
    %p124 = por %p122, %p123
    %p125 = scmp.ne.s32.totalorder %s114, %s117
    %p126 = scmp.eq.s32.totalorder %s15, 1
    %p127 = por %p125, %p126
    %p128 = scmp.ne.s32.totalorder %s117, %s118
    %p129 = scmp.eq.s32.totalorder %s15, 0
    %p130 = por %p128, %p129
    %p131 = scmp.ne.s32.totalorder %s117, %s118
    %p132 = scmp.eq.s32.totalorder %s16, 1
    %p133 = por %p131, %p132
    %p135 = scmp.ne.s32.totalorder %s118, %s134
    %p136 = scmp.eq.s32.totalorder %s16, 0
    %p137 = por %p135, %p136
    %p138 = scmp.le.s32.totalorder 1, %s10
    %p139 = scmp.lt.s32.totalorder %s10, 3
    %p140 = pnand %p138, %p139
    %p141 = pneg %p140
    // Predicated region
    $region9: #{_lambda_.8} parent=5 // pred_check
      _
    $region10: #{_lambda_.8} parent=5 // pred_check_branch
      %143 = sbr.rel (%p140) target = $region12
    $region11: #{_lambda_.8} parent=5 // pred_region
      %s144 = ssub.s32 %s10, 1
      // Predicated region
      $region13: #{_lambda_.8} parent=11 // pred_check
        %p145 = pneg %p83
      $region14: #{_lambda_.8} parent=11 // pred_check_branch
        %147 = sbr.rel (%p145) target = $region16
      $region15: #{_lambda_.8} parent=11 // pred_region
        _
      $region16: #{_lambda_.8} parent=11 // pred_fallthru
        _
      // Predicated region
      $region17: #{_lambda_.8} parent=11 // pred_check
        %p148 = pneg %p104
      $region18: #{_lambda_.8} parent=11 // pred_check_branch
        %150 = sbr.rel (%p148) target = $region20
      $region19: #{_lambda_.8} parent=11 // pred_region
        _
      $region20: #{_lambda_.8} parent=11 // pred_fallthru
        _
    $region12: #{_lambda_.8} parent=5 // pred_fallthru
      _
    %p151 = scmp.lt.s32.totalorder %s10, 2
    // Predicated region
    $region21: #{_lambda_.8} parent=5 // pred_check
      %p152 = pneg %p151
    $region22: #{_lambda_.8} parent=5 // pred_check_branch
      %154 = sbr.rel (%p152) target = $region24
    $region23: #{_lambda_.8} parent=5 // pred_region
      // Predicated region
      $region25: #{_lambda_.8} parent=23 // pred_check
        %p155 = pneg %p30
      $region26: #{_lambda_.8} parent=23 // pred_check_branch
        %157 = sbr.rel (%p155) target = $region28
      $region27: #{_lambda_.8} parent=23 // pred_region
        %s158 = smul.u32 32, %s10
        %p159 = scmp.lt.s32.totalorder %s158, 63
        %s160 = scalar_select %p159, %s158, 63
        %s161 = smul.addr %s160, 8
        %s162 = scalar_lea.vmem %s0, %s161
        %s163 = smul.u32 32, %s10
      $region28: #{_lambda_.8} parent=23 // pred_fallthru
        _
      // Predicated region
      $region29: #{_lambda_.8} parent=23 // pred_check
        %p164 = pneg %p56
      $region30: #{_lambda_.8} parent=23 // pred_check_branch
        %166 = sbr.rel (%p164) target = $region32
      $region31: #{_lambda_.8} parent=23 // pred_region
        %s167 = smul.u32 32, %s10
        %p168 = scmp.lt.s32.totalorder %s167, 63
        %s169 = scalar_select %p168, %s167, 63
        %s170 = smul.addr %s169, 8
        %s171 = scalar_lea.vmem %s1, %s170
        %s172 = smul.u32 32, %s10
      $region32: #{_lambda_.8} parent=23 // pred_fallthru
        _
    $region24: #{_lambda_.8} parent=5 // pred_fallthru
      _
    %p173 = scmp.le.s32.totalorder 1, %s10
    %p174 = scmp.lt.s32.totalorder %s10, 3
    %p175 = pnand %p173, %p174
    %p176 = pneg %p175
    // Predicated region
    $region33: #{_lambda_.8} parent=5 // pred_check
      _
    $region34: #{_lambda_.8} parent=5 // pred_check_branch
      %178 = sbr.rel (%p175) target = $region36
    $region35: #{_lambda_.8} parent=5 // pred_region
      %s179 = ssub.s32 %s10, 1
      %s180 = smul.u32 32, %s15
      %p181 = scmp.lt.s32.totalorder %s180, 63
      %s182 = scalar_select %p181, %s180, 63
      %s183 = smul.addr %s182, 8
      %s184 = scalar_lea.vmem %s0, %s183
      %p185 = pneg %p36
      %p186 = pneg %p33
      %s187 = smul.u32 32, %s15
      %p188 = scmp.lt.s32.totalorder %s187, 63
      %s189 = scalar_select %p188, %s187, 63
      %s190 = smul.addr %s189, 8
      %s191 = scalar_lea.vmem %s1, %s190
      %p192 = pneg %p62
      %p193 = pneg %p59
      %p194 = pneg %p83
      %p195 = pneg %p80
      %p196 = pneg %p104
      %p197 = pneg %p101
      %p198 = pneg %p130
      %p199 = pneg %p127
      %s200 = smul.u32 32, %s15
      %p201 = scmp.lt.s32.totalorder %s200, 63
      %s202 = scalar_select %p201, %s200, 63
      %s203 = smul.addr %s202, 8
      %s204 = scalar_lea.vmem %s4, %s203
      %s205 = smul.u32 32, %s15
      %p206 = scmp.lt.s32.totalorder %s205, 63
      %s207 = scalar_select %p206, %s205, 63
      %s208 = smul.addr %s207, 8
      %s209 = scalar_lea.vmem %s0, %s208
      %s210 = smul.u32 32, %s15
      %s211 = smul.u32 32, %s15
      %p212 = scmp.lt.s32.totalorder %s211, 63
      %s213 = scalar_select %p212, %s211, 63
      %s214 = smul.addr %s213, 8
      %s215 = scalar_lea.vmem %s1, %s214
      %s216 = smul.u32 32, %s15
      %s217 = smul.u32 32, %s15
      %p218 = scmp.lt.s32.totalorder %s217, 63
      %s219 = scalar_select %p218, %s217, 63
      %s220 = smul.addr %s219, 8
      %s221 = scalar_lea.vmem %s4, %s220
      %s222 = smul.u32 32, %s15
      %v223 = vld [vmem:[%s209] sm:$0xff]
      %v224 = vld [vmem:[%s209 + $0x8] sm:$0xff]
      %v225 = vld [vmem:[%s209 + $0x10] sm:$0xff]
      %v226 = vld [vmem:[%s209 + $0x18] sm:$0xff]
      %v227 = vld [vmem:[%s209 + $0x20] sm:$0xff]
      %v228 = vld [vmem:[%s209 + $0x28] sm:$0xff]
      %v229 = vld [vmem:[%s209 + $0x30] sm:$0xff]
      %v230 = vld [vmem:[%s209 + $0x38] sm:$0xff]
      %v231 = vld [vmem:[%s209 + $0x40] sm:$0xff]
      %v232 = vld [vmem:[%s209 + $0x48] sm:$0xff]
      %v233 = vld [vmem:[%s209 + $0x50] sm:$0xff]
      %v234 = vld [vmem:[%s209 + $0x58] sm:$0xff]
      %v235 = vld [vmem:[%s209 + $0x60] sm:$0xff]
      %v236 = vld [vmem:[%s209 + $0x68] sm:$0xff]
      %v237 = vld [vmem:[%s209 + $0x70] sm:$0xff]
      %v238 = vld [vmem:[%s209 + $0x78] sm:$0xff]
      %v239 = vld [vmem:[%s209 + $0x80] sm:$0xff]
      %v240 = vld [vmem:[%s209 + $0x88] sm:$0xff]
      %v241 = vld [vmem:[%s209 + $0x90] sm:$0xff]
      %v242 = vld [vmem:[%s209 + $0x98] sm:$0xff]
      %v243 = vld [vmem:[%s209 + $0xa0] sm:$0xff]
      %v244 = vld [vmem:[%s209 + $0xa8] sm:$0xff]
      %v245 = vld [vmem:[%s209 + $0xb0] sm:$0xff]
      %v246 = vld [vmem:[%s209 + $0xb8] sm:$0xff]
      %v247 = vld [vmem:[%s209 + $0xc0] sm:$0xff]
      %v248 = vld [vmem:[%s209 + $0xc8] sm:$0xff]
      %v249 = vld [vmem:[%s209 + $0xd0] sm:$0xff]
      %v250 = vld [vmem:[%s209 + $0xd8] sm:$0xff]
      %v251 = vld [vmem:[%s209 + $0xe0] sm:$0xff]
      %v252 = vld [vmem:[%s209 + $0xe8] sm:$0xff]
      %v253 = vld [vmem:[%s209 + $0xf0] sm:$0xff]
      %v254 = vld [vmem:[%s209 + $0xf8] sm:$0xff]
      %v255 = vld [vmem:[%s2] sm:$0xff]
      %v256 = vld [vmem:[%s2 + $0x8] sm:$0xff]
      %v257 = vld [vmem:[%s2 + $0x10] sm:$0xff]
      %v258 = vld [vmem:[%s2 + $0x18] sm:$0xff]
      %v259 = vld [vmem:[%s3] sm:$0x1]
      %v261 = vperm.slane %v259, 0
      %vm263 = vcmask 261120
      %v265 = vsel %vm263, %v223, 0
      %v268 = vsel %vm263, %v224, 0
      %v271 = vsel %vm263, %v225, 0
      %v274 = vsel %vm263, %v226, 0
      %v277 = vsel %vm263, %v227, 0
      %v280 = vsel %vm263, %v228, 0
      %v283 = vsel %vm263, %v229, 0
      %v286 = vsel %vm263, %v230, 0
      %v289 = vsel %vm263, %v231, 0
      %v292 = vsel %vm263, %v232, 0
      %v295 = vsel %vm263, %v233, 0
      %v298 = vsel %vm263, %v234, 0
      %v301 = vsel %vm263, %v235, 0
      %v304 = vsel %vm263, %v236, 0
      %v307 = vsel %vm263, %v237, 0
      %v310 = vsel %vm263, %v238, 0
      %v313 = vsel %vm263, %v239, 0
      %v316 = vsel %vm263, %v240, 0
      %v319 = vsel %vm263, %v241, 0
      %v322 = vsel %vm263, %v242, 0
      %v325 = vsel %vm263, %v243, 0
      %v328 = vsel %vm263, %v244, 0
      %v331 = vsel %vm263, %v245, 0
      %v334 = vsel %vm263, %v246, 0
      %v337 = vsel %vm263, %v247, 0
      %v340 = vsel %vm263, %v248, 0
      %v343 = vsel %vm263, %v249, 0
      %v346 = vsel %vm263, %v250, 0
      %v349 = vsel %vm263, %v251, 0
      %v352 = vsel %vm263, %v252, 0
      %v355 = vsel %vm263, %v253, 0
      %v358 = vsel %vm263, %v254, 0
      %360 = vmatpush.msra.mxu0 0.0
      %361 = vmatpush.msra.mxu0 0.0
      %362 = vmatpush.msra.mxu0 0.0
      %363 = vmatpush.msra.mxu0 0.0
      %364 = vmatpush.msra.mxu0 0.0
      %365 = vmatpush.msra.mxu0 0.0
      %366 = vmatpush.msra.mxu0 0.0
      %367 = vmatpush.msra.mxu0 0.0
      %368 = vmatpush.msra.mxu0 0.0
      %369 = vmatpush.msra.mxu0 0.0
      %370 = vmatpush.msra.mxu0 0.0
      %371 = vmatpush.msra.mxu0 0.0
      %372 = vmatpush.msra.mxu0 %v258
      %373 = vmatpush.msra.mxu0 %v257
      %374 = vmatpush.msra.mxu0 %v256
      %375 = vmatpush.msra.mxu0 %v255
      %376 = vmatmul.f32.gmra.mxu0 %v265
      %v377 = vpop.f32.mrf.mxu0
      %v378 = vadd.f32 %v261, %v377
      %379 = vmatmul.f32.gmra.mxu0 %v268
      %v380 = vpop.f32.mrf.mxu0
      %v381 = vadd.f32 %v261, %v380
      %382 = vmatmul.f32.gmra.mxu0 %v271
      %v383 = vpop.f32.mrf.mxu0
      %v384 = vadd.f32 %v261, %v383
      %385 = vmatmul.f32.gmra.mxu0 %v274
      %v386 = vpop.f32.mrf.mxu0
      %v387 = vadd.f32 %v261, %v386
      %388 = vmatmul.f32.gmra.mxu0 %v277
      %v389 = vpop.f32.mrf.mxu0
      %v390 = vadd.f32 %v261, %v389
      %391 = vmatmul.f32.gmra.mxu0 %v280
      %v392 = vpop.f32.mrf.mxu0
      %v393 = vadd.f32 %v261, %v392
      %394 = vmatmul.f32.gmra.mxu0 %v283
      %v395 = vpop.f32.mrf.mxu0
      %v396 = vadd.f32 %v261, %v395
      %397 = vmatmul.f32.gmra.mxu0 %v286
      %v398 = vpop.f32.mrf.mxu0
      %v399 = vadd.f32 %v261, %v398
      %400 = vmatmul.f32.gmra.mxu0 %v289
      %v401 = vpop.f32.mrf.mxu0
      %v402 = vadd.f32 %v261, %v401
      %403 = vmatmul.f32.gmra.mxu0 %v292
      %v404 = vpop.f32.mrf.mxu0
      %v405 = vadd.f32 %v261, %v404
      %406 = vmatmul.f32.gmra.mxu0 %v295
      %v407 = vpop.f32.mrf.mxu0
      %v408 = vadd.f32 %v261, %v407
      %409 = vmatmul.f32.gmra.mxu0 %v298
      %v410 = vpop.f32.mrf.mxu0
      %v411 = vadd.f32 %v261, %v410
      %412 = vmatmul.f32.gmra.mxu0 %v301
      %v413 = vpop.f32.mrf.mxu0
      %v414 = vadd.f32 %v261, %v413
      %415 = vmatmul.f32.gmra.mxu0 %v304
      %v416 = vpop.f32.mrf.mxu0
      %v417 = vadd.f32 %v261, %v416
      %418 = vmatmul.f32.gmra.mxu0 %v307
      %v419 = vpop.f32.mrf.mxu0
      %v420 = vadd.f32 %v261, %v419
      %421 = vmatmul.f32.gmra.mxu0 %v310
      %v422 = vpop.f32.mrf.mxu0
      %v423 = vadd.f32 %v261, %v422
      %424 = vmatmul.f32.gmra.mxu0 %v313
      %v425 = vpop.f32.mrf.mxu0
      %v426 = vadd.f32 %v261, %v425
      %427 = vmatmul.f32.gmra.mxu0 %v316
      %v428 = vpop.f32.mrf.mxu0
      %v429 = vadd.f32 %v261, %v428
      %430 = vmatmul.f32.gmra.mxu0 %v319
      %v431 = vpop.f32.mrf.mxu0
      %v432 = vadd.f32 %v261, %v431
      %433 = vmatmul.f32.gmra.mxu0 %v322
      %v434 = vpop.f32.mrf.mxu0
      %v435 = vadd.f32 %v261, %v434
      %436 = vmatmul.f32.gmra.mxu0 %v325
      %v437 = vpop.f32.mrf.mxu0
      %v438 = vadd.f32 %v261, %v437
      %439 = vmatmul.f32.gmra.mxu0 %v328
      %v440 = vpop.f32.mrf.mxu0
      %v441 = vadd.f32 %v261, %v440
      %442 = vmatmul.f32.gmra.mxu0 %v331
      %v443 = vpop.f32.mrf.mxu0
      %v444 = vadd.f32 %v261, %v443
      %445 = vmatmul.f32.gmra.mxu0 %v334
      %v446 = vpop.f32.mrf.mxu0
      %v447 = vadd.f32 %v261, %v446
      %448 = vmatmul.f32.gmra.mxu0 %v337
      %v449 = vpop.f32.mrf.mxu0
      %v450 = vadd.f32 %v261, %v449
      %451 = vmatmul.f32.gmra.mxu0 %v340
      %v452 = vpop.f32.mrf.mxu0
      %v453 = vadd.f32 %v261, %v452
      %454 = vmatmul.f32.gmra.mxu0 %v343
      %v455 = vpop.f32.mrf.mxu0
      %v456 = vadd.f32 %v261, %v455
      %457 = vmatmul.f32.gmra.mxu0 %v346
      %v458 = vpop.f32.mrf.mxu0
      %v459 = vadd.f32 %v261, %v458
      %460 = vmatmul.f32.gmra.mxu0 %v349
      %v461 = vpop.f32.mrf.mxu0
      %v462 = vadd.f32 %v261, %v461
      %463 = vmatmul.f32.gmra.mxu0 %v352
      %v464 = vpop.f32.mrf.mxu0
      %v465 = vadd.f32 %v261, %v464
      %466 = vmatmul.f32.gmra.mxu0 %v355
      %v467 = vpop.f32.mrf.mxu0
      %v468 = vadd.f32 %v261, %v467
      %469 = vmatmul.f32.gmra.mxu0 %v358
      %v470 = vpop.f32.mrf.mxu0
      %v471 = vadd.f32 %v261, %v470
      %472 = vdwg.mxu0
      %v473 = vld [vmem:[%s215] sm:$0xff]
      %v474 = vld [vmem:[%s215 + $0x8] sm:$0xff]
      %v475 = vld [vmem:[%s215 + $0x10] sm:$0xff]
      %v476 = vld [vmem:[%s215 + $0x18] sm:$0xff]
      %v477 = vld [vmem:[%s215 + $0x20] sm:$0xff]
      %v478 = vld [vmem:[%s215 + $0x28] sm:$0xff]
      %v479 = vld [vmem:[%s215 + $0x30] sm:$0xff]
      %v480 = vld [vmem:[%s215 + $0x38] sm:$0xff]
      %v481 = vld [vmem:[%s215 + $0x40] sm:$0xff]
      %v482 = vld [vmem:[%s215 + $0x48] sm:$0xff]
      %v483 = vld [vmem:[%s215 + $0x50] sm:$0xff]
      %v484 = vld [vmem:[%s215 + $0x58] sm:$0xff]
      %v485 = vld [vmem:[%s215 + $0x60] sm:$0xff]
      %v486 = vld [vmem:[%s215 + $0x68] sm:$0xff]
      %v487 = vld [vmem:[%s215 + $0x70] sm:$0xff]
      %v488 = vld [vmem:[%s215 + $0x78] sm:$0xff]
      %v489 = vld [vmem:[%s215 + $0x80] sm:$0xff]
      %v490 = vld [vmem:[%s215 + $0x88] sm:$0xff]
      %v491 = vld [vmem:[%s215 + $0x90] sm:$0xff]
      %v492 = vld [vmem:[%s215 + $0x98] sm:$0xff]
      %v493 = vld [vmem:[%s215 + $0xa0] sm:$0xff]
      %v494 = vld [vmem:[%s215 + $0xa8] sm:$0xff]
      %v495 = vld [vmem:[%s215 + $0xb0] sm:$0xff]
      %v496 = vld [vmem:[%s215 + $0xb8] sm:$0xff]
      %v497 = vld [vmem:[%s215 + $0xc0] sm:$0xff]
      %v498 = vld [vmem:[%s215 + $0xc8] sm:$0xff]
      %v499 = vld [vmem:[%s215 + $0xd0] sm:$0xff]
      %v500 = vld [vmem:[%s215 + $0xd8] sm:$0xff]
      %v501 = vld [vmem:[%s215 + $0xe0] sm:$0xff]
      %v502 = vld [vmem:[%s215 + $0xe8] sm:$0xff]
      %v503 = vld [vmem:[%s215 + $0xf0] sm:$0xff]
      %v504 = vld [vmem:[%s215 + $0xf8] sm:$0xff]
      %v505 = vadd.f32 %v378, %v473
      %v506 = vadd.f32 %v381, %v474
      %v507 = vadd.f32 %v384, %v475
      %v508 = vadd.f32 %v387, %v476
      %v509 = vadd.f32 %v390, %v477
      %v510 = vadd.f32 %v393, %v478
      %v511 = vadd.f32 %v396, %v479
      %v512 = vadd.f32 %v399, %v480
      %v513 = vadd.f32 %v402, %v481
      %v514 = vadd.f32 %v405, %v482
      %v515 = vadd.f32 %v408, %v483
      %v516 = vadd.f32 %v411, %v484
      %v517 = vadd.f32 %v414, %v485
      %v518 = vadd.f32 %v417, %v486
      %v519 = vadd.f32 %v420, %v487
      %v520 = vadd.f32 %v423, %v488
      %v521 = vadd.f32 %v426, %v489
      %v522 = vadd.f32 %v429, %v490
      %v523 = vadd.f32 %v432, %v491
      %v524 = vadd.f32 %v435, %v492
      %v525 = vadd.f32 %v438, %v493
      %v526 = vadd.f32 %v441, %v494
      %v527 = vadd.f32 %v444, %v495
      %v528 = vadd.f32 %v447, %v496
      %v529 = vadd.f32 %v450, %v497
      %v530 = vadd.f32 %v453, %v498
      %v531 = vadd.f32 %v456, %v499
      %v532 = vadd.f32 %v459, %v500
      %v533 = vadd.f32 %v462, %v501
      %v534 = vadd.f32 %v465, %v502
      %v535 = vadd.f32 %v468, %v503
      %v536 = vadd.f32 %v471, %v504
      %v537 = vxor.u32 %v505, 2147483648
      %v538 = vxor.u32 %v506, 2147483648
      %v539 = vxor.u32 %v507, 2147483648
      %v540 = vxor.u32 %v508, 2147483648
      %v541 = vxor.u32 %v509, 2147483648
      %v542 = vxor.u32 %v510, 2147483648
      %v543 = vxor.u32 %v511, 2147483648
      %v544 = vxor.u32 %v512, 2147483648
      %v545 = vxor.u32 %v513, 2147483648
      %v546 = vxor.u32 %v514, 2147483648
      %v547 = vxor.u32 %v515, 2147483648
      %v548 = vxor.u32 %v516, 2147483648
      %v549 = vxor.u32 %v517, 2147483648
      %v550 = vxor.u32 %v518, 2147483648
      %v551 = vxor.u32 %v519, 2147483648
      %v552 = vxor.u32 %v520, 2147483648
      %v553 = vxor.u32 %v521, 2147483648
      %v554 = vxor.u32 %v522, 2147483648
      %v555 = vxor.u32 %v523, 2147483648
      %v556 = vxor.u32 %v524, 2147483648
      %v557 = vxor.u32 %v525, 2147483648
      %v558 = vxor.u32 %v526, 2147483648
      %v559 = vxor.u32 %v527, 2147483648
      %v560 = vxor.u32 %v528, 2147483648
      %v561 = vxor.u32 %v529, 2147483648
      %v562 = vxor.u32 %v530, 2147483648
      %v563 = vxor.u32 %v531, 2147483648
      %v564 = vxor.u32 %v532, 2147483648
      %v565 = vxor.u32 %v533, 2147483648
      %v566 = vxor.u32 %v534, 2147483648
      %v567 = vxor.u32 %v535, 2147483648
      %v568 = vxor.u32 %v536, 2147483648
      %v569 = vmul.f32 %v537, 1.442695
      %v570 = vpow.pop %v569
      %v571 = vmul.f32 %v538, 1.442695
      %v572 = vpow.pop %v571
      %v573 = vmul.f32 %v539, 1.442695
      %v574 = vpow.pop %v573
      %v575 = vmul.f32 %v540, 1.442695
      %v576 = vpow.pop %v575
      %v577 = vmul.f32 %v541, 1.442695
      %v578 = vpow.pop %v577
      %v579 = vmul.f32 %v542, 1.442695
      %v580 = vpow.pop %v579
      %v581 = vmul.f32 %v543, 1.442695
      %v582 = vpow.pop %v581
      %v583 = vmul.f32 %v544, 1.442695
      %v584 = vpow.pop %v583
      %v585 = vmul.f32 %v545, 1.442695
      %v586 = vpow.pop %v585
      %v587 = vmul.f32 %v546, 1.442695
      %v588 = vpow.pop %v587
      %v589 = vmul.f32 %v547, 1.442695
      %v590 = vpow.pop %v589
      %v591 = vmul.f32 %v548, 1.442695
      %v592 = vpow.pop %v591
      %v593 = vmul.f32 %v549, 1.442695
      %v594 = vpow.pop %v593
      %v595 = vmul.f32 %v550, 1.442695
      %v596 = vpow.pop %v595
      %v597 = vmul.f32 %v551, 1.442695
      %v598 = vpow.pop %v597
      %v599 = vmul.f32 %v552, 1.442695
      %v600 = vpow.pop %v599
      %v601 = vmul.f32 %v553, 1.442695
      %v602 = vpow.pop %v601
      %v603 = vmul.f32 %v554, 1.442695
      %v604 = vpow.pop %v603
      %v605 = vmul.f32 %v555, 1.442695
      %v606 = vpow.pop %v605
      %v607 = vmul.f32 %v556, 1.442695
      %v608 = vpow.pop %v607
      %v609 = vmul.f32 %v557, 1.442695
      %v610 = vpow.pop %v609
      %v611 = vmul.f32 %v558, 1.442695
      %v612 = vpow.pop %v611
      %v613 = vmul.f32 %v559, 1.442695
      %v614 = vpow.pop %v613
      %v615 = vmul.f32 %v560, 1.442695
      %v616 = vpow.pop %v615
      %v617 = vmul.f32 %v561, 1.442695
      %v618 = vpow.pop %v617
      %v619 = vmul.f32 %v562, 1.442695
      %v620 = vpow.pop %v619
      %v621 = vmul.f32 %v563, 1.442695
      %v622 = vpow.pop %v621
      %v623 = vmul.f32 %v564, 1.442695
      %v624 = vpow.pop %v623
      %v625 = vmul.f32 %v565, 1.442695
      %v626 = vpow.pop %v625
      %v627 = vmul.f32 %v566, 1.442695
      %v628 = vpow.pop %v627
      %v629 = vmul.f32 %v567, 1.442695
      %v630 = vpow.pop %v629
      %v631 = vmul.f32 %v568, 1.442695
      %v632 = vpow.pop %v631
      %v633 = vadd.f32 %v570, 1.0
      %v634 = vadd.f32 %v572, 1.0
      %v635 = vadd.f32 %v574, 1.0
      %v636 = vadd.f32 %v576, 1.0
      %v637 = vadd.f32 %v578, 1.0
      %v638 = vadd.f32 %v580, 1.0
      %v639 = vadd.f32 %v582, 1.0
      %v640 = vadd.f32 %v584, 1.0
      %v641 = vadd.f32 %v586, 1.0
      %v642 = vadd.f32 %v588, 1.0
      %v643 = vadd.f32 %v590, 1.0
      %v644 = vadd.f32 %v592, 1.0
      %v645 = vadd.f32 %v594, 1.0
      %v646 = vadd.f32 %v596, 1.0
      %v647 = vadd.f32 %v598, 1.0
      %v648 = vadd.f32 %v600, 1.0
      %v649 = vadd.f32 %v602, 1.0
      %v650 = vadd.f32 %v604, 1.0
      %v651 = vadd.f32 %v606, 1.0
      %v652 = vadd.f32 %v608, 1.0
      %v653 = vadd.f32 %v610, 1.0
      %v654 = vadd.f32 %v612, 1.0
      %v655 = vadd.f32 %v614, 1.0
      %v656 = vadd.f32 %v616, 1.0
      %v657 = vadd.f32 %v618, 1.0
      %v658 = vadd.f32 %v620, 1.0
      %v659 = vadd.f32 %v622, 1.0
      %v660 = vadd.f32 %v624, 1.0
      %v661 = vadd.f32 %v626, 1.0
      %v662 = vadd.f32 %v628, 1.0
      %v663 = vadd.f32 %v630, 1.0
      %v664 = vadd.f32 %v632, 1.0
      %v665 = vrcp.pop %v633
      %v666 = vmul.f32 %v633, %v665
      %v667 = vsub.f32 1.0, %v666
      %v668 = vmul.f32 %v665, %v667
      %v669 = vadd.f32 %v665, %v668
      %vm670 = vweird.f32 %v633
      %vm671 = vweird.f32 %v665
      %vm672 = vmor %vm670, %vm671
      %v673 = vsel %vm672, %v665, %v669
      %v674 = vand.u32 2147483647, %v633
      %vm675 = vcmp.eq.f32.partialorder %v674, 8.507059e+37
      %v676 = vand.u32 %v633, 2147483648
      %v677 = vor.u32 1.1754944e-38, %v676
      %v678 = vsel %vm675, %v677, %v673
      %v679 = vmul.f32 1.0, %v678
      %v680 = vrcp.pop %v634
      %v681 = vmul.f32 %v634, %v680
      %v682 = vsub.f32 1.0, %v681
      %v683 = vmul.f32 %v680, %v682
      %v684 = vadd.f32 %v680, %v683
      %vm685 = vweird.f32 %v634
      %vm686 = vweird.f32 %v680
      %vm687 = vmor %vm685, %vm686
      %v688 = vsel %vm687, %v680, %v684
      %v689 = vand.u32 2147483647, %v634
      %vm690 = vcmp.eq.f32.partialorder %v689, 8.507059e+37
      %v691 = vand.u32 %v634, 2147483648
      %v692 = vor.u32 1.1754944e-38, %v691
      %v693 = vsel %vm690, %v692, %v688
      %v694 = vmul.f32 1.0, %v693
      %v695 = vrcp.pop %v635
      %v696 = vmul.f32 %v635, %v695
      %v697 = vsub.f32 1.0, %v696
      %v698 = vmul.f32 %v695, %v697
      %v699 = vadd.f32 %v695, %v698
      %vm700 = vweird.f32 %v635
      %vm701 = vweird.f32 %v695
      %vm702 = vmor %vm700, %vm701
      %v703 = vsel %vm702, %v695, %v699
      %v704 = vand.u32 2147483647, %v635
      %vm705 = vcmp.eq.f32.partialorder %v704, 8.507059e+37
      %v706 = vand.u32 %v635, 2147483648
      %v707 = vor.u32 1.1754944e-38, %v706
      %v708 = vsel %vm705, %v707, %v703
      %v709 = vmul.f32 1.0, %v708
      %v710 = vrcp.pop %v636
      %v711 = vmul.f32 %v636, %v710
      %v712 = vsub.f32 1.0, %v711
      %v713 = vmul.f32 %v710, %v712
      %v714 = vadd.f32 %v710, %v713
      %vm715 = vweird.f32 %v636
      %vm716 = vweird.f32 %v710
      %vm717 = vmor %vm715, %vm716
      %v718 = vsel %vm717, %v710, %v714
      %v719 = vand.u32 2147483647, %v636
      %vm720 = vcmp.eq.f32.partialorder %v719, 8.507059e+37
      %v721 = vand.u32 %v636, 2147483648
      %v722 = vor.u32 1.1754944e-38, %v721
      %v723 = vsel %vm720, %v722, %v718
      %v724 = vmul.f32 1.0, %v723
      %v725 = vrcp.pop %v637
      %v726 = vmul.f32 %v637, %v725
      %v727 = vsub.f32 1.0, %v726
      %v728 = vmul.f32 %v725, %v727
      %v729 = vadd.f32 %v725, %v728
      %vm730 = vweird.f32 %v637
      %vm731 = vweird.f32 %v725
      %vm732 = vmor %vm730, %vm731
      %v733 = vsel %vm732, %v725, %v729
      %v734 = vand.u32 2147483647, %v637
      %vm735 = vcmp.eq.f32.partialorder %v734, 8.507059e+37
      %v736 = vand.u32 %v637, 2147483648
      %v737 = vor.u32 1.1754944e-38, %v736
      %v738 = vsel %vm735, %v737, %v733
      %v739 = vmul.f32 1.0, %v738
      %v740 = vrcp.pop %v638
      %v741 = vmul.f32 %v638, %v740
      %v742 = vsub.f32 1.0, %v741
      %v743 = vmul.f32 %v740, %v742
      %v744 = vadd.f32 %v740, %v743
      %vm745 = vweird.f32 %v638
      %vm746 = vweird.f32 %v740
      %vm747 = vmor %vm745, %vm746
      %v748 = vsel %vm747, %v740, %v744
      %v749 = vand.u32 2147483647, %v638
      %vm750 = vcmp.eq.f32.partialorder %v749, 8.507059e+37
      %v751 = vand.u32 %v638, 2147483648
      %v752 = vor.u32 1.1754944e-38, %v751
      %v753 = vsel %vm750, %v752, %v748
      %v754 = vmul.f32 1.0, %v753
      %v755 = vrcp.pop %v639
      %v756 = vmul.f32 %v639, %v755
      %v757 = vsub.f32 1.0, %v756
      %v758 = vmul.f32 %v755, %v757
      %v759 = vadd.f32 %v755, %v758
      %vm760 = vweird.f32 %v639
      %vm761 = vweird.f32 %v755
      %vm762 = vmor %vm760, %vm761
      %v763 = vsel %vm762, %v755, %v759
      %v764 = vand.u32 2147483647, %v639
      %vm765 = vcmp.eq.f32.partialorder %v764, 8.507059e+37
      %v766 = vand.u32 %v639, 2147483648
      %v767 = vor.u32 1.1754944e-38, %v766
      %v768 = vsel %vm765, %v767, %v763
      %v769 = vmul.f32 1.0, %v768
      %v770 = vrcp.pop %v640
      %v771 = vmul.f32 %v640, %v770
      %v772 = vsub.f32 1.0, %v771
      %v773 = vmul.f32 %v770, %v772
      %v774 = vadd.f32 %v770, %v773
      %vm775 = vweird.f32 %v640
      %vm776 = vweird.f32 %v770
      %vm777 = vmor %vm775, %vm776
      %v778 = vsel %vm777, %v770, %v774
      %v779 = vand.u32 2147483647, %v640
      %vm780 = vcmp.eq.f32.partialorder %v779, 8.507059e+37
      %v781 = vand.u32 %v640, 2147483648
      %v782 = vor.u32 1.1754944e-38, %v781
      %v783 = vsel %vm780, %v782, %v778
      %v784 = vmul.f32 1.0, %v783
      %v785 = vrcp.pop %v641
      %v786 = vmul.f32 %v641, %v785
      %v787 = vsub.f32 1.0, %v786
      %v788 = vmul.f32 %v785, %v787
      %v789 = vadd.f32 %v785, %v788
      %vm790 = vweird.f32 %v641
      %vm791 = vweird.f32 %v785
      %vm792 = vmor %vm790, %vm791
      %v793 = vsel %vm792, %v785, %v789
      %v794 = vand.u32 2147483647, %v641
      %vm795 = vcmp.eq.f32.partialorder %v794, 8.507059e+37
      %v796 = vand.u32 %v641, 2147483648
      %v797 = vor.u32 1.1754944e-38, %v796
      %v798 = vsel %vm795, %v797, %v793
      %v799 = vmul.f32 1.0, %v798
      %v800 = vrcp.pop %v642
      %v801 = vmul.f32 %v642, %v800
      %v802 = vsub.f32 1.0, %v801
      %v803 = vmul.f32 %v800, %v802
      %v804 = vadd.f32 %v800, %v803
      %vm805 = vweird.f32 %v642
      %vm806 = vweird.f32 %v800
      %vm807 = vmor %vm805, %vm806
      %v808 = vsel %vm807, %v800, %v804
      %v809 = vand.u32 2147483647, %v642
      %vm810 = vcmp.eq.f32.partialorder %v809, 8.507059e+37
      %v811 = vand.u32 %v642, 2147483648
      %v812 = vor.u32 1.1754944e-38, %v811
      %v813 = vsel %vm810, %v812, %v808
      %v814 = vmul.f32 1.0, %v813
      %v815 = vrcp.pop %v643
      %v816 = vmul.f32 %v643, %v815
      %v817 = vsub.f32 1.0, %v816
      %v818 = vmul.f32 %v815, %v817
      %v819 = vadd.f32 %v815, %v818
      %vm820 = vweird.f32 %v643
      %vm821 = vweird.f32 %v815
      %vm822 = vmor %vm820, %vm821
      %v823 = vsel %vm822, %v815, %v819
      %v824 = vand.u32 2147483647, %v643
      %vm825 = vcmp.eq.f32.partialorder %v824, 8.507059e+37
      %v826 = vand.u32 %v643, 2147483648
      %v827 = vor.u32 1.1754944e-38, %v826
      %v828 = vsel %vm825, %v827, %v823
      %v829 = vmul.f32 1.0, %v828
      %v830 = vrcp.pop %v644
      %v831 = vmul.f32 %v644, %v830
      %v832 = vsub.f32 1.0, %v831
      %v833 = vmul.f32 %v830, %v832
      %v834 = vadd.f32 %v830, %v833
      %vm835 = vweird.f32 %v644
      %vm836 = vweird.f32 %v830
      %vm837 = vmor %vm835, %vm836
      %v838 = vsel %vm837, %v830, %v834
      %v839 = vand.u32 2147483647, %v644
      %vm840 = vcmp.eq.f32.partialorder %v839, 8.507059e+37
      %v841 = vand.u32 %v644, 2147483648
      %v842 = vor.u32 1.1754944e-38, %v841
      %v843 = vsel %vm840, %v842, %v838
      %v844 = vmul.f32 1.0, %v843
      %v845 = vrcp.pop %v645
      %v846 = vmul.f32 %v645, %v845
      %v847 = vsub.f32 1.0, %v846
      %v848 = vmul.f32 %v845, %v847
      %v849 = vadd.f32 %v845, %v848
      %vm850 = vweird.f32 %v645
      %vm851 = vweird.f32 %v845
      %vm852 = vmor %vm850, %vm851
      %v853 = vsel %vm852, %v845, %v849
      %v854 = vand.u32 2147483647, %v645
      %vm855 = vcmp.eq.f32.partialorder %v854, 8.507059e+37
      %v856 = vand.u32 %v645, 2147483648
      %v857 = vor.u32 1.1754944e-38, %v856
      %v858 = vsel %vm855, %v857, %v853
      %v859 = vmul.f32 1.0, %v858
      %v860 = vrcp.pop %v646
      %v861 = vmul.f32 %v646, %v860
      %v862 = vsub.f32 1.0, %v861
      %v863 = vmul.f32 %v860, %v862
      %v864 = vadd.f32 %v860, %v863
      %vm865 = vweird.f32 %v646
      %vm866 = vweird.f32 %v860
      %vm867 = vmor %vm865, %vm866
      %v868 = vsel %vm867, %v860, %v864
      %v869 = vand.u32 2147483647, %v646
      %vm870 = vcmp.eq.f32.partialorder %v869, 8.507059e+37
      %v871 = vand.u32 %v646, 2147483648
      %v872 = vor.u32 1.1754944e-38, %v871
      %v873 = vsel %vm870, %v872, %v868
      %v874 = vmul.f32 1.0, %v873
      %v875 = vrcp.pop %v647
      %v876 = vmul.f32 %v647, %v875
      %v877 = vsub.f32 1.0, %v876
      %v878 = vmul.f32 %v875, %v877
      %v879 = vadd.f32 %v875, %v878
      %vm880 = vweird.f32 %v647
      %vm881 = vweird.f32 %v875
      %vm882 = vmor %vm880, %vm881
      %v883 = vsel %vm882, %v875, %v879
      %v884 = vand.u32 2147483647, %v647
      %vm885 = vcmp.eq.f32.partialorder %v884, 8.507059e+37
      %v886 = vand.u32 %v647, 2147483648
      %v887 = vor.u32 1.1754944e-38, %v886
      %v888 = vsel %vm885, %v887, %v883
      %v889 = vmul.f32 1.0, %v888
      %v890 = vrcp.pop %v648
      %v891 = vmul.f32 %v648, %v890
      %v892 = vsub.f32 1.0, %v891
      %v893 = vmul.f32 %v890, %v892
      %v894 = vadd.f32 %v890, %v893
      %vm895 = vweird.f32 %v648
      %vm896 = vweird.f32 %v890
      %vm897 = vmor %vm895, %vm896
      %v898 = vsel %vm897, %v890, %v894
      %v899 = vand.u32 2147483647, %v648
      %vm900 = vcmp.eq.f32.partialorder %v899, 8.507059e+37
      %v901 = vand.u32 %v648, 2147483648
      %v902 = vor.u32 1.1754944e-38, %v901
      %v903 = vsel %vm900, %v902, %v898
      %v904 = vmul.f32 1.0, %v903
      %v905 = vrcp.pop %v649
      %v906 = vmul.f32 %v649, %v905
      %v907 = vsub.f32 1.0, %v906
      %v908 = vmul.f32 %v905, %v907
      %v909 = vadd.f32 %v905, %v908
      %vm910 = vweird.f32 %v649
      %vm911 = vweird.f32 %v905
      %vm912 = vmor %vm910, %vm911
      %v913 = vsel %vm912, %v905, %v909
      %v914 = vand.u32 2147483647, %v649
      %vm915 = vcmp.eq.f32.partialorder %v914, 8.507059e+37
      %v916 = vand.u32 %v649, 2147483648
      %v917 = vor.u32 1.1754944e-38, %v916
      %v918 = vsel %vm915, %v917, %v913
      %v919 = vmul.f32 1.0, %v918
      %v920 = vrcp.pop %v650
      %v921 = vmul.f32 %v650, %v920
      %v922 = vsub.f32 1.0, %v921
      %v923 = vmul.f32 %v920, %v922
      %v924 = vadd.f32 %v920, %v923
      %vm925 = vweird.f32 %v650
      %vm926 = vweird.f32 %v920
      %vm927 = vmor %vm925, %vm926
      %v928 = vsel %vm927, %v920, %v924
      %v929 = vand.u32 2147483647, %v650
      %vm930 = vcmp.eq.f32.partialorder %v929, 8.507059e+37
      %v931 = vand.u32 %v650, 2147483648
      %v932 = vor.u32 1.1754944e-38, %v931
      %v933 = vsel %vm930, %v932, %v928
      %v934 = vmul.f32 1.0, %v933
      %v935 = vrcp.pop %v651
      %v936 = vmul.f32 %v651, %v935
      %v937 = vsub.f32 1.0, %v936
      %v938 = vmul.f32 %v935, %v937
      %v939 = vadd.f32 %v935, %v938
      %vm940 = vweird.f32 %v651
      %vm941 = vweird.f32 %v935
      %vm942 = vmor %vm940, %vm941
      %v943 = vsel %vm942, %v935, %v939
      %v944 = vand.u32 2147483647, %v651
      %vm945 = vcmp.eq.f32.partialorder %v944, 8.507059e+37
      %v946 = vand.u32 %v651, 2147483648
      %v947 = vor.u32 1.1754944e-38, %v946
      %v948 = vsel %vm945, %v947, %v943
      %v949 = vmul.f32 1.0, %v948
      %v950 = vrcp.pop %v652
      %v951 = vmul.f32 %v652, %v950
      %v952 = vsub.f32 1.0, %v951
      %v953 = vmul.f32 %v950, %v952
      %v954 = vadd.f32 %v950, %v953
      %vm955 = vweird.f32 %v652
      %vm956 = vweird.f32 %v950
      %vm957 = vmor %vm955, %vm956
      %v958 = vsel %vm957, %v950, %v954
      %v959 = vand.u32 2147483647, %v652
      %vm960 = vcmp.eq.f32.partialorder %v959, 8.507059e+37
      %v961 = vand.u32 %v652, 2147483648
      %v962 = vor.u32 1.1754944e-38, %v961
      %v963 = vsel %vm960, %v962, %v958
      %v964 = vmul.f32 1.0, %v963
      %v965 = vrcp.pop %v653
      %v966 = vmul.f32 %v653, %v965
      %v967 = vsub.f32 1.0, %v966
      %v968 = vmul.f32 %v965, %v967
      %v969 = vadd.f32 %v965, %v968
      %vm970 = vweird.f32 %v653
      %vm971 = vweird.f32 %v965
      %vm972 = vmor %vm970, %vm971
      %v973 = vsel %vm972, %v965, %v969
      %v974 = vand.u32 2147483647, %v653
      %vm975 = vcmp.eq.f32.partialorder %v974, 8.507059e+37
      %v976 = vand.u32 %v653, 2147483648
      %v977 = vor.u32 1.1754944e-38, %v976
      %v978 = vsel %vm975, %v977, %v973
      %v979 = vmul.f32 1.0, %v978
      %v980 = vrcp.pop %v654
      %v981 = vmul.f32 %v654, %v980
      %v982 = vsub.f32 1.0, %v981
      %v983 = vmul.f32 %v980, %v982
      %v984 = vadd.f32 %v980, %v983
      %vm985 = vweird.f32 %v654
      %vm986 = vweird.f32 %v980
      %vm987 = vmor %vm985, %vm986
      %v988 = vsel %vm987, %v980, %v984
      %v989 = vand.u32 2147483647, %v654
      %vm990 = vcmp.eq.f32.partialorder %v989, 8.507059e+37
      %v991 = vand.u32 %v654, 2147483648
      %v992 = vor.u32 1.1754944e-38, %v991
      %v993 = vsel %vm990, %v992, %v988
      %v994 = vmul.f32 1.0, %v993
      %v995 = vrcp.pop %v655
      %v996 = vmul.f32 %v655, %v995
      %v997 = vsub.f32 1.0, %v996
      %v998 = vmul.f32 %v995, %v997
      %v999 = vadd.f32 %v995, %v998
      %vm1000 = vweird.f32 %v655
      %vm1001 = vweird.f32 %v995
      %vm1002 = vmor %vm1000, %vm1001
      %v1003 = vsel %vm1002, %v995, %v999
      %v1004 = vand.u32 2147483647, %v655
      %vm1005 = vcmp.eq.f32.partialorder %v1004, 8.507059e+37
      %v1006 = vand.u32 %v655, 2147483648
      %v1007 = vor.u32 1.1754944e-38, %v1006
      %v1008 = vsel %vm1005, %v1007, %v1003
      %v1009 = vmul.f32 1.0, %v1008
      %v1010 = vrcp.pop %v656
      %v1011 = vmul.f32 %v656, %v1010
      %v1012 = vsub.f32 1.0, %v1011
      %v1013 = vmul.f32 %v1010, %v1012
      %v1014 = vadd.f32 %v1010, %v1013
      %vm1015 = vweird.f32 %v656
      %vm1016 = vweird.f32 %v1010
      %vm1017 = vmor %vm1015, %vm1016
      %v1018 = vsel %vm1017, %v1010, %v1014
      %v1019 = vand.u32 2147483647, %v656
      %vm1020 = vcmp.eq.f32.partialorder %v1019, 8.507059e+37
      %v1021 = vand.u32 %v656, 2147483648
      %v1022 = vor.u32 1.1754944e-38, %v1021
      %v1023 = vsel %vm1020, %v1022, %v1018
      %v1024 = vmul.f32 1.0, %v1023
      %v1025 = vrcp.pop %v657
      %v1026 = vmul.f32 %v657, %v1025
      %v1027 = vsub.f32 1.0, %v1026
      %v1028 = vmul.f32 %v1025, %v1027
      %v1029 = vadd.f32 %v1025, %v1028
      %vm1030 = vweird.f32 %v657
      %vm1031 = vweird.f32 %v1025
      %vm1032 = vmor %vm1030, %vm1031
      %v1033 = vsel %vm1032, %v1025, %v1029
      %v1034 = vand.u32 2147483647, %v657
      %vm1035 = vcmp.eq.f32.partialorder %v1034, 8.507059e+37
      %v1036 = vand.u32 %v657, 2147483648
      %v1037 = vor.u32 1.1754944e-38, %v1036
      %v1038 = vsel %vm1035, %v1037, %v1033
      %v1039 = vmul.f32 1.0, %v1038
      %v1040 = vrcp.pop %v658
      %v1041 = vmul.f32 %v658, %v1040
      %v1042 = vsub.f32 1.0, %v1041
      %v1043 = vmul.f32 %v1040, %v1042
      %v1044 = vadd.f32 %v1040, %v1043
      %vm1045 = vweird.f32 %v658
      %vm1046 = vweird.f32 %v1040
      %vm1047 = vmor %vm1045, %vm1046
      %v1048 = vsel %vm1047, %v1040, %v1044
      %v1049 = vand.u32 2147483647, %v658
      %vm1050 = vcmp.eq.f32.partialorder %v1049, 8.507059e+37
      %v1051 = vand.u32 %v658, 2147483648
      %v1052 = vor.u32 1.1754944e-38, %v1051
      %v1053 = vsel %vm1050, %v1052, %v1048
      %v1054 = vmul.f32 1.0, %v1053
      %v1055 = vrcp.pop %v659
      %v1056 = vmul.f32 %v659, %v1055
      %v1057 = vsub.f32 1.0, %v1056
      %v1058 = vmul.f32 %v1055, %v1057
      %v1059 = vadd.f32 %v1055, %v1058
      %vm1060 = vweird.f32 %v659
      %vm1061 = vweird.f32 %v1055
      %vm1062 = vmor %vm1060, %vm1061
      %v1063 = vsel %vm1062, %v1055, %v1059
      %v1064 = vand.u32 2147483647, %v659
      %vm1065 = vcmp.eq.f32.partialorder %v1064, 8.507059e+37
      %v1066 = vand.u32 %v659, 2147483648
      %v1067 = vor.u32 1.1754944e-38, %v1066
      %v1068 = vsel %vm1065, %v1067, %v1063
      %v1069 = vmul.f32 1.0, %v1068
      %v1070 = vrcp.pop %v660
      %v1071 = vmul.f32 %v660, %v1070
      %v1072 = vsub.f32 1.0, %v1071
      %v1073 = vmul.f32 %v1070, %v1072
      %v1074 = vadd.f32 %v1070, %v1073
      %vm1075 = vweird.f32 %v660
      %vm1076 = vweird.f32 %v1070
      %vm1077 = vmor %vm1075, %vm1076
      %v1078 = vsel %vm1077, %v1070, %v1074
      %v1079 = vand.u32 2147483647, %v660
      %vm1080 = vcmp.eq.f32.partialorder %v1079, 8.507059e+37
      %v1081 = vand.u32 %v660, 2147483648
      %v1082 = vor.u32 1.1754944e-38, %v1081
      %v1083 = vsel %vm1080, %v1082, %v1078
      %v1084 = vmul.f32 1.0, %v1083
      %v1085 = vrcp.pop %v661
      %v1086 = vmul.f32 %v661, %v1085
      %v1087 = vsub.f32 1.0, %v1086
      %v1088 = vmul.f32 %v1085, %v1087
      %v1089 = vadd.f32 %v1085, %v1088
      %vm1090 = vweird.f32 %v661
      %vm1091 = vweird.f32 %v1085
      %vm1092 = vmor %vm1090, %vm1091
      %v1093 = vsel %vm1092, %v1085, %v1089
      %v1094 = vand.u32 2147483647, %v661
      %vm1095 = vcmp.eq.f32.partialorder %v1094, 8.507059e+37
      %v1096 = vand.u32 %v661, 2147483648
      %v1097 = vor.u32 1.1754944e-38, %v1096
      %v1098 = vsel %vm1095, %v1097, %v1093
      %v1099 = vmul.f32 1.0, %v1098
      %v1100 = vrcp.pop %v662
      %v1101 = vmul.f32 %v662, %v1100
      %v1102 = vsub.f32 1.0, %v1101
      %v1103 = vmul.f32 %v1100, %v1102
      %v1104 = vadd.f32 %v1100, %v1103
      %vm1105 = vweird.f32 %v662
      %vm1106 = vweird.f32 %v1100
      %vm1107 = vmor %vm1105, %vm1106
      %v1108 = vsel %vm1107, %v1100, %v1104
      %v1109 = vand.u32 2147483647, %v662
      %vm1110 = vcmp.eq.f32.partialorder %v1109, 8.507059e+37
      %v1111 = vand.u32 %v662, 2147483648
      %v1112 = vor.u32 1.1754944e-38, %v1111
      %v1113 = vsel %vm1110, %v1112, %v1108
      %v1114 = vmul.f32 1.0, %v1113
      %v1115 = vrcp.pop %v663
      %v1116 = vmul.f32 %v663, %v1115
      %v1117 = vsub.f32 1.0, %v1116
      %v1118 = vmul.f32 %v1115, %v1117
      %v1119 = vadd.f32 %v1115, %v1118
      %vm1120 = vweird.f32 %v663
      %vm1121 = vweird.f32 %v1115
      %vm1122 = vmor %vm1120, %vm1121
      %v1123 = vsel %vm1122, %v1115, %v1119
      %v1124 = vand.u32 2147483647, %v663
      %vm1125 = vcmp.eq.f32.partialorder %v1124, 8.507059e+37
      %v1126 = vand.u32 %v663, 2147483648
      %v1127 = vor.u32 1.1754944e-38, %v1126
      %v1128 = vsel %vm1125, %v1127, %v1123
      %v1129 = vmul.f32 1.0, %v1128
      %v1130 = vrcp.pop %v664
      %v1131 = vmul.f32 %v664, %v1130
      %v1132 = vsub.f32 1.0, %v1131
      %v1133 = vmul.f32 %v1130, %v1132
      %v1134 = vadd.f32 %v1130, %v1133
      %vm1135 = vweird.f32 %v664
      %vm1136 = vweird.f32 %v1130
      %vm1137 = vmor %vm1135, %vm1136
      %v1138 = vsel %vm1137, %v1130, %v1134
      %v1139 = vand.u32 2147483647, %v664
      %vm1140 = vcmp.eq.f32.partialorder %v1139, 8.507059e+37
      %v1141 = vand.u32 %v664, 2147483648
      %v1142 = vor.u32 1.1754944e-38, %v1141
      %v1143 = vsel %vm1140, %v1142, %v1138
      %v1144 = vmul.f32 1.0, %v1143
      %v1145 = vmul.f32 %v505, %v679
      %v1146 = vmul.f32 %v506, %v694
      %v1147 = vmul.f32 %v507, %v709
      %v1148 = vmul.f32 %v508, %v724
      %v1149 = vmul.f32 %v509, %v739
      %v1150 = vmul.f32 %v510, %v754
      %v1151 = vmul.f32 %v511, %v769
      %v1152 = vmul.f32 %v512, %v784
      %v1153 = vmul.f32 %v513, %v799
      %v1154 = vmul.f32 %v514, %v814
      %v1155 = vmul.f32 %v515, %v829
      %v1156 = vmul.f32 %v516, %v844
      %v1157 = vmul.f32 %v517, %v859
      %v1158 = vmul.f32 %v518, %v874
      %v1159 = vmul.f32 %v519, %v889
      %v1160 = vmul.f32 %v520, %v904
      %v1161 = vmul.f32 %v521, %v919
      %v1162 = vmul.f32 %v522, %v934
      %v1163 = vmul.f32 %v523, %v949
      %v1164 = vmul.f32 %v524, %v964
      %v1165 = vmul.f32 %v525, %v979
      %v1166 = vmul.f32 %v526, %v994
      %v1167 = vmul.f32 %v527, %v1009
      %v1168 = vmul.f32 %v528, %v1024
      %v1169 = vmul.f32 %v529, %v1039
      %v1170 = vmul.f32 %v530, %v1054
      %v1171 = vmul.f32 %v531, %v1069
      %v1172 = vmul.f32 %v532, %v1084
      %v1173 = vmul.f32 %v533, %v1099
      %v1174 = vmul.f32 %v534, %v1114
      %v1175 = vmul.f32 %v535, %v1129
      %v1176 = vmul.f32 %v536, %v1144
      %vm1177 = vcmask 130048
      %1178 = vst.msk [vmem:[%s221] sm:$0xff] %vm1177, %v1145
      %1179 = vst.msk [vmem:[%s221 + $0x8] sm:$0xff] %vm1177, %v1146
      %1180 = vst.msk [vmem:[%s221 + $0x10] sm:$0xff] %vm1177, %v1147
      %1181 = vst.msk [vmem:[%s221 + $0x18] sm:$0xff] %vm1177, %v1148
      %1182 = vst.msk [vmem:[%s221 + $0x20] sm:$0xff] %vm1177, %v1149
      %1183 = vst.msk [vmem:[%s221 + $0x28] sm:$0xff] %vm1177, %v1150
      %1184 = vst.msk [vmem:[%s221 + $0x30] sm:$0xff] %vm1177, %v1151
      %1185 = vst.msk [vmem:[%s221 + $0x38] sm:$0xff] %vm1177, %v1152
      %1186 = vst.msk [vmem:[%s221 + $0x40] sm:$0xff] %vm1177, %v1153
      %1187 = vst.msk [vmem:[%s221 + $0x48] sm:$0xff] %vm1177, %v1154
      %1188 = vst.msk [vmem:[%s221 + $0x50] sm:$0xff] %vm1177, %v1155
      %1189 = vst.msk [vmem:[%s221 + $0x58] sm:$0xff] %vm1177, %v1156
      %1190 = vst.msk [vmem:[%s221 + $0x60] sm:$0xff] %vm1177, %v1157
      %1191 = vst.msk [vmem:[%s221 + $0x68] sm:$0xff] %vm1177, %v1158
      %1192 = vst.msk [vmem:[%s221 + $0x70] sm:$0xff] %vm1177, %v1159
      %1193 = vst.msk [vmem:[%s221 + $0x78] sm:$0xff] %vm1177, %v1160
      %1194 = vst.msk [vmem:[%s221 + $0x80] sm:$0xff] %vm1177, %v1161
      %1195 = vst.msk [vmem:[%s221 + $0x88] sm:$0xff] %vm1177, %v1162
      %1196 = vst.msk [vmem:[%s221 + $0x90] sm:$0xff] %vm1177, %v1163
      %1197 = vst.msk [vmem:[%s221 + $0x98] sm:$0xff] %vm1177, %v1164
      %1198 = vst.msk [vmem:[%s221 + $0xa0] sm:$0xff] %vm1177, %v1165
      %1199 = vst.msk [vmem:[%s221 + $0xa8] sm:$0xff] %vm1177, %v1166
      %1200 = vst.msk [vmem:[%s221 + $0xb0] sm:$0xff] %vm1177, %v1167
      %1201 = vst.msk [vmem:[%s221 + $0xb8] sm:$0xff] %vm1177, %v1168
      %1202 = vst.msk [vmem:[%s221 + $0xc0] sm:$0xff] %vm1177, %v1169
      %1203 = vst.msk [vmem:[%s221 + $0xc8] sm:$0xff] %vm1177, %v1170
      %1204 = vst.msk [vmem:[%s221 + $0xd0] sm:$0xff] %vm1177, %v1171
      %1205 = vst.msk [vmem:[%s221 + $0xd8] sm:$0xff] %vm1177, %v1172
      %1206 = vst.msk [vmem:[%s221 + $0xe0] sm:$0xff] %vm1177, %v1173
      %1207 = vst.msk [vmem:[%s221 + $0xe8] sm:$0xff] %vm1177, %v1174
      %1208 = vst.msk [vmem:[%s221 + $0xf0] sm:$0xff] %vm1177, %v1175
      %1209 = vst.msk [vmem:[%s221 + $0xf8] sm:$0xff] %vm1177, %v1176
      %s1210 = smul.u32 32, %s15
      %p1211 = scmp.lt.s32.totalorder %s1210, 63
      %s1212 = scalar_select %p1211, %s1210, 63
      %s1213 = smul.addr %s1212, 8
      %s1214 = scalar_lea.vmem %s4, %s1213
      // Predicated region
      $region37: #{_lambda_.8} parent=35 // pred_check
        %p1215 = pneg %p127
      $region38: #{_lambda_.8} parent=35 // pred_check_branch
        %1217 = sbr.rel (%p1215) target = $region40
      $region39: #{_lambda_.8} parent=35 // pred_region
        %s1218 = smul.u32 32, %s15
      $region40: #{_lambda_.8} parent=35 // pred_fallthru
        _
    $region36: #{_lambda_.8} parent=5 // pred_fallthru
      _
    %p1219 = scmp.le.s32.totalorder 2, %s10
    // Predicated region
    $region41: #{_lambda_.8} parent=5 // pred_check
      %p1220 = pneg %p1219
    $region42: #{_lambda_.8} parent=5 // pred_check_branch
      %1222 = sbr.rel (%p1220) target = $region44
    $region43: #{_lambda_.8} parent=5 // pred_region
      %s1223 = ssub.s32 %s10, 2
      // Predicated region
      $region45: #{_lambda_.8} parent=43 // pred_check
        %p1224 = pneg %p133
      $region46: #{_lambda_.8} parent=43 // pred_check_branch
        %1226 = sbr.rel (%p1224) target = $region48
      $region47: #{_lambda_.8} parent=43 // pred_region
        %s1227 = smul.u32 32, %s16
        %p1228 = scmp.lt.s32.totalorder %s1227, 63
        %s1229 = scalar_select %p1228, %s1227, 63
        %s1230 = smul.addr %s1229, 8
        %s1231 = scalar_lea.vmem %s4, %s1230
      $region48: #{_lambda_.8} parent=43 // pred_fallthru
        _
    $region44: #{_lambda_.8} parent=5 // pred_fallthru
      _
  $region6: #{_lambda_.8} parent=0 // loop_footer
    %s14 = sadd.s32 1, %s10
  $region7: #{_lambda_.8} parent=0 // loop_footer_branch
    %9 = sbr.rel target = $region3
  $region8: #{_lambda_.8} parent=0 // loop_exit
    _

// kernel: _lambda_.9
$region0: #{_lambda_.9}
  #allocation0 [shape = 'u32[]', space=smem, size = 0x4, offset = 0x4, fixed_abs, tag = 'smem constant byte address 0x4 - core index']
  #allocation1 [shape = 'u32[72,128]{1,0:T(1,128)}', space=vmem, size = 0x9000, scoped, tag = 'internal scratch']
  %s0 = inlined_call_operand.vmem [shape: f32[2,2,16,16], index: 0, kind: input, shape index: {}]
  %s1 = inlined_call_operand.vmem [shape: f32[2,2,16,16], index: 1, kind: input, shape index: {}]
  %s2 = inlined_call_operand.vmem [shape: f32[2,16,16,16], index: 2, kind: input, shape index: {}]
  %s3 = inlined_call_operand.vmem [shape: f32[2,16,16,16], index: 3, kind: input, shape index: {}]
  %s4 = inlined_call_operand.vmem [shape: f32[2,2,16,16], index: 4, kind: output, shape index: {0}]
  %s5 = inlined_call_operand.vmem [shape: f32[2,2,16,16], index: 5, kind: output, shape index: {1}]
  %6 = xla_tuple %s4, %s5
  %s7 = sld [smem:[#allocation0]]
  $region57: #{_lambda_.9} parent=0
    _
  %s9 = ssub.s32 1, %s7
  %s10 = scalar_select 0, %s9, %s7
  loop: start=0, step=1, limit=4
  $region2: #{_lambda_.9} parent=0 // loop_pre_header
    _
  $region3: #{_lambda_.9} parent=0 // loop_header
    %s12 = sphi 0, %s16
    %p13 = scmp.ge.s32.totalorder %s12, 4
    %s22 = sphi 0, %s24
    %s25 = sphi 0, %s22
    %s26 = sphi 0, %s25
    %s42 = sphi 0, %s26
    %s48 = sphi 0, %s50
    %s51 = sphi 0, %s48
    %s52 = sphi 0, %s51
    %s68 = sphi 0, %s52
    %s74 = sphi 0, %s76
    %s77 = sphi 0, %s74
    %s78 = sphi 0, %s77
    %s94 = sphi 0, %s78
    %s100 = sphi 0, %s102
    %s103 = sphi 0, %s100
    %s104 = sphi 0, %s103
    %s120 = sphi 0, %s104
    %s126 = sphi 0, %s128
    %s129 = sphi 0, %s126
    %s130 = sphi 0, %s129
    %s146 = sphi 0, %s130
    %s152 = sphi 0, %s154
    %s155 = sphi 0, %s152
    %s156 = sphi 0, %s155
    %s172 = sphi 0, %s156
  $region4: #{_lambda_.9} parent=0 // loop_header_branch
    %15 = sbr.rel (%p13) target = $region8
  $region5: #{_lambda_.9} parent=0 // loop_body
    %s17 = ssub.s32 %s12, 1
    %s18 = ssub.s32 %s12, 2
    %s19 = sadd.s32 %s12, 1
    %s20 = ssub.s32 %s12, %s19
    %p21 = scmp.eq.s32.totalorder %s20, 0
    %s23 = sadd.s32 %s22, 1
    %s24 = scalar_select %p21, %s22, %s23
    %p27 = pneg %p21
    %p28 = scmp.eq.s32.totalorder %s12, 1
    %p29 = por %p27, %p28
    %p30 = scmp.ne.s32.totalorder %s22, %s25
    %p31 = scmp.eq.s32.totalorder %s12, 0
    %p32 = por %p30, %p31
    %p33 = scmp.ne.s32.totalorder %s22, %s25
    %p34 = scmp.eq.s32.totalorder %s17, 1
    %p35 = por %p33, %p34
    %p36 = scmp.ne.s32.totalorder %s25, %s26
    %p37 = scmp.eq.s32.totalorder %s17, 0
    %p38 = por %p36, %p37
    %p39 = scmp.ne.s32.totalorder %s25, %s26
    %p40 = scmp.eq.s32.totalorder %s18, 1
    %p41 = por %p39, %p40
    %p43 = scmp.ne.s32.totalorder %s26, %s42
    %p44 = scmp.eq.s32.totalorder %s18, 0
    %p45 = por %p43, %p44
    %s46 = ssub.s32 %s12, %s19
    %p47 = scmp.eq.s32.totalorder %s46, 0
    %s49 = sadd.s32 %s48, 1
    %s50 = scalar_select %p47, %s48, %s49
    %p53 = pneg %p47
    %p54 = scmp.eq.s32.totalorder %s12, 1
    %p55 = por %p53, %p54
    %p56 = scmp.ne.s32.totalorder %s48, %s51
    %p57 = scmp.eq.s32.totalorder %s12, 0
    %p58 = por %p56, %p57
    %p59 = scmp.ne.s32.totalorder %s48, %s51
    %p60 = scmp.eq.s32.totalorder %s17, 1
    %p61 = por %p59, %p60
    %p62 = scmp.ne.s32.totalorder %s51, %s52
    %p63 = scmp.eq.s32.totalorder %s17, 0
    %p64 = por %p62, %p63
    %p65 = scmp.ne.s32.totalorder %s51, %s52
    %p66 = scmp.eq.s32.totalorder %s18, 1
    %p67 = por %p65, %p66
    %p69 = scmp.ne.s32.totalorder %s52, %s68
    %p70 = scmp.eq.s32.totalorder %s18, 0
    %p71 = por %p69, %p70
    %s72 = ssub.s32 %s12, %s19
    %p73 = scmp.eq.s32.totalorder %s72, 0
    %s75 = sadd.s32 %s74, 1
    %s76 = scalar_select %p73, %s74, %s75
    %p79 = pneg %p73
    %p80 = scmp.eq.s32.totalorder %s12, 1
    %p81 = por %p79, %p80
    %p82 = scmp.ne.s32.totalorder %s74, %s77
    %p83 = scmp.eq.s32.totalorder %s12, 0
    %p84 = por %p82, %p83
    %p85 = scmp.ne.s32.totalorder %s74, %s77
    %p86 = scmp.eq.s32.totalorder %s17, 1
    %p87 = por %p85, %p86
    %p88 = scmp.ne.s32.totalorder %s77, %s78
    %p89 = scmp.eq.s32.totalorder %s17, 0
    %p90 = por %p88, %p89
    %p91 = scmp.ne.s32.totalorder %s77, %s78
    %p92 = scmp.eq.s32.totalorder %s18, 1
    %p93 = por %p91, %p92
    %p95 = scmp.ne.s32.totalorder %s78, %s94
    %p96 = scmp.eq.s32.totalorder %s18, 0
    %p97 = por %p95, %p96
    %s98 = ssub.s32 %s12, %s19
    %p99 = scmp.eq.s32.totalorder %s98, 0
    %s101 = sadd.s32 %s100, 1
    %s102 = scalar_select %p99, %s100, %s101
    %p105 = pneg %p99
    %p106 = scmp.eq.s32.totalorder %s12, 1
    %p107 = por %p105, %p106
    %p108 = scmp.ne.s32.totalorder %s100, %s103
    %p109 = scmp.eq.s32.totalorder %s12, 0
    %p110 = por %p108, %p109
    %p111 = scmp.ne.s32.totalorder %s100, %s103
    %p112 = scmp.eq.s32.totalorder %s17, 1
    %p113 = por %p111, %p112
    %p114 = scmp.ne.s32.totalorder %s103, %s104
    %p115 = scmp.eq.s32.totalorder %s17, 0
    %p116 = por %p114, %p115
    %p117 = scmp.ne.s32.totalorder %s103, %s104
    %p118 = scmp.eq.s32.totalorder %s18, 1
    %p119 = por %p117, %p118
    %p121 = scmp.ne.s32.totalorder %s104, %s120
    %p122 = scmp.eq.s32.totalorder %s18, 0
    %p123 = por %p121, %p122
    %s124 = ssub.s32 %s12, %s19
    %p125 = scmp.eq.s32.totalorder %s124, 0
    %s127 = sadd.s32 %s126, 1
    %s128 = scalar_select %p125, %s126, %s127
    %p131 = pneg %p125
    %p132 = scmp.eq.s32.totalorder %s12, 1
    %p133 = por %p131, %p132
    %p134 = scmp.ne.s32.totalorder %s126, %s129
    %p135 = scmp.eq.s32.totalorder %s12, 0
    %p136 = por %p134, %p135
    %p137 = scmp.ne.s32.totalorder %s126, %s129
    %p138 = scmp.eq.s32.totalorder %s17, 1
    %p139 = por %p137, %p138
    %p140 = scmp.ne.s32.totalorder %s129, %s130
    %p141 = scmp.eq.s32.totalorder %s17, 0
    %p142 = por %p140, %p141
    %p143 = scmp.ne.s32.totalorder %s129, %s130
    %p144 = scmp.eq.s32.totalorder %s18, 1
    %p145 = por %p143, %p144
    %p147 = scmp.ne.s32.totalorder %s130, %s146
    %p148 = scmp.eq.s32.totalorder %s18, 0
    %p149 = por %p147, %p148
    %s150 = ssub.s32 %s12, %s19
    %p151 = scmp.eq.s32.totalorder %s150, 0
    %s153 = sadd.s32 %s152, 1
    %s154 = scalar_select %p151, %s152, %s153
    %p157 = pneg %p151
    %p158 = scmp.eq.s32.totalorder %s12, 1
    %p159 = por %p157, %p158
    %p160 = scmp.ne.s32.totalorder %s152, %s155
    %p161 = scmp.eq.s32.totalorder %s12, 0
    %p162 = por %p160, %p161
    %p163 = scmp.ne.s32.totalorder %s152, %s155
    %p164 = scmp.eq.s32.totalorder %s17, 1
    %p165 = por %p163, %p164
    %p166 = scmp.ne.s32.totalorder %s155, %s156
    %p167 = scmp.eq.s32.totalorder %s17, 0
    %p168 = por %p166, %p167
    %p169 = scmp.ne.s32.totalorder %s155, %s156
    %p170 = scmp.eq.s32.totalorder %s18, 1
    %p171 = por %p169, %p170
    %p173 = scmp.ne.s32.totalorder %s156, %s172
    %p174 = scmp.eq.s32.totalorder %s18, 0
    %p175 = por %p173, %p174
    %p176 = scmp.le.s32.totalorder 1, %s12
    %p177 = scmp.lt.s32.totalorder %s12, 3
    %p178 = pnand %p176, %p177
    %p179 = pneg %p178
    // Predicated region
    $region9: #{_lambda_.9} parent=5 // pred_check
      _
    $region10: #{_lambda_.9} parent=5 // pred_check_branch
      %181 = sbr.rel (%p178) target = $region12
    $region11: #{_lambda_.9} parent=5 // pred_region
      %s182 = ssub.s32 %s12, 1
    $region12: #{_lambda_.9} parent=5 // pred_fallthru
      _
    %p183 = scmp.lt.s32.totalorder %s12, 2
    // Predicated region
    $region13: #{_lambda_.9} parent=5 // pred_check
      %p184 = pneg %p183
    $region14: #{_lambda_.9} parent=5 // pred_check_branch
      %186 = sbr.rel (%p184) target = $region16
    $region15: #{_lambda_.9} parent=5 // pred_region
      // Predicated region
      $region17: #{_lambda_.9} parent=15 // pred_check
        %p187 = pneg %p32
      $region18: #{_lambda_.9} parent=15 // pred_check_branch
        %189 = sbr.rel (%p187) target = $region20
      $region19: #{_lambda_.9} parent=15 // pred_region
        %p190 = scmp.lt.s32.totalorder %s12, 1
        %s191 = scalar_select %p190, %s12, 1
        %s192 = smul.addr %s191, 4
        %s193 = smul.addr %s192, 8
        %s194 = scalar_lea.vmem %s0, %s193
      $region20: #{_lambda_.9} parent=15 // pred_fallthru
        _
      // Predicated region
      $region21: #{_lambda_.9} parent=15 // pred_check
        %p195 = pneg %p58
      $region22: #{_lambda_.9} parent=15 // pred_check_branch
        %197 = sbr.rel (%p195) target = $region24
      $region23: #{_lambda_.9} parent=15 // pred_region
        %p198 = scmp.lt.s32.totalorder %s12, 1
        %s199 = scalar_select %p198, %s12, 1
        %s200 = smul.addr %s199, 4
        %s201 = smul.addr %s200, 8
        %s202 = scalar_lea.vmem %s1, %s201
      $region24: #{_lambda_.9} parent=15 // pred_fallthru
        _
      // Predicated region
      $region25: #{_lambda_.9} parent=15 // pred_check
        %p203 = pneg %p84
      $region26: #{_lambda_.9} parent=15 // pred_check_branch
        %205 = sbr.rel (%p203) target = $region28
      $region27: #{_lambda_.9} parent=15 // pred_region
        %p206 = scmp.lt.s32.totalorder %s12, 1
        %s207 = scalar_select %p206, %s12, 1
        %s208 = smul.addr %s207, 32
        %s209 = smul.addr %s208, 8
        %s210 = scalar_lea.vmem %s2, %s209
      $region28: #{_lambda_.9} parent=15 // pred_fallthru
        _
      // Predicated region
      $region29: #{_lambda_.9} parent=15 // pred_check
        %p211 = pneg %p110
      $region30: #{_lambda_.9} parent=15 // pred_check_branch
        %213 = sbr.rel (%p211) target = $region32
      $region31: #{_lambda_.9} parent=15 // pred_region
        %p214 = scmp.lt.s32.totalorder %s12, 1
        %s215 = scalar_select %p214, %s12, 1
        %s216 = smul.addr %s215, 32
        %s217 = smul.addr %s216, 8
        %s218 = scalar_lea.vmem %s3, %s217
      $region32: #{_lambda_.9} parent=15 // pred_fallthru
        _
    $region16: #{_lambda_.9} parent=5 // pred_fallthru
      _
    %p219 = scmp.le.s32.totalorder 1, %s12
    %p220 = scmp.lt.s32.totalorder %s12, 3
    %p221 = pnand %p219, %p220
    %p222 = pneg %p221
    // Predicated region
    $region33: #{_lambda_.9} parent=5 // pred_check
      _
    $region34: #{_lambda_.9} parent=5 // pred_check_branch
      %224 = sbr.rel (%p221) target = $region36
    $region35: #{_lambda_.9} parent=5 // pred_region
      %s225 = ssub.s32 %s12, 1
      %p226 = scmp.lt.s32.totalorder %s17, 1
      %s227 = scalar_select %p226, %s17, 1
      %s228 = smul.addr %s227, 4
      %s229 = smul.addr %s228, 8
      %s230 = scalar_lea.vmem %s0, %s229
      %p231 = pneg %p38
      %p232 = pneg %p35
      %p233 = scmp.lt.s32.totalorder %s17, 1
      %s234 = scalar_select %p233, %s17, 1
      %s235 = smul.addr %s234, 4
      %s236 = smul.addr %s235, 8
      %s237 = scalar_lea.vmem %s1, %s236
      %p238 = pneg %p64
      %p239 = pneg %p61
      %p240 = scmp.lt.s32.totalorder %s17, 1
      %s241 = scalar_select %p240, %s17, 1
      %s242 = smul.addr %s241, 32
      %s243 = smul.addr %s242, 8
      %s244 = scalar_lea.vmem %s2, %s243
      %p245 = pneg %p90
      %p246 = pneg %p87
      %p247 = scmp.lt.s32.totalorder %s17, 1
      %s248 = scalar_select %p247, %s17, 1
      %s249 = smul.addr %s248, 32
      %s250 = smul.addr %s249, 8
      %s251 = scalar_lea.vmem %s3, %s250
      %p252 = pneg %p116
      %p253 = pneg %p113
      %p254 = pneg %p142
      %p255 = pneg %p139
      %p256 = scmp.lt.s32.totalorder %s17, 1
      %s257 = scalar_select %p256, %s17, 1
      %s258 = smul.addr %s257, 4
      %s259 = smul.addr %s258, 8
      %s260 = scalar_lea.vmem %s4, %s259
      %p261 = pneg %p168
      %p262 = pneg %p165
      %p263 = scmp.lt.s32.totalorder %s17, 1
      %s264 = scalar_select %p263, %s17, 1
      %s265 = smul.addr %s264, 4
      %s266 = smul.addr %s265, 8
      %s267 = scalar_lea.vmem %s5, %s266
      %p268 = scmp.lt.s32.totalorder %s17, 1
      %s269 = scalar_select %p268, %s17, 1
      %s270 = smul.addr %s269, 4
      %s271 = smul.addr %s270, 8
      %s272 = scalar_lea.vmem %s0, %s271
      %p273 = scmp.lt.s32.totalorder %s17, 1
      %s274 = scalar_select %p273, %s17, 1
      %s275 = smul.addr %s274, 4
      %s276 = smul.addr %s275, 8
      %s277 = scalar_lea.vmem %s1, %s276
      %p278 = scmp.lt.s32.totalorder %s17, 1
      %s279 = scalar_select %p278, %s17, 1
      %s280 = smul.addr %s279, 32
      %s281 = smul.addr %s280, 8
      %s282 = scalar_lea.vmem %s2, %s281
      %p283 = scmp.lt.s32.totalorder %s17, 1
      %s284 = scalar_select %p283, %s17, 1
      %s285 = smul.addr %s284, 32
      %s286 = smul.addr %s285, 8
      %s287 = scalar_lea.vmem %s3, %s286
      %p288 = scmp.lt.s32.totalorder %s17, 1
      %s289 = scalar_select %p288, %s17, 1
      %s290 = smul.addr %s289, 4
      %s291 = smul.addr %s290, 8
      %s292 = scalar_lea.vmem %s4, %s291
      %p293 = scmp.lt.s32.totalorder %s17, 1
      %s294 = scalar_select %p293, %s17, 1
      %s295 = smul.addr %s294, 4
      %s296 = smul.addr %s295, 8
      %s297 = scalar_lea.vmem %s5, %s296
      %v298 = vld [vmem:[%s272] sm:$0xff]
      %v299 = vld [vmem:[%s272 + $0x8] sm:$0xff]
      %v300 = vld [vmem:[%s272 + $0x10] sm:$0xff]
      %v301 = vld [vmem:[%s272 + $0x18] sm:$0xff]
      %v302 = vld [vmem:[%s277] sm:$0xff]
      %v303 = vld [vmem:[%s277 + $0x8] sm:$0xff]
      %v304 = vld [vmem:[%s277 + $0x10] sm:$0xff]
      %v305 = vld [vmem:[%s277 + $0x18] sm:$0xff]
      %v306 = vld [vmem:[%s282] sm:$0xff]
      %v307 = vld [vmem:[%s282 + $0x8] sm:$0xff]
      %v308 = vld [vmem:[%s282 + $0x10] sm:$0xff]
      %v309 = vld [vmem:[%s282 + $0x18] sm:$0xff]
      %v310 = vld [vmem:[%s282 + $0x20] sm:$0xff]
      %v311 = vld [vmem:[%s282 + $0x28] sm:$0xff]
      %v312 = vld [vmem:[%s282 + $0x30] sm:$0xff]
      %v313 = vld [vmem:[%s282 + $0x38] sm:$0xff]
      %v314 = vld [vmem:[%s282 + $0x40] sm:$0xff]
      %v315 = vld [vmem:[%s282 + $0x48] sm:$0xff]
      %v316 = vld [vmem:[%s282 + $0x50] sm:$0xff]
      %v317 = vld [vmem:[%s282 + $0x58] sm:$0xff]
      %v318 = vld [vmem:[%s282 + $0x60] sm:$0xff]
      %v319 = vld [vmem:[%s282 + $0x68] sm:$0xff]
      %v320 = vld [vmem:[%s282 + $0x70] sm:$0xff]
      %v321 = vld [vmem:[%s282 + $0x78] sm:$0xff]
      %v322 = vld [vmem:[%s282 + $0x80] sm:$0xff]
      %v323 = vld [vmem:[%s282 + $0x88] sm:$0xff]
      %v324 = vld [vmem:[%s282 + $0x90] sm:$0xff]
      %v325 = vld [vmem:[%s282 + $0x98] sm:$0xff]
      %v326 = vld [vmem:[%s282 + $0xa0] sm:$0xff]
      %v327 = vld [vmem:[%s282 + $0xa8] sm:$0xff]
      %v328 = vld [vmem:[%s282 + $0xb0] sm:$0xff]
      %v329 = vld [vmem:[%s282 + $0xb8] sm:$0xff]
      %v330 = vld [vmem:[%s282 + $0xc0] sm:$0xff]
      %v331 = vld [vmem:[%s282 + $0xc8] sm:$0xff]
      %v332 = vld [vmem:[%s282 + $0xd0] sm:$0xff]
      %v333 = vld [vmem:[%s282 + $0xd8] sm:$0xff]
      %v334 = vld [vmem:[%s282 + $0xe0] sm:$0xff]
      %v335 = vld [vmem:[%s282 + $0xe8] sm:$0xff]
      %v336 = vld [vmem:[%s282 + $0xf0] sm:$0xff]
      %v337 = vld [vmem:[%s282 + $0xf8] sm:$0xff]
      %v338 = vld [vmem:[%s287] sm:$0xff]
      %v339 = vld [vmem:[%s287 + $0x8] sm:$0xff]
      %v340 = vld [vmem:[%s287 + $0x10] sm:$0xff]
      %v341 = vld [vmem:[%s287 + $0x18] sm:$0xff]
      %v342 = vld [vmem:[%s287 + $0x20] sm:$0xff]
      %v343 = vld [vmem:[%s287 + $0x28] sm:$0xff]
      %v344 = vld [vmem:[%s287 + $0x30] sm:$0xff]
      %v345 = vld [vmem:[%s287 + $0x38] sm:$0xff]
      %v346 = vld [vmem:[%s287 + $0x40] sm:$0xff]
      %v347 = vld [vmem:[%s287 + $0x48] sm:$0xff]
      %v348 = vld [vmem:[%s287 + $0x50] sm:$0xff]
      %v349 = vld [vmem:[%s287 + $0x58] sm:$0xff]
      %v350 = vld [vmem:[%s287 + $0x60] sm:$0xff]
      %v351 = vld [vmem:[%s287 + $0x68] sm:$0xff]
      %v352 = vld [vmem:[%s287 + $0x70] sm:$0xff]
      %v353 = vld [vmem:[%s287 + $0x78] sm:$0xff]
      %v354 = vld [vmem:[%s287 + $0x80] sm:$0xff]
      %v355 = vld [vmem:[%s287 + $0x88] sm:$0xff]
      %v356 = vld [vmem:[%s287 + $0x90] sm:$0xff]
      %v357 = vld [vmem:[%s287 + $0x98] sm:$0xff]
      %v358 = vld [vmem:[%s287 + $0xa0] sm:$0xff]
      %v359 = vld [vmem:[%s287 + $0xa8] sm:$0xff]
      %v360 = vld [vmem:[%s287 + $0xb0] sm:$0xff]
      %v361 = vld [vmem:[%s287 + $0xb8] sm:$0xff]
      %v362 = vld [vmem:[%s287 + $0xc0] sm:$0xff]
      %v363 = vld [vmem:[%s287 + $0xc8] sm:$0xff]
      %v364 = vld [vmem:[%s287 + $0xd0] sm:$0xff]
      %v365 = vld [vmem:[%s287 + $0xd8] sm:$0xff]
      %v366 = vld [vmem:[%s287 + $0xe0] sm:$0xff]
      %v367 = vld [vmem:[%s287 + $0xe8] sm:$0xff]
      %v368 = vld [vmem:[%s287 + $0xf0] sm:$0xff]
      %v369 = vld [vmem:[%s287 + $0xf8] sm:$0xff]
      %v374 = vrot.slane %v298, 1
      %v375 = vrot.slane %v298, 2
      %v376 = vrot.slane %v298, 3
      %v377 = vrot.slane %v298, 4
      %v378 = vrot.slane %v298, 5
      %v379 = vrot.slane %v298, 6
      %v380 = vrot.slane %v298, 7
      %v381 = vrot.slane %v299, 1
      %v382 = vrot.slane %v299, 2
      %v383 = vrot.slane %v299, 3
      %v384 = vrot.slane %v299, 4
      %v385 = vrot.slane %v299, 5
      %v386 = vrot.slane %v299, 6
      %v387 = vrot.slane %v299, 7
      %v388 = vrot.slane %v300, 1
      %v389 = vrot.slane %v300, 2
      %v390 = vrot.slane %v300, 3
      %v391 = vrot.slane %v300, 4
      %v392 = vrot.slane %v300, 5
      %v393 = vrot.slane %v300, 6
      %v394 = vrot.slane %v300, 7
      %v395 = vrot.slane %v301, 1
      %v396 = vrot.slane %v301, 2
      %v397 = vrot.slane %v301, 3
      %v398 = vrot.slane %v301, 4
      %v399 = vrot.slane %v301, 5
      %v400 = vrot.slane %v301, 6
      %v401 = vrot.slane %v301, 7
      %v406 = vrot.slane %v302, 1
      %v407 = vrot.slane %v302, 2
      %v408 = vrot.slane %v302, 3
      %v409 = vrot.slane %v302, 4
      %v410 = vrot.slane %v302, 5
      %v411 = vrot.slane %v302, 6
      %v412 = vrot.slane %v302, 7
      %v413 = vrot.slane %v303, 1
      %v414 = vrot.slane %v303, 2
      %v415 = vrot.slane %v303, 3
      %v416 = vrot.slane %v303, 4
      %v417 = vrot.slane %v303, 5
      %v418 = vrot.slane %v303, 6
      %v419 = vrot.slane %v303, 7
      %v420 = vrot.slane %v304, 1
      %v421 = vrot.slane %v304, 2
      %v422 = vrot.slane %v304, 3
      %v423 = vrot.slane %v304, 4
      %v424 = vrot.slane %v304, 5
      %v425 = vrot.slane %v304, 6
      %v426 = vrot.slane %v304, 7
      %v427 = vrot.slane %v305, 1
      %v428 = vrot.slane %v305, 2
      %v429 = vrot.slane %v305, 3
      %v430 = vrot.slane %v305, 4
      %v431 = vrot.slane %v305, 5
      %v432 = vrot.slane %v305, 6
      %v433 = vrot.slane %v305, 7
      %v434 = vperm.slane %v298, 0
      %v435 = vperm.slane %v374, 0
      %v436 = vperm.slane %v375, 0
      %v437 = vperm.slane %v376, 0
      %v438 = vperm.slane %v377, 0
      %v439 = vperm.slane %v378, 0
      %v440 = vperm.slane %v379, 0
      %v441 = vperm.slane %v380, 0
      %v442 = vperm.slane %v299, 0
      %v443 = vperm.slane %v381, 0
      %v444 = vperm.slane %v382, 0
      %v445 = vperm.slane %v383, 0
      %v446 = vperm.slane %v384, 0
      %v447 = vperm.slane %v385, 0
      %v448 = vperm.slane %v386, 0
      %v449 = vperm.slane %v387, 0
      %v450 = vperm.slane %v300, 0
      %v451 = vperm.slane %v388, 0
      %v452 = vperm.slane %v389, 0
      %v453 = vperm.slane %v390, 0
      %v454 = vperm.slane %v391, 0
      %v455 = vperm.slane %v392, 0
      %v456 = vperm.slane %v393, 0
      %v457 = vperm.slane %v394, 0
      %v458 = vperm.slane %v301, 0
      %v459 = vperm.slane %v395, 0
      %v460 = vperm.slane %v396, 0
      %v461 = vperm.slane %v397, 0
      %v462 = vperm.slane %v398, 0
      %v463 = vperm.slane %v399, 0
      %v464 = vperm.slane %v400, 0
      %v465 = vperm.slane %v401, 0
      %v498 = vmul.f32 %v434, %v306
      %v499 = vmul.f32 %v434, %v307
      %v500 = vmul.f32 %v435, %v308
      %v501 = vmul.f32 %v435, %v309
      %v502 = vmul.f32 %v436, %v310
      %v503 = vmul.f32 %v436, %v311
      %v504 = vmul.f32 %v437, %v312
      %v505 = vmul.f32 %v437, %v313
      %v506 = vmul.f32 %v438, %v314
      %v507 = vmul.f32 %v438, %v315
      %v508 = vmul.f32 %v439, %v316
      %v509 = vmul.f32 %v439, %v317
      %v510 = vmul.f32 %v440, %v318
      %v511 = vmul.f32 %v440, %v319
      %v512 = vmul.f32 %v441, %v320
      %v513 = vmul.f32 %v441, %v321
      %v514 = vmul.f32 %v442, %v322
      %v515 = vmul.f32 %v442, %v323
      %v516 = vmul.f32 %v443, %v324
      %v517 = vmul.f32 %v443, %v325
      %v518 = vmul.f32 %v444, %v326
      %v519 = vmul.f32 %v444, %v327
      %v520 = vmul.f32 %v445, %v328
      %v521 = vmul.f32 %v445, %v329
      %v522 = vmul.f32 %v446, %v330
      %v523 = vmul.f32 %v446, %v331
      %v524 = vmul.f32 %v447, %v332
      %v525 = vmul.f32 %v447, %v333
      %v526 = vmul.f32 %v448, %v334
      %v527 = vmul.f32 %v448, %v335
      %v528 = vmul.f32 %v449, %v336
      %v529 = vmul.f32 %v449, %v337
      %v530 = vmul.f32 %v450, %v306
      %v531 = vmul.f32 %v450, %v307
      %v532 = vmul.f32 %v451, %v308
      %v533 = vmul.f32 %v451, %v309
      %v534 = vmul.f32 %v452, %v310
      %v535 = vmul.f32 %v452, %v311
      %v536 = vmul.f32 %v453, %v312
      %v537 = vmul.f32 %v453, %v313
      %v538 = vmul.f32 %v454, %v314
      %v539 = vmul.f32 %v454, %v315
      %v540 = vmul.f32 %v455, %v316
      %v541 = vmul.f32 %v455, %v317
      %v542 = vmul.f32 %v456, %v318
      %v543 = vmul.f32 %v456, %v319
      %v544 = vmul.f32 %v457, %v320
      %v545 = vmul.f32 %v457, %v321
      %v546 = vmul.f32 %v458, %v322
      %v547 = vmul.f32 %v458, %v323
      %v548 = vmul.f32 %v459, %v324
      %v549 = vmul.f32 %v459, %v325
      %v550 = vmul.f32 %v460, %v326
      %v551 = vmul.f32 %v460, %v327
      %v552 = vmul.f32 %v461, %v328
      %v553 = vmul.f32 %v461, %v329
      %v554 = vmul.f32 %v462, %v330
      %v555 = vmul.f32 %v462, %v331
      %v556 = vmul.f32 %v463, %v332
      %v557 = vmul.f32 %v463, %v333
      %v558 = vmul.f32 %v464, %v334
      %v559 = vmul.f32 %v464, %v335
      %v560 = vmul.f32 %v465, %v336
      %v561 = vmul.f32 %v465, %v337
      %v562 = vperm.slane %v302, 0
      %v563 = vperm.slane %v406, 0
      %v564 = vperm.slane %v407, 0
      %v565 = vperm.slane %v408, 0
      %v566 = vperm.slane %v409, 0
      %v567 = vperm.slane %v410, 0
      %v568 = vperm.slane %v411, 0
      %v569 = vperm.slane %v412, 0
      %v570 = vperm.slane %v303, 0
      %v571 = vperm.slane %v413, 0
      %v572 = vperm.slane %v414, 0
      %v573 = vperm.slane %v415, 0
      %v574 = vperm.slane %v416, 0
      %v575 = vperm.slane %v417, 0
      %v576 = vperm.slane %v418, 0
      %v577 = vperm.slane %v419, 0
      %v578 = vperm.slane %v304, 0
      %v579 = vperm.slane %v420, 0
      %v580 = vperm.slane %v421, 0
      %v581 = vperm.slane %v422, 0
      %v582 = vperm.slane %v423, 0
      %v583 = vperm.slane %v424, 0
      %v584 = vperm.slane %v425, 0
      %v585 = vperm.slane %v426, 0
      %v586 = vperm.slane %v305, 0
      %v587 = vperm.slane %v427, 0
      %v588 = vperm.slane %v428, 0
      %v589 = vperm.slane %v429, 0
      %v590 = vperm.slane %v430, 0
      %v591 = vperm.slane %v431, 0
      %v592 = vperm.slane %v432, 0
      %v593 = vperm.slane %v433, 0
      %v626 = vmul.f32 %v562, %v338
      %v627 = vmul.f32 %v562, %v339
      %v628 = vmul.f32 %v563, %v340
      %v629 = vmul.f32 %v563, %v341
      %v630 = vmul.f32 %v564, %v342
      %v631 = vmul.f32 %v564, %v343
      %v632 = vmul.f32 %v565, %v344
      %v633 = vmul.f32 %v565, %v345
      %v634 = vmul.f32 %v566, %v346
      %v635 = vmul.f32 %v566, %v347
      %v636 = vmul.f32 %v567, %v348
      %v637 = vmul.f32 %v567, %v349
      %v638 = vmul.f32 %v568, %v350
      %v639 = vmul.f32 %v568, %v351
      %v640 = vmul.f32 %v569, %v352
      %v641 = vmul.f32 %v569, %v353
      %v642 = vmul.f32 %v570, %v354
      %v643 = vmul.f32 %v570, %v355
      %v644 = vmul.f32 %v571, %v356
      %v645 = vmul.f32 %v571, %v357
      %v646 = vmul.f32 %v572, %v358
      %v647 = vmul.f32 %v572, %v359
      %v648 = vmul.f32 %v573, %v360
      %v649 = vmul.f32 %v573, %v361
      %v650 = vmul.f32 %v574, %v362
      %v651 = vmul.f32 %v574, %v363
      %v652 = vmul.f32 %v575, %v364
      %v653 = vmul.f32 %v575, %v365
      %v654 = vmul.f32 %v576, %v366
      %v655 = vmul.f32 %v576, %v367
      %v656 = vmul.f32 %v577, %v368
      %v657 = vmul.f32 %v577, %v369
      %v658 = vmul.f32 %v578, %v338
      %v659 = vmul.f32 %v578, %v339
      %v660 = vmul.f32 %v579, %v340
      %v661 = vmul.f32 %v579, %v341
      %v662 = vmul.f32 %v580, %v342
      %v663 = vmul.f32 %v580, %v343
      %v664 = vmul.f32 %v581, %v344
      %v665 = vmul.f32 %v581, %v345
      %v666 = vmul.f32 %v582, %v346
      %v667 = vmul.f32 %v582, %v347
      %v668 = vmul.f32 %v583, %v348
      %v669 = vmul.f32 %v583, %v349
      %v670 = vmul.f32 %v584, %v350
      %v671 = vmul.f32 %v584, %v351
      %v672 = vmul.f32 %v585, %v352
      %v673 = vmul.f32 %v585, %v353
      %v674 = vmul.f32 %v586, %v354
      %v675 = vmul.f32 %v586, %v355
      %v676 = vmul.f32 %v587, %v356
      %v677 = vmul.f32 %v587, %v357
      %v678 = vmul.f32 %v588, %v358
      %v679 = vmul.f32 %v588, %v359
      %v680 = vmul.f32 %v589, %v360
      %v681 = vmul.f32 %v589, %v361
      %v682 = vmul.f32 %v590, %v362
      %v683 = vmul.f32 %v590, %v363
      %v684 = vmul.f32 %v591, %v364
      %v685 = vmul.f32 %v591, %v365
      %v686 = vmul.f32 %v592, %v366
      %v687 = vmul.f32 %v592, %v367
      %v688 = vmul.f32 %v593, %v368
      %v689 = vmul.f32 %v593, %v369
      %v690 = vsub.f32 %v498, %v626
      %v691 = vsub.f32 %v499, %v627
      %v692 = vsub.f32 %v500, %v628
      %v693 = vsub.f32 %v501, %v629
      %v694 = vsub.f32 %v502, %v630
      %v695 = vsub.f32 %v503, %v631
      %v696 = vsub.f32 %v504, %v632
      %v697 = vsub.f32 %v505, %v633
      %v698 = vsub.f32 %v506, %v634
      %v699 = vsub.f32 %v507, %v635
      %v700 = vsub.f32 %v508, %v636
      %v701 = vsub.f32 %v509, %v637
      %v702 = vsub.f32 %v510, %v638
      %v703 = vsub.f32 %v511, %v639
      %v704 = vsub.f32 %v512, %v640
      %v705 = vsub.f32 %v513, %v641
      %v706 = vsub.f32 %v514, %v642
      %v707 = vsub.f32 %v515, %v643
      %v708 = vsub.f32 %v516, %v644
      %v709 = vsub.f32 %v517, %v645
      %v710 = vsub.f32 %v518, %v646
      %v711 = vsub.f32 %v519, %v647
      %v712 = vsub.f32 %v520, %v648
      %v713 = vsub.f32 %v521, %v649
      %v714 = vsub.f32 %v522, %v650
      %v715 = vsub.f32 %v523, %v651
      %v716 = vsub.f32 %v524, %v652
      %v717 = vsub.f32 %v525, %v653
      %v718 = vsub.f32 %v526, %v654
      %v719 = vsub.f32 %v527, %v655
      %v720 = vsub.f32 %v528, %v656
      %v721 = vsub.f32 %v529, %v657
      %v722 = vsub.f32 %v530, %v658
      %v723 = vsub.f32 %v531, %v659
      %v724 = vsub.f32 %v532, %v660
      %v725 = vsub.f32 %v533, %v661
      %v726 = vsub.f32 %v534, %v662
      %v727 = vsub.f32 %v535, %v663
      %v728 = vsub.f32 %v536, %v664
      %v729 = vsub.f32 %v537, %v665
      %v730 = vsub.f32 %v538, %v666
      %v731 = vsub.f32 %v539, %v667
      %v732 = vsub.f32 %v540, %v668
      %v733 = vsub.f32 %v541, %v669
      %v734 = vsub.f32 %v542, %v670
      %v735 = vsub.f32 %v543, %v671
      %v736 = vsub.f32 %v544, %v672
      %v737 = vsub.f32 %v545, %v673
      %v738 = vsub.f32 %v546, %v674
      %v739 = vsub.f32 %v547, %v675
      %v740 = vsub.f32 %v548, %v676
      %v741 = vsub.f32 %v549, %v677
      %v742 = vsub.f32 %v550, %v678
      %v743 = vsub.f32 %v551, %v679
      %v744 = vsub.f32 %v552, %v680
      %v745 = vsub.f32 %v553, %v681
      %v746 = vsub.f32 %v554, %v682
      %v747 = vsub.f32 %v555, %v683
      %v748 = vsub.f32 %v556, %v684
      %v749 = vsub.f32 %v557, %v685
      %v750 = vsub.f32 %v558, %v686
      %v751 = vsub.f32 %v559, %v687
      %v752 = vsub.f32 %v560, %v688
      %v753 = vsub.f32 %v561, %v689
      %vm754 = vcmask 130048
      %v755 = vsel %vm754, %v690, 0.0
      %v756 = vsel %vm754, %v692, 0.0
      %v757 = vadd.f32 %v755, %v756
      %v758 = vsel %vm754, %v694, 0.0
      %v759 = vadd.f32 %v757, %v758
      %v760 = vsel %vm754, %v696, 0.0
      %v761 = vadd.f32 %v759, %v760
      %v762 = vsel %vm754, %v698, 0.0
      %v763 = vadd.f32 %v761, %v762
      %v764 = vsel %vm754, %v700, 0.0
      %v765 = vadd.f32 %v763, %v764
      %v766 = vsel %vm754, %v702, 0.0
      %v767 = vadd.f32 %v765, %v766
      %v768 = vsel %vm754, %v704, 0.0
      %v769 = vadd.f32 %v767, %v768
      %v770 = vsel %vm754, %v706, 0.0
      %v771 = vadd.f32 %v769, %v770
      %v772 = vsel %vm754, %v708, 0.0
      %v773 = vadd.f32 %v771, %v772
      %v774 = vsel %vm754, %v710, 0.0
      %v775 = vadd.f32 %v773, %v774
      %v776 = vsel %vm754, %v712, 0.0
      %v777 = vadd.f32 %v775, %v776
      %v778 = vsel %vm754, %v714, 0.0
      %v779 = vadd.f32 %v777, %v778
      %v780 = vsel %vm754, %v716, 0.0
      %v781 = vadd.f32 %v779, %v780
      %v782 = vsel %vm754, %v718, 0.0
      %v783 = vadd.f32 %v781, %v782
      %v784 = vsel %vm754, %v720, 0.0
      %v785 = vadd.f32 %v783, %v784
      %v786 = vsel %vm754, %v691, 0.0
      %v787 = vsel %vm754, %v693, 0.0
      %v788 = vadd.f32 %v786, %v787
      %v789 = vsel %vm754, %v695, 0.0
      %v790 = vadd.f32 %v788, %v789
      %v791 = vsel %vm754, %v697, 0.0
      %v792 = vadd.f32 %v790, %v791
      %v793 = vsel %vm754, %v699, 0.0
      %v794 = vadd.f32 %v792, %v793
      %v795 = vsel %vm754, %v701, 0.0
      %v796 = vadd.f32 %v794, %v795
      %v797 = vsel %vm754, %v703, 0.0
      %v798 = vadd.f32 %v796, %v797
      %v799 = vsel %vm754, %v705, 0.0
      %v800 = vadd.f32 %v798, %v799
      %v801 = vsel %vm754, %v707, 0.0
      %v802 = vadd.f32 %v800, %v801
      %v803 = vsel %vm754, %v709, 0.0
      %v804 = vadd.f32 %v802, %v803
      %v805 = vsel %vm754, %v711, 0.0
      %v806 = vadd.f32 %v804, %v805
      %v807 = vsel %vm754, %v713, 0.0
      %v808 = vadd.f32 %v806, %v807
      %v809 = vsel %vm754, %v715, 0.0
      %v810 = vadd.f32 %v808, %v809
      %v811 = vsel %vm754, %v717, 0.0
      %v812 = vadd.f32 %v810, %v811
      %v813 = vsel %vm754, %v719, 0.0
      %v814 = vadd.f32 %v812, %v813
      %v815 = vsel %vm754, %v721, 0.0
      %v816 = vadd.f32 %v814, %v815
      %v817 = vsel %vm754, %v722, 0.0
      %v818 = vsel %vm754, %v724, 0.0
      %v819 = vadd.f32 %v817, %v818
      %v820 = vsel %vm754, %v726, 0.0
      %v821 = vadd.f32 %v819, %v820
      %v822 = vsel %vm754, %v728, 0.0
      %v823 = vadd.f32 %v821, %v822
      %v824 = vsel %vm754, %v730, 0.0
      %v825 = vadd.f32 %v823, %v824
      %v826 = vsel %vm754, %v732, 0.0
      %v827 = vadd.f32 %v825, %v826
      %v828 = vsel %vm754, %v734, 0.0
      %v829 = vadd.f32 %v827, %v828
      %v830 = vsel %vm754, %v736, 0.0
      %v831 = vadd.f32 %v829, %v830
      %v832 = vsel %vm754, %v738, 0.0
      %v833 = vadd.f32 %v831, %v832
      %v834 = vsel %vm754, %v740, 0.0
      %v835 = vadd.f32 %v833, %v834
      %v836 = vsel %vm754, %v742, 0.0
      %v837 = vadd.f32 %v835, %v836
      %v838 = vsel %vm754, %v744, 0.0
      %v839 = vadd.f32 %v837, %v838
      %v840 = vsel %vm754, %v746, 0.0
      %v841 = vadd.f32 %v839, %v840
      %v842 = vsel %vm754, %v748, 0.0
      %v843 = vadd.f32 %v841, %v842
      %v844 = vsel %vm754, %v750, 0.0
      %v845 = vadd.f32 %v843, %v844
      %v846 = vsel %vm754, %v752, 0.0
      %v847 = vadd.f32 %v845, %v846
      %v848 = vsel %vm754, %v723, 0.0
      %v849 = vsel %vm754, %v725, 0.0
      %v850 = vadd.f32 %v848, %v849
      %v851 = vsel %vm754, %v727, 0.0
      %v852 = vadd.f32 %v850, %v851
      %v853 = vsel %vm754, %v729, 0.0
      %v854 = vadd.f32 %v852, %v853
      %v855 = vsel %vm754, %v731, 0.0
      %v856 = vadd.f32 %v854, %v855
      %v857 = vsel %vm754, %v733, 0.0
      %v858 = vadd.f32 %v856, %v857
      %v859 = vsel %vm754, %v735, 0.0
      %v860 = vadd.f32 %v858, %v859
      %v861 = vsel %vm754, %v737, 0.0
      %v862 = vadd.f32 %v860, %v861
      %v863 = vsel %vm754, %v739, 0.0
      %v864 = vadd.f32 %v862, %v863
      %v865 = vsel %vm754, %v741, 0.0
      %v866 = vadd.f32 %v864, %v865
      %v867 = vsel %vm754, %v743, 0.0
      %v868 = vadd.f32 %v866, %v867
      %v869 = vsel %vm754, %v745, 0.0
      %v870 = vadd.f32 %v868, %v869
      %v871 = vsel %vm754, %v747, 0.0
      %v872 = vadd.f32 %v870, %v871
      %v873 = vsel %vm754, %v749, 0.0
      %v874 = vadd.f32 %v872, %v873
      %v875 = vsel %vm754, %v751, 0.0
      %v876 = vadd.f32 %v874, %v875
      %v877 = vsel %vm754, %v753, 0.0
      %v878 = vadd.f32 %v876, %v877
      %879 = vst.msk [vmem:[%s292] sm:$0xff] %vm754, %v785
      %880 = vst.msk [vmem:[%s292 + $0x8] sm:$0xff] %vm754, %v816
      %881 = vst.msk [vmem:[%s292 + $0x10] sm:$0xff] %vm754, %v847
      %882 = vst.msk [vmem:[%s292 + $0x18] sm:$0xff] %vm754, %v878
      %v883 = vmul.f32 %v562, %v306
      %v884 = vmul.f32 %v562, %v307
      %v885 = vmul.f32 %v563, %v308
      %v886 = vmul.f32 %v563, %v309
      %v887 = vmul.f32 %v564, %v310
      %v888 = vmul.f32 %v564, %v311
      %v889 = vmul.f32 %v565, %v312
      %v890 = vmul.f32 %v565, %v313
      %v891 = vmul.f32 %v566, %v314
      %v892 = vmul.f32 %v566, %v315
      %v893 = vmul.f32 %v567, %v316
      %v894 = vmul.f32 %v567, %v317
      %v895 = vmul.f32 %v568, %v318
      %v896 = vmul.f32 %v568, %v319
      %v897 = vmul.f32 %v569, %v320
      %v898 = vmul.f32 %v569, %v321
      %v899 = vmul.f32 %v570, %v322
      %v900 = vmul.f32 %v570, %v323
      %v901 = vmul.f32 %v571, %v324
      %v902 = vmul.f32 %v571, %v325
      %v903 = vmul.f32 %v572, %v326
      %v904 = vmul.f32 %v572, %v327
      %v905 = vmul.f32 %v573, %v328
      %v906 = vmul.f32 %v573, %v329
      %v907 = vmul.f32 %v574, %v330
      %v908 = vmul.f32 %v574, %v331
      %v909 = vmul.f32 %v575, %v332
      %v910 = vmul.f32 %v575, %v333
      %v911 = vmul.f32 %v576, %v334
      %v912 = vmul.f32 %v576, %v335
      %v913 = vmul.f32 %v577, %v336
      %v914 = vmul.f32 %v577, %v337
      %v915 = vmul.f32 %v578, %v306
      %v916 = vmul.f32 %v578, %v307
      %v917 = vmul.f32 %v579, %v308
      %v918 = vmul.f32 %v579, %v309
      %v919 = vmul.f32 %v580, %v310
      %v920 = vmul.f32 %v580, %v311
      %v921 = vmul.f32 %v581, %v312
      %v922 = vmul.f32 %v581, %v313
      %v923 = vmul.f32 %v582, %v314
      %v924 = vmul.f32 %v582, %v315
      %v925 = vmul.f32 %v583, %v316
      %v926 = vmul.f32 %v583, %v317
      %v927 = vmul.f32 %v584, %v318
      %v928 = vmul.f32 %v584, %v319
      %v929 = vmul.f32 %v585, %v320
      %v930 = vmul.f32 %v585, %v321
      %v931 = vmul.f32 %v586, %v322
      %v932 = vmul.f32 %v586, %v323
      %v933 = vmul.f32 %v587, %v324
      %v934 = vmul.f32 %v587, %v325
      %v935 = vmul.f32 %v588, %v326
      %v936 = vmul.f32 %v588, %v327
      %v937 = vmul.f32 %v589, %v328
      %v938 = vmul.f32 %v589, %v329
      %v939 = vmul.f32 %v590, %v330
      %v940 = vmul.f32 %v590, %v331
      %v941 = vmul.f32 %v591, %v332
      %v942 = vmul.f32 %v591, %v333
      %v943 = vmul.f32 %v592, %v334
      %v944 = vmul.f32 %v592, %v335
      %v945 = vmul.f32 %v593, %v336
      %v946 = vmul.f32 %v593, %v337
      %v947 = vmul.f32 %v434, %v338
      %v948 = vmul.f32 %v434, %v339
      %v949 = vmul.f32 %v435, %v340
      %v950 = vmul.f32 %v435, %v341
      %v951 = vmul.f32 %v436, %v342
      %v952 = vmul.f32 %v436, %v343
      %v953 = vmul.f32 %v437, %v344
      %v954 = vmul.f32 %v437, %v345
      %v955 = vmul.f32 %v438, %v346
      %v956 = vmul.f32 %v438, %v347
      %v957 = vmul.f32 %v439, %v348
      %v958 = vmul.f32 %v439, %v349
      %v959 = vmul.f32 %v440, %v350
      %v960 = vmul.f32 %v440, %v351
      %v961 = vmul.f32 %v441, %v352
      %v962 = vmul.f32 %v441, %v353
      %v963 = vmul.f32 %v442, %v354
      %v964 = vmul.f32 %v442, %v355
      %v965 = vmul.f32 %v443, %v356
      %v966 = vmul.f32 %v443, %v357
      %v967 = vmul.f32 %v444, %v358
      %v968 = vmul.f32 %v444, %v359
      %v969 = vmul.f32 %v445, %v360
      %v970 = vmul.f32 %v445, %v361
      %v971 = vmul.f32 %v446, %v362
      %v972 = vmul.f32 %v446, %v363
      %v973 = vmul.f32 %v447, %v364
      %v974 = vmul.f32 %v447, %v365
      %v975 = vmul.f32 %v448, %v366
      %v976 = vmul.f32 %v448, %v367
      %v977 = vmul.f32 %v449, %v368
      %v978 = vmul.f32 %v449, %v369
      %v979 = vmul.f32 %v450, %v338
      %v980 = vmul.f32 %v450, %v339
      %v981 = vmul.f32 %v451, %v340
      %v982 = vmul.f32 %v451, %v341
      %v983 = vmul.f32 %v452, %v342
      %v984 = vmul.f32 %v452, %v343
      %v985 = vmul.f32 %v453, %v344
      %v986 = vmul.f32 %v453, %v345
      %v987 = vmul.f32 %v454, %v346
      %v988 = vmul.f32 %v454, %v347
      %v989 = vmul.f32 %v455, %v348
      %v990 = vmul.f32 %v455, %v349
      %v991 = vmul.f32 %v456, %v350
      %v992 = vmul.f32 %v456, %v351
      %v993 = vmul.f32 %v457, %v352
      %v994 = vmul.f32 %v457, %v353
      %v995 = vmul.f32 %v458, %v354
      %v996 = vmul.f32 %v458, %v355
      %v997 = vmul.f32 %v459, %v356
      %v998 = vmul.f32 %v459, %v357
      %v999 = vmul.f32 %v460, %v358
      %v1000 = vmul.f32 %v460, %v359
      %v1001 = vmul.f32 %v461, %v360
      %v1002 = vmul.f32 %v461, %v361
      %v1003 = vmul.f32 %v462, %v362
      %v1004 = vmul.f32 %v462, %v363
      %v1005 = vmul.f32 %v463, %v364
      %v1006 = vmul.f32 %v463, %v365
      %v1007 = vmul.f32 %v464, %v366
      %v1008 = vmul.f32 %v464, %v367
      %v1009 = vmul.f32 %v465, %v368
      %v1010 = vmul.f32 %v465, %v369
      %v1011 = vadd.f32 %v883, %v947
      %v1012 = vadd.f32 %v884, %v948
      %v1013 = vadd.f32 %v885, %v949
      %v1014 = vadd.f32 %v886, %v950
      %v1015 = vadd.f32 %v887, %v951
      %v1016 = vadd.f32 %v888, %v952
      %v1017 = vadd.f32 %v889, %v953
      %v1018 = vadd.f32 %v890, %v954
      %v1019 = vadd.f32 %v891, %v955
      %v1020 = vadd.f32 %v892, %v956
      %v1021 = vadd.f32 %v893, %v957
      %v1022 = vadd.f32 %v894, %v958
      %v1023 = vadd.f32 %v895, %v959
      %v1024 = vadd.f32 %v896, %v960
      %v1025 = vadd.f32 %v897, %v961
      %v1026 = vadd.f32 %v898, %v962
      %v1027 = vadd.f32 %v899, %v963
      %v1028 = vadd.f32 %v900, %v964
      %v1029 = vadd.f32 %v901, %v965
      %v1030 = vadd.f32 %v902, %v966
      %v1031 = vadd.f32 %v903, %v967
      %v1032 = vadd.f32 %v904, %v968
      %v1033 = vadd.f32 %v905, %v969
      %v1034 = vadd.f32 %v906, %v970
      %v1035 = vadd.f32 %v907, %v971
      %v1036 = vadd.f32 %v908, %v972
      %v1037 = vadd.f32 %v909, %v973
      %v1038 = vadd.f32 %v910, %v974
      %v1039 = vadd.f32 %v911, %v975
      %v1040 = vadd.f32 %v912, %v976
      %v1041 = vadd.f32 %v913, %v977
      %v1042 = vadd.f32 %v914, %v978
      %v1043 = vadd.f32 %v915, %v979
      %v1044 = vadd.f32 %v916, %v980
      %v1045 = vadd.f32 %v917, %v981
      %v1046 = vadd.f32 %v918, %v982
      %v1047 = vadd.f32 %v919, %v983
      %v1048 = vadd.f32 %v920, %v984
      %v1049 = vadd.f32 %v921, %v985
      %v1050 = vadd.f32 %v922, %v986
      %v1051 = vadd.f32 %v923, %v987
      %v1052 = vadd.f32 %v924, %v988
      %v1053 = vadd.f32 %v925, %v989
      %v1054 = vadd.f32 %v926, %v990
      %v1055 = vadd.f32 %v927, %v991
      %v1056 = vadd.f32 %v928, %v992
      %v1057 = vadd.f32 %v929, %v993
      %v1058 = vadd.f32 %v930, %v994
      %v1059 = vadd.f32 %v931, %v995
      %v1060 = vadd.f32 %v932, %v996
      %v1061 = vadd.f32 %v933, %v997
      %v1062 = vadd.f32 %v934, %v998
      %v1063 = vadd.f32 %v935, %v999
      %v1064 = vadd.f32 %v936, %v1000
      %v1065 = vadd.f32 %v937, %v1001
      %v1066 = vadd.f32 %v938, %v1002
      %v1067 = vadd.f32 %v939, %v1003
      %v1068 = vadd.f32 %v940, %v1004
      %v1069 = vadd.f32 %v941, %v1005
      %v1070 = vadd.f32 %v942, %v1006
      %v1071 = vadd.f32 %v943, %v1007
      %v1072 = vadd.f32 %v944, %v1008
      %v1073 = vadd.f32 %v945, %v1009
      %v1074 = vadd.f32 %v946, %v1010
      %v1075 = vsel %vm754, %v1011, 0.0
      %v1076 = vsel %vm754, %v1013, 0.0
      %v1077 = vadd.f32 %v1075, %v1076
      %v1078 = vsel %vm754, %v1015, 0.0
      %v1079 = vadd.f32 %v1077, %v1078
      %v1080 = vsel %vm754, %v1017, 0.0
      %v1081 = vadd.f32 %v1079, %v1080
      %v1082 = vsel %vm754, %v1019, 0.0
      %v1083 = vadd.f32 %v1081, %v1082
      %v1084 = vsel %vm754, %v1021, 0.0
      %v1085 = vadd.f32 %v1083, %v1084
      %v1086 = vsel %vm754, %v1023, 0.0
      %v1087 = vadd.f32 %v1085, %v1086
      %v1088 = vsel %vm754, %v1025, 0.0
      %v1089 = vadd.f32 %v1087, %v1088
      %v1090 = vsel %vm754, %v1027, 0.0
      %v1091 = vadd.f32 %v1089, %v1090
      %v1092 = vsel %vm754, %v1029, 0.0
      %v1093 = vadd.f32 %v1091, %v1092
      %v1094 = vsel %vm754, %v1031, 0.0
      %v1095 = vadd.f32 %v1093, %v1094
      %v1096 = vsel %vm754, %v1033, 0.0
      %v1097 = vadd.f32 %v1095, %v1096
      %v1098 = vsel %vm754, %v1035, 0.0
      %v1099 = vadd.f32 %v1097, %v1098
      %v1100 = vsel %vm754, %v1037, 0.0
      %v1101 = vadd.f32 %v1099, %v1100
      %v1102 = vsel %vm754, %v1039, 0.0
      %v1103 = vadd.f32 %v1101, %v1102
      %v1104 = vsel %vm754, %v1041, 0.0
      %v1105 = vadd.f32 %v1103, %v1104
      %v1106 = vsel %vm754, %v1012, 0.0
      %v1107 = vsel %vm754, %v1014, 0.0
      %v1108 = vadd.f32 %v1106, %v1107
      %v1109 = vsel %vm754, %v1016, 0.0
      %v1110 = vadd.f32 %v1108, %v1109
      %v1111 = vsel %vm754, %v1018, 0.0
      %v1112 = vadd.f32 %v1110, %v1111
      %v1113 = vsel %vm754, %v1020, 0.0
      %v1114 = vadd.f32 %v1112, %v1113
      %v1115 = vsel %vm754, %v1022, 0.0
      %v1116 = vadd.f32 %v1114, %v1115
      %v1117 = vsel %vm754, %v1024, 0.0
      %v1118 = vadd.f32 %v1116, %v1117
      %v1119 = vsel %vm754, %v1026, 0.0
      %v1120 = vadd.f32 %v1118, %v1119
      %v1121 = vsel %vm754, %v1028, 0.0
      %v1122 = vadd.f32 %v1120, %v1121
      %v1123 = vsel %vm754, %v1030, 0.0
      %v1124 = vadd.f32 %v1122, %v1123
      %v1125 = vsel %vm754, %v1032, 0.0
      %v1126 = vadd.f32 %v1124, %v1125
      %v1127 = vsel %vm754, %v1034, 0.0
      %v1128 = vadd.f32 %v1126, %v1127
      %v1129 = vsel %vm754, %v1036, 0.0
      %v1130 = vadd.f32 %v1128, %v1129
      %v1131 = vsel %vm754, %v1038, 0.0
      %v1132 = vadd.f32 %v1130, %v1131
      %v1133 = vsel %vm754, %v1040, 0.0
      %v1134 = vadd.f32 %v1132, %v1133
      %v1135 = vsel %vm754, %v1042, 0.0
      %v1136 = vadd.f32 %v1134, %v1135
      %v1137 = vsel %vm754, %v1043, 0.0
      %v1138 = vsel %vm754, %v1045, 0.0
      %v1139 = vadd.f32 %v1137, %v1138
      %v1140 = vsel %vm754, %v1047, 0.0
      %v1141 = vadd.f32 %v1139, %v1140
      %v1142 = vsel %vm754, %v1049, 0.0
      %v1143 = vadd.f32 %v1141, %v1142
      %v1144 = vsel %vm754, %v1051, 0.0
      %v1145 = vadd.f32 %v1143, %v1144
      %v1146 = vsel %vm754, %v1053, 0.0
      %v1147 = vadd.f32 %v1145, %v1146
      %v1148 = vsel %vm754, %v1055, 0.0
      %v1149 = vadd.f32 %v1147, %v1148
      %v1150 = vsel %vm754, %v1057, 0.0
      %v1151 = vadd.f32 %v1149, %v1150
      %v1152 = vsel %vm754, %v1059, 0.0
      %v1153 = vadd.f32 %v1151, %v1152
      %v1154 = vsel %vm754, %v1061, 0.0
      %v1155 = vadd.f32 %v1153, %v1154
      %v1156 = vsel %vm754, %v1063, 0.0
      %v1157 = vadd.f32 %v1155, %v1156
      %v1158 = vsel %vm754, %v1065, 0.0
      %v1159 = vadd.f32 %v1157, %v1158
      %v1160 = vsel %vm754, %v1067, 0.0
      %v1161 = vadd.f32 %v1159, %v1160
      %v1162 = vsel %vm754, %v1069, 0.0
      %v1163 = vadd.f32 %v1161, %v1162
      %v1164 = vsel %vm754, %v1071, 0.0
      %v1165 = vadd.f32 %v1163, %v1164
      %v1166 = vsel %vm754, %v1073, 0.0
      %v1167 = vadd.f32 %v1165, %v1166
      %v1168 = vsel %vm754, %v1044, 0.0
      %v1169 = vsel %vm754, %v1046, 0.0
      %v1170 = vadd.f32 %v1168, %v1169
      %v1171 = vsel %vm754, %v1048, 0.0
      %v1172 = vadd.f32 %v1170, %v1171
      %v1173 = vsel %vm754, %v1050, 0.0
      %v1174 = vadd.f32 %v1172, %v1173
      %v1175 = vsel %vm754, %v1052, 0.0
      %v1176 = vadd.f32 %v1174, %v1175
      %v1177 = vsel %vm754, %v1054, 0.0
      %v1178 = vadd.f32 %v1176, %v1177
      %v1179 = vsel %vm754, %v1056, 0.0
      %v1180 = vadd.f32 %v1178, %v1179
      %v1181 = vsel %vm754, %v1058, 0.0
      %v1182 = vadd.f32 %v1180, %v1181
      %v1183 = vsel %vm754, %v1060, 0.0
      %v1184 = vadd.f32 %v1182, %v1183
      %v1185 = vsel %vm754, %v1062, 0.0
      %v1186 = vadd.f32 %v1184, %v1185
      %v1187 = vsel %vm754, %v1064, 0.0
      %v1188 = vadd.f32 %v1186, %v1187
      %v1189 = vsel %vm754, %v1066, 0.0
      %v1190 = vadd.f32 %v1188, %v1189
      %v1191 = vsel %vm754, %v1068, 0.0
      %v1192 = vadd.f32 %v1190, %v1191
      %v1193 = vsel %vm754, %v1070, 0.0
      %v1194 = vadd.f32 %v1192, %v1193
      %v1195 = vsel %vm754, %v1072, 0.0
      %v1196 = vadd.f32 %v1194, %v1195
      %v1197 = vsel %vm754, %v1074, 0.0
      %v1198 = vadd.f32 %v1196, %v1197
      %1199 = vst.msk [vmem:[%s297] sm:$0xff] %vm754, %v1105
      %1200 = vst.msk [vmem:[%s297 + $0x8] sm:$0xff] %vm754, %v1136
      %1201 = vst.msk [vmem:[%s297 + $0x10] sm:$0xff] %vm754, %v1167
      %1202 = vst.msk [vmem:[%s297 + $0x18] sm:$0xff] %vm754, %v1198
      %p1203 = scmp.lt.s32.totalorder %s17, 1
      %s1204 = scalar_select %p1203, %s17, 1
      %s1205 = smul.addr %s1204, 4
      %s1206 = smul.addr %s1205, 8
      %s1207 = scalar_lea.vmem %s4, %s1206
      %p1208 = scmp.lt.s32.totalorder %s17, 1
      %s1209 = scalar_select %p1208, %s17, 1
      %s1210 = smul.addr %s1209, 4
      %s1211 = smul.addr %s1210, 8
      %s1212 = scalar_lea.vmem %s5, %s1211
      // Predicated region
      $region37: #{_lambda_.9} parent=35 // pred_check
        %p1213 = pneg %p139
      $region38: #{_lambda_.9} parent=35 // pred_check_branch
        %1215 = sbr.rel (%p1213) target = $region40
      $region39: #{_lambda_.9} parent=35 // pred_region
        _
      $region40: #{_lambda_.9} parent=35 // pred_fallthru
        _
      // Predicated region
      $region41: #{_lambda_.9} parent=35 // pred_check
        %p1216 = pneg %p165
      $region42: #{_lambda_.9} parent=35 // pred_check_branch
        %1218 = sbr.rel (%p1216) target = $region44
      $region43: #{_lambda_.9} parent=35 // pred_region
        _
      $region44: #{_lambda_.9} parent=35 // pred_fallthru
        _
    $region36: #{_lambda_.9} parent=5 // pred_fallthru
      _
    %p1219 = scmp.le.s32.totalorder 2, %s12
    // Predicated region
    $region45: #{_lambda_.9} parent=5 // pred_check
      %p1220 = pneg %p1219
    $region46: #{_lambda_.9} parent=5 // pred_check_branch
      %1222 = sbr.rel (%p1220) target = $region48
    $region47: #{_lambda_.9} parent=5 // pred_region
      %s1223 = ssub.s32 %s12, 2
      // Predicated region
      $region49: #{_lambda_.9} parent=47 // pred_check
        %p1224 = pneg %p145
      $region50: #{_lambda_.9} parent=47 // pred_check_branch
        %1226 = sbr.rel (%p1224) target = $region52
      $region51: #{_lambda_.9} parent=47 // pred_region
        %p1227 = scmp.lt.s32.totalorder %s18, 1
        %s1228 = scalar_select %p1227, %s18, 1
        %s1229 = smul.addr %s1228, 4
        %s1230 = smul.addr %s1229, 8
        %s1231 = scalar_lea.vmem %s4, %s1230
      $region52: #{_lambda_.9} parent=47 // pred_fallthru
        _
      // Predicated region
      $region53: #{_lambda_.9} parent=47 // pred_check
        %p1232 = pneg %p171
      $region54: #{_lambda_.9} parent=47 // pred_check_branch
        %1234 = sbr.rel (%p1232) target = $region56
      $region55: #{_lambda_.9} parent=47 // pred_region
        %p1235 = scmp.lt.s32.totalorder %s18, 1
        %s1236 = scalar_select %p1235, %s18, 1
        %s1237 = smul.addr %s1236, 4
        %s1238 = smul.addr %s1237, 8
        %s1239 = scalar_lea.vmem %s5, %s1238
      $region56: #{_lambda_.9} parent=47 // pred_fallthru
        _
    $region48: #{_lambda_.9} parent=5 // pred_fallthru
      _
  $region6: #{_lambda_.9} parent=0 // loop_footer
    %s16 = sadd.s32 1, %s12
  $region7: #{_lambda_.9} parent=0 // loop_footer_branch
    %11 = sbr.rel target = $region3
  $region8: #{_lambda_.9} parent=0 // loop_exit
    _

// kernel: _lambda_.10
$region0: #{_lambda_.10}
  #allocation0 [shape = 'u32[]', space=smem, size = 0x4, offset = 0x4, fixed_abs, tag = 'smem constant byte address 0x4 - core index']
  #allocation1 [shape = 'u32[72,128]{1,0:T(1,128)}', space=vmem, size = 0x9000, scoped, tag = 'internal scratch']
  %s0 = inlined_call_operand.vmem [shape: f32[512,16], index: 0, kind: input, shape index: {}]
  %s1 = inlined_call_operand.vmem [shape: f32[512,16], index: 1, kind: input, shape index: {}]
  %s2 = inlined_call_operand.vmem [shape: f32[16,16], index: 2, kind: input, shape index: {}]
  %s3 = inlined_call_operand.vmem [shape: f32[1,16], index: 3, kind: input, shape index: {}]
  %s4 = inlined_call_operand.vmem [shape: f32[512,16], index: 4, kind: output, shape index: {}]
  %s5 = sld [smem:[#allocation0]]
  $region49: #{_lambda_.10} parent=0
    _
  %s7 = ssub.s32 1, %s5
  %s8 = scalar_select 0, %s7, %s5
  loop: start=0, step=1, limit=4
  $region2: #{_lambda_.10} parent=0 // loop_pre_header
    _
  $region3: #{_lambda_.10} parent=0 // loop_header
    %s10 = sphi 0, %s14
    %p11 = scmp.ge.s32.totalorder %s10, 4
    %s20 = sphi 0, %s22
    %s23 = sphi 0, %s20
    %s24 = sphi 0, %s23
    %s40 = sphi 0, %s24
    %s46 = sphi 0, %s48
    %s49 = sphi 0, %s46
    %s50 = sphi 0, %s49
    %s66 = sphi 0, %s50
    %s70 = sphi 0, %s70
    %s72 = sphi 0, %s70
    %s73 = sphi 0, %s72
    %s87 = sphi 0, %s73
    %s91 = sphi 0, %s91
    %s93 = sphi 0, %s91
    %s94 = sphi 0, %s93
    %s108 = sphi 0, %s94
    %s114 = sphi 0, %s116
    %s117 = sphi 0, %s114
    %s118 = sphi 0, %s117
    %s134 = sphi 0, %s118
  $region4: #{_lambda_.10} parent=0 // loop_header_branch
    %13 = sbr.rel (%p11) target = $region8
  $region5: #{_lambda_.10} parent=0 // loop_body
    %s15 = ssub.s32 %s10, 1
    %s16 = ssub.s32 %s10, 2
    %s17 = sadd.s32 %s10, 1
    %s18 = ssub.s32 %s10, %s17
    %p19 = scmp.eq.s32.totalorder %s18, 0
    %s21 = sadd.s32 %s20, 1
    %s22 = scalar_select %p19, %s20, %s21
    %p25 = pneg %p19
    %p26 = scmp.eq.s32.totalorder %s10, 1
    %p27 = por %p25, %p26
    %p28 = scmp.ne.s32.totalorder %s20, %s23
    %p29 = scmp.eq.s32.totalorder %s10, 0
    %p30 = por %p28, %p29
    %p31 = scmp.ne.s32.totalorder %s20, %s23
    %p32 = scmp.eq.s32.totalorder %s15, 1
    %p33 = por %p31, %p32
    %p34 = scmp.ne.s32.totalorder %s23, %s24
    %p35 = scmp.eq.s32.totalorder %s15, 0
    %p36 = por %p34, %p35
    %p37 = scmp.ne.s32.totalorder %s23, %s24
    %p38 = scmp.eq.s32.totalorder %s16, 1
    %p39 = por %p37, %p38
    %p41 = scmp.ne.s32.totalorder %s24, %s40
    %p42 = scmp.eq.s32.totalorder %s16, 0
    %p43 = por %p41, %p42
    %s44 = ssub.s32 %s10, %s17
    %p45 = scmp.eq.s32.totalorder %s44, 0
    %s47 = sadd.s32 %s46, 1
    %s48 = scalar_select %p45, %s46, %s47
    %p51 = pneg %p45
    %p52 = scmp.eq.s32.totalorder %s10, 1
    %p53 = por %p51, %p52
    %p54 = scmp.ne.s32.totalorder %s46, %s49
    %p55 = scmp.eq.s32.totalorder %s10, 0
    %p56 = por %p54, %p55
    %p57 = scmp.ne.s32.totalorder %s46, %s49
    %p58 = scmp.eq.s32.totalorder %s15, 1
    %p59 = por %p57, %p58
    %p60 = scmp.ne.s32.totalorder %s49, %s50
    %p61 = scmp.eq.s32.totalorder %s15, 0
    %p62 = por %p60, %p61
    %p63 = scmp.ne.s32.totalorder %s49, %s50
    %p64 = scmp.eq.s32.totalorder %s16, 1
    %p65 = por %p63, %p64
    %p67 = scmp.ne.s32.totalorder %s50, %s66
    %p68 = scmp.eq.s32.totalorder %s16, 0
    %p69 = por %p67, %p68
    %s71 = sadd.s32 %s70, 1
    %p74 = scmp.eq.s32.totalorder %s10, 1
    %p75 = scmp.ne.s32.totalorder %s70, %s72
    %p76 = scmp.eq.s32.totalorder %s10, 0
    %p77 = por %p75, %p76
    %p78 = scmp.ne.s32.totalorder %s70, %s72
    %p79 = scmp.eq.s32.totalorder %s15, 1
    %p80 = por %p78, %p79
    %p81 = scmp.ne.s32.totalorder %s72, %s73
    %p82 = scmp.eq.s32.totalorder %s15, 0
    %p83 = por %p81, %p82
    %p84 = scmp.ne.s32.totalorder %s72, %s73
    %p85 = scmp.eq.s32.totalorder %s16, 1
    %p86 = por %p84, %p85
    %p88 = scmp.ne.s32.totalorder %s73, %s87
    %p89 = scmp.eq.s32.totalorder %s16, 0
    %p90 = por %p88, %p89
    %s92 = sadd.s32 %s91, 1
    %p95 = scmp.eq.s32.totalorder %s10, 1
    %p96 = scmp.ne.s32.totalorder %s91, %s93
    %p97 = scmp.eq.s32.totalorder %s10, 0
    %p98 = por %p96, %p97
    %p99 = scmp.ne.s32.totalorder %s91, %s93
    %p100 = scmp.eq.s32.totalorder %s15, 1
    %p101 = por %p99, %p100
    %p102 = scmp.ne.s32.totalorder %s93, %s94
    %p103 = scmp.eq.s32.totalorder %s15, 0
    %p104 = por %p102, %p103
    %p105 = scmp.ne.s32.totalorder %s93, %s94
    %p106 = scmp.eq.s32.totalorder %s16, 1
    %p107 = por %p105, %p106
    %p109 = scmp.ne.s32.totalorder %s94, %s108
    %p110 = scmp.eq.s32.totalorder %s16, 0
    %p111 = por %p109, %p110
    %s112 = ssub.s32 %s10, %s17
    %p113 = scmp.eq.s32.totalorder %s112, 0
    %s115 = sadd.s32 %s114, 1
    %s116 = scalar_select %p113, %s114, %s115
    %p119 = pneg %p113
    %p120 = scmp.eq.s32.totalorder %s10, 1
    %p121 = por %p119, %p120
    %p122 = scmp.ne.s32.totalorder %s114, %s117
    %p123 = scmp.eq.s32.totalorder %s10, 0
    %p124 = por %p122, %p123
    %p125 = scmp.ne.s32.totalorder %s114, %s117
    %p126 = scmp.eq.s32.totalorder %s15, 1
    %p127 = por %p125, %p126
    %p128 = scmp.ne.s32.totalorder %s117, %s118
    %p129 = scmp.eq.s32.totalorder %s15, 0
    %p130 = por %p128, %p129
    %p131 = scmp.ne.s32.totalorder %s117, %s118
    %p132 = scmp.eq.s32.totalorder %s16, 1
    %p133 = por %p131, %p132
    %p135 = scmp.ne.s32.totalorder %s118, %s134
    %p136 = scmp.eq.s32.totalorder %s16, 0
    %p137 = por %p135, %p136
    %p138 = scmp.le.s32.totalorder 1, %s10
    %p139 = scmp.lt.s32.totalorder %s10, 3
    %p140 = pnand %p138, %p139
    %p141 = pneg %p140
    // Predicated region
    $region9: #{_lambda_.10} parent=5 // pred_check
      _
    $region10: #{_lambda_.10} parent=5 // pred_check_branch
      %143 = sbr.rel (%p140) target = $region12
    $region11: #{_lambda_.10} parent=5 // pred_region
      %s144 = ssub.s32 %s10, 1
      // Predicated region
      $region13: #{_lambda_.10} parent=11 // pred_check
        %p145 = pneg %p83
      $region14: #{_lambda_.10} parent=11 // pred_check_branch
        %147 = sbr.rel (%p145) target = $region16
      $region15: #{_lambda_.10} parent=11 // pred_region
        _
      $region16: #{_lambda_.10} parent=11 // pred_fallthru
        _
      // Predicated region
      $region17: #{_lambda_.10} parent=11 // pred_check
        %p148 = pneg %p104
      $region18: #{_lambda_.10} parent=11 // pred_check_branch
        %150 = sbr.rel (%p148) target = $region20
      $region19: #{_lambda_.10} parent=11 // pred_region
        _
      $region20: #{_lambda_.10} parent=11 // pred_fallthru
        _
    $region12: #{_lambda_.10} parent=5 // pred_fallthru
      _
    %p151 = scmp.lt.s32.totalorder %s10, 2
    // Predicated region
    $region21: #{_lambda_.10} parent=5 // pred_check
      %p152 = pneg %p151
    $region22: #{_lambda_.10} parent=5 // pred_check_branch
      %154 = sbr.rel (%p152) target = $region24
    $region23: #{_lambda_.10} parent=5 // pred_region
      // Predicated region
      $region25: #{_lambda_.10} parent=23 // pred_check
        %p155 = pneg %p30
      $region26: #{_lambda_.10} parent=23 // pred_check_branch
        %157 = sbr.rel (%p155) target = $region28
      $region27: #{_lambda_.10} parent=23 // pred_region
        %s158 = smul.u32 32, %s10
        %p159 = scmp.lt.s32.totalorder %s158, 63
        %s160 = scalar_select %p159, %s158, 63
        %s161 = smul.addr %s160, 8
        %s162 = scalar_lea.vmem %s0, %s161
        %s163 = smul.u32 32, %s10
      $region28: #{_lambda_.10} parent=23 // pred_fallthru
        _
      // Predicated region
      $region29: #{_lambda_.10} parent=23 // pred_check
        %p164 = pneg %p56
      $region30: #{_lambda_.10} parent=23 // pred_check_branch
        %166 = sbr.rel (%p164) target = $region32
      $region31: #{_lambda_.10} parent=23 // pred_region
        %s167 = smul.u32 32, %s10
        %p168 = scmp.lt.s32.totalorder %s167, 63
        %s169 = scalar_select %p168, %s167, 63
        %s170 = smul.addr %s169, 8
        %s171 = scalar_lea.vmem %s1, %s170
        %s172 = smul.u32 32, %s10
      $region32: #{_lambda_.10} parent=23 // pred_fallthru
        _
    $region24: #{_lambda_.10} parent=5 // pred_fallthru
      _
    %p173 = scmp.le.s32.totalorder 1, %s10
    %p174 = scmp.lt.s32.totalorder %s10, 3
    %p175 = pnand %p173, %p174
    %p176 = pneg %p175
    // Predicated region
    $region33: #{_lambda_.10} parent=5 // pred_check
      _
    $region34: #{_lambda_.10} parent=5 // pred_check_branch
      %178 = sbr.rel (%p175) target = $region36
    $region35: #{_lambda_.10} parent=5 // pred_region
      %s179 = ssub.s32 %s10, 1
      %s180 = smul.u32 32, %s15
      %p181 = scmp.lt.s32.totalorder %s180, 63
      %s182 = scalar_select %p181, %s180, 63
      %s183 = smul.addr %s182, 8
      %s184 = scalar_lea.vmem %s0, %s183
      %p185 = pneg %p36
      %p186 = pneg %p33
      %s187 = smul.u32 32, %s15
      %p188 = scmp.lt.s32.totalorder %s187, 63
      %s189 = scalar_select %p188, %s187, 63
      %s190 = smul.addr %s189, 8
      %s191 = scalar_lea.vmem %s1, %s190
      %p192 = pneg %p62
      %p193 = pneg %p59
      %p194 = pneg %p83
      %p195 = pneg %p80
      %p196 = pneg %p104
      %p197 = pneg %p101
      %p198 = pneg %p130
      %p199 = pneg %p127
      %s200 = smul.u32 32, %s15
      %p201 = scmp.lt.s32.totalorder %s200, 63
      %s202 = scalar_select %p201, %s200, 63
      %s203 = smul.addr %s202, 8
      %s204 = scalar_lea.vmem %s4, %s203
      %s205 = smul.u32 32, %s15
      %p206 = scmp.lt.s32.totalorder %s205, 63
      %s207 = scalar_select %p206, %s205, 63
      %s208 = smul.addr %s207, 8
      %s209 = scalar_lea.vmem %s0, %s208
      %s210 = smul.u32 32, %s15
      %s211 = smul.u32 32, %s15
      %p212 = scmp.lt.s32.totalorder %s211, 63
      %s213 = scalar_select %p212, %s211, 63
      %s214 = smul.addr %s213, 8
      %s215 = scalar_lea.vmem %s1, %s214
      %s216 = smul.u32 32, %s15
      %s217 = smul.u32 32, %s15
      %p218 = scmp.lt.s32.totalorder %s217, 63
      %s219 = scalar_select %p218, %s217, 63
      %s220 = smul.addr %s219, 8
      %s221 = scalar_lea.vmem %s4, %s220
      %s222 = smul.u32 32, %s15
      %v223 = vld [vmem:[%s209] sm:$0xff]
      %v224 = vld [vmem:[%s209 + $0x8] sm:$0xff]
      %v225 = vld [vmem:[%s209 + $0x10] sm:$0xff]
      %v226 = vld [vmem:[%s209 + $0x18] sm:$0xff]
      %v227 = vld [vmem:[%s209 + $0x20] sm:$0xff]
      %v228 = vld [vmem:[%s209 + $0x28] sm:$0xff]
      %v229 = vld [vmem:[%s209 + $0x30] sm:$0xff]
      %v230 = vld [vmem:[%s209 + $0x38] sm:$0xff]
      %v231 = vld [vmem:[%s209 + $0x40] sm:$0xff]
      %v232 = vld [vmem:[%s209 + $0x48] sm:$0xff]
      %v233 = vld [vmem:[%s209 + $0x50] sm:$0xff]
      %v234 = vld [vmem:[%s209 + $0x58] sm:$0xff]
      %v235 = vld [vmem:[%s209 + $0x60] sm:$0xff]
      %v236 = vld [vmem:[%s209 + $0x68] sm:$0xff]
      %v237 = vld [vmem:[%s209 + $0x70] sm:$0xff]
      %v238 = vld [vmem:[%s209 + $0x78] sm:$0xff]
      %v239 = vld [vmem:[%s209 + $0x80] sm:$0xff]
      %v240 = vld [vmem:[%s209 + $0x88] sm:$0xff]
      %v241 = vld [vmem:[%s209 + $0x90] sm:$0xff]
      %v242 = vld [vmem:[%s209 + $0x98] sm:$0xff]
      %v243 = vld [vmem:[%s209 + $0xa0] sm:$0xff]
      %v244 = vld [vmem:[%s209 + $0xa8] sm:$0xff]
      %v245 = vld [vmem:[%s209 + $0xb0] sm:$0xff]
      %v246 = vld [vmem:[%s209 + $0xb8] sm:$0xff]
      %v247 = vld [vmem:[%s209 + $0xc0] sm:$0xff]
      %v248 = vld [vmem:[%s209 + $0xc8] sm:$0xff]
      %v249 = vld [vmem:[%s209 + $0xd0] sm:$0xff]
      %v250 = vld [vmem:[%s209 + $0xd8] sm:$0xff]
      %v251 = vld [vmem:[%s209 + $0xe0] sm:$0xff]
      %v252 = vld [vmem:[%s209 + $0xe8] sm:$0xff]
      %v253 = vld [vmem:[%s209 + $0xf0] sm:$0xff]
      %v254 = vld [vmem:[%s209 + $0xf8] sm:$0xff]
      %v255 = vld [vmem:[%s2] sm:$0xff]
      %v256 = vld [vmem:[%s2 + $0x8] sm:$0xff]
      %v257 = vld [vmem:[%s3] sm:$0x1]
      %v259 = vperm.slane %v257, 0
      %vm261 = vcmask 130048
      %v263 = vsel %vm261, %v223, 0
      %v266 = vsel %vm261, %v224, 0
      %v269 = vsel %vm261, %v225, 0
      %v272 = vsel %vm261, %v226, 0
      %v275 = vsel %vm261, %v227, 0
      %v278 = vsel %vm261, %v228, 0
      %v281 = vsel %vm261, %v229, 0
      %v284 = vsel %vm261, %v230, 0
      %v287 = vsel %vm261, %v231, 0
      %v290 = vsel %vm261, %v232, 0
      %v293 = vsel %vm261, %v233, 0
      %v296 = vsel %vm261, %v234, 0
      %v299 = vsel %vm261, %v235, 0
      %v302 = vsel %vm261, %v236, 0
      %v305 = vsel %vm261, %v237, 0
      %v308 = vsel %vm261, %v238, 0
      %v311 = vsel %vm261, %v239, 0
      %v314 = vsel %vm261, %v240, 0
      %v317 = vsel %vm261, %v241, 0
      %v320 = vsel %vm261, %v242, 0
      %v323 = vsel %vm261, %v243, 0
      %v326 = vsel %vm261, %v244, 0
      %v329 = vsel %vm261, %v245, 0
      %v332 = vsel %vm261, %v246, 0
      %v335 = vsel %vm261, %v247, 0
      %v338 = vsel %vm261, %v248, 0
      %v341 = vsel %vm261, %v249, 0
      %v344 = vsel %vm261, %v250, 0
      %v347 = vsel %vm261, %v251, 0
      %v350 = vsel %vm261, %v252, 0
      %v353 = vsel %vm261, %v253, 0
      %v356 = vsel %vm261, %v254, 0
      %358 = vmatpush.msra.mxu0 0.0
      %359 = vmatpush.msra.mxu0 0.0
      %360 = vmatpush.msra.mxu0 0.0
      %361 = vmatpush.msra.mxu0 0.0
      %362 = vmatpush.msra.mxu0 0.0
      %363 = vmatpush.msra.mxu0 0.0
      %364 = vmatpush.msra.mxu0 0.0
      %365 = vmatpush.msra.mxu0 0.0
      %366 = vmatpush.msra.mxu0 0.0
      %367 = vmatpush.msra.mxu0 0.0
      %368 = vmatpush.msra.mxu0 0.0
      %369 = vmatpush.msra.mxu0 0.0
      %370 = vmatpush.msra.mxu0 0.0
      %371 = vmatpush.msra.mxu0 0.0
      %372 = vmatpush.msra.mxu0 %v256
      %373 = vmatpush.msra.mxu0 %v255
      %374 = vmatmul.f32.gmra.mxu0 %v263
      %v375 = vpop.f32.mrf.mxu0
      %v376 = vadd.f32 %v259, %v375
      %377 = vmatmul.f32.gmra.mxu0 %v266
      %v378 = vpop.f32.mrf.mxu0
      %v379 = vadd.f32 %v259, %v378
      %380 = vmatmul.f32.gmra.mxu0 %v269
      %v381 = vpop.f32.mrf.mxu0
      %v382 = vadd.f32 %v259, %v381
      %383 = vmatmul.f32.gmra.mxu0 %v272
      %v384 = vpop.f32.mrf.mxu0
      %v385 = vadd.f32 %v259, %v384
      %386 = vmatmul.f32.gmra.mxu0 %v275
      %v387 = vpop.f32.mrf.mxu0
      %v388 = vadd.f32 %v259, %v387
      %389 = vmatmul.f32.gmra.mxu0 %v278
      %v390 = vpop.f32.mrf.mxu0
      %v391 = vadd.f32 %v259, %v390
      %392 = vmatmul.f32.gmra.mxu0 %v281
      %v393 = vpop.f32.mrf.mxu0
      %v394 = vadd.f32 %v259, %v393
      %395 = vmatmul.f32.gmra.mxu0 %v284
      %v396 = vpop.f32.mrf.mxu0
      %v397 = vadd.f32 %v259, %v396
      %398 = vmatmul.f32.gmra.mxu0 %v287
      %v399 = vpop.f32.mrf.mxu0
      %v400 = vadd.f32 %v259, %v399
      %401 = vmatmul.f32.gmra.mxu0 %v290
      %v402 = vpop.f32.mrf.mxu0
      %v403 = vadd.f32 %v259, %v402
      %404 = vmatmul.f32.gmra.mxu0 %v293
      %v405 = vpop.f32.mrf.mxu0
      %v406 = vadd.f32 %v259, %v405
      %407 = vmatmul.f32.gmra.mxu0 %v296
      %v408 = vpop.f32.mrf.mxu0
      %v409 = vadd.f32 %v259, %v408
      %410 = vmatmul.f32.gmra.mxu0 %v299
      %v411 = vpop.f32.mrf.mxu0
      %v412 = vadd.f32 %v259, %v411
      %413 = vmatmul.f32.gmra.mxu0 %v302
      %v414 = vpop.f32.mrf.mxu0
      %v415 = vadd.f32 %v259, %v414
      %416 = vmatmul.f32.gmra.mxu0 %v305
      %v417 = vpop.f32.mrf.mxu0
      %v418 = vadd.f32 %v259, %v417
      %419 = vmatmul.f32.gmra.mxu0 %v308
      %v420 = vpop.f32.mrf.mxu0
      %v421 = vadd.f32 %v259, %v420
      %422 = vmatmul.f32.gmra.mxu0 %v311
      %v423 = vpop.f32.mrf.mxu0
      %v424 = vadd.f32 %v259, %v423
      %425 = vmatmul.f32.gmra.mxu0 %v314
      %v426 = vpop.f32.mrf.mxu0
      %v427 = vadd.f32 %v259, %v426
      %428 = vmatmul.f32.gmra.mxu0 %v317
      %v429 = vpop.f32.mrf.mxu0
      %v430 = vadd.f32 %v259, %v429
      %431 = vmatmul.f32.gmra.mxu0 %v320
      %v432 = vpop.f32.mrf.mxu0
      %v433 = vadd.f32 %v259, %v432
      %434 = vmatmul.f32.gmra.mxu0 %v323
      %v435 = vpop.f32.mrf.mxu0
      %v436 = vadd.f32 %v259, %v435
      %437 = vmatmul.f32.gmra.mxu0 %v326
      %v438 = vpop.f32.mrf.mxu0
      %v439 = vadd.f32 %v259, %v438
      %440 = vmatmul.f32.gmra.mxu0 %v329
      %v441 = vpop.f32.mrf.mxu0
      %v442 = vadd.f32 %v259, %v441
      %443 = vmatmul.f32.gmra.mxu0 %v332
      %v444 = vpop.f32.mrf.mxu0
      %v445 = vadd.f32 %v259, %v444
      %446 = vmatmul.f32.gmra.mxu0 %v335
      %v447 = vpop.f32.mrf.mxu0
      %v448 = vadd.f32 %v259, %v447
      %449 = vmatmul.f32.gmra.mxu0 %v338
      %v450 = vpop.f32.mrf.mxu0
      %v451 = vadd.f32 %v259, %v450
      %452 = vmatmul.f32.gmra.mxu0 %v341
      %v453 = vpop.f32.mrf.mxu0
      %v454 = vadd.f32 %v259, %v453
      %455 = vmatmul.f32.gmra.mxu0 %v344
      %v456 = vpop.f32.mrf.mxu0
      %v457 = vadd.f32 %v259, %v456
      %458 = vmatmul.f32.gmra.mxu0 %v347
      %v459 = vpop.f32.mrf.mxu0
      %v460 = vadd.f32 %v259, %v459
      %461 = vmatmul.f32.gmra.mxu0 %v350
      %v462 = vpop.f32.mrf.mxu0
      %v463 = vadd.f32 %v259, %v462
      %464 = vmatmul.f32.gmra.mxu0 %v353
      %v465 = vpop.f32.mrf.mxu0
      %v466 = vadd.f32 %v259, %v465
      %467 = vmatmul.f32.gmra.mxu0 %v356
      %v468 = vpop.f32.mrf.mxu0
      %v469 = vadd.f32 %v259, %v468
      %470 = vdwg.mxu0
      %v471 = vld [vmem:[%s215] sm:$0xff]
      %v472 = vld [vmem:[%s215 + $0x8] sm:$0xff]
      %v473 = vld [vmem:[%s215 + $0x10] sm:$0xff]
      %v474 = vld [vmem:[%s215 + $0x18] sm:$0xff]
      %v475 = vld [vmem:[%s215 + $0x20] sm:$0xff]
      %v476 = vld [vmem:[%s215 + $0x28] sm:$0xff]
      %v477 = vld [vmem:[%s215 + $0x30] sm:$0xff]
      %v478 = vld [vmem:[%s215 + $0x38] sm:$0xff]
      %v479 = vld [vmem:[%s215 + $0x40] sm:$0xff]
      %v480 = vld [vmem:[%s215 + $0x48] sm:$0xff]
      %v481 = vld [vmem:[%s215 + $0x50] sm:$0xff]
      %v482 = vld [vmem:[%s215 + $0x58] sm:$0xff]
      %v483 = vld [vmem:[%s215 + $0x60] sm:$0xff]
      %v484 = vld [vmem:[%s215 + $0x68] sm:$0xff]
      %v485 = vld [vmem:[%s215 + $0x70] sm:$0xff]
      %v486 = vld [vmem:[%s215 + $0x78] sm:$0xff]
      %v487 = vld [vmem:[%s215 + $0x80] sm:$0xff]
      %v488 = vld [vmem:[%s215 + $0x88] sm:$0xff]
      %v489 = vld [vmem:[%s215 + $0x90] sm:$0xff]
      %v490 = vld [vmem:[%s215 + $0x98] sm:$0xff]
      %v491 = vld [vmem:[%s215 + $0xa0] sm:$0xff]
      %v492 = vld [vmem:[%s215 + $0xa8] sm:$0xff]
      %v493 = vld [vmem:[%s215 + $0xb0] sm:$0xff]
      %v494 = vld [vmem:[%s215 + $0xb8] sm:$0xff]
      %v495 = vld [vmem:[%s215 + $0xc0] sm:$0xff]
      %v496 = vld [vmem:[%s215 + $0xc8] sm:$0xff]
      %v497 = vld [vmem:[%s215 + $0xd0] sm:$0xff]
      %v498 = vld [vmem:[%s215 + $0xd8] sm:$0xff]
      %v499 = vld [vmem:[%s215 + $0xe0] sm:$0xff]
      %v500 = vld [vmem:[%s215 + $0xe8] sm:$0xff]
      %v501 = vld [vmem:[%s215 + $0xf0] sm:$0xff]
      %v502 = vld [vmem:[%s215 + $0xf8] sm:$0xff]
      %v503 = vadd.f32 %v376, %v471
      %v504 = vadd.f32 %v379, %v472
      %v505 = vadd.f32 %v382, %v473
      %v506 = vadd.f32 %v385, %v474
      %v507 = vadd.f32 %v388, %v475
      %v508 = vadd.f32 %v391, %v476
      %v509 = vadd.f32 %v394, %v477
      %v510 = vadd.f32 %v397, %v478
      %v511 = vadd.f32 %v400, %v479
      %v512 = vadd.f32 %v403, %v480
      %v513 = vadd.f32 %v406, %v481
      %v514 = vadd.f32 %v409, %v482
      %v515 = vadd.f32 %v412, %v483
      %v516 = vadd.f32 %v415, %v484
      %v517 = vadd.f32 %v418, %v485
      %v518 = vadd.f32 %v421, %v486
      %v519 = vadd.f32 %v424, %v487
      %v520 = vadd.f32 %v427, %v488
      %v521 = vadd.f32 %v430, %v489
      %v522 = vadd.f32 %v433, %v490
      %v523 = vadd.f32 %v436, %v491
      %v524 = vadd.f32 %v439, %v492
      %v525 = vadd.f32 %v442, %v493
      %v526 = vadd.f32 %v445, %v494
      %v527 = vadd.f32 %v448, %v495
      %v528 = vadd.f32 %v451, %v496
      %v529 = vadd.f32 %v454, %v497
      %v530 = vadd.f32 %v457, %v498
      %v531 = vadd.f32 %v460, %v499
      %v532 = vadd.f32 %v463, %v500
      %v533 = vadd.f32 %v466, %v501
      %v534 = vadd.f32 %v469, %v502
      %v535 = vxor.u32 %v503, 2147483648
      %v536 = vxor.u32 %v504, 2147483648
      %v537 = vxor.u32 %v505, 2147483648
      %v538 = vxor.u32 %v506, 2147483648
      %v539 = vxor.u32 %v507, 2147483648
      %v540 = vxor.u32 %v508, 2147483648
      %v541 = vxor.u32 %v509, 2147483648
      %v542 = vxor.u32 %v510, 2147483648
      %v543 = vxor.u32 %v511, 2147483648
      %v544 = vxor.u32 %v512, 2147483648
      %v545 = vxor.u32 %v513, 2147483648
      %v546 = vxor.u32 %v514, 2147483648
      %v547 = vxor.u32 %v515, 2147483648
      %v548 = vxor.u32 %v516, 2147483648
      %v549 = vxor.u32 %v517, 2147483648
      %v550 = vxor.u32 %v518, 2147483648
      %v551 = vxor.u32 %v519, 2147483648
      %v552 = vxor.u32 %v520, 2147483648
      %v553 = vxor.u32 %v521, 2147483648
      %v554 = vxor.u32 %v522, 2147483648
      %v555 = vxor.u32 %v523, 2147483648
      %v556 = vxor.u32 %v524, 2147483648
      %v557 = vxor.u32 %v525, 2147483648
      %v558 = vxor.u32 %v526, 2147483648
      %v559 = vxor.u32 %v527, 2147483648
      %v560 = vxor.u32 %v528, 2147483648
      %v561 = vxor.u32 %v529, 2147483648
      %v562 = vxor.u32 %v530, 2147483648
      %v563 = vxor.u32 %v531, 2147483648
      %v564 = vxor.u32 %v532, 2147483648
      %v565 = vxor.u32 %v533, 2147483648
      %v566 = vxor.u32 %v534, 2147483648
      %v567 = vmul.f32 %v535, 1.442695
      %v568 = vpow.pop %v567
      %v569 = vmul.f32 %v536, 1.442695
      %v570 = vpow.pop %v569
      %v571 = vmul.f32 %v537, 1.442695
      %v572 = vpow.pop %v571
      %v573 = vmul.f32 %v538, 1.442695
      %v574 = vpow.pop %v573
      %v575 = vmul.f32 %v539, 1.442695
      %v576 = vpow.pop %v575
      %v577 = vmul.f32 %v540, 1.442695
      %v578 = vpow.pop %v577
      %v579 = vmul.f32 %v541, 1.442695
      %v580 = vpow.pop %v579
      %v581 = vmul.f32 %v542, 1.442695
      %v582 = vpow.pop %v581
      %v583 = vmul.f32 %v543, 1.442695
      %v584 = vpow.pop %v583
      %v585 = vmul.f32 %v544, 1.442695
      %v586 = vpow.pop %v585
      %v587 = vmul.f32 %v545, 1.442695
      %v588 = vpow.pop %v587
      %v589 = vmul.f32 %v546, 1.442695
      %v590 = vpow.pop %v589
      %v591 = vmul.f32 %v547, 1.442695
      %v592 = vpow.pop %v591
      %v593 = vmul.f32 %v548, 1.442695
      %v594 = vpow.pop %v593
      %v595 = vmul.f32 %v549, 1.442695
      %v596 = vpow.pop %v595
      %v597 = vmul.f32 %v550, 1.442695
      %v598 = vpow.pop %v597
      %v599 = vmul.f32 %v551, 1.442695
      %v600 = vpow.pop %v599
      %v601 = vmul.f32 %v552, 1.442695
      %v602 = vpow.pop %v601
      %v603 = vmul.f32 %v553, 1.442695
      %v604 = vpow.pop %v603
      %v605 = vmul.f32 %v554, 1.442695
      %v606 = vpow.pop %v605
      %v607 = vmul.f32 %v555, 1.442695
      %v608 = vpow.pop %v607
      %v609 = vmul.f32 %v556, 1.442695
      %v610 = vpow.pop %v609
      %v611 = vmul.f32 %v557, 1.442695
      %v612 = vpow.pop %v611
      %v613 = vmul.f32 %v558, 1.442695
      %v614 = vpow.pop %v613
      %v615 = vmul.f32 %v559, 1.442695
      %v616 = vpow.pop %v615
      %v617 = vmul.f32 %v560, 1.442695
      %v618 = vpow.pop %v617
      %v619 = vmul.f32 %v561, 1.442695
      %v620 = vpow.pop %v619
      %v621 = vmul.f32 %v562, 1.442695
      %v622 = vpow.pop %v621
      %v623 = vmul.f32 %v563, 1.442695
      %v624 = vpow.pop %v623
      %v625 = vmul.f32 %v564, 1.442695
      %v626 = vpow.pop %v625
      %v627 = vmul.f32 %v565, 1.442695
      %v628 = vpow.pop %v627
      %v629 = vmul.f32 %v566, 1.442695
      %v630 = vpow.pop %v629
      %v631 = vadd.f32 %v568, 1.0
      %v632 = vadd.f32 %v570, 1.0
      %v633 = vadd.f32 %v572, 1.0
      %v634 = vadd.f32 %v574, 1.0
      %v635 = vadd.f32 %v576, 1.0
      %v636 = vadd.f32 %v578, 1.0
      %v637 = vadd.f32 %v580, 1.0
      %v638 = vadd.f32 %v582, 1.0
      %v639 = vadd.f32 %v584, 1.0
      %v640 = vadd.f32 %v586, 1.0
      %v641 = vadd.f32 %v588, 1.0
      %v642 = vadd.f32 %v590, 1.0
      %v643 = vadd.f32 %v592, 1.0
      %v644 = vadd.f32 %v594, 1.0
      %v645 = vadd.f32 %v596, 1.0
      %v646 = vadd.f32 %v598, 1.0
      %v647 = vadd.f32 %v600, 1.0
      %v648 = vadd.f32 %v602, 1.0
      %v649 = vadd.f32 %v604, 1.0
      %v650 = vadd.f32 %v606, 1.0
      %v651 = vadd.f32 %v608, 1.0
      %v652 = vadd.f32 %v610, 1.0
      %v653 = vadd.f32 %v612, 1.0
      %v654 = vadd.f32 %v614, 1.0
      %v655 = vadd.f32 %v616, 1.0
      %v656 = vadd.f32 %v618, 1.0
      %v657 = vadd.f32 %v620, 1.0
      %v658 = vadd.f32 %v622, 1.0
      %v659 = vadd.f32 %v624, 1.0
      %v660 = vadd.f32 %v626, 1.0
      %v661 = vadd.f32 %v628, 1.0
      %v662 = vadd.f32 %v630, 1.0
      %v663 = vrcp.pop %v631
      %v664 = vmul.f32 %v631, %v663
      %v665 = vsub.f32 1.0, %v664
      %v666 = vmul.f32 %v663, %v665
      %v667 = vadd.f32 %v663, %v666
      %vm668 = vweird.f32 %v631
      %vm669 = vweird.f32 %v663
      %vm670 = vmor %vm668, %vm669
      %v671 = vsel %vm670, %v663, %v667
      %v672 = vand.u32 2147483647, %v631
      %vm673 = vcmp.eq.f32.partialorder %v672, 8.507059e+37
      %v674 = vand.u32 %v631, 2147483648
      %v675 = vor.u32 1.1754944e-38, %v674
      %v676 = vsel %vm673, %v675, %v671
      %v677 = vmul.f32 1.0, %v676
      %v678 = vrcp.pop %v632
      %v679 = vmul.f32 %v632, %v678
      %v680 = vsub.f32 1.0, %v679
      %v681 = vmul.f32 %v678, %v680
      %v682 = vadd.f32 %v678, %v681
      %vm683 = vweird.f32 %v632
      %vm684 = vweird.f32 %v678
      %vm685 = vmor %vm683, %vm684
      %v686 = vsel %vm685, %v678, %v682
      %v687 = vand.u32 2147483647, %v632
      %vm688 = vcmp.eq.f32.partialorder %v687, 8.507059e+37
      %v689 = vand.u32 %v632, 2147483648
      %v690 = vor.u32 1.1754944e-38, %v689
      %v691 = vsel %vm688, %v690, %v686
      %v692 = vmul.f32 1.0, %v691
      %v693 = vrcp.pop %v633
      %v694 = vmul.f32 %v633, %v693
      %v695 = vsub.f32 1.0, %v694
      %v696 = vmul.f32 %v693, %v695
      %v697 = vadd.f32 %v693, %v696
      %vm698 = vweird.f32 %v633
      %vm699 = vweird.f32 %v693
      %vm700 = vmor %vm698, %vm699
      %v701 = vsel %vm700, %v693, %v697
      %v702 = vand.u32 2147483647, %v633
      %vm703 = vcmp.eq.f32.partialorder %v702, 8.507059e+37
      %v704 = vand.u32 %v633, 2147483648
      %v705 = vor.u32 1.1754944e-38, %v704
      %v706 = vsel %vm703, %v705, %v701
      %v707 = vmul.f32 1.0, %v706
      %v708 = vrcp.pop %v634
      %v709 = vmul.f32 %v634, %v708
      %v710 = vsub.f32 1.0, %v709
      %v711 = vmul.f32 %v708, %v710
      %v712 = vadd.f32 %v708, %v711
      %vm713 = vweird.f32 %v634
      %vm714 = vweird.f32 %v708
      %vm715 = vmor %vm713, %vm714
      %v716 = vsel %vm715, %v708, %v712
      %v717 = vand.u32 2147483647, %v634
      %vm718 = vcmp.eq.f32.partialorder %v717, 8.507059e+37
      %v719 = vand.u32 %v634, 2147483648
      %v720 = vor.u32 1.1754944e-38, %v719
      %v721 = vsel %vm718, %v720, %v716
      %v722 = vmul.f32 1.0, %v721
      %v723 = vrcp.pop %v635
      %v724 = vmul.f32 %v635, %v723
      %v725 = vsub.f32 1.0, %v724
      %v726 = vmul.f32 %v723, %v725
      %v727 = vadd.f32 %v723, %v726
      %vm728 = vweird.f32 %v635
      %vm729 = vweird.f32 %v723
      %vm730 = vmor %vm728, %vm729
      %v731 = vsel %vm730, %v723, %v727
      %v732 = vand.u32 2147483647, %v635
      %vm733 = vcmp.eq.f32.partialorder %v732, 8.507059e+37
      %v734 = vand.u32 %v635, 2147483648
      %v735 = vor.u32 1.1754944e-38, %v734
      %v736 = vsel %vm733, %v735, %v731
      %v737 = vmul.f32 1.0, %v736
      %v738 = vrcp.pop %v636
      %v739 = vmul.f32 %v636, %v738
      %v740 = vsub.f32 1.0, %v739
      %v741 = vmul.f32 %v738, %v740
      %v742 = vadd.f32 %v738, %v741
      %vm743 = vweird.f32 %v636
      %vm744 = vweird.f32 %v738
      %vm745 = vmor %vm743, %vm744
      %v746 = vsel %vm745, %v738, %v742
      %v747 = vand.u32 2147483647, %v636
      %vm748 = vcmp.eq.f32.partialorder %v747, 8.507059e+37
      %v749 = vand.u32 %v636, 2147483648
      %v750 = vor.u32 1.1754944e-38, %v749
      %v751 = vsel %vm748, %v750, %v746
      %v752 = vmul.f32 1.0, %v751
      %v753 = vrcp.pop %v637
      %v754 = vmul.f32 %v637, %v753
      %v755 = vsub.f32 1.0, %v754
      %v756 = vmul.f32 %v753, %v755
      %v757 = vadd.f32 %v753, %v756
      %vm758 = vweird.f32 %v637
      %vm759 = vweird.f32 %v753
      %vm760 = vmor %vm758, %vm759
      %v761 = vsel %vm760, %v753, %v757
      %v762 = vand.u32 2147483647, %v637
      %vm763 = vcmp.eq.f32.partialorder %v762, 8.507059e+37
      %v764 = vand.u32 %v637, 2147483648
      %v765 = vor.u32 1.1754944e-38, %v764
      %v766 = vsel %vm763, %v765, %v761
      %v767 = vmul.f32 1.0, %v766
      %v768 = vrcp.pop %v638
      %v769 = vmul.f32 %v638, %v768
      %v770 = vsub.f32 1.0, %v769
      %v771 = vmul.f32 %v768, %v770
      %v772 = vadd.f32 %v768, %v771
      %vm773 = vweird.f32 %v638
      %vm774 = vweird.f32 %v768
      %vm775 = vmor %vm773, %vm774
      %v776 = vsel %vm775, %v768, %v772
      %v777 = vand.u32 2147483647, %v638
      %vm778 = vcmp.eq.f32.partialorder %v777, 8.507059e+37
      %v779 = vand.u32 %v638, 2147483648
      %v780 = vor.u32 1.1754944e-38, %v779
      %v781 = vsel %vm778, %v780, %v776
      %v782 = vmul.f32 1.0, %v781
      %v783 = vrcp.pop %v639
      %v784 = vmul.f32 %v639, %v783
      %v785 = vsub.f32 1.0, %v784
      %v786 = vmul.f32 %v783, %v785
      %v787 = vadd.f32 %v783, %v786
      %vm788 = vweird.f32 %v639
      %vm789 = vweird.f32 %v783
      %vm790 = vmor %vm788, %vm789
      %v791 = vsel %vm790, %v783, %v787
      %v792 = vand.u32 2147483647, %v639
      %vm793 = vcmp.eq.f32.partialorder %v792, 8.507059e+37
      %v794 = vand.u32 %v639, 2147483648
      %v795 = vor.u32 1.1754944e-38, %v794
      %v796 = vsel %vm793, %v795, %v791
      %v797 = vmul.f32 1.0, %v796
      %v798 = vrcp.pop %v640
      %v799 = vmul.f32 %v640, %v798
      %v800 = vsub.f32 1.0, %v799
      %v801 = vmul.f32 %v798, %v800
      %v802 = vadd.f32 %v798, %v801
      %vm803 = vweird.f32 %v640
      %vm804 = vweird.f32 %v798
      %vm805 = vmor %vm803, %vm804
      %v806 = vsel %vm805, %v798, %v802
      %v807 = vand.u32 2147483647, %v640
      %vm808 = vcmp.eq.f32.partialorder %v807, 8.507059e+37
      %v809 = vand.u32 %v640, 2147483648
      %v810 = vor.u32 1.1754944e-38, %v809
      %v811 = vsel %vm808, %v810, %v806
      %v812 = vmul.f32 1.0, %v811
      %v813 = vrcp.pop %v641
      %v814 = vmul.f32 %v641, %v813
      %v815 = vsub.f32 1.0, %v814
      %v816 = vmul.f32 %v813, %v815
      %v817 = vadd.f32 %v813, %v816
      %vm818 = vweird.f32 %v641
      %vm819 = vweird.f32 %v813
      %vm820 = vmor %vm818, %vm819
      %v821 = vsel %vm820, %v813, %v817
      %v822 = vand.u32 2147483647, %v641
      %vm823 = vcmp.eq.f32.partialorder %v822, 8.507059e+37
      %v824 = vand.u32 %v641, 2147483648
      %v825 = vor.u32 1.1754944e-38, %v824
      %v826 = vsel %vm823, %v825, %v821
      %v827 = vmul.f32 1.0, %v826
      %v828 = vrcp.pop %v642
      %v829 = vmul.f32 %v642, %v828
      %v830 = vsub.f32 1.0, %v829
      %v831 = vmul.f32 %v828, %v830
      %v832 = vadd.f32 %v828, %v831
      %vm833 = vweird.f32 %v642
      %vm834 = vweird.f32 %v828
      %vm835 = vmor %vm833, %vm834
      %v836 = vsel %vm835, %v828, %v832
      %v837 = vand.u32 2147483647, %v642
      %vm838 = vcmp.eq.f32.partialorder %v837, 8.507059e+37
      %v839 = vand.u32 %v642, 2147483648
      %v840 = vor.u32 1.1754944e-38, %v839
      %v841 = vsel %vm838, %v840, %v836
      %v842 = vmul.f32 1.0, %v841
      %v843 = vrcp.pop %v643
      %v844 = vmul.f32 %v643, %v843
      %v845 = vsub.f32 1.0, %v844
      %v846 = vmul.f32 %v843, %v845
      %v847 = vadd.f32 %v843, %v846
      %vm848 = vweird.f32 %v643
      %vm849 = vweird.f32 %v843
      %vm850 = vmor %vm848, %vm849
      %v851 = vsel %vm850, %v843, %v847
      %v852 = vand.u32 2147483647, %v643
      %vm853 = vcmp.eq.f32.partialorder %v852, 8.507059e+37
      %v854 = vand.u32 %v643, 2147483648
      %v855 = vor.u32 1.1754944e-38, %v854
      %v856 = vsel %vm853, %v855, %v851
      %v857 = vmul.f32 1.0, %v856
      %v858 = vrcp.pop %v644
      %v859 = vmul.f32 %v644, %v858
      %v860 = vsub.f32 1.0, %v859
      %v861 = vmul.f32 %v858, %v860
      %v862 = vadd.f32 %v858, %v861
      %vm863 = vweird.f32 %v644
      %vm864 = vweird.f32 %v858
      %vm865 = vmor %vm863, %vm864
      %v866 = vsel %vm865, %v858, %v862
      %v867 = vand.u32 2147483647, %v644
      %vm868 = vcmp.eq.f32.partialorder %v867, 8.507059e+37
      %v869 = vand.u32 %v644, 2147483648
      %v870 = vor.u32 1.1754944e-38, %v869
      %v871 = vsel %vm868, %v870, %v866
      %v872 = vmul.f32 1.0, %v871
      %v873 = vrcp.pop %v645
      %v874 = vmul.f32 %v645, %v873
      %v875 = vsub.f32 1.0, %v874
      %v876 = vmul.f32 %v873, %v875
      %v877 = vadd.f32 %v873, %v876
      %vm878 = vweird.f32 %v645
      %vm879 = vweird.f32 %v873
      %vm880 = vmor %vm878, %vm879
      %v881 = vsel %vm880, %v873, %v877
      %v882 = vand.u32 2147483647, %v645
      %vm883 = vcmp.eq.f32.partialorder %v882, 8.507059e+37
      %v884 = vand.u32 %v645, 2147483648
      %v885 = vor.u32 1.1754944e-38, %v884
      %v886 = vsel %vm883, %v885, %v881
      %v887 = vmul.f32 1.0, %v886
      %v888 = vrcp.pop %v646
      %v889 = vmul.f32 %v646, %v888
      %v890 = vsub.f32 1.0, %v889
      %v891 = vmul.f32 %v888, %v890
      %v892 = vadd.f32 %v888, %v891
      %vm893 = vweird.f32 %v646
      %vm894 = vweird.f32 %v888
      %vm895 = vmor %vm893, %vm894
      %v896 = vsel %vm895, %v888, %v892
      %v897 = vand.u32 2147483647, %v646
      %vm898 = vcmp.eq.f32.partialorder %v897, 8.507059e+37
      %v899 = vand.u32 %v646, 2147483648
      %v900 = vor.u32 1.1754944e-38, %v899
      %v901 = vsel %vm898, %v900, %v896
      %v902 = vmul.f32 1.0, %v901
      %v903 = vrcp.pop %v647
      %v904 = vmul.f32 %v647, %v903
      %v905 = vsub.f32 1.0, %v904
      %v906 = vmul.f32 %v903, %v905
      %v907 = vadd.f32 %v903, %v906
      %vm908 = vweird.f32 %v647
      %vm909 = vweird.f32 %v903
      %vm910 = vmor %vm908, %vm909
      %v911 = vsel %vm910, %v903, %v907
      %v912 = vand.u32 2147483647, %v647
      %vm913 = vcmp.eq.f32.partialorder %v912, 8.507059e+37
      %v914 = vand.u32 %v647, 2147483648
      %v915 = vor.u32 1.1754944e-38, %v914
      %v916 = vsel %vm913, %v915, %v911
      %v917 = vmul.f32 1.0, %v916
      %v918 = vrcp.pop %v648
      %v919 = vmul.f32 %v648, %v918
      %v920 = vsub.f32 1.0, %v919
      %v921 = vmul.f32 %v918, %v920
      %v922 = vadd.f32 %v918, %v921
      %vm923 = vweird.f32 %v648
      %vm924 = vweird.f32 %v918
      %vm925 = vmor %vm923, %vm924
      %v926 = vsel %vm925, %v918, %v922
      %v927 = vand.u32 2147483647, %v648
      %vm928 = vcmp.eq.f32.partialorder %v927, 8.507059e+37
      %v929 = vand.u32 %v648, 2147483648
      %v930 = vor.u32 1.1754944e-38, %v929
      %v931 = vsel %vm928, %v930, %v926
      %v932 = vmul.f32 1.0, %v931
      %v933 = vrcp.pop %v649
      %v934 = vmul.f32 %v649, %v933
      %v935 = vsub.f32 1.0, %v934
      %v936 = vmul.f32 %v933, %v935
      %v937 = vadd.f32 %v933, %v936
      %vm938 = vweird.f32 %v649
      %vm939 = vweird.f32 %v933
      %vm940 = vmor %vm938, %vm939
      %v941 = vsel %vm940, %v933, %v937
      %v942 = vand.u32 2147483647, %v649
      %vm943 = vcmp.eq.f32.partialorder %v942, 8.507059e+37
      %v944 = vand.u32 %v649, 2147483648
      %v945 = vor.u32 1.1754944e-38, %v944
      %v946 = vsel %vm943, %v945, %v941
      %v947 = vmul.f32 1.0, %v946
      %v948 = vrcp.pop %v650
      %v949 = vmul.f32 %v650, %v948
      %v950 = vsub.f32 1.0, %v949
      %v951 = vmul.f32 %v948, %v950
      %v952 = vadd.f32 %v948, %v951
      %vm953 = vweird.f32 %v650
      %vm954 = vweird.f32 %v948
      %vm955 = vmor %vm953, %vm954
      %v956 = vsel %vm955, %v948, %v952
      %v957 = vand.u32 2147483647, %v650
      %vm958 = vcmp.eq.f32.partialorder %v957, 8.507059e+37
      %v959 = vand.u32 %v650, 2147483648
      %v960 = vor.u32 1.1754944e-38, %v959
      %v961 = vsel %vm958, %v960, %v956
      %v962 = vmul.f32 1.0, %v961
      %v963 = vrcp.pop %v651
      %v964 = vmul.f32 %v651, %v963
      %v965 = vsub.f32 1.0, %v964
      %v966 = vmul.f32 %v963, %v965
      %v967 = vadd.f32 %v963, %v966
      %vm968 = vweird.f32 %v651
      %vm969 = vweird.f32 %v963
      %vm970 = vmor %vm968, %vm969
      %v971 = vsel %vm970, %v963, %v967
      %v972 = vand.u32 2147483647, %v651
      %vm973 = vcmp.eq.f32.partialorder %v972, 8.507059e+37
      %v974 = vand.u32 %v651, 2147483648
      %v975 = vor.u32 1.1754944e-38, %v974
      %v976 = vsel %vm973, %v975, %v971
      %v977 = vmul.f32 1.0, %v976
      %v978 = vrcp.pop %v652
      %v979 = vmul.f32 %v652, %v978
      %v980 = vsub.f32 1.0, %v979
      %v981 = vmul.f32 %v978, %v980
      %v982 = vadd.f32 %v978, %v981
      %vm983 = vweird.f32 %v652
      %vm984 = vweird.f32 %v978
      %vm985 = vmor %vm983, %vm984
      %v986 = vsel %vm985, %v978, %v982
      %v987 = vand.u32 2147483647, %v652
      %vm988 = vcmp.eq.f32.partialorder %v987, 8.507059e+37
      %v989 = vand.u32 %v652, 2147483648
      %v990 = vor.u32 1.1754944e-38, %v989
      %v991 = vsel %vm988, %v990, %v986
      %v992 = vmul.f32 1.0, %v991
      %v993 = vrcp.pop %v653
      %v994 = vmul.f32 %v653, %v993
      %v995 = vsub.f32 1.0, %v994
      %v996 = vmul.f32 %v993, %v995
      %v997 = vadd.f32 %v993, %v996
      %vm998 = vweird.f32 %v653
      %vm999 = vweird.f32 %v993
      %vm1000 = vmor %vm998, %vm999
      %v1001 = vsel %vm1000, %v993, %v997
      %v1002 = vand.u32 2147483647, %v653
      %vm1003 = vcmp.eq.f32.partialorder %v1002, 8.507059e+37
      %v1004 = vand.u32 %v653, 2147483648
      %v1005 = vor.u32 1.1754944e-38, %v1004
      %v1006 = vsel %vm1003, %v1005, %v1001
      %v1007 = vmul.f32 1.0, %v1006
      %v1008 = vrcp.pop %v654
      %v1009 = vmul.f32 %v654, %v1008
      %v1010 = vsub.f32 1.0, %v1009
      %v1011 = vmul.f32 %v1008, %v1010
      %v1012 = vadd.f32 %v1008, %v1011
      %vm1013 = vweird.f32 %v654
      %vm1014 = vweird.f32 %v1008
      %vm1015 = vmor %vm1013, %vm1014
      %v1016 = vsel %vm1015, %v1008, %v1012
      %v1017 = vand.u32 2147483647, %v654
      %vm1018 = vcmp.eq.f32.partialorder %v1017, 8.507059e+37
      %v1019 = vand.u32 %v654, 2147483648
      %v1020 = vor.u32 1.1754944e-38, %v1019
      %v1021 = vsel %vm1018, %v1020, %v1016
      %v1022 = vmul.f32 1.0, %v1021
      %v1023 = vrcp.pop %v655
      %v1024 = vmul.f32 %v655, %v1023
      %v1025 = vsub.f32 1.0, %v1024
      %v1026 = vmul.f32 %v1023, %v1025
      %v1027 = vadd.f32 %v1023, %v1026
      %vm1028 = vweird.f32 %v655
      %vm1029 = vweird.f32 %v1023
      %vm1030 = vmor %vm1028, %vm1029
      %v1031 = vsel %vm1030, %v1023, %v1027
      %v1032 = vand.u32 2147483647, %v655
      %vm1033 = vcmp.eq.f32.partialorder %v1032, 8.507059e+37
      %v1034 = vand.u32 %v655, 2147483648
      %v1035 = vor.u32 1.1754944e-38, %v1034
      %v1036 = vsel %vm1033, %v1035, %v1031
      %v1037 = vmul.f32 1.0, %v1036
      %v1038 = vrcp.pop %v656
      %v1039 = vmul.f32 %v656, %v1038
      %v1040 = vsub.f32 1.0, %v1039
      %v1041 = vmul.f32 %v1038, %v1040
      %v1042 = vadd.f32 %v1038, %v1041
      %vm1043 = vweird.f32 %v656
      %vm1044 = vweird.f32 %v1038
      %vm1045 = vmor %vm1043, %vm1044
      %v1046 = vsel %vm1045, %v1038, %v1042
      %v1047 = vand.u32 2147483647, %v656
      %vm1048 = vcmp.eq.f32.partialorder %v1047, 8.507059e+37
      %v1049 = vand.u32 %v656, 2147483648
      %v1050 = vor.u32 1.1754944e-38, %v1049
      %v1051 = vsel %vm1048, %v1050, %v1046
      %v1052 = vmul.f32 1.0, %v1051
      %v1053 = vrcp.pop %v657
      %v1054 = vmul.f32 %v657, %v1053
      %v1055 = vsub.f32 1.0, %v1054
      %v1056 = vmul.f32 %v1053, %v1055
      %v1057 = vadd.f32 %v1053, %v1056
      %vm1058 = vweird.f32 %v657
      %vm1059 = vweird.f32 %v1053
      %vm1060 = vmor %vm1058, %vm1059
      %v1061 = vsel %vm1060, %v1053, %v1057
      %v1062 = vand.u32 2147483647, %v657
      %vm1063 = vcmp.eq.f32.partialorder %v1062, 8.507059e+37
      %v1064 = vand.u32 %v657, 2147483648
      %v1065 = vor.u32 1.1754944e-38, %v1064
      %v1066 = vsel %vm1063, %v1065, %v1061
      %v1067 = vmul.f32 1.0, %v1066
      %v1068 = vrcp.pop %v658
      %v1069 = vmul.f32 %v658, %v1068
      %v1070 = vsub.f32 1.0, %v1069
      %v1071 = vmul.f32 %v1068, %v1070
      %v1072 = vadd.f32 %v1068, %v1071
      %vm1073 = vweird.f32 %v658
      %vm1074 = vweird.f32 %v1068
      %vm1075 = vmor %vm1073, %vm1074
      %v1076 = vsel %vm1075, %v1068, %v1072
      %v1077 = vand.u32 2147483647, %v658
      %vm1078 = vcmp.eq.f32.partialorder %v1077, 8.507059e+37
      %v1079 = vand.u32 %v658, 2147483648
      %v1080 = vor.u32 1.1754944e-38, %v1079
      %v1081 = vsel %vm1078, %v1080, %v1076
      %v1082 = vmul.f32 1.0, %v1081
      %v1083 = vrcp.pop %v659
      %v1084 = vmul.f32 %v659, %v1083
      %v1085 = vsub.f32 1.0, %v1084
      %v1086 = vmul.f32 %v1083, %v1085
      %v1087 = vadd.f32 %v1083, %v1086
      %vm1088 = vweird.f32 %v659
      %vm1089 = vweird.f32 %v1083
      %vm1090 = vmor %vm1088, %vm1089
      %v1091 = vsel %vm1090, %v1083, %v1087
      %v1092 = vand.u32 2147483647, %v659
      %vm1093 = vcmp.eq.f32.partialorder %v1092, 8.507059e+37
      %v1094 = vand.u32 %v659, 2147483648
      %v1095 = vor.u32 1.1754944e-38, %v1094
      %v1096 = vsel %vm1093, %v1095, %v1091
      %v1097 = vmul.f32 1.0, %v1096
      %v1098 = vrcp.pop %v660
      %v1099 = vmul.f32 %v660, %v1098
      %v1100 = vsub.f32 1.0, %v1099
      %v1101 = vmul.f32 %v1098, %v1100
      %v1102 = vadd.f32 %v1098, %v1101
      %vm1103 = vweird.f32 %v660
      %vm1104 = vweird.f32 %v1098
      %vm1105 = vmor %vm1103, %vm1104
      %v1106 = vsel %vm1105, %v1098, %v1102
      %v1107 = vand.u32 2147483647, %v660
      %vm1108 = vcmp.eq.f32.partialorder %v1107, 8.507059e+37
      %v1109 = vand.u32 %v660, 2147483648
      %v1110 = vor.u32 1.1754944e-38, %v1109
      %v1111 = vsel %vm1108, %v1110, %v1106
      %v1112 = vmul.f32 1.0, %v1111
      %v1113 = vrcp.pop %v661
      %v1114 = vmul.f32 %v661, %v1113
      %v1115 = vsub.f32 1.0, %v1114
      %v1116 = vmul.f32 %v1113, %v1115
      %v1117 = vadd.f32 %v1113, %v1116
      %vm1118 = vweird.f32 %v661
      %vm1119 = vweird.f32 %v1113
      %vm1120 = vmor %vm1118, %vm1119
      %v1121 = vsel %vm1120, %v1113, %v1117
      %v1122 = vand.u32 2147483647, %v661
      %vm1123 = vcmp.eq.f32.partialorder %v1122, 8.507059e+37
      %v1124 = vand.u32 %v661, 2147483648
      %v1125 = vor.u32 1.1754944e-38, %v1124
      %v1126 = vsel %vm1123, %v1125, %v1121
      %v1127 = vmul.f32 1.0, %v1126
      %v1128 = vrcp.pop %v662
      %v1129 = vmul.f32 %v662, %v1128
      %v1130 = vsub.f32 1.0, %v1129
      %v1131 = vmul.f32 %v1128, %v1130
      %v1132 = vadd.f32 %v1128, %v1131
      %vm1133 = vweird.f32 %v662
      %vm1134 = vweird.f32 %v1128
      %vm1135 = vmor %vm1133, %vm1134
      %v1136 = vsel %vm1135, %v1128, %v1132
      %v1137 = vand.u32 2147483647, %v662
      %vm1138 = vcmp.eq.f32.partialorder %v1137, 8.507059e+37
      %v1139 = vand.u32 %v662, 2147483648
      %v1140 = vor.u32 1.1754944e-38, %v1139
      %v1141 = vsel %vm1138, %v1140, %v1136
      %v1142 = vmul.f32 1.0, %v1141
      %v1143 = vmul.f32 %v503, %v677
      %v1144 = vmul.f32 %v504, %v692
      %v1145 = vmul.f32 %v505, %v707
      %v1146 = vmul.f32 %v506, %v722
      %v1147 = vmul.f32 %v507, %v737
      %v1148 = vmul.f32 %v508, %v752
      %v1149 = vmul.f32 %v509, %v767
      %v1150 = vmul.f32 %v510, %v782
      %v1151 = vmul.f32 %v511, %v797
      %v1152 = vmul.f32 %v512, %v812
      %v1153 = vmul.f32 %v513, %v827
      %v1154 = vmul.f32 %v514, %v842
      %v1155 = vmul.f32 %v515, %v857
      %v1156 = vmul.f32 %v516, %v872
      %v1157 = vmul.f32 %v517, %v887
      %v1158 = vmul.f32 %v518, %v902
      %v1159 = vmul.f32 %v519, %v917
      %v1160 = vmul.f32 %v520, %v932
      %v1161 = vmul.f32 %v521, %v947
      %v1162 = vmul.f32 %v522, %v962
      %v1163 = vmul.f32 %v523, %v977
      %v1164 = vmul.f32 %v524, %v992
      %v1165 = vmul.f32 %v525, %v1007
      %v1166 = vmul.f32 %v526, %v1022
      %v1167 = vmul.f32 %v527, %v1037
      %v1168 = vmul.f32 %v528, %v1052
      %v1169 = vmul.f32 %v529, %v1067
      %v1170 = vmul.f32 %v530, %v1082
      %v1171 = vmul.f32 %v531, %v1097
      %v1172 = vmul.f32 %v532, %v1112
      %v1173 = vmul.f32 %v533, %v1127
      %v1174 = vmul.f32 %v534, %v1142
      %1175 = vst.msk [vmem:[%s221] sm:$0xff] %vm261, %v1143
      %1176 = vst.msk [vmem:[%s221 + $0x8] sm:$0xff] %vm261, %v1144
      %1177 = vst.msk [vmem:[%s221 + $0x10] sm:$0xff] %vm261, %v1145
      %1178 = vst.msk [vmem:[%s221 + $0x18] sm:$0xff] %vm261, %v1146
      %1179 = vst.msk [vmem:[%s221 + $0x20] sm:$0xff] %vm261, %v1147
      %1180 = vst.msk [vmem:[%s221 + $0x28] sm:$0xff] %vm261, %v1148
      %1181 = vst.msk [vmem:[%s221 + $0x30] sm:$0xff] %vm261, %v1149
      %1182 = vst.msk [vmem:[%s221 + $0x38] sm:$0xff] %vm261, %v1150
      %1183 = vst.msk [vmem:[%s221 + $0x40] sm:$0xff] %vm261, %v1151
      %1184 = vst.msk [vmem:[%s221 + $0x48] sm:$0xff] %vm261, %v1152
      %1185 = vst.msk [vmem:[%s221 + $0x50] sm:$0xff] %vm261, %v1153
      %1186 = vst.msk [vmem:[%s221 + $0x58] sm:$0xff] %vm261, %v1154
      %1187 = vst.msk [vmem:[%s221 + $0x60] sm:$0xff] %vm261, %v1155
      %1188 = vst.msk [vmem:[%s221 + $0x68] sm:$0xff] %vm261, %v1156
      %1189 = vst.msk [vmem:[%s221 + $0x70] sm:$0xff] %vm261, %v1157
      %1190 = vst.msk [vmem:[%s221 + $0x78] sm:$0xff] %vm261, %v1158
      %1191 = vst.msk [vmem:[%s221 + $0x80] sm:$0xff] %vm261, %v1159
      %1192 = vst.msk [vmem:[%s221 + $0x88] sm:$0xff] %vm261, %v1160
      %1193 = vst.msk [vmem:[%s221 + $0x90] sm:$0xff] %vm261, %v1161
      %1194 = vst.msk [vmem:[%s221 + $0x98] sm:$0xff] %vm261, %v1162
      %1195 = vst.msk [vmem:[%s221 + $0xa0] sm:$0xff] %vm261, %v1163
      %1196 = vst.msk [vmem:[%s221 + $0xa8] sm:$0xff] %vm261, %v1164
      %1197 = vst.msk [vmem:[%s221 + $0xb0] sm:$0xff] %vm261, %v1165
      %1198 = vst.msk [vmem:[%s221 + $0xb8] sm:$0xff] %vm261, %v1166
      %1199 = vst.msk [vmem:[%s221 + $0xc0] sm:$0xff] %vm261, %v1167
      %1200 = vst.msk [vmem:[%s221 + $0xc8] sm:$0xff] %vm261, %v1168
      %1201 = vst.msk [vmem:[%s221 + $0xd0] sm:$0xff] %vm261, %v1169
      %1202 = vst.msk [vmem:[%s221 + $0xd8] sm:$0xff] %vm261, %v1170
      %1203 = vst.msk [vmem:[%s221 + $0xe0] sm:$0xff] %vm261, %v1171
      %1204 = vst.msk [vmem:[%s221 + $0xe8] sm:$0xff] %vm261, %v1172
      %1205 = vst.msk [vmem:[%s221 + $0xf0] sm:$0xff] %vm261, %v1173
      %1206 = vst.msk [vmem:[%s221 + $0xf8] sm:$0xff] %vm261, %v1174
      %s1207 = smul.u32 32, %s15
      %p1208 = scmp.lt.s32.totalorder %s1207, 63
      %s1209 = scalar_select %p1208, %s1207, 63
      %s1210 = smul.addr %s1209, 8
      %s1211 = scalar_lea.vmem %s4, %s1210
      // Predicated region
      $region37: #{_lambda_.10} parent=35 // pred_check
        %p1212 = pneg %p127
      $region38: #{_lambda_.10} parent=35 // pred_check_branch
        %1214 = sbr.rel (%p1212) target = $region40
      $region39: #{_lambda_.10} parent=35 // pred_region
        %s1215 = smul.u32 32, %s15
      $region40: #{_lambda_.10} parent=35 // pred_fallthru
        _
    $region36: #{_lambda_.10} parent=5 // pred_fallthru
      _
    %p1216 = scmp.le.s32.totalorder 2, %s10
    // Predicated region
    $region41: #{_lambda_.10} parent=5 // pred_check
      %p1217 = pneg %p1216
    $region42: #{_lambda_.10} parent=5 // pred_check_branch
      %1219 = sbr.rel (%p1217) target = $region44
    $region43: #{_lambda_.10} parent=5 // pred_region
      %s1220 = ssub.s32 %s10, 2
      // Predicated region
      $region45: #{_lambda_.10} parent=43 // pred_check
        %p1221 = pneg %p133
      $region46: #{_lambda_.10} parent=43 // pred_check_branch
        %1223 = sbr.rel (%p1221) target = $region48
      $region47: #{_lambda_.10} parent=43 // pred_region
        %s1224 = smul.u32 32, %s16
        %p1225 = scmp.lt.s32.totalorder %s1224, 63
        %s1226 = scalar_select %p1225, %s1224, 63
        %s1227 = smul.addr %s1226, 8
        %s1228 = scalar_lea.vmem %s4, %s1227
      $region48: #{_lambda_.10} parent=43 // pred_fallthru
        _
    $region44: #{_lambda_.10} parent=5 // pred_fallthru
      _
  $region6: #{_lambda_.10} parent=0 // loop_footer
    %s14 = sadd.s32 1, %s10
  $region7: #{_lambda_.10} parent=0 // loop_footer_branch
    %9 = sbr.rel target = $region3
  $region8: #{_lambda_.10} parent=0 // loop_exit
    _

// kernel: _lambda_.11
$region0: #{_lambda_.11}
  #allocation0 [shape = 'u32[]', space=smem, size = 0x4, offset = 0x4, fixed_abs, tag = 'smem constant byte address 0x4 - core index']
  #allocation1 [shape = 'u32[72,128]{1,0:T(1,128)}', space=vmem, size = 0x9000, scoped, tag = 'internal scratch']
  %s0 = inlined_call_operand.vmem [shape: f32[512,16], index: 0, kind: input, shape index: {}]
  %s1 = inlined_call_operand.vmem [shape: f32[16,64], index: 1, kind: input, shape index: {}]
  %s2 = inlined_call_operand.vmem [shape: f32[1,64], index: 2, kind: input, shape index: {}]
  %s3 = inlined_call_operand.vmem [shape: f32[64,3], index: 3, kind: input, shape index: {}]
  %s4 = inlined_call_operand.vmem [shape: f32[1,3], index: 4, kind: input, shape index: {}]
  %s5 = inlined_call_operand.vmem [shape: f32[512,3], index: 5, kind: output, shape index: {}]
  %s6 = sld [smem:[#allocation0]]
  $region53: #{_lambda_.11} parent=0
    _
  %s8 = ssub.s32 1, %s6
  %s9 = scalar_select 0, %s8, %s6
  loop: start=0, step=1, limit=4
  $region2: #{_lambda_.11} parent=0 // loop_pre_header
    _
  $region3: #{_lambda_.11} parent=0 // loop_header
    %s11 = sphi 0, %s15
    %p12 = scmp.ge.s32.totalorder %s11, 4
    %s21 = sphi 0, %s23
    %s24 = sphi 0, %s21
    %s25 = sphi 0, %s24
    %s41 = sphi 0, %s25
    %s45 = sphi 0, %s45
    %s47 = sphi 0, %s45
    %s48 = sphi 0, %s47
    %s62 = sphi 0, %s48
    %s66 = sphi 0, %s66
    %s68 = sphi 0, %s66
    %s69 = sphi 0, %s68
    %s83 = sphi 0, %s69
    %s87 = sphi 0, %s87
    %s89 = sphi 0, %s87
    %s90 = sphi 0, %s89
    %s104 = sphi 0, %s90
    %s108 = sphi 0, %s108
    %s110 = sphi 0, %s108
    %s111 = sphi 0, %s110
    %s125 = sphi 0, %s111
    %s131 = sphi 0, %s133
    %s134 = sphi 0, %s131
    %s135 = sphi 0, %s134
    %s151 = sphi 0, %s135
  $region4: #{_lambda_.11} parent=0 // loop_header_branch
    %14 = sbr.rel (%p12) target = $region8
  $region5: #{_lambda_.11} parent=0 // loop_body
    %s16 = ssub.s32 %s11, 1
    %s17 = ssub.s32 %s11, 2
    %s18 = sadd.s32 %s11, 1
    %s19 = ssub.s32 %s11, %s18
    %p20 = scmp.eq.s32.totalorder %s19, 0
    %s22 = sadd.s32 %s21, 1
    %s23 = scalar_select %p20, %s21, %s22
    %p26 = pneg %p20
    %p27 = scmp.eq.s32.totalorder %s11, 1
    %p28 = por %p26, %p27
    %p29 = scmp.ne.s32.totalorder %s21, %s24
    %p30 = scmp.eq.s32.totalorder %s11, 0
    %p31 = por %p29, %p30
    %p32 = scmp.ne.s32.totalorder %s21, %s24
    %p33 = scmp.eq.s32.totalorder %s16, 1
    %p34 = por %p32, %p33
    %p35 = scmp.ne.s32.totalorder %s24, %s25
    %p36 = scmp.eq.s32.totalorder %s16, 0
    %p37 = por %p35, %p36
    %p38 = scmp.ne.s32.totalorder %s24, %s25
    %p39 = scmp.eq.s32.totalorder %s17, 1
    %p40 = por %p38, %p39
    %p42 = scmp.ne.s32.totalorder %s25, %s41
    %p43 = scmp.eq.s32.totalorder %s17, 0
    %p44 = por %p42, %p43
    %s46 = sadd.s32 %s45, 1
    %p49 = scmp.eq.s32.totalorder %s11, 1
    %p50 = scmp.ne.s32.totalorder %s45, %s47
    %p51 = scmp.eq.s32.totalorder %s11, 0
    %p52 = por %p50, %p51
    %p53 = scmp.ne.s32.totalorder %s45, %s47
    %p54 = scmp.eq.s32.totalorder %s16, 1
    %p55 = por %p53, %p54
    %p56 = scmp.ne.s32.totalorder %s47, %s48
    %p57 = scmp.eq.s32.totalorder %s16, 0
    %p58 = por %p56, %p57
    %p59 = scmp.ne.s32.totalorder %s47, %s48
    %p60 = scmp.eq.s32.totalorder %s17, 1
    %p61 = por %p59, %p60
    %p63 = scmp.ne.s32.totalorder %s48, %s62
    %p64 = scmp.eq.s32.totalorder %s17, 0
    %p65 = por %p63, %p64
    %s67 = sadd.s32 %s66, 1
    %p70 = scmp.eq.s32.totalorder %s11, 1
    %p71 = scmp.ne.s32.totalorder %s66, %s68
    %p72 = scmp.eq.s32.totalorder %s11, 0
    %p73 = por %p71, %p72
    %p74 = scmp.ne.s32.totalorder %s66, %s68
    %p75 = scmp.eq.s32.totalorder %s16, 1
    %p76 = por %p74, %p75
    %p77 = scmp.ne.s32.totalorder %s68, %s69
    %p78 = scmp.eq.s32.totalorder %s16, 0
    %p79 = por %p77, %p78
    %p80 = scmp.ne.s32.totalorder %s68, %s69
    %p81 = scmp.eq.s32.totalorder %s17, 1
    %p82 = por %p80, %p81
    %p84 = scmp.ne.s32.totalorder %s69, %s83
    %p85 = scmp.eq.s32.totalorder %s17, 0
    %p86 = por %p84, %p85
    %s88 = sadd.s32 %s87, 1
    %p91 = scmp.eq.s32.totalorder %s11, 1
    %p92 = scmp.ne.s32.totalorder %s87, %s89
    %p93 = scmp.eq.s32.totalorder %s11, 0
    %p94 = por %p92, %p93
    %p95 = scmp.ne.s32.totalorder %s87, %s89
    %p96 = scmp.eq.s32.totalorder %s16, 1
    %p97 = por %p95, %p96
    %p98 = scmp.ne.s32.totalorder %s89, %s90
    %p99 = scmp.eq.s32.totalorder %s16, 0
    %p100 = por %p98, %p99
    %p101 = scmp.ne.s32.totalorder %s89, %s90
    %p102 = scmp.eq.s32.totalorder %s17, 1
    %p103 = por %p101, %p102
    %p105 = scmp.ne.s32.totalorder %s90, %s104
    %p106 = scmp.eq.s32.totalorder %s17, 0
    %p107 = por %p105, %p106
    %s109 = sadd.s32 %s108, 1
    %p112 = scmp.eq.s32.totalorder %s11, 1
    %p113 = scmp.ne.s32.totalorder %s108, %s110
    %p114 = scmp.eq.s32.totalorder %s11, 0
    %p115 = por %p113, %p114
    %p116 = scmp.ne.s32.totalorder %s108, %s110
    %p117 = scmp.eq.s32.totalorder %s16, 1
    %p118 = por %p116, %p117
    %p119 = scmp.ne.s32.totalorder %s110, %s111
    %p120 = scmp.eq.s32.totalorder %s16, 0
    %p121 = por %p119, %p120
    %p122 = scmp.ne.s32.totalorder %s110, %s111
    %p123 = scmp.eq.s32.totalorder %s17, 1
    %p124 = por %p122, %p123
    %p126 = scmp.ne.s32.totalorder %s111, %s125
    %p127 = scmp.eq.s32.totalorder %s17, 0
    %p128 = por %p126, %p127
    %s129 = ssub.s32 %s11, %s18
    %p130 = scmp.eq.s32.totalorder %s129, 0
    %s132 = sadd.s32 %s131, 1
    %s133 = scalar_select %p130, %s131, %s132
    %p136 = pneg %p130
    %p137 = scmp.eq.s32.totalorder %s11, 1
    %p138 = por %p136, %p137
    %p139 = scmp.ne.s32.totalorder %s131, %s134
    %p140 = scmp.eq.s32.totalorder %s11, 0
    %p141 = por %p139, %p140
    %p142 = scmp.ne.s32.totalorder %s131, %s134
    %p143 = scmp.eq.s32.totalorder %s16, 1
    %p144 = por %p142, %p143
    %p145 = scmp.ne.s32.totalorder %s134, %s135
    %p146 = scmp.eq.s32.totalorder %s16, 0
    %p147 = por %p145, %p146
    %p148 = scmp.ne.s32.totalorder %s134, %s135
    %p149 = scmp.eq.s32.totalorder %s17, 1
    %p150 = por %p148, %p149
    %p152 = scmp.ne.s32.totalorder %s135, %s151
    %p153 = scmp.eq.s32.totalorder %s17, 0
    %p154 = por %p152, %p153
    %p155 = scmp.le.s32.totalorder 1, %s11
    %p156 = scmp.lt.s32.totalorder %s11, 3
    %p157 = pnand %p155, %p156
    %p158 = pneg %p157
    // Predicated region
    $region9: #{_lambda_.11} parent=5 // pred_check
      _
    $region10: #{_lambda_.11} parent=5 // pred_check_branch
      %160 = sbr.rel (%p157) target = $region12
    $region11: #{_lambda_.11} parent=5 // pred_region
      %s161 = ssub.s32 %s11, 1
      // Predicated region
      $region13: #{_lambda_.11} parent=11 // pred_check
        %p162 = pneg %p58
      $region14: #{_lambda_.11} parent=11 // pred_check_branch
        %164 = sbr.rel (%p162) target = $region16
      $region15: #{_lambda_.11} parent=11 // pred_region
        _
      $region16: #{_lambda_.11} parent=11 // pred_fallthru
        _
      // Predicated region
      $region17: #{_lambda_.11} parent=11 // pred_check
        %p165 = pneg %p79
      $region18: #{_lambda_.11} parent=11 // pred_check_branch
        %167 = sbr.rel (%p165) target = $region20
      $region19: #{_lambda_.11} parent=11 // pred_region
        _
      $region20: #{_lambda_.11} parent=11 // pred_fallthru
        _
      // Predicated region
      $region21: #{_lambda_.11} parent=11 // pred_check
        %p168 = pneg %p100
      $region22: #{_lambda_.11} parent=11 // pred_check_branch
        %170 = sbr.rel (%p168) target = $region24
      $region23: #{_lambda_.11} parent=11 // pred_region
        _
      $region24: #{_lambda_.11} parent=11 // pred_fallthru
        _
      // Predicated region
      $region25: #{_lambda_.11} parent=11 // pred_check
        %p171 = pneg %p121
      $region26: #{_lambda_.11} parent=11 // pred_check_branch
        %173 = sbr.rel (%p171) target = $region28
      $region27: #{_lambda_.11} parent=11 // pred_region
        _
      $region28: #{_lambda_.11} parent=11 // pred_fallthru
        _
    $region12: #{_lambda_.11} parent=5 // pred_fallthru
      _
    %p174 = scmp.lt.s32.totalorder %s11, 2
    // Predicated region
    $region29: #{_lambda_.11} parent=5 // pred_check
      %p175 = pneg %p174
    $region30: #{_lambda_.11} parent=5 // pred_check_branch
      %177 = sbr.rel (%p175) target = $region32
    $region31: #{_lambda_.11} parent=5 // pred_region
      // Predicated region
      $region33: #{_lambda_.11} parent=31 // pred_check
        %p178 = pneg %p31
      $region34: #{_lambda_.11} parent=31 // pred_check_branch
        %180 = sbr.rel (%p178) target = $region36
      $region35: #{_lambda_.11} parent=31 // pred_region
        %s181 = smul.u32 32, %s11
        %p182 = scmp.lt.s32.totalorder %s181, 63
        %s183 = scalar_select %p182, %s181, 63
        %s184 = smul.addr %s183, 8
        %s185 = scalar_lea.vmem %s0, %s184
        %s186 = smul.u32 32, %s11
      $region36: #{_lambda_.11} parent=31 // pred_fallthru
        _
    $region32: #{_lambda_.11} parent=5 // pred_fallthru
      _
    %p187 = scmp.le.s32.totalorder 1, %s11
    %p188 = scmp.lt.s32.totalorder %s11, 3
    %p189 = pnand %p187, %p188
    %p190 = pneg %p189
    // Predicated region
    $region37: #{_lambda_.11} parent=5 // pred_check
      _
    $region38: #{_lambda_.11} parent=5 // pred_check_branch
      %192 = sbr.rel (%p189) target = $region40
    $region39: #{_lambda_.11} parent=5 // pred_region
      %s193 = ssub.s32 %s11, 1
      %s194 = smul.u32 32, %s16
      %p195 = scmp.lt.s32.totalorder %s194, 63
      %s196 = scalar_select %p195, %s194, 63
      %s197 = smul.addr %s196, 8
      %s198 = scalar_lea.vmem %s0, %s197
      %p199 = pneg %p37
      %p200 = pneg %p34
      %p201 = pneg %p58
      %p202 = pneg %p55
      %p203 = pneg %p79
      %p204 = pneg %p76
      %p205 = pneg %p100
      %p206 = pneg %p97
      %p207 = pneg %p121
      %p208 = pneg %p118
      %p209 = pneg %p147
      %p210 = pneg %p144
      %s211 = smul.u32 32, %s16
      %p212 = scmp.lt.s32.totalorder %s211, 63
      %s213 = scalar_select %p212, %s211, 63
      %s214 = smul.addr %s213, 8
      %s215 = scalar_lea.vmem %s5, %s214
      %s216 = smul.u32 32, %s16
      %p217 = scmp.lt.s32.totalorder %s216, 63
      %s218 = scalar_select %p217, %s216, 63
      %s219 = smul.addr %s218, 8
      %s220 = scalar_lea.vmem %s0, %s219
      %s221 = smul.u32 32, %s16
      %s222 = smul.u32 32, %s16
      %p223 = scmp.lt.s32.totalorder %s222, 63
      %s224 = scalar_select %p223, %s222, 63
      %s225 = smul.addr %s224, 8
      %s226 = scalar_lea.vmem %s5, %s225
      %s227 = smul.u32 32, %s16
      %v228 = vld [vmem:[%s220] sm:$0xff]
      %v229 = vld [vmem:[%s220 + $0x8] sm:$0xff]
      %v230 = vld [vmem:[%s220 + $0x10] sm:$0xff]
      %v231 = vld [vmem:[%s220 + $0x18] sm:$0xff]
      %v232 = vld [vmem:[%s220 + $0x20] sm:$0xff]
      %v233 = vld [vmem:[%s220 + $0x28] sm:$0xff]
      %v234 = vld [vmem:[%s220 + $0x30] sm:$0xff]
      %v235 = vld [vmem:[%s220 + $0x38] sm:$0xff]
      %v236 = vld [vmem:[%s220 + $0x40] sm:$0xff]
      %v237 = vld [vmem:[%s220 + $0x48] sm:$0xff]
      %v238 = vld [vmem:[%s220 + $0x50] sm:$0xff]
      %v239 = vld [vmem:[%s220 + $0x58] sm:$0xff]
      %v240 = vld [vmem:[%s220 + $0x60] sm:$0xff]
      %v241 = vld [vmem:[%s220 + $0x68] sm:$0xff]
      %v242 = vld [vmem:[%s220 + $0x70] sm:$0xff]
      %v243 = vld [vmem:[%s220 + $0x78] sm:$0xff]
      %v244 = vld [vmem:[%s220 + $0x80] sm:$0xff]
      %v245 = vld [vmem:[%s220 + $0x88] sm:$0xff]
      %v246 = vld [vmem:[%s220 + $0x90] sm:$0xff]
      %v247 = vld [vmem:[%s220 + $0x98] sm:$0xff]
      %v248 = vld [vmem:[%s220 + $0xa0] sm:$0xff]
      %v249 = vld [vmem:[%s220 + $0xa8] sm:$0xff]
      %v250 = vld [vmem:[%s220 + $0xb0] sm:$0xff]
      %v251 = vld [vmem:[%s220 + $0xb8] sm:$0xff]
      %v252 = vld [vmem:[%s220 + $0xc0] sm:$0xff]
      %v253 = vld [vmem:[%s220 + $0xc8] sm:$0xff]
      %v254 = vld [vmem:[%s220 + $0xd0] sm:$0xff]
      %v255 = vld [vmem:[%s220 + $0xd8] sm:$0xff]
      %v256 = vld [vmem:[%s220 + $0xe0] sm:$0xff]
      %v257 = vld [vmem:[%s220 + $0xe8] sm:$0xff]
      %v258 = vld [vmem:[%s220 + $0xf0] sm:$0xff]
      %v259 = vld [vmem:[%s220 + $0xf8] sm:$0xff]
      %v260 = vld [vmem:[%s1] sm:$0xff]
      %v261 = vld [vmem:[%s1 + $0x8] sm:$0xff]
      %v262 = vld [vmem:[%s2] sm:$0x1]
      %v264 = vperm.slane %v262, 0
      %vm266 = vcmask 130048
      %v268 = vsel %vm266, %v228, 0
      %v271 = vsel %vm266, %v229, 0
      %v274 = vsel %vm266, %v230, 0
      %v277 = vsel %vm266, %v231, 0
      %v280 = vsel %vm266, %v232, 0
      %v283 = vsel %vm266, %v233, 0
      %v286 = vsel %vm266, %v234, 0
      %v289 = vsel %vm266, %v235, 0
      %v292 = vsel %vm266, %v236, 0
      %v295 = vsel %vm266, %v237, 0
      %v298 = vsel %vm266, %v238, 0
      %v301 = vsel %vm266, %v239, 0
      %v304 = vsel %vm266, %v240, 0
      %v307 = vsel %vm266, %v241, 0
      %v310 = vsel %vm266, %v242, 0
      %v313 = vsel %vm266, %v243, 0
      %v316 = vsel %vm266, %v244, 0
      %v319 = vsel %vm266, %v245, 0
      %v322 = vsel %vm266, %v246, 0
      %v325 = vsel %vm266, %v247, 0
      %v328 = vsel %vm266, %v248, 0
      %v331 = vsel %vm266, %v249, 0
      %v334 = vsel %vm266, %v250, 0
      %v337 = vsel %vm266, %v251, 0
      %v340 = vsel %vm266, %v252, 0
      %v343 = vsel %vm266, %v253, 0
      %v346 = vsel %vm266, %v254, 0
      %v349 = vsel %vm266, %v255, 0
      %v352 = vsel %vm266, %v256, 0
      %v355 = vsel %vm266, %v257, 0
      %v358 = vsel %vm266, %v258, 0
      %v361 = vsel %vm266, %v259, 0
      %363 = vmatpush.msra.mxu0 0.0
      %364 = vmatpush.msra.mxu0 0.0
      %365 = vmatpush.msra.mxu0 0.0
      %366 = vmatpush.msra.mxu0 0.0
      %367 = vmatpush.msra.mxu0 0.0
      %368 = vmatpush.msra.mxu0 0.0
      %369 = vmatpush.msra.mxu0 0.0
      %370 = vmatpush.msra.mxu0 0.0
      %371 = vmatpush.msra.mxu0 0.0
      %372 = vmatpush.msra.mxu0 0.0
      %373 = vmatpush.msra.mxu0 0.0
      %374 = vmatpush.msra.mxu0 0.0
      %375 = vmatpush.msra.mxu0 0.0
      %376 = vmatpush.msra.mxu0 0.0
      %377 = vmatpush.msra.mxu0 %v261
      %378 = vmatpush.msra.mxu0 %v260
      %379 = vmatmul.f32.gmra.mxu0 %v268
      %v380 = vpop.f32.mrf.mxu0
      %v381 = vadd.f32 %v264, %v380
      %382 = vmatmul.f32.gmra.mxu0 %v271
      %v383 = vpop.f32.mrf.mxu0
      %v384 = vadd.f32 %v264, %v383
      %385 = vmatmul.f32.gmra.mxu0 %v274
      %v386 = vpop.f32.mrf.mxu0
      %v387 = vadd.f32 %v264, %v386
      %388 = vmatmul.f32.gmra.mxu0 %v277
      %v389 = vpop.f32.mrf.mxu0
      %v390 = vadd.f32 %v264, %v389
      %391 = vmatmul.f32.gmra.mxu0 %v280
      %v392 = vpop.f32.mrf.mxu0
      %v393 = vadd.f32 %v264, %v392
      %394 = vmatmul.f32.gmra.mxu0 %v283
      %v395 = vpop.f32.mrf.mxu0
      %v396 = vadd.f32 %v264, %v395
      %397 = vmatmul.f32.gmra.mxu0 %v286
      %v398 = vpop.f32.mrf.mxu0
      %v399 = vadd.f32 %v264, %v398
      %400 = vmatmul.f32.gmra.mxu0 %v289
      %v401 = vpop.f32.mrf.mxu0
      %v402 = vadd.f32 %v264, %v401
      %403 = vmatmul.f32.gmra.mxu0 %v292
      %v404 = vpop.f32.mrf.mxu0
      %v405 = vadd.f32 %v264, %v404
      %406 = vmatmul.f32.gmra.mxu0 %v295
      %v407 = vpop.f32.mrf.mxu0
      %v408 = vadd.f32 %v264, %v407
      %409 = vmatmul.f32.gmra.mxu0 %v298
      %v410 = vpop.f32.mrf.mxu0
      %v411 = vadd.f32 %v264, %v410
      %412 = vmatmul.f32.gmra.mxu0 %v301
      %v413 = vpop.f32.mrf.mxu0
      %v414 = vadd.f32 %v264, %v413
      %415 = vmatmul.f32.gmra.mxu0 %v304
      %v416 = vpop.f32.mrf.mxu0
      %v417 = vadd.f32 %v264, %v416
      %418 = vmatmul.f32.gmra.mxu0 %v307
      %v419 = vpop.f32.mrf.mxu0
      %v420 = vadd.f32 %v264, %v419
      %421 = vmatmul.f32.gmra.mxu0 %v310
      %v422 = vpop.f32.mrf.mxu0
      %v423 = vadd.f32 %v264, %v422
      %424 = vmatmul.f32.gmra.mxu0 %v313
      %v425 = vpop.f32.mrf.mxu0
      %v426 = vadd.f32 %v264, %v425
      %427 = vmatmul.f32.gmra.mxu0 %v316
      %v428 = vpop.f32.mrf.mxu0
      %v429 = vadd.f32 %v264, %v428
      %430 = vmatmul.f32.gmra.mxu0 %v319
      %v431 = vpop.f32.mrf.mxu0
      %v432 = vadd.f32 %v264, %v431
      %433 = vmatmul.f32.gmra.mxu0 %v322
      %v434 = vpop.f32.mrf.mxu0
      %v435 = vadd.f32 %v264, %v434
      %436 = vmatmul.f32.gmra.mxu0 %v325
      %v437 = vpop.f32.mrf.mxu0
      %v438 = vadd.f32 %v264, %v437
      %439 = vmatmul.f32.gmra.mxu0 %v328
      %v440 = vpop.f32.mrf.mxu0
      %v441 = vadd.f32 %v264, %v440
      %442 = vmatmul.f32.gmra.mxu0 %v331
      %v443 = vpop.f32.mrf.mxu0
      %v444 = vadd.f32 %v264, %v443
      %445 = vmatmul.f32.gmra.mxu0 %v334
      %v446 = vpop.f32.mrf.mxu0
      %v447 = vadd.f32 %v264, %v446
      %448 = vmatmul.f32.gmra.mxu0 %v337
      %v449 = vpop.f32.mrf.mxu0
      %v450 = vadd.f32 %v264, %v449
      %451 = vmatmul.f32.gmra.mxu0 %v340
      %v452 = vpop.f32.mrf.mxu0
      %v453 = vadd.f32 %v264, %v452
      %454 = vmatmul.f32.gmra.mxu0 %v343
      %v455 = vpop.f32.mrf.mxu0
      %v456 = vadd.f32 %v264, %v455
      %457 = vmatmul.f32.gmra.mxu0 %v346
      %v458 = vpop.f32.mrf.mxu0
      %v459 = vadd.f32 %v264, %v458
      %460 = vmatmul.f32.gmra.mxu0 %v349
      %v461 = vpop.f32.mrf.mxu0
      %v462 = vadd.f32 %v264, %v461
      %463 = vmatmul.f32.gmra.mxu0 %v352
      %v464 = vpop.f32.mrf.mxu0
      %v465 = vadd.f32 %v264, %v464
      %466 = vmatmul.f32.gmra.mxu0 %v355
      %v467 = vpop.f32.mrf.mxu0
      %v468 = vadd.f32 %v264, %v467
      %469 = vmatmul.f32.gmra.mxu0 %v358
      %v470 = vpop.f32.mrf.mxu0
      %v471 = vadd.f32 %v264, %v470
      %472 = vmatmul.f32.gmra.mxu0 %v361
      %v473 = vpop.f32.mrf.mxu0
      %v474 = vadd.f32 %v264, %v473
      %475 = vdwg.mxu0
      %v476 = vxor.u32 %v381, 2147483648
      %v477 = vxor.u32 %v384, 2147483648
      %v478 = vxor.u32 %v387, 2147483648
      %v479 = vxor.u32 %v390, 2147483648
      %v480 = vxor.u32 %v393, 2147483648
      %v481 = vxor.u32 %v396, 2147483648
      %v482 = vxor.u32 %v399, 2147483648
      %v483 = vxor.u32 %v402, 2147483648
      %v484 = vxor.u32 %v405, 2147483648
      %v485 = vxor.u32 %v408, 2147483648
      %v486 = vxor.u32 %v411, 2147483648
      %v487 = vxor.u32 %v414, 2147483648
      %v488 = vxor.u32 %v417, 2147483648
      %v489 = vxor.u32 %v420, 2147483648
      %v490 = vxor.u32 %v423, 2147483648
      %v491 = vxor.u32 %v426, 2147483648
      %v492 = vxor.u32 %v429, 2147483648
      %v493 = vxor.u32 %v432, 2147483648
      %v494 = vxor.u32 %v435, 2147483648
      %v495 = vxor.u32 %v438, 2147483648
      %v496 = vxor.u32 %v441, 2147483648
      %v497 = vxor.u32 %v444, 2147483648
      %v498 = vxor.u32 %v447, 2147483648
      %v499 = vxor.u32 %v450, 2147483648
      %v500 = vxor.u32 %v453, 2147483648
      %v501 = vxor.u32 %v456, 2147483648
      %v502 = vxor.u32 %v459, 2147483648
      %v503 = vxor.u32 %v462, 2147483648
      %v504 = vxor.u32 %v465, 2147483648
      %v505 = vxor.u32 %v468, 2147483648
      %v506 = vxor.u32 %v471, 2147483648
      %v507 = vxor.u32 %v474, 2147483648
      %v508 = vmul.f32 %v476, 1.442695
      %v509 = vpow.pop %v508
      %v510 = vmul.f32 %v477, 1.442695
      %v511 = vpow.pop %v510
      %v512 = vmul.f32 %v478, 1.442695
      %v513 = vpow.pop %v512
      %v514 = vmul.f32 %v479, 1.442695
      %v515 = vpow.pop %v514
      %v516 = vmul.f32 %v480, 1.442695
      %v517 = vpow.pop %v516
      %v518 = vmul.f32 %v481, 1.442695
      %v519 = vpow.pop %v518
      %v520 = vmul.f32 %v482, 1.442695
      %v521 = vpow.pop %v520
      %v522 = vmul.f32 %v483, 1.442695
      %v523 = vpow.pop %v522
      %v524 = vmul.f32 %v484, 1.442695
      %v525 = vpow.pop %v524
      %v526 = vmul.f32 %v485, 1.442695
      %v527 = vpow.pop %v526
      %v528 = vmul.f32 %v486, 1.442695
      %v529 = vpow.pop %v528
      %v530 = vmul.f32 %v487, 1.442695
      %v531 = vpow.pop %v530
      %v532 = vmul.f32 %v488, 1.442695
      %v533 = vpow.pop %v532
      %v534 = vmul.f32 %v489, 1.442695
      %v535 = vpow.pop %v534
      %v536 = vmul.f32 %v490, 1.442695
      %v537 = vpow.pop %v536
      %v538 = vmul.f32 %v491, 1.442695
      %v539 = vpow.pop %v538
      %v540 = vmul.f32 %v492, 1.442695
      %v541 = vpow.pop %v540
      %v542 = vmul.f32 %v493, 1.442695
      %v543 = vpow.pop %v542
      %v544 = vmul.f32 %v494, 1.442695
      %v545 = vpow.pop %v544
      %v546 = vmul.f32 %v495, 1.442695
      %v547 = vpow.pop %v546
      %v548 = vmul.f32 %v496, 1.442695
      %v549 = vpow.pop %v548
      %v550 = vmul.f32 %v497, 1.442695
      %v551 = vpow.pop %v550
      %v552 = vmul.f32 %v498, 1.442695
      %v553 = vpow.pop %v552
      %v554 = vmul.f32 %v499, 1.442695
      %v555 = vpow.pop %v554
      %v556 = vmul.f32 %v500, 1.442695
      %v557 = vpow.pop %v556
      %v558 = vmul.f32 %v501, 1.442695
      %v559 = vpow.pop %v558
      %v560 = vmul.f32 %v502, 1.442695
      %v561 = vpow.pop %v560
      %v562 = vmul.f32 %v503, 1.442695
      %v563 = vpow.pop %v562
      %v564 = vmul.f32 %v504, 1.442695
      %v565 = vpow.pop %v564
      %v566 = vmul.f32 %v505, 1.442695
      %v567 = vpow.pop %v566
      %v568 = vmul.f32 %v506, 1.442695
      %v569 = vpow.pop %v568
      %v570 = vmul.f32 %v507, 1.442695
      %v571 = vpow.pop %v570
      %v572 = vadd.f32 %v509, 1.0
      %v573 = vadd.f32 %v511, 1.0
      %v574 = vadd.f32 %v513, 1.0
      %v575 = vadd.f32 %v515, 1.0
      %v576 = vadd.f32 %v517, 1.0
      %v577 = vadd.f32 %v519, 1.0
      %v578 = vadd.f32 %v521, 1.0
      %v579 = vadd.f32 %v523, 1.0
      %v580 = vadd.f32 %v525, 1.0
      %v581 = vadd.f32 %v527, 1.0
      %v582 = vadd.f32 %v529, 1.0
      %v583 = vadd.f32 %v531, 1.0
      %v584 = vadd.f32 %v533, 1.0
      %v585 = vadd.f32 %v535, 1.0
      %v586 = vadd.f32 %v537, 1.0
      %v587 = vadd.f32 %v539, 1.0
      %v588 = vadd.f32 %v541, 1.0
      %v589 = vadd.f32 %v543, 1.0
      %v590 = vadd.f32 %v545, 1.0
      %v591 = vadd.f32 %v547, 1.0
      %v592 = vadd.f32 %v549, 1.0
      %v593 = vadd.f32 %v551, 1.0
      %v594 = vadd.f32 %v553, 1.0
      %v595 = vadd.f32 %v555, 1.0
      %v596 = vadd.f32 %v557, 1.0
      %v597 = vadd.f32 %v559, 1.0
      %v598 = vadd.f32 %v561, 1.0
      %v599 = vadd.f32 %v563, 1.0
      %v600 = vadd.f32 %v565, 1.0
      %v601 = vadd.f32 %v567, 1.0
      %v602 = vadd.f32 %v569, 1.0
      %v603 = vadd.f32 %v571, 1.0
      %v604 = vrcp.pop %v572
      %v605 = vmul.f32 %v572, %v604
      %v606 = vsub.f32 1.0, %v605
      %v607 = vmul.f32 %v604, %v606
      %v608 = vadd.f32 %v604, %v607
      %vm609 = vweird.f32 %v572
      %vm610 = vweird.f32 %v604
      %vm611 = vmor %vm609, %vm610
      %v612 = vsel %vm611, %v604, %v608
      %v613 = vand.u32 2147483647, %v572
      %vm614 = vcmp.eq.f32.partialorder %v613, 8.507059e+37
      %v615 = vand.u32 %v572, 2147483648
      %v616 = vor.u32 1.1754944e-38, %v615
      %v617 = vsel %vm614, %v616, %v612
      %v618 = vmul.f32 1.0, %v617
      %v619 = vrcp.pop %v573
      %v620 = vmul.f32 %v573, %v619
      %v621 = vsub.f32 1.0, %v620
      %v622 = vmul.f32 %v619, %v621
      %v623 = vadd.f32 %v619, %v622
      %vm624 = vweird.f32 %v573
      %vm625 = vweird.f32 %v619
      %vm626 = vmor %vm624, %vm625
      %v627 = vsel %vm626, %v619, %v623
      %v628 = vand.u32 2147483647, %v573
      %vm629 = vcmp.eq.f32.partialorder %v628, 8.507059e+37
      %v630 = vand.u32 %v573, 2147483648
      %v631 = vor.u32 1.1754944e-38, %v630
      %v632 = vsel %vm629, %v631, %v627
      %v633 = vmul.f32 1.0, %v632
      %v634 = vrcp.pop %v574
      %v635 = vmul.f32 %v574, %v634
      %v636 = vsub.f32 1.0, %v635
      %v637 = vmul.f32 %v634, %v636
      %v638 = vadd.f32 %v634, %v637
      %vm639 = vweird.f32 %v574
      %vm640 = vweird.f32 %v634
      %vm641 = vmor %vm639, %vm640
      %v642 = vsel %vm641, %v634, %v638
      %v643 = vand.u32 2147483647, %v574
      %vm644 = vcmp.eq.f32.partialorder %v643, 8.507059e+37
      %v645 = vand.u32 %v574, 2147483648
      %v646 = vor.u32 1.1754944e-38, %v645
      %v647 = vsel %vm644, %v646, %v642
      %v648 = vmul.f32 1.0, %v647
      %v649 = vrcp.pop %v575
      %v650 = vmul.f32 %v575, %v649
      %v651 = vsub.f32 1.0, %v650
      %v652 = vmul.f32 %v649, %v651
      %v653 = vadd.f32 %v649, %v652
      %vm654 = vweird.f32 %v575
      %vm655 = vweird.f32 %v649
      %vm656 = vmor %vm654, %vm655
      %v657 = vsel %vm656, %v649, %v653
      %v658 = vand.u32 2147483647, %v575
      %vm659 = vcmp.eq.f32.partialorder %v658, 8.507059e+37
      %v660 = vand.u32 %v575, 2147483648
      %v661 = vor.u32 1.1754944e-38, %v660
      %v662 = vsel %vm659, %v661, %v657
      %v663 = vmul.f32 1.0, %v662
      %v664 = vrcp.pop %v576
      %v665 = vmul.f32 %v576, %v664
      %v666 = vsub.f32 1.0, %v665
      %v667 = vmul.f32 %v664, %v666
      %v668 = vadd.f32 %v664, %v667
      %vm669 = vweird.f32 %v576
      %vm670 = vweird.f32 %v664
      %vm671 = vmor %vm669, %vm670
      %v672 = vsel %vm671, %v664, %v668
      %v673 = vand.u32 2147483647, %v576
      %vm674 = vcmp.eq.f32.partialorder %v673, 8.507059e+37
      %v675 = vand.u32 %v576, 2147483648
      %v676 = vor.u32 1.1754944e-38, %v675
      %v677 = vsel %vm674, %v676, %v672
      %v678 = vmul.f32 1.0, %v677
      %v679 = vrcp.pop %v577
      %v680 = vmul.f32 %v577, %v679
      %v681 = vsub.f32 1.0, %v680
      %v682 = vmul.f32 %v679, %v681
      %v683 = vadd.f32 %v679, %v682
      %vm684 = vweird.f32 %v577
      %vm685 = vweird.f32 %v679
      %vm686 = vmor %vm684, %vm685
      %v687 = vsel %vm686, %v679, %v683
      %v688 = vand.u32 2147483647, %v577
      %vm689 = vcmp.eq.f32.partialorder %v688, 8.507059e+37
      %v690 = vand.u32 %v577, 2147483648
      %v691 = vor.u32 1.1754944e-38, %v690
      %v692 = vsel %vm689, %v691, %v687
      %v693 = vmul.f32 1.0, %v692
      %v694 = vrcp.pop %v578
      %v695 = vmul.f32 %v578, %v694
      %v696 = vsub.f32 1.0, %v695
      %v697 = vmul.f32 %v694, %v696
      %v698 = vadd.f32 %v694, %v697
      %vm699 = vweird.f32 %v578
      %vm700 = vweird.f32 %v694
      %vm701 = vmor %vm699, %vm700
      %v702 = vsel %vm701, %v694, %v698
      %v703 = vand.u32 2147483647, %v578
      %vm704 = vcmp.eq.f32.partialorder %v703, 8.507059e+37
      %v705 = vand.u32 %v578, 2147483648
      %v706 = vor.u32 1.1754944e-38, %v705
      %v707 = vsel %vm704, %v706, %v702
      %v708 = vmul.f32 1.0, %v707
      %v709 = vrcp.pop %v579
      %v710 = vmul.f32 %v579, %v709
      %v711 = vsub.f32 1.0, %v710
      %v712 = vmul.f32 %v709, %v711
      %v713 = vadd.f32 %v709, %v712
      %vm714 = vweird.f32 %v579
      %vm715 = vweird.f32 %v709
      %vm716 = vmor %vm714, %vm715
      %v717 = vsel %vm716, %v709, %v713
      %v718 = vand.u32 2147483647, %v579
      %vm719 = vcmp.eq.f32.partialorder %v718, 8.507059e+37
      %v720 = vand.u32 %v579, 2147483648
      %v721 = vor.u32 1.1754944e-38, %v720
      %v722 = vsel %vm719, %v721, %v717
      %v723 = vmul.f32 1.0, %v722
      %v724 = vrcp.pop %v580
      %v725 = vmul.f32 %v580, %v724
      %v726 = vsub.f32 1.0, %v725
      %v727 = vmul.f32 %v724, %v726
      %v728 = vadd.f32 %v724, %v727
      %vm729 = vweird.f32 %v580
      %vm730 = vweird.f32 %v724
      %vm731 = vmor %vm729, %vm730
      %v732 = vsel %vm731, %v724, %v728
      %v733 = vand.u32 2147483647, %v580
      %vm734 = vcmp.eq.f32.partialorder %v733, 8.507059e+37
      %v735 = vand.u32 %v580, 2147483648
      %v736 = vor.u32 1.1754944e-38, %v735
      %v737 = vsel %vm734, %v736, %v732
      %v738 = vmul.f32 1.0, %v737
      %v739 = vrcp.pop %v581
      %v740 = vmul.f32 %v581, %v739
      %v741 = vsub.f32 1.0, %v740
      %v742 = vmul.f32 %v739, %v741
      %v743 = vadd.f32 %v739, %v742
      %vm744 = vweird.f32 %v581
      %vm745 = vweird.f32 %v739
      %vm746 = vmor %vm744, %vm745
      %v747 = vsel %vm746, %v739, %v743
      %v748 = vand.u32 2147483647, %v581
      %vm749 = vcmp.eq.f32.partialorder %v748, 8.507059e+37
      %v750 = vand.u32 %v581, 2147483648
      %v751 = vor.u32 1.1754944e-38, %v750
      %v752 = vsel %vm749, %v751, %v747
      %v753 = vmul.f32 1.0, %v752
      %v754 = vrcp.pop %v582
      %v755 = vmul.f32 %v582, %v754
      %v756 = vsub.f32 1.0, %v755
      %v757 = vmul.f32 %v754, %v756
      %v758 = vadd.f32 %v754, %v757
      %vm759 = vweird.f32 %v582
      %vm760 = vweird.f32 %v754
      %vm761 = vmor %vm759, %vm760
      %v762 = vsel %vm761, %v754, %v758
      %v763 = vand.u32 2147483647, %v582
      %vm764 = vcmp.eq.f32.partialorder %v763, 8.507059e+37
      %v765 = vand.u32 %v582, 2147483648
      %v766 = vor.u32 1.1754944e-38, %v765
      %v767 = vsel %vm764, %v766, %v762
      %v768 = vmul.f32 1.0, %v767
      %v769 = vrcp.pop %v583
      %v770 = vmul.f32 %v583, %v769
      %v771 = vsub.f32 1.0, %v770
      %v772 = vmul.f32 %v769, %v771
      %v773 = vadd.f32 %v769, %v772
      %vm774 = vweird.f32 %v583
      %vm775 = vweird.f32 %v769
      %vm776 = vmor %vm774, %vm775
      %v777 = vsel %vm776, %v769, %v773
      %v778 = vand.u32 2147483647, %v583
      %vm779 = vcmp.eq.f32.partialorder %v778, 8.507059e+37
      %v780 = vand.u32 %v583, 2147483648
      %v781 = vor.u32 1.1754944e-38, %v780
      %v782 = vsel %vm779, %v781, %v777
      %v783 = vmul.f32 1.0, %v782
      %v784 = vrcp.pop %v584
      %v785 = vmul.f32 %v584, %v784
      %v786 = vsub.f32 1.0, %v785
      %v787 = vmul.f32 %v784, %v786
      %v788 = vadd.f32 %v784, %v787
      %vm789 = vweird.f32 %v584
      %vm790 = vweird.f32 %v784
      %vm791 = vmor %vm789, %vm790
      %v792 = vsel %vm791, %v784, %v788
      %v793 = vand.u32 2147483647, %v584
      %vm794 = vcmp.eq.f32.partialorder %v793, 8.507059e+37
      %v795 = vand.u32 %v584, 2147483648
      %v796 = vor.u32 1.1754944e-38, %v795
      %v797 = vsel %vm794, %v796, %v792
      %v798 = vmul.f32 1.0, %v797
      %v799 = vrcp.pop %v585
      %v800 = vmul.f32 %v585, %v799
      %v801 = vsub.f32 1.0, %v800
      %v802 = vmul.f32 %v799, %v801
      %v803 = vadd.f32 %v799, %v802
      %vm804 = vweird.f32 %v585
      %vm805 = vweird.f32 %v799
      %vm806 = vmor %vm804, %vm805
      %v807 = vsel %vm806, %v799, %v803
      %v808 = vand.u32 2147483647, %v585
      %vm809 = vcmp.eq.f32.partialorder %v808, 8.507059e+37
      %v810 = vand.u32 %v585, 2147483648
      %v811 = vor.u32 1.1754944e-38, %v810
      %v812 = vsel %vm809, %v811, %v807
      %v813 = vmul.f32 1.0, %v812
      %v814 = vrcp.pop %v586
      %v815 = vmul.f32 %v586, %v814
      %v816 = vsub.f32 1.0, %v815
      %v817 = vmul.f32 %v814, %v816
      %v818 = vadd.f32 %v814, %v817
      %vm819 = vweird.f32 %v586
      %vm820 = vweird.f32 %v814
      %vm821 = vmor %vm819, %vm820
      %v822 = vsel %vm821, %v814, %v818
      %v823 = vand.u32 2147483647, %v586
      %vm824 = vcmp.eq.f32.partialorder %v823, 8.507059e+37
      %v825 = vand.u32 %v586, 2147483648
      %v826 = vor.u32 1.1754944e-38, %v825
      %v827 = vsel %vm824, %v826, %v822
      %v828 = vmul.f32 1.0, %v827
      %v829 = vrcp.pop %v587
      %v830 = vmul.f32 %v587, %v829
      %v831 = vsub.f32 1.0, %v830
      %v832 = vmul.f32 %v829, %v831
      %v833 = vadd.f32 %v829, %v832
      %vm834 = vweird.f32 %v587
      %vm835 = vweird.f32 %v829
      %vm836 = vmor %vm834, %vm835
      %v837 = vsel %vm836, %v829, %v833
      %v838 = vand.u32 2147483647, %v587
      %vm839 = vcmp.eq.f32.partialorder %v838, 8.507059e+37
      %v840 = vand.u32 %v587, 2147483648
      %v841 = vor.u32 1.1754944e-38, %v840
      %v842 = vsel %vm839, %v841, %v837
      %v843 = vmul.f32 1.0, %v842
      %v844 = vrcp.pop %v588
      %v845 = vmul.f32 %v588, %v844
      %v846 = vsub.f32 1.0, %v845
      %v847 = vmul.f32 %v844, %v846
      %v848 = vadd.f32 %v844, %v847
      %vm849 = vweird.f32 %v588
      %vm850 = vweird.f32 %v844
      %vm851 = vmor %vm849, %vm850
      %v852 = vsel %vm851, %v844, %v848
      %v853 = vand.u32 2147483647, %v588
      %vm854 = vcmp.eq.f32.partialorder %v853, 8.507059e+37
      %v855 = vand.u32 %v588, 2147483648
      %v856 = vor.u32 1.1754944e-38, %v855
      %v857 = vsel %vm854, %v856, %v852
      %v858 = vmul.f32 1.0, %v857
      %v859 = vrcp.pop %v589
      %v860 = vmul.f32 %v589, %v859
      %v861 = vsub.f32 1.0, %v860
      %v862 = vmul.f32 %v859, %v861
      %v863 = vadd.f32 %v859, %v862
      %vm864 = vweird.f32 %v589
      %vm865 = vweird.f32 %v859
      %vm866 = vmor %vm864, %vm865
      %v867 = vsel %vm866, %v859, %v863
      %v868 = vand.u32 2147483647, %v589
      %vm869 = vcmp.eq.f32.partialorder %v868, 8.507059e+37
      %v870 = vand.u32 %v589, 2147483648
      %v871 = vor.u32 1.1754944e-38, %v870
      %v872 = vsel %vm869, %v871, %v867
      %v873 = vmul.f32 1.0, %v872
      %v874 = vrcp.pop %v590
      %v875 = vmul.f32 %v590, %v874
      %v876 = vsub.f32 1.0, %v875
      %v877 = vmul.f32 %v874, %v876
      %v878 = vadd.f32 %v874, %v877
      %vm879 = vweird.f32 %v590
      %vm880 = vweird.f32 %v874
      %vm881 = vmor %vm879, %vm880
      %v882 = vsel %vm881, %v874, %v878
      %v883 = vand.u32 2147483647, %v590
      %vm884 = vcmp.eq.f32.partialorder %v883, 8.507059e+37
      %v885 = vand.u32 %v590, 2147483648
      %v886 = vor.u32 1.1754944e-38, %v885
      %v887 = vsel %vm884, %v886, %v882
      %v888 = vmul.f32 1.0, %v887
      %v889 = vrcp.pop %v591
      %v890 = vmul.f32 %v591, %v889
      %v891 = vsub.f32 1.0, %v890
      %v892 = vmul.f32 %v889, %v891
      %v893 = vadd.f32 %v889, %v892
      %vm894 = vweird.f32 %v591
      %vm895 = vweird.f32 %v889
      %vm896 = vmor %vm894, %vm895
      %v897 = vsel %vm896, %v889, %v893
      %v898 = vand.u32 2147483647, %v591
      %vm899 = vcmp.eq.f32.partialorder %v898, 8.507059e+37
      %v900 = vand.u32 %v591, 2147483648
      %v901 = vor.u32 1.1754944e-38, %v900
      %v902 = vsel %vm899, %v901, %v897
      %v903 = vmul.f32 1.0, %v902
      %v904 = vrcp.pop %v592
      %v905 = vmul.f32 %v592, %v904
      %v906 = vsub.f32 1.0, %v905
      %v907 = vmul.f32 %v904, %v906
      %v908 = vadd.f32 %v904, %v907
      %vm909 = vweird.f32 %v592
      %vm910 = vweird.f32 %v904
      %vm911 = vmor %vm909, %vm910
      %v912 = vsel %vm911, %v904, %v908
      %v913 = vand.u32 2147483647, %v592
      %vm914 = vcmp.eq.f32.partialorder %v913, 8.507059e+37
      %v915 = vand.u32 %v592, 2147483648
      %v916 = vor.u32 1.1754944e-38, %v915
      %v917 = vsel %vm914, %v916, %v912
      %v918 = vmul.f32 1.0, %v917
      %v919 = vrcp.pop %v593
      %v920 = vmul.f32 %v593, %v919
      %v921 = vsub.f32 1.0, %v920
      %v922 = vmul.f32 %v919, %v921
      %v923 = vadd.f32 %v919, %v922
      %vm924 = vweird.f32 %v593
      %vm925 = vweird.f32 %v919
      %vm926 = vmor %vm924, %vm925
      %v927 = vsel %vm926, %v919, %v923
      %v928 = vand.u32 2147483647, %v593
      %vm929 = vcmp.eq.f32.partialorder %v928, 8.507059e+37
      %v930 = vand.u32 %v593, 2147483648
      %v931 = vor.u32 1.1754944e-38, %v930
      %v932 = vsel %vm929, %v931, %v927
      %v933 = vmul.f32 1.0, %v932
      %v934 = vrcp.pop %v594
      %v935 = vmul.f32 %v594, %v934
      %v936 = vsub.f32 1.0, %v935
      %v937 = vmul.f32 %v934, %v936
      %v938 = vadd.f32 %v934, %v937
      %vm939 = vweird.f32 %v594
      %vm940 = vweird.f32 %v934
      %vm941 = vmor %vm939, %vm940
      %v942 = vsel %vm941, %v934, %v938
      %v943 = vand.u32 2147483647, %v594
      %vm944 = vcmp.eq.f32.partialorder %v943, 8.507059e+37
      %v945 = vand.u32 %v594, 2147483648
      %v946 = vor.u32 1.1754944e-38, %v945
      %v947 = vsel %vm944, %v946, %v942
      %v948 = vmul.f32 1.0, %v947
      %v949 = vrcp.pop %v595
      %v950 = vmul.f32 %v595, %v949
      %v951 = vsub.f32 1.0, %v950
      %v952 = vmul.f32 %v949, %v951
      %v953 = vadd.f32 %v949, %v952
      %vm954 = vweird.f32 %v595
      %vm955 = vweird.f32 %v949
      %vm956 = vmor %vm954, %vm955
      %v957 = vsel %vm956, %v949, %v953
      %v958 = vand.u32 2147483647, %v595
      %vm959 = vcmp.eq.f32.partialorder %v958, 8.507059e+37
      %v960 = vand.u32 %v595, 2147483648
      %v961 = vor.u32 1.1754944e-38, %v960
      %v962 = vsel %vm959, %v961, %v957
      %v963 = vmul.f32 1.0, %v962
      %v964 = vrcp.pop %v596
      %v965 = vmul.f32 %v596, %v964
      %v966 = vsub.f32 1.0, %v965
      %v967 = vmul.f32 %v964, %v966
      %v968 = vadd.f32 %v964, %v967
      %vm969 = vweird.f32 %v596
      %vm970 = vweird.f32 %v964
      %vm971 = vmor %vm969, %vm970
      %v972 = vsel %vm971, %v964, %v968
      %v973 = vand.u32 2147483647, %v596
      %vm974 = vcmp.eq.f32.partialorder %v973, 8.507059e+37
      %v975 = vand.u32 %v596, 2147483648
      %v976 = vor.u32 1.1754944e-38, %v975
      %v977 = vsel %vm974, %v976, %v972
      %v978 = vmul.f32 1.0, %v977
      %v979 = vrcp.pop %v597
      %v980 = vmul.f32 %v597, %v979
      %v981 = vsub.f32 1.0, %v980
      %v982 = vmul.f32 %v979, %v981
      %v983 = vadd.f32 %v979, %v982
      %vm984 = vweird.f32 %v597
      %vm985 = vweird.f32 %v979
      %vm986 = vmor %vm984, %vm985
      %v987 = vsel %vm986, %v979, %v983
      %v988 = vand.u32 2147483647, %v597
      %vm989 = vcmp.eq.f32.partialorder %v988, 8.507059e+37
      %v990 = vand.u32 %v597, 2147483648
      %v991 = vor.u32 1.1754944e-38, %v990
      %v992 = vsel %vm989, %v991, %v987
      %v993 = vmul.f32 1.0, %v992
      %v994 = vrcp.pop %v598
      %v995 = vmul.f32 %v598, %v994
      %v996 = vsub.f32 1.0, %v995
      %v997 = vmul.f32 %v994, %v996
      %v998 = vadd.f32 %v994, %v997
      %vm999 = vweird.f32 %v598
      %vm1000 = vweird.f32 %v994
      %vm1001 = vmor %vm999, %vm1000
      %v1002 = vsel %vm1001, %v994, %v998
      %v1003 = vand.u32 2147483647, %v598
      %vm1004 = vcmp.eq.f32.partialorder %v1003, 8.507059e+37
      %v1005 = vand.u32 %v598, 2147483648
      %v1006 = vor.u32 1.1754944e-38, %v1005
      %v1007 = vsel %vm1004, %v1006, %v1002
      %v1008 = vmul.f32 1.0, %v1007
      %v1009 = vrcp.pop %v599
      %v1010 = vmul.f32 %v599, %v1009
      %v1011 = vsub.f32 1.0, %v1010
      %v1012 = vmul.f32 %v1009, %v1011
      %v1013 = vadd.f32 %v1009, %v1012
      %vm1014 = vweird.f32 %v599
      %vm1015 = vweird.f32 %v1009
      %vm1016 = vmor %vm1014, %vm1015
      %v1017 = vsel %vm1016, %v1009, %v1013
      %v1018 = vand.u32 2147483647, %v599
      %vm1019 = vcmp.eq.f32.partialorder %v1018, 8.507059e+37
      %v1020 = vand.u32 %v599, 2147483648
      %v1021 = vor.u32 1.1754944e-38, %v1020
      %v1022 = vsel %vm1019, %v1021, %v1017
      %v1023 = vmul.f32 1.0, %v1022
      %v1024 = vrcp.pop %v600
      %v1025 = vmul.f32 %v600, %v1024
      %v1026 = vsub.f32 1.0, %v1025
      %v1027 = vmul.f32 %v1024, %v1026
      %v1028 = vadd.f32 %v1024, %v1027
      %vm1029 = vweird.f32 %v600
      %vm1030 = vweird.f32 %v1024
      %vm1031 = vmor %vm1029, %vm1030
      %v1032 = vsel %vm1031, %v1024, %v1028
      %v1033 = vand.u32 2147483647, %v600
      %vm1034 = vcmp.eq.f32.partialorder %v1033, 8.507059e+37
      %v1035 = vand.u32 %v600, 2147483648
      %v1036 = vor.u32 1.1754944e-38, %v1035
      %v1037 = vsel %vm1034, %v1036, %v1032
      %v1038 = vmul.f32 1.0, %v1037
      %v1039 = vrcp.pop %v601
      %v1040 = vmul.f32 %v601, %v1039
      %v1041 = vsub.f32 1.0, %v1040
      %v1042 = vmul.f32 %v1039, %v1041
      %v1043 = vadd.f32 %v1039, %v1042
      %vm1044 = vweird.f32 %v601
      %vm1045 = vweird.f32 %v1039
      %vm1046 = vmor %vm1044, %vm1045
      %v1047 = vsel %vm1046, %v1039, %v1043
      %v1048 = vand.u32 2147483647, %v601
      %vm1049 = vcmp.eq.f32.partialorder %v1048, 8.507059e+37
      %v1050 = vand.u32 %v601, 2147483648
      %v1051 = vor.u32 1.1754944e-38, %v1050
      %v1052 = vsel %vm1049, %v1051, %v1047
      %v1053 = vmul.f32 1.0, %v1052
      %v1054 = vrcp.pop %v602
      %v1055 = vmul.f32 %v602, %v1054
      %v1056 = vsub.f32 1.0, %v1055
      %v1057 = vmul.f32 %v1054, %v1056
      %v1058 = vadd.f32 %v1054, %v1057
      %vm1059 = vweird.f32 %v602
      %vm1060 = vweird.f32 %v1054
      %vm1061 = vmor %vm1059, %vm1060
      %v1062 = vsel %vm1061, %v1054, %v1058
      %v1063 = vand.u32 2147483647, %v602
      %vm1064 = vcmp.eq.f32.partialorder %v1063, 8.507059e+37
      %v1065 = vand.u32 %v602, 2147483648
      %v1066 = vor.u32 1.1754944e-38, %v1065
      %v1067 = vsel %vm1064, %v1066, %v1062
      %v1068 = vmul.f32 1.0, %v1067
      %v1069 = vrcp.pop %v603
      %v1070 = vmul.f32 %v603, %v1069
      %v1071 = vsub.f32 1.0, %v1070
      %v1072 = vmul.f32 %v1069, %v1071
      %v1073 = vadd.f32 %v1069, %v1072
      %vm1074 = vweird.f32 %v603
      %vm1075 = vweird.f32 %v1069
      %vm1076 = vmor %vm1074, %vm1075
      %v1077 = vsel %vm1076, %v1069, %v1073
      %v1078 = vand.u32 2147483647, %v603
      %vm1079 = vcmp.eq.f32.partialorder %v1078, 8.507059e+37
      %v1080 = vand.u32 %v603, 2147483648
      %v1081 = vor.u32 1.1754944e-38, %v1080
      %v1082 = vsel %vm1079, %v1081, %v1077
      %v1083 = vmul.f32 1.0, %v1082
      %v1084 = vmul.f32 %v381, %v618
      %v1085 = vmul.f32 %v384, %v633
      %v1086 = vmul.f32 %v387, %v648
      %v1087 = vmul.f32 %v390, %v663
      %v1088 = vmul.f32 %v393, %v678
      %v1089 = vmul.f32 %v396, %v693
      %v1090 = vmul.f32 %v399, %v708
      %v1091 = vmul.f32 %v402, %v723
      %v1092 = vmul.f32 %v405, %v738
      %v1093 = vmul.f32 %v408, %v753
      %v1094 = vmul.f32 %v411, %v768
      %v1095 = vmul.f32 %v414, %v783
      %v1096 = vmul.f32 %v417, %v798
      %v1097 = vmul.f32 %v420, %v813
      %v1098 = vmul.f32 %v423, %v828
      %v1099 = vmul.f32 %v426, %v843
      %v1100 = vmul.f32 %v429, %v858
      %v1101 = vmul.f32 %v432, %v873
      %v1102 = vmul.f32 %v435, %v888
      %v1103 = vmul.f32 %v438, %v903
      %v1104 = vmul.f32 %v441, %v918
      %v1105 = vmul.f32 %v444, %v933
      %v1106 = vmul.f32 %v447, %v948
      %v1107 = vmul.f32 %v450, %v963
      %v1108 = vmul.f32 %v453, %v978
      %v1109 = vmul.f32 %v456, %v993
      %v1110 = vmul.f32 %v459, %v1008
      %v1111 = vmul.f32 %v462, %v1023
      %v1112 = vmul.f32 %v465, %v1038
      %v1113 = vmul.f32 %v468, %v1053
      %v1114 = vmul.f32 %v471, %v1068
      %v1115 = vmul.f32 %v474, %v1083
      %v1116 = vld [vmem:[%s3] sm:$0xff]
      %v1117 = vld [vmem:[%s3 + $0x8] sm:$0xff]
      %v1118 = vld [vmem:[%s3 + $0x10] sm:$0xff]
      %v1119 = vld [vmem:[%s3 + $0x18] sm:$0xff]
      %v1120 = vld [vmem:[%s3 + $0x20] sm:$0xff]
      %v1121 = vld [vmem:[%s3 + $0x28] sm:$0xff]
      %v1122 = vld [vmem:[%s3 + $0x30] sm:$0xff]
      %v1123 = vld [vmem:[%s3 + $0x38] sm:$0xff]
      %v1124 = vld [vmem:[%s4] sm:$0x1]
      %v1126 = vperm.slane %v1124, 0
      %vm1128 = vcmask 523264
      %v1130 = vsel %vm1128, %v1084, 0
      %v1133 = vsel %vm1128, %v1085, 0
      %v1136 = vsel %vm1128, %v1086, 0
      %v1139 = vsel %vm1128, %v1087, 0
      %v1142 = vsel %vm1128, %v1088, 0
      %v1145 = vsel %vm1128, %v1089, 0
      %v1148 = vsel %vm1128, %v1090, 0
      %v1151 = vsel %vm1128, %v1091, 0
      %v1154 = vsel %vm1128, %v1092, 0
      %v1157 = vsel %vm1128, %v1093, 0
      %v1160 = vsel %vm1128, %v1094, 0
      %v1163 = vsel %vm1128, %v1095, 0
      %v1166 = vsel %vm1128, %v1096, 0
      %v1169 = vsel %vm1128, %v1097, 0
      %v1172 = vsel %vm1128, %v1098, 0
      %v1175 = vsel %vm1128, %v1099, 0
      %v1178 = vsel %vm1128, %v1100, 0
      %v1181 = vsel %vm1128, %v1101, 0
      %v1184 = vsel %vm1128, %v1102, 0
      %v1187 = vsel %vm1128, %v1103, 0
      %v1190 = vsel %vm1128, %v1104, 0
      %v1193 = vsel %vm1128, %v1105, 0
      %v1196 = vsel %vm1128, %v1106, 0
      %v1199 = vsel %vm1128, %v1107, 0
      %v1202 = vsel %vm1128, %v1108, 0
      %v1205 = vsel %vm1128, %v1109, 0
      %v1208 = vsel %vm1128, %v1110, 0
      %v1211 = vsel %vm1128, %v1111, 0
      %v1214 = vsel %vm1128, %v1112, 0
      %v1217 = vsel %vm1128, %v1113, 0
      %v1220 = vsel %vm1128, %v1114, 0
      %v1223 = vsel %vm1128, %v1115, 0
      %1225 = vmatpush.msra.mxu0 0.0
      %1226 = vmatpush.msra.mxu0 0.0
      %1227 = vmatpush.msra.mxu0 0.0
      %1228 = vmatpush.msra.mxu0 0.0
      %1229 = vmatpush.msra.mxu0 0.0
      %1230 = vmatpush.msra.mxu0 0.0
      %1231 = vmatpush.msra.mxu0 0.0
      %1232 = vmatpush.msra.mxu0 0.0
      %1233 = vmatpush.msra.mxu0 %v1123
      %1234 = vmatpush.msra.mxu0 %v1122
      %1235 = vmatpush.msra.mxu0 %v1121
      %1236 = vmatpush.msra.mxu0 %v1120
      %1237 = vmatpush.msra.mxu0 %v1119
      %1238 = vmatpush.msra.mxu0 %v1118
      %1239 = vmatpush.msra.mxu0 %v1117
      %1240 = vmatpush.msra.mxu0 %v1116
      %1241 = vmatmul.f32.gmra.mxu0 %v1130
      %v1242 = vpop.f32.mrf.mxu0
      %v1243 = vadd.f32 %v1126, %v1242
      %1244 = vmatmul.f32.gmra.mxu0 %v1133
      %v1245 = vpop.f32.mrf.mxu0
      %v1246 = vadd.f32 %v1126, %v1245
      %1247 = vmatmul.f32.gmra.mxu0 %v1136
      %v1248 = vpop.f32.mrf.mxu0
      %v1249 = vadd.f32 %v1126, %v1248
      %1250 = vmatmul.f32.gmra.mxu0 %v1139
      %v1251 = vpop.f32.mrf.mxu0
      %v1252 = vadd.f32 %v1126, %v1251
      %1253 = vmatmul.f32.gmra.mxu0 %v1142
      %v1254 = vpop.f32.mrf.mxu0
      %v1255 = vadd.f32 %v1126, %v1254
      %1256 = vmatmul.f32.gmra.mxu0 %v1145
      %v1257 = vpop.f32.mrf.mxu0
      %v1258 = vadd.f32 %v1126, %v1257
      %1259 = vmatmul.f32.gmra.mxu0 %v1148
      %v1260 = vpop.f32.mrf.mxu0
      %v1261 = vadd.f32 %v1126, %v1260
      %1262 = vmatmul.f32.gmra.mxu0 %v1151
      %v1263 = vpop.f32.mrf.mxu0
      %v1264 = vadd.f32 %v1126, %v1263
      %1265 = vmatmul.f32.gmra.mxu0 %v1154
      %v1266 = vpop.f32.mrf.mxu0
      %v1267 = vadd.f32 %v1126, %v1266
      %1268 = vmatmul.f32.gmra.mxu0 %v1157
      %v1269 = vpop.f32.mrf.mxu0
      %v1270 = vadd.f32 %v1126, %v1269
      %1271 = vmatmul.f32.gmra.mxu0 %v1160
      %v1272 = vpop.f32.mrf.mxu0
      %v1273 = vadd.f32 %v1126, %v1272
      %1274 = vmatmul.f32.gmra.mxu0 %v1163
      %v1275 = vpop.f32.mrf.mxu0
      %v1276 = vadd.f32 %v1126, %v1275
      %1277 = vmatmul.f32.gmra.mxu0 %v1166
      %v1278 = vpop.f32.mrf.mxu0
      %v1279 = vadd.f32 %v1126, %v1278
      %1280 = vmatmul.f32.gmra.mxu0 %v1169
      %v1281 = vpop.f32.mrf.mxu0
      %v1282 = vadd.f32 %v1126, %v1281
      %1283 = vmatmul.f32.gmra.mxu0 %v1172
      %v1284 = vpop.f32.mrf.mxu0
      %v1285 = vadd.f32 %v1126, %v1284
      %1286 = vmatmul.f32.gmra.mxu0 %v1175
      %v1287 = vpop.f32.mrf.mxu0
      %v1288 = vadd.f32 %v1126, %v1287
      %1289 = vmatmul.f32.gmra.mxu0 %v1178
      %v1290 = vpop.f32.mrf.mxu0
      %v1291 = vadd.f32 %v1126, %v1290
      %1292 = vmatmul.f32.gmra.mxu0 %v1181
      %v1293 = vpop.f32.mrf.mxu0
      %v1294 = vadd.f32 %v1126, %v1293
      %1295 = vmatmul.f32.gmra.mxu0 %v1184
      %v1296 = vpop.f32.mrf.mxu0
      %v1297 = vadd.f32 %v1126, %v1296
      %1298 = vmatmul.f32.gmra.mxu0 %v1187
      %v1299 = vpop.f32.mrf.mxu0
      %v1300 = vadd.f32 %v1126, %v1299
      %1301 = vmatmul.f32.gmra.mxu0 %v1190
      %v1302 = vpop.f32.mrf.mxu0
      %v1303 = vadd.f32 %v1126, %v1302
      %1304 = vmatmul.f32.gmra.mxu0 %v1193
      %v1305 = vpop.f32.mrf.mxu0
      %v1306 = vadd.f32 %v1126, %v1305
      %1307 = vmatmul.f32.gmra.mxu0 %v1196
      %v1308 = vpop.f32.mrf.mxu0
      %v1309 = vadd.f32 %v1126, %v1308
      %1310 = vmatmul.f32.gmra.mxu0 %v1199
      %v1311 = vpop.f32.mrf.mxu0
      %v1312 = vadd.f32 %v1126, %v1311
      %1313 = vmatmul.f32.gmra.mxu0 %v1202
      %v1314 = vpop.f32.mrf.mxu0
      %v1315 = vadd.f32 %v1126, %v1314
      %1316 = vmatmul.f32.gmra.mxu0 %v1205
      %v1317 = vpop.f32.mrf.mxu0
      %v1318 = vadd.f32 %v1126, %v1317
      %1319 = vmatmul.f32.gmra.mxu0 %v1208
      %v1320 = vpop.f32.mrf.mxu0
      %v1321 = vadd.f32 %v1126, %v1320
      %1322 = vmatmul.f32.gmra.mxu0 %v1211
      %v1323 = vpop.f32.mrf.mxu0
      %v1324 = vadd.f32 %v1126, %v1323
      %1325 = vmatmul.f32.gmra.mxu0 %v1214
      %v1326 = vpop.f32.mrf.mxu0
      %v1327 = vadd.f32 %v1126, %v1326
      %1328 = vmatmul.f32.gmra.mxu0 %v1217
      %v1329 = vpop.f32.mrf.mxu0
      %v1330 = vadd.f32 %v1126, %v1329
      %1331 = vmatmul.f32.gmra.mxu0 %v1220
      %v1332 = vpop.f32.mrf.mxu0
      %v1333 = vadd.f32 %v1126, %v1332
      %1334 = vmatmul.f32.gmra.mxu0 %v1223
      %v1335 = vpop.f32.mrf.mxu0
      %v1336 = vadd.f32 %v1126, %v1335
      %1337 = vdwg.mxu0
      %vm1338 = vcmask 23552
      %1339 = vst.msk [vmem:[%s226] sm:$0xff] %vm1338, %v1243
      %1340 = vst.msk [vmem:[%s226 + $0x8] sm:$0xff] %vm1338, %v1246
      %1341 = vst.msk [vmem:[%s226 + $0x10] sm:$0xff] %vm1338, %v1249
      %1342 = vst.msk [vmem:[%s226 + $0x18] sm:$0xff] %vm1338, %v1252
      %1343 = vst.msk [vmem:[%s226 + $0x20] sm:$0xff] %vm1338, %v1255
      %1344 = vst.msk [vmem:[%s226 + $0x28] sm:$0xff] %vm1338, %v1258
      %1345 = vst.msk [vmem:[%s226 + $0x30] sm:$0xff] %vm1338, %v1261
      %1346 = vst.msk [vmem:[%s226 + $0x38] sm:$0xff] %vm1338, %v1264
      %1347 = vst.msk [vmem:[%s226 + $0x40] sm:$0xff] %vm1338, %v1267
      %1348 = vst.msk [vmem:[%s226 + $0x48] sm:$0xff] %vm1338, %v1270
      %1349 = vst.msk [vmem:[%s226 + $0x50] sm:$0xff] %vm1338, %v1273
      %1350 = vst.msk [vmem:[%s226 + $0x58] sm:$0xff] %vm1338, %v1276
      %1351 = vst.msk [vmem:[%s226 + $0x60] sm:$0xff] %vm1338, %v1279
      %1352 = vst.msk [vmem:[%s226 + $0x68] sm:$0xff] %vm1338, %v1282
      %1353 = vst.msk [vmem:[%s226 + $0x70] sm:$0xff] %vm1338, %v1285
      %1354 = vst.msk [vmem:[%s226 + $0x78] sm:$0xff] %vm1338, %v1288
      %1355 = vst.msk [vmem:[%s226 + $0x80] sm:$0xff] %vm1338, %v1291
      %1356 = vst.msk [vmem:[%s226 + $0x88] sm:$0xff] %vm1338, %v1294
      %1357 = vst.msk [vmem:[%s226 + $0x90] sm:$0xff] %vm1338, %v1297
      %1358 = vst.msk [vmem:[%s226 + $0x98] sm:$0xff] %vm1338, %v1300
      %1359 = vst.msk [vmem:[%s226 + $0xa0] sm:$0xff] %vm1338, %v1303
      %1360 = vst.msk [vmem:[%s226 + $0xa8] sm:$0xff] %vm1338, %v1306
      %1361 = vst.msk [vmem:[%s226 + $0xb0] sm:$0xff] %vm1338, %v1309
      %1362 = vst.msk [vmem:[%s226 + $0xb8] sm:$0xff] %vm1338, %v1312
      %1363 = vst.msk [vmem:[%s226 + $0xc0] sm:$0xff] %vm1338, %v1315
      %1364 = vst.msk [vmem:[%s226 + $0xc8] sm:$0xff] %vm1338, %v1318
      %1365 = vst.msk [vmem:[%s226 + $0xd0] sm:$0xff] %vm1338, %v1321
      %1366 = vst.msk [vmem:[%s226 + $0xd8] sm:$0xff] %vm1338, %v1324
      %1367 = vst.msk [vmem:[%s226 + $0xe0] sm:$0xff] %vm1338, %v1327
      %1368 = vst.msk [vmem:[%s226 + $0xe8] sm:$0xff] %vm1338, %v1330
      %1369 = vst.msk [vmem:[%s226 + $0xf0] sm:$0xff] %vm1338, %v1333
      %1370 = vst.msk [vmem:[%s226 + $0xf8] sm:$0xff] %vm1338, %v1336
      %s1371 = smul.u32 32, %s16
      %p1372 = scmp.lt.s32.totalorder %s1371, 63
      %s1373 = scalar_select %p1372, %s1371, 63
      %s1374 = smul.addr %s1373, 8
      %s1375 = scalar_lea.vmem %s5, %s1374
      // Predicated region
      $region41: #{_lambda_.11} parent=39 // pred_check
        %p1376 = pneg %p144
      $region42: #{_lambda_.11} parent=39 // pred_check_branch
        %1378 = sbr.rel (%p1376) target = $region44
      $region43: #{_lambda_.11} parent=39 // pred_region
        %s1379 = smul.u32 32, %s16
      $region44: #{_lambda_.11} parent=39 // pred_fallthru
        _
    $region40: #{_lambda_.11} parent=5 // pred_fallthru
      _
    %p1380 = scmp.le.s32.totalorder 2, %s11
    // Predicated region
    $region45: #{_lambda_.11} parent=5 // pred_check
      %p1381 = pneg %p1380
    $region46: #{_lambda_.11} parent=5 // pred_check_branch
      %1383 = sbr.rel (%p1381) target = $region48
    $region47: #{_lambda_.11} parent=5 // pred_region
      %s1384 = ssub.s32 %s11, 2
      // Predicated region
      $region49: #{_lambda_.11} parent=47 // pred_check
        %p1385 = pneg %p150
      $region50: #{_lambda_.11} parent=47 // pred_check_branch
        %1387 = sbr.rel (%p1385) target = $region52
      $region51: #{_lambda_.11} parent=47 // pred_region
        %s1388 = smul.u32 32, %s17
        %p1389 = scmp.lt.s32.totalorder %s1388, 63
        %s1390 = scalar_select %p1389, %s1388, 63
        %s1391 = smul.addr %s1390, 8
        %s1392 = scalar_lea.vmem %s5, %s1391
      $region52: #{_lambda_.11} parent=47 // pred_fallthru
        _
    $region48: #{_lambda_.11} parent=5 // pred_fallthru
      _
  $region6: #{_lambda_.11} parent=0 // loop_footer
    %s15 = sadd.s32 1, %s11
  $region7: #{_lambda_.11} parent=0 // loop_footer_branch
    %10 = sbr.rel target = $region3
  $region8: #{_lambda_.11} parent=0 // loop_exit
    _

</llo_original>
